<compile_context>
chip_gen: v7x
topology: tpu7x:2x2x1
jax: 0.10.0
libtpu: 0.0.40
codegen_flags: <defaults>
</compile_context>

<pallas_src>
import functools

import jax
import jax.numpy as jnp
from jax import lax
from jax.experimental import pallas as pl
from jax.experimental.pallas import tpu as pltpu

_VMEM_LIMIT_BYTES = 48 * 1024 * 1024


def _round_up(n, m):
    return ((n + m - 1) // m) * m


# ---------------------------------------------------------------------------
# Kernel 1: fused conv tower (3 x [conv3x3 SAME + folded-BN + ReLU + maxpool2])
# ---------------------------------------------------------------------------
def _conv_bn_relu_pool(src, H, W, w_ref, b_ref, hbuf, wpbuf,
                       dst, dst_start, dst_stride):
    """One conv block on a row-flattened, zero-padded image.

    src : ref ((H+2)*(W+2)+2, Cin) bf16 -- padded input, (h, w) row-major,
          plus 2 zero guard rows for the shifted reads.
    Writes the pooled (H//2, W//2, Cout) map, row-flattened, into `dst` at
    rows [dst_start + i*dst_stride, +W//2) for pooled row i.
    """
    Wp = W + 2
    W2 = W // 2
    Cout = w_ref.shape[-1]
    n_wide = H * Wp  # conv output rows incl. 2 junk columns per image row

    # 3x3 conv == sum of 9 shifted matmuls (bf16 operands, f32 accumulation).
    acc = jnp.zeros((n_wide, Cout), jnp.float32)
    for t in range(9):
        dy, dx = divmod(t, 3)
        off = dy * Wp + dx
        acc = acc + jnp.dot(src[off:off + n_wide, :], w_ref[t],
                            preferred_element_type=jnp.float32)

    # Folded BatchNorm + conv bias, then ReLU (f32 epilogue).
    acc = jnp.maximum(acc + b_ref[...], 0.0)
    hbuf[...] = acc

    # 2x2 max-pool, step 1 (along W): even vs odd interleaved rows.
    wpbuf[...] = jnp.maximum(hbuf[pl.ds(0, n_wide // 2, stride=2), :],
                             hbuf[pl.ds(1, n_wide // 2, stride=2), :])

    # Step 2 (along H): max of row blocks 2i / 2i+1, dropping the junk columns.
    wq = Wp // 2
    for i in range(H // 2):
        top = wpbuf[2 * i * wq:2 * i * wq + W2, :]
        bot = wpbuf[(2 * i + 1) * wq:(2 * i + 1) * wq + W2, :]
        d0 = dst_start + i * dst_stride
        dst[d0:d0 + W2, :] = jnp.maximum(top, bot).astype(dst.dtype)


def _conv_tower_kernel(x_ref, w1_ref, b1_ref, w2_ref, b2_ref, w3_ref, b3_ref,
                       o_ref, h1, p1, pad2, h2, p2, pad3, h3, p3, *, H, W):
    H2, W2 = H // 2, W // 2
    H3, W3 = H // 4, W // 4

    # Stage 1: (H, W, Cin) -> (H/2, W/2, C1), written into pad2's interior.
    pad2[...] = jnp.zeros_like(pad2)
    _conv_bn_relu_pool(x_ref, H, W, w1_ref, b1_ref, h1, p1,
                       pad2, dst_start=(W2 + 2) + 1, dst_stride=W2 + 2)
    # Stage 2: -> (H/4, W/4, C2) into pad3's interior.
    pad3[...] = jnp.zeros_like(pad3)
    _conv_bn_relu_pool(pad2, H2, W2, w2_ref, b2_ref, h2, p2,
                       pad3, dst_start=(W3 + 2) + 1, dst_stride=W3 + 2)
    # Stage 3: -> (H/8, W/8, C3) rows straight into the lane-dense output block.
    _conv_bn_relu_pool(pad3, H3, W3, w3_ref, b3_ref, h3, p3,
                       o_ref, dst_start=0, dst_stride=W3 // 2)


def _conv_tower_forward(x_nhwc, w1, b1, w2, b2, w3, b3):
    B, H, W, Cin = x_nhwc.shape
    C1, C2, C3 = w1.shape[-1], w2.shape[-1], w3.shape[-1]
    H2, W2, H3, W3, H4, W4 = H // 2, W // 2, H // 4, W // 4, H // 8, W // 8
    Wp = W + 2

    # Zero-pad (SAME conv), flatten rows, add 2 guard rows, bf16 for the MXU.
    xp = jnp.pad(x_nhwc, ((0, 0), (1, 1), (1, 1), (0, 0)))
    xflat = jnp.pad(xp.reshape(B, (H + 2) * Wp, Cin), ((0, 0), (0, 2), (0, 0)))
    xflat = xflat.astype(jnp.bfloat16)

    kern = functools.partial(_conv_tower_kernel, H=H, W=W)
    wspec = lambda s: pl.BlockSpec(s, lambda b: (0, 0, 0))   # weights: constant index map
    bspec = lambda s: pl.BlockSpec(s, lambda b: (0, 0))      # biases:  constant index map

    return pl.pallas_call(
        kern,
        out_shape=jax.ShapeDtypeStruct((B, H4 * W4, C3), jnp.float32),
        grid_spec=pltpu.PrefetchScalarGridSpec(
            num_scalar_prefetch=0,
            grid=(B,),
            in_specs=[
                pl.BlockSpec((None, (H + 2) * Wp + 2, Cin), lambda b: (b, 0, 0)),
                wspec((9, Cin, C1)), bspec((1, C1)),
                wspec((9, C1, C2)), bspec((1, C2)),
                wspec((9, C2, C3)), bspec((1, C3)),
            ],
            out_specs=pl.BlockSpec((None, H4 * W4, C3), lambda b: (b, 0, 0)),
            scratch_shapes=[
                pltpu.VMEM((H * Wp, C1), jnp.float32),
                pltpu.VMEM((H * Wp // 2, C1), jnp.float32),
                pltpu.VMEM(((H2 + 2) * (W2 + 2) + 2, C1), jnp.bfloat16),
                pltpu.VMEM((H2 * (W2 + 2), C2), jnp.float32),
                pltpu.VMEM((H2 * (W2 + 2) // 2, C2), jnp.float32),
                pltpu.VMEM(((H3 + 2) * (W3 + 2) + 2, C2), jnp.bfloat16),
                pltpu.VMEM((H3 * (W3 + 2), C3), jnp.float32),
                pltpu.VMEM((H3 * (W3 + 2) // 2, C3), jnp.float32),
            ]),
        compiler_params=pltpu.CompilerParams(
            dimension_semantics=("parallel",),
            vmem_limit_bytes=_VMEM_LIMIT_BYTES),
    )(xflat, w1, b1, w2, b2, w3, b3)


# ---------------------------------------------------------------------------
# Kernel 2: classifier (flatten -> Dropout(identity, eval) -> Linear)
# ---------------------------------------------------------------------------
def _linear_kernel(x_ref, w_ref, b_ref, o_ref):
    o_ref[...] = (jnp.dot(x_ref[...], w_ref[...],
                          preferred_element_type=jnp.float32)
                  + b_ref[...]).astype(o_ref.dtype)


def _linear_forward(x, w, b, *, block_b=256):
    B, F = x.shape
    n_out = w.shape[1]
    n_pad = _round_up(max(n_out, 128), 128)            # lane-dense output columns
    bb = min(_round_up(block_b, 8), _round_up(B, 8))   # batch tile (cdiv-style)
    Bpad = _round_up(B, bb)

    xp = jnp.pad(x, ((0, Bpad - B), (0, 0)))
    wp = jnp.pad(w, ((0, 0), (0, n_pad - n_out)))
    bp = jnp.pad(b, (0, n_pad - n_out)).reshape(1, n_pad).astype(jnp.float32)

    out = pl.pallas_call(
        _linear_kernel,
        out_shape=jax.ShapeDtypeStruct((Bpad, n_pad), jnp.float32),
        grid_spec=pltpu.PrefetchScalarGridSpec(
            num_scalar_prefetch=0,
            grid=(Bpad // bb,),
            in_specs=[pl.BlockSpec((bb, F), lambda i: (i, 0)),
                      pl.BlockSpec((F, n_pad), lambda i: (0, 0)),
                      pl.BlockSpec((1, n_pad), lambda i: (0, 0))],
            out_specs=pl.BlockSpec((bb, n_pad), lambda i: (i, 0))),
        compiler_params=pltpu.CompilerParams(
            dimension_semantics=("parallel",),
            vmem_limit_bytes=_VMEM_LIMIT_BYTES),
    )(xp, wp, bp)
    return out[:B, :n_out]


# ---------------------------------------------------------------------------
# Wrapper: fold BN, cast operands, run both kernels.
# ---------------------------------------------------------------------------
def _fold_bn(params, eps=1e-5):
    folded = {}
    for i in (1, 2, 3):
        inv = params[f"bn{i}_gamma"] * lax.rsqrt(params[f"bn{i}_var"] + eps)
        folded[f"w{i}"] = params[f"w{i}"] * inv                      # (3,3,Cin,Cout)
        folded[f"b{i}"] = (params[f"b{i}"] - params[f"bn{i}_mean"]) * inv \
            + params[f"bn{i}_beta"]
    return folded


def image_model_forward(x_nchw, params, *, block_b=256, eps=1e-5):
    """Eval-mode forward of ImageModel (pretrained=False branch)."""
    f = _fold_bn(params, eps)
    x = jnp.transpose(x_nchw, (0, 2, 3, 1))            # NCHW -> NHWC (channels on lanes)
    B, H, W, Cin = x.shape
    assert H % 8 == 0 and W % 8 == 0, "spatial dims must survive three 2x2 pools"

    bf16 = jnp.bfloat16
    feats = _conv_tower_forward(
        x,
        f["w1"].reshape(9, *f["w1"].shape[2:]).astype(bf16), f["b1"].reshape(1, -1),
        f["w2"].reshape(9, *f["w2"].shape[2:]).astype(bf16), f["b2"].reshape(1, -1),
        f["w3"].reshape(9, *f["w3"].shape[2:]).astype(bf16), f["b3"].reshape(1, -1))

    # flatten (NHWC order); Dropout(0.5) is identity in eval mode.
    feats = feats.reshape(B, -1).astype(bf16)
    return _linear_forward(feats, params["wfc"].astype(bf16), params["bfc"],
                           block_b=block_b)


# ---------------------------------------------------------------------------
# Deterministic init + pure-XLA references
# ---------------------------------------------------------------------------
def init_params(key, in_ch, num_classes, spatial_hw):
    H, W = spatial_hw
    chans = (in_ch, 32, 64, 128)
    keys = jax.random.split(key, 20)
    p, k = {}, 0
    for i in (1, 2, 3):
        cin, cout = chans[i - 1], chans[i]
        bound = 1.0 / (cin * 9) ** 0.5
        p[f"w{i}"] = jax.random.uniform(keys[k], (3, 3, cin, cout), jnp.float32,
                                        -bound, bound); k += 1
        p[f"b{i}"] = jax.random.uniform(keys[k], (cout,), jnp.float32,
                                        -bound, bound); k += 1
        p[f"bn{i}_gamma"] = jax.random.uniform(keys[k], (cout,), jnp.float32,
                                               0.5, 1.5); k += 1
        p[f"bn{i}_beta"] = 0.1 * jax.random.normal(keys[k], (cout,), jnp.float32); k += 1
        p[f"bn{i}_mean"] = 0.1 * jax.random.normal(keys[k], (cout,), jnp.float32); k += 1
        p[f"bn{i}_var"] = jax.random.uniform(keys[k], (cout,), jnp.float32,
                                             0.5, 1.5); k += 1
    feat = 128 * (H // 8) * (W // 8)
    bound = 1.0 / feat ** 0.5
    p["wfc"] = jax.random.uniform(keys[k], (feat, num_classes), jnp.float32,
                                  -bound, bound); k += 1
    p["bfc"] = jax.random.uniform(keys[k], (num_classes,), jnp.float32, -bound, bound)
    return p


def _maxpool2x2_nhwc(x):
    B, H, W, C = x.shape
    return x.reshape(B, H // 2, 2, W // 2, 2, C).max(axis=(2, 4))


def reference_forward_f32(x_nchw, params, eps=1e-5):
    """Eval-mode module semantics, pure XLA, full f32."""
    x = jnp.transpose(x_nchw, (0, 2, 3, 1))
    for i in (1, 2, 3):
        x = lax.conv_general_dilated(x, params[f"w{i}"], (1, 1), "SAME",
                                     dimension_numbers=("NHWC", "HWIO", "NHWC"))
        x = x + params[f"b{i}"]
        inv = params[f"bn{i}_gamma"] * lax.rsqrt(params[f"bn{i}_var"] + eps)
        x = (x - params[f"bn{i}_mean"]) * inv + params[f"bn{i}_beta"]
        x = _maxpool2x2_nhwc(jnp.maximum(x, 0.0))
    feats = x.reshape(x.shape[0], -1)
    return feats @ params["wfc"] + params["bfc"]


def reference_forward_bf16(x_nchw, params, eps=1e-5):
    """Same math as the Pallas path: folded BN, bf16 operands, f32 accumulation."""
    f = _fold_bn(params, eps)
    x = jnp.transpose(x_nchw, (0, 2, 3, 1))
    for i in (1, 2, 3):
        x = lax.conv_general_dilated(
            x.astype(jnp.bfloat16), f[f"w{i}"].astype(jnp.bfloat16), (1, 1), "SAME",
            dimension_numbers=("NHWC", "HWIO", "NHWC"),
            preferred_element_type=jnp.float32)
        x = _maxpool2x2_nhwc(jnp.maximum(x + f[f"b{i}"], 0.0))
    feats = x.reshape(x.shape[0], -1).astype(jnp.bfloat16)
    return (jnp.dot(feats, params["wfc"].astype(jnp.bfloat16),
                    preferred_element_type=jnp.float32) + params["bfc"])


if __name__ == "__main__":
    key = jax.random.PRNGKey(0)
    kx, kp = jax.random.split(key)

    batch, in_ch, height, width = 4, 3, 16, 16
    num_classes = 10

    x = jax.random.normal(kx, (batch, in_ch, height, width), jnp.float32)  # NCHW
    params = init_params(kp, in_ch, num_classes, (height, width))

    out = image_model_forward(x, params)
    out = jax.block_until_ready(out)
    assert out.shape == (batch, num_classes)

    # Primary check: exact same math (folded BN, bf16 operands, f32 accum) in XLA.
    ref_bf16 = reference_forward_bf16(x, params)
    assert jnp.allclose(out, ref_bf16, atol=2e-3, rtol=2e-3), \
        float(jnp.max(jnp.abs(out - ref_bf16)))

    # Sanity check: close to the full-f32 eval-mode module semantics
    # (difference is only bf16 rounding of the matmul operands).
    ref_f32 = reference_forward_f32(x, params)
    assert jnp.allclose(out, ref_f32, atol=1e-1, rtol=1e-1), \
        float(jnp.max(jnp.abs(out - ref_f32)))

    print("KERNEL_OK")
</pallas_src>

<mosaic_0001>
module attributes {stable_mosaic.version = 11 : i64} {
  func.func @_conv_tower_kernel(%arg0: i32, %arg1: memref<1x326x3xbf16, #tpu.memory_space<vmem>>, %arg2: memref<9x3x32xbf16, #tpu.memory_space<vmem>>, %arg3: memref<1x32xf32, #tpu.memory_space<vmem>>, %arg4: memref<9x32x64xbf16, #tpu.memory_space<vmem>>, %arg5: memref<1x64xf32, #tpu.memory_space<vmem>>, %arg6: memref<9x64x128xbf16, #tpu.memory_space<vmem>>, %arg7: memref<1x128xf32, #tpu.memory_space<vmem>>, %arg8: memref<1x4x128xf32, #tpu.memory_space<vmem>>, %arg9: memref<288x32xf32, #tpu.memory_space<vmem>>, %arg10: memref<144x32xf32, #tpu.memory_space<vmem>>, %arg11: memref<102x32xbf16, #tpu.memory_space<vmem>>, %arg12: memref<80x64xf32, #tpu.memory_space<vmem>>, %arg13: memref<40x64xf32, #tpu.memory_space<vmem>>, %arg14: memref<38x64xbf16, #tpu.memory_space<vmem>>, %arg15: memref<24x128xf32, #tpu.memory_space<vmem>>, %arg16: memref<12x128xf32, #tpu.memory_space<vmem>>) attributes {dimension_semantics = [#tpu.dimension_semantics<parallel>], iteration_bounds = array<i64: 4>, scalar_prefetch = 0 : i64, scratch_operands = 8 : i64, tpu.core_type = #tpu.core_type<tc>, window_params = [{transform_indices = @transform_0, window_bounds = array<i64: 1, 326, 3>}, {pipeline_mode = #tpu.pipeline_mode<synchronous>, transform_indices = @transform_1, window_bounds = array<i64: 9, 3, 32>}, {pipeline_mode = #tpu.pipeline_mode<synchronous>, transform_indices = @transform_2, window_bounds = array<i64: 1, 32>}, {pipeline_mode = #tpu.pipeline_mode<synchronous>, transform_indices = @transform_3, window_bounds = array<i64: 9, 32, 64>}, {pipeline_mode = #tpu.pipeline_mode<synchronous>, transform_indices = @transform_4, window_bounds = array<i64: 1, 64>}, {pipeline_mode = #tpu.pipeline_mode<synchronous>, transform_indices = @transform_5, window_bounds = array<i64: 9, 64, 128>}, {pipeline_mode = #tpu.pipeline_mode<synchronous>, transform_indices = @transform_6, window_bounds = array<i64: 1, 128>}, {transform_indices = @transform_7, window_bounds = array<i64: 1, 4, 128>}]} {
    %cst = arith.constant 0.000000e+00 : bf16
    %0 = vector.broadcast %cst : bf16 to vector<102x32xbf16>
    %c0 = arith.constant 0 : index
    %c0_0 = arith.constant 0 : index
    %1 = vector.load %arg11[%c0, %c0_0] : memref<102x32xbf16, #tpu.memory_space<vmem>>, vector<102x32xbf16>
    tpu.vector_store %arg11[%c0, %c0_0], %0 {strides = array<i32>} : memref<102x32xbf16, #tpu.memory_space<vmem>>, vector<102x32xbf16>,
    %cst_1 = arith.constant 0.000000e+00 : f32
    %2 = vector.broadcast %cst_1 : f32 to vector<288x32xf32>
    %c0_2 = arith.constant 0 : index
    %c0_3 = arith.constant 0 : index
    %c0_4 = arith.constant 0 : index
    %3 = vector.load %arg1[%c0_2, %c0_3, %c0_4] : memref<1x326x3xbf16, #tpu.memory_space<vmem>>, vector<1x288x3xbf16>
    %4 = vector.shape_cast %3 : vector<1x288x3xbf16> to vector<288x3xbf16>
    %c0_5 = arith.constant 0 : index
    %c0_6 = arith.constant 0 : index
    %c0_7 = arith.constant 0 : index
    %5 = vector.load %arg2[%c0_5, %c0_6, %c0_7] : memref<9x3x32xbf16, #tpu.memory_space<vmem>>, vector<1x3x32xbf16>
    %6 = vector.shape_cast %5 : vector<1x3x32xbf16> to vector<3x32xbf16>
    %cst_8 = arith.constant dense<0.000000e+00> : vector<288x32xf32>
    %7 = tpu.matmul %4, %6, %cst_8 {dimension_numbers = #tpu.dot_dimension_numbers<[1], [0], [0], [1], [0, 0, 1, 1], [], []>} : vector<288x3xbf16>, vector<3x32xbf16>, vector<288x32xf32> -> vector<288x32xf32>
    %8 = arith.addf %2, %7 : vector<288x32xf32>
    %c0_9 = arith.constant 0 : index
    %c1 = arith.constant 1 : index
    %c0_10 = arith.constant 0 : index
    %9 = vector.load %arg1[%c0_9, %c1, %c0_10] : memref<1x326x3xbf16, #tpu.memory_space<vmem>>, vector<1x288x3xbf16>
    %10 = vector.shape_cast %9 : vector<1x288x3xbf16> to vector<288x3xbf16>
    %c1_11 = arith.constant 1 : index
    %c0_12 = arith.constant 0 : index
    %c0_13 = arith.constant 0 : index
    %11 = vector.load %arg2[%c1_11, %c0_12, %c0_13] : memref<9x3x32xbf16, #tpu.memory_space<vmem>>, vector<1x3x32xbf16>
    %12 = vector.shape_cast %11 : vector<1x3x32xbf16> to vector<3x32xbf16>
    %cst_14 = arith.constant dense<0.000000e+00> : vector<288x32xf32>
    %13 = tpu.matmul %10, %12, %cst_14 {dimension_numbers = #tpu.dot_dimension_numbers<[1], [0], [0], [1], [0, 0, 1, 1], [], []>} : vector<288x3xbf16>, vector<3x32xbf16>, vector<288x32xf32> -> vector<288x32xf32>
    %14 = arith.addf %8, %13 : vector<288x32xf32>
    %c0_15 = arith.constant 0 : index
    %c2 = arith.constant 2 : index
    %c0_16 = arith.constant 0 : index
    %15 = vector.load %arg1[%c0_15, %c2, %c0_16] : memref<1x326x3xbf16, #tpu.memory_space<vmem>>, vector<1x288x3xbf16>
    %16 = vector.shape_cast %15 : vector<1x288x3xbf16> to vector<288x3xbf16>
    %c2_17 = arith.constant 2 : index
    %c0_18 = arith.constant 0 : index
    %c0_19 = arith.constant 0 : index
    %17 = vector.load %arg2[%c2_17, %c0_18, %c0_19] : memref<9x3x32xbf16, #tpu.memory_space<vmem>>, vector<1x3x32xbf16>
    %18 = vector.shape_cast %17 : vector<1x3x32xbf16> to vector<3x32xbf16>
    %cst_20 = arith.constant dense<0.000000e+00> : vector<288x32xf32>
    %19 = tpu.matmul %16, %18, %cst_20 {dimension_numbers = #tpu.dot_dimension_numbers<[1], [0], [0], [1], [0, 0, 1, 1], [], []>} : vector<288x3xbf16>, vector<3x32xbf16>, vector<288x32xf32> -> vector<288x32xf32>
    %20 = arith.addf %14, %19 : vector<288x32xf32>
    %c0_21 = arith.constant 0 : index
    %c18 = arith.constant 18 : index
    %c0_22 = arith.constant 0 : index
    %21 = vector.load %arg1[%c0_21, %c18, %c0_22] : memref<1x326x3xbf16, #tpu.memory_space<vmem>>, vector<1x288x3xbf16>
    %22 = vector.shape_cast %21 : vector<1x288x3xbf16> to vector<288x3xbf16>
    %c3 = arith.constant 3 : index
    %c0_23 = arith.constant 0 : index
    %c0_24 = arith.constant 0 : index
    %23 = vector.load %arg2[%c3, %c0_23, %c0_24] : memref<9x3x32xbf16, #tpu.memory_space<vmem>>, vector<1x3x32xbf16>
    %24 = vector.shape_cast %23 : vector<1x3x32xbf16> to vector<3x32xbf16>
    %cst_25 = arith.constant dense<0.000000e+00> : vector<288x32xf32>
    %25 = tpu.matmul %22, %24, %cst_25 {dimension_numbers = #tpu.dot_dimension_numbers<[1], [0], [0], [1], [0, 0, 1, 1], [], []>} : vector<288x3xbf16>, vector<3x32xbf16>, vector<288x32xf32> -> vector<288x32xf32>
    %26 = arith.addf %20, %25 : vector<288x32xf32>
    %c0_26 = arith.constant 0 : index
    %c19 = arith.constant 19 : index
    %c0_27 = arith.constant 0 : index
    %27 = vector.load %arg1[%c0_26, %c19, %c0_27] : memref<1x326x3xbf16, #tpu.memory_space<vmem>>, vector<1x288x3xbf16>
    %28 = vector.shape_cast %27 : vector<1x288x3xbf16> to vector<288x3xbf16>
    %c4 = arith.constant 4 : index
    %c0_28 = arith.constant 0 : index
    %c0_29 = arith.constant 0 : index
    %29 = vector.load %arg2[%c4, %c0_28, %c0_29] : memref<9x3x32xbf16, #tpu.memory_space<vmem>>, vector<1x3x32xbf16>
    %30 = vector.shape_cast %29 : vector<1x3x32xbf16> to vector<3x32xbf16>
    %cst_30 = arith.constant dense<0.000000e+00> : vector<288x32xf32>
    %31 = tpu.matmul %28, %30, %cst_30 {dimension_numbers = #tpu.dot_dimension_numbers<[1], [0], [0], [1], [0, 0, 1, 1], [], []>} : vector<288x3xbf16>, vector<3x32xbf16>, vector<288x32xf32> -> vector<288x32xf32>
    %32 = arith.addf %26, %31 : vector<288x32xf32>
    %c0_31 = arith.constant 0 : index
    %c20 = arith.constant 20 : index
    %c0_32 = arith.constant 0 : index
    %33 = vector.load %arg1[%c0_31, %c20, %c0_32] : memref<1x326x3xbf16, #tpu.memory_space<vmem>>, vector<1x288x3xbf16>
    %34 = vector.shape_cast %33 : vector<1x288x3xbf16> to vector<288x3xbf16>
    %c5 = arith.constant 5 : index
    %c0_33 = arith.constant 0 : index
    %c0_34 = arith.constant 0 : index
    %35 = vector.load %arg2[%c5, %c0_33, %c0_34] : memref<9x3x32xbf16, #tpu.memory_space<vmem>>, vector<1x3x32xbf16>
    %36 = vector.shape_cast %35 : vector<1x3x32xbf16> to vector<3x32xbf16>
    %cst_35 = arith.constant dense<0.000000e+00> : vector<288x32xf32>
    %37 = tpu.matmul %34, %36, %cst_35 {dimension_numbers = #tpu.dot_dimension_numbers<[1], [0], [0], [1], [0, 0, 1, 1], [], []>} : vector<288x3xbf16>, vector<3x32xbf16>, vector<288x32xf32> -> vector<288x32xf32>
    %38 = arith.addf %32, %37 : vector<288x32xf32>
    %c0_36 = arith.constant 0 : index
    %c36 = arith.constant 36 : index
    %c0_37 = arith.constant 0 : index
    %39 = vector.load %arg1[%c0_36, %c36, %c0_37] : memref<1x326x3xbf16, #tpu.memory_space<vmem>>, vector<1x288x3xbf16>
    %40 = vector.shape_cast %39 : vector<1x288x3xbf16> to vector<288x3xbf16>
    %c6 = arith.constant 6 : index
    %c0_38 = arith.constant 0 : index
    %c0_39 = arith.constant 0 : index
    %41 = vector.load %arg2[%c6, %c0_38, %c0_39] : memref<9x3x32xbf16, #tpu.memory_space<vmem>>, vector<1x3x32xbf16>
    %42 = vector.shape_cast %41 : vector<1x3x32xbf16> to vector<3x32xbf16>
    %cst_40 = arith.constant dense<0.000000e+00> : vector<288x32xf32>
    %43 = tpu.matmul %40, %42, %cst_40 {dimension_numbers = #tpu.dot_dimension_numbers<[1], [0], [0], [1], [0, 0, 1, 1], [], []>} : vector<288x3xbf16>, vector<3x32xbf16>, vector<288x32xf32> -> vector<288x32xf32>
    %44 = arith.addf %38, %43 : vector<288x32xf32>
    %c0_41 = arith.constant 0 : index
    %c37 = arith.constant 37 : index
    %c0_42 = arith.constant 0 : index
    %45 = vector.load %arg1[%c0_41, %c37, %c0_42] : memref<1x326x3xbf16, #tpu.memory_space<vmem>>, vector<1x288x3xbf16>
    %46 = vector.shape_cast %45 : vector<1x288x3xbf16> to vector<288x3xbf16>
    %c7 = arith.constant 7 : index
    %c0_43 = arith.constant 0 : index
    %c0_44 = arith.constant 0 : index
    %47 = vector.load %arg2[%c7, %c0_43, %c0_44] : memref<9x3x32xbf16, #tpu.memory_space<vmem>>, vector<1x3x32xbf16>
    %48 = vector.shape_cast %47 : vector<1x3x32xbf16> to vector<3x32xbf16>
    %cst_45 = arith.constant dense<0.000000e+00> : vector<288x32xf32>
    %49 = tpu.matmul %46, %48, %cst_45 {dimension_numbers = #tpu.dot_dimension_numbers<[1], [0], [0], [1], [0, 0, 1, 1], [], []>} : vector<288x3xbf16>, vector<3x32xbf16>, vector<288x32xf32> -> vector<288x32xf32>
    %50 = arith.addf %44, %49 : vector<288x32xf32>
    %c0_46 = arith.constant 0 : index
    %c38 = arith.constant 38 : index
    %c0_47 = arith.constant 0 : index
    %51 = vector.load %arg1[%c0_46, %c38, %c0_47] : memref<1x326x3xbf16, #tpu.memory_space<vmem>>, vector<1x288x3xbf16>
    %52 = vector.shape_cast %51 : vector<1x288x3xbf16> to vector<288x3xbf16>
    %c8 = arith.constant 8 : index
    %c0_48 = arith.constant 0 : index
    %c0_49 = arith.constant 0 : index
    %53 = vector.load %arg2[%c8, %c0_48, %c0_49] : memref<9x3x32xbf16, #tpu.memory_space<vmem>>, vector<1x3x32xbf16>
    %54 = vector.shape_cast %53 : vector<1x3x32xbf16> to vector<3x32xbf16>
    %cst_50 = arith.constant dense<0.000000e+00> : vector<288x32xf32>
    %55 = tpu.matmul %52, %54, %cst_50 {dimension_numbers = #tpu.dot_dimension_numbers<[1], [0], [0], [1], [0, 0, 1, 1], [], []>} : vector<288x3xbf16>, vector<3x32xbf16>, vector<288x32xf32> -> vector<288x32xf32>
    %56 = arith.addf %50, %55 : vector<288x32xf32>
    %c0_51 = arith.constant 0 : index
    %c0_52 = arith.constant 0 : index
    %57 = vector.load %arg3[%c0_51, %c0_52] : memref<1x32xf32, #tpu.memory_space<vmem>>, vector<1x32xf32>
    %58 = vector.broadcast %57 : vector<1x32xf32> to vector<288x32xf32>
    %59 = arith.addf %56, %58 : vector<288x32xf32>
    %cst_53 = arith.constant 0.000000e+00 : f32
    %60 = vector.broadcast %cst_53 : f32 to vector<288x32xf32>
    %61 = arith.maximumf %59, %60 : vector<288x32xf32>
    %c0_54 = arith.constant 0 : index
    %c0_55 = arith.constant 0 : index
    %62 = vector.load %arg9[%c0_54, %c0_55] : memref<288x32xf32, #tpu.memory_space<vmem>>, vector<288x32xf32>
    tpu.vector_store %arg9[%c0_54, %c0_55], %61 {strides = array<i32>} : memref<288x32xf32, #tpu.memory_space<vmem>>, vector<288x32xf32>,
    %c0_56 = arith.constant 0 : index
    %c0_57 = arith.constant 0 : index
    %63 = tpu.strided_load %arg9[%c0_56, %c0_57] {strides = array<i32: 2, 1>} : memref<288x32xf32, #tpu.memory_space<vmem>>, vector<144x32xf32>
    %c1_58 = arith.constant 1 : index
    %c0_59 = arith.constant 0 : index
    %64 = tpu.strided_load %arg9[%c1_58, %c0_59] {strides = array<i32: 2, 1>} : memref<288x32xf32, #tpu.memory_space<vmem>>, vector<144x32xf32>
    %65 = arith.maximumf %63, %64 : vector<144x32xf32>
    %c0_60 = arith.constant 0 : index
    %c0_61 = arith.constant 0 : index
    %66 = vector.load %arg10[%c0_60, %c0_61] : memref<144x32xf32, #tpu.memory_space<vmem>>, vector<144x32xf32>
    tpu.vector_store %arg10[%c0_60, %c0_61], %65 {strides = array<i32>} : memref<144x32xf32, #tpu.memory_space<vmem>>, vector<144x32xf32>,
    %c0_62 = arith.constant 0 : index
    %c0_63 = arith.constant 0 : index
    %67 = vector.load %arg10[%c0_62, %c0_63] : memref<144x32xf32, #tpu.memory_space<vmem>>, vector<8x32xf32>
    %c9 = arith.constant 9 : index
    %c0_64 = arith.constant 0 : index
    %68 = vector.load %arg10[%c9, %c0_64] : memref<144x32xf32, #tpu.memory_space<vmem>>, vector<8x32xf32>
    %69 = arith.maximumf %67, %68 : vector<8x32xf32>
    %70 = arith.truncf %69 : vector<8x32xf32> to vector<8x32xbf16>
    %c11 = arith.constant 11 : index
    %c0_65 = arith.constant 0 : index
    %71 = vector.load %arg11[%c11, %c0_65] : memref<102x32xbf16, #tpu.memory_space<vmem>>, vector<8x32xbf16>
    tpu.vector_store %arg11[%c11, %c0_65], %70 {strides = array<i32>} : memref<102x32xbf16, #tpu.memory_space<vmem>>, vector<8x32xbf16>,
    %c18_66 = arith.constant 18 : index
    %c0_67 = arith.constant 0 : index
    %72 = vector.load %arg10[%c18_66, %c0_67] : memref<144x32xf32, #tpu.memory_space<vmem>>, vector<8x32xf32>
    %c27 = arith.constant 27 : index
    %c0_68 = arith.constant 0 : index
    %73 = vector.load %arg10[%c27, %c0_68] : memref<144x32xf32, #tpu.memory_space<vmem>>, vector<8x32xf32>
    %74 = arith.maximumf %72, %73 : vector<8x32xf32>
    %75 = arith.truncf %74 : vector<8x32xf32> to vector<8x32xbf16>
    %c21 = arith.constant 21 : index
    %c0_69 = arith.constant 0 : index
    %76 = vector.load %arg11[%c21, %c0_69] : memref<102x32xbf16, #tpu.memory_space<vmem>>, vector<8x32xbf16>
    tpu.vector_store %arg11[%c21, %c0_69], %75 {strides = array<i32>} : memref<102x32xbf16, #tpu.memory_space<vmem>>, vector<8x32xbf16>,
    %c36_70 = arith.constant 36 : index
    %c0_71 = arith.constant 0 : index
    %77 = vector.load %arg10[%c36_70, %c0_71] : memref<144x32xf32, #tpu.memory_space<vmem>>, vector<8x32xf32>
    %c45 = arith.constant 45 : index
    %c0_72 = arith.constant 0 : index
    %78 = vector.load %arg10[%c45, %c0_72] : memref<144x32xf32, #tpu.memory_space<vmem>>, vector<8x32xf32>
    %79 = arith.maximumf %77, %78 : vector<8x32xf32>
    %80 = arith.truncf %79 : vector<8x32xf32> to vector<8x32xbf16>
    %c31 = arith.constant 31 : index
    %c0_73 = arith.constant 0 : index
    %81 = vector.load %arg11[%c31, %c0_73] : memref<102x32xbf16, #tpu.memory_space<vmem>>, vector<8x32xbf16>
    tpu.vector_store %arg11[%c31, %c0_73], %80 {strides = array<i32>} : memref<102x32xbf16, #tpu.memory_space<vmem>>, vector<8x32xbf16>,
    %c54 = arith.constant 54 : index
    %c0_74 = arith.constant 0 : index
    %82 = vector.load %arg10[%c54, %c0_74] : memref<144x32xf32, #tpu.memory_space<vmem>>, vector<8x32xf32>
    %c63 = arith.constant 63 : index
    %c0_75 = arith.constant 0 : index
    %83 = vector.load %arg10[%c63, %c0_75] : memref<144x32xf32, #tpu.memory_space<vmem>>, vector<8x32xf32>
    %84 = arith.maximumf %82, %83 : vector<8x32xf32>
    %85 = arith.truncf %84 : vector<8x32xf32> to vector<8x32xbf16>
    %c41 = arith.constant 41 : index
    %c0_76 = arith.constant 0 : index
    %86 = vector.load %arg11[%c41, %c0_76] : memref<102x32xbf16, #tpu.memory_space<vmem>>, vector<8x32xbf16>
    tpu.vector_store %arg11[%c41, %c0_76], %85 {strides = array<i32>} : memref<102x32xbf16, #tpu.memory_space<vmem>>, vector<8x32xbf16>,
    %c72 = arith.constant 72 : index
    %c0_77 = arith.constant 0 : index
    %87 = vector.load %arg10[%c72, %c0_77] : memref<144x32xf32, #tpu.memory_space<vmem>>, vector<8x32xf32>
    %c81 = arith.constant 81 : index
    %c0_78 = arith.constant 0 : index
    %88 = vector.load %arg10[%c81, %c0_78] : memref<144x32xf32, #tpu.memory_space<vmem>>, vector<8x32xf32>
    %89 = arith.maximumf %87, %88 : vector<8x32xf32>
    %90 = arith.truncf %89 : vector<8x32xf32> to vector<8x32xbf16>
    %c51 = arith.constant 51 : index
    %c0_79 = arith.constant 0 : index
    %91 = vector.load %arg11[%c51, %c0_79] : memref<102x32xbf16, #tpu.memory_space<vmem>>, vector<8x32xbf16>
    tpu.vector_store %arg11[%c51, %c0_79], %90 {strides = array<i32>} : memref<102x32xbf16, #tpu.memory_space<vmem>>, vector<8x32xbf16>,
    %c90 = arith.constant 90 : index
    %c0_80 = arith.constant 0 : index
    %92 = vector.load %arg10[%c90, %c0_80] : memref<144x32xf32, #tpu.memory_space<vmem>>, vector<8x32xf32>
    %c99 = arith.constant 99 : index
    %c0_81 = arith.constant 0 : index
    %93 = vector.load %arg10[%c99, %c0_81] : memref<144x32xf32, #tpu.memory_space<vmem>>, vector<8x32xf32>
    %94 = arith.maximumf %92, %93 : vector<8x32xf32>
    %95 = arith.truncf %94 : vector<8x32xf32> to vector<8x32xbf16>
    %c61 = arith.constant 61 : index
    %c0_82 = arith.constant 0 : index
    %96 = vector.load %arg11[%c61, %c0_82] : memref<102x32xbf16, #tpu.memory_space<vmem>>, vector<8x32xbf16>
    tpu.vector_store %arg11[%c61, %c0_82], %95 {strides = array<i32>} : memref<102x32xbf16, #tpu.memory_space<vmem>>, vector<8x32xbf16>,
    %c108 = arith.constant 108 : index
    %c0_83 = arith.constant 0 : index
    %97 = vector.load %arg10[%c108, %c0_83] : memref<144x32xf32, #tpu.memory_space<vmem>>, vector<8x32xf32>
    %c117 = arith.constant 117 : index
    %c0_84 = arith.constant 0 : index
    %98 = vector.load %arg10[%c117, %c0_84] : memref<144x32xf32, #tpu.memory_space<vmem>>, vector<8x32xf32>
    %99 = arith.maximumf %97, %98 : vector<8x32xf32>
    %100 = arith.truncf %99 : vector<8x32xf32> to vector<8x32xbf16>
    %c71 = arith.constant 71 : index
    %c0_85 = arith.constant 0 : index
    %101 = vector.load %arg11[%c71, %c0_85] : memref<102x32xbf16, #tpu.memory_space<vmem>>, vector<8x32xbf16>
    tpu.vector_store %arg11[%c71, %c0_85], %100 {strides = array<i32>} : memref<102x32xbf16, #tpu.memory_space<vmem>>, vector<8x32xbf16>,
    %c126 = arith.constant 126 : index
    %c0_86 = arith.constant 0 : index
    %102 = vector.load %arg10[%c126, %c0_86] : memref<144x32xf32, #tpu.memory_space<vmem>>, vector<8x32xf32>
    %c135 = arith.constant 135 : index
    %c0_87 = arith.constant 0 : index
    %103 = vector.load %arg10[%c135, %c0_87] : memref<144x32xf32, #tpu.memory_space<vmem>>, vector<8x32xf32>
    %104 = arith.maximumf %102, %103 : vector<8x32xf32>
    %105 = arith.truncf %104 : vector<8x32xf32> to vector<8x32xbf16>
    %c81_88 = arith.constant 81 : index
    %c0_89 = arith.constant 0 : index
    %106 = vector.load %arg11[%c81_88, %c0_89] : memref<102x32xbf16, #tpu.memory_space<vmem>>, vector<8x32xbf16>
    tpu.vector_store %arg11[%c81_88, %c0_89], %105 {strides = array<i32>} : memref<102x32xbf16, #tpu.memory_space<vmem>>, vector<8x32xbf16>,
    %cst_90 = arith.constant 0.000000e+00 : bf16
    %107 = vector.broadcast %cst_90 : bf16 to vector<38x64xbf16>
    %c0_91 = arith.constant 0 : index
    %c0_92 = arith.constant 0 : index
    %108 = vector.load %arg14[%c0_91, %c0_92] : memref<38x64xbf16, #tpu.memory_space<vmem>>, vector<38x64xbf16>
    tpu.vector_store %arg14[%c0_91, %c0_92], %107 {strides = array<i32>} : memref<38x64xbf16, #tpu.memory_space<vmem>>, vector<38x64xbf16>,
    %cst_93 = arith.constant 0.000000e+00 : f32
    %109 = vector.broadcast %cst_93 : f32 to vector<80x64xf32>
    %c0_94 = arith.constant 0 : index
    %c0_95 = arith.constant 0 : index
    %110 = vector.load %arg11[%c0_94, %c0_95] : memref<102x32xbf16, #tpu.memory_space<vmem>>, vector<80x32xbf16>
    %c0_96 = arith.constant 0 : index
    %c0_97 = arith.constant 0 : index
    %c0_98 = arith.constant 0 : index
    %111 = vector.load %arg4[%c0_96, %c0_97, %c0_98] : memref<9x32x64xbf16, #tpu.memory_space<vmem>>, vector<1x32x64xbf16>
    %112 = vector.shape_cast %111 : vector<1x32x64xbf16> to vector<32x64xbf16>
    %cst_99 = arith.constant dense<0.000000e+00> : vector<80x64xf32>
    %113 = tpu.matmul %110, %112, %cst_99 {dimension_numbers = #tpu.dot_dimension_numbers<[1], [0], [0], [1], [0, 0, 1, 1], [], []>} : vector<80x32xbf16>, vector<32x64xbf16>, vector<80x64xf32> -> vector<80x64xf32>
    %114 = arith.addf %109, %113 : vector<80x64xf32>
    %c1_100 = arith.constant 1 : index
    %c0_101 = arith.constant 0 : index
    %115 = vector.load %arg11[%c1_100, %c0_101] : memref<102x32xbf16, #tpu.memory_space<vmem>>, vector<80x32xbf16>
    %c1_102 = arith.constant 1 : index
    %c0_103 = arith.constant 0 : index
    %c0_104 = arith.constant 0 : index
    %116 = vector.load %arg4[%c1_102, %c0_103, %c0_104] : memref<9x32x64xbf16, #tpu.memory_space<vmem>>, vector<1x32x64xbf16>
    %117 = vector.shape_cast %116 : vector<1x32x64xbf16> to vector<32x64xbf16>
    %cst_105 = arith.constant dense<0.000000e+00> : vector<80x64xf32>
    %118 = tpu.matmul %115, %117, %cst_105 {dimension_numbers = #tpu.dot_dimension_numbers<[1], [0], [0], [1], [0, 0, 1, 1], [], []>} : vector<80x32xbf16>, vector<32x64xbf16>, vector<80x64xf32> -> vector<80x64xf32>
    %119 = arith.addf %114, %118 : vector<80x64xf32>
    %c2_106 = arith.constant 2 : index
    %c0_107 = arith.constant 0 : index
    %120 = vector.load %arg11[%c2_106, %c0_107] : memref<102x32xbf16, #tpu.memory_space<vmem>>, vector<80x32xbf16>
    %c2_108 = arith.constant 2 : index
    %c0_109 = arith.constant 0 : index
    %c0_110 = arith.constant 0 : index
    %121 = vector.load %arg4[%c2_108, %c0_109, %c0_110] : memref<9x32x64xbf16, #tpu.memory_space<vmem>>, vector<1x32x64xbf16>
    %122 = vector.shape_cast %121 : vector<1x32x64xbf16> to vector<32x64xbf16>
    %cst_111 = arith.constant dense<0.000000e+00> : vector<80x64xf32>
    %123 = tpu.matmul %120, %122, %cst_111 {dimension_numbers = #tpu.dot_dimension_numbers<[1], [0], [0], [1], [0, 0, 1, 1], [], []>} : vector<80x32xbf16>, vector<32x64xbf16>, vector<80x64xf32> -> vector<80x64xf32>
    %124 = arith.addf %119, %123 : vector<80x64xf32>
    %c10 = arith.constant 10 : index
    %c0_112 = arith.constant 0 : index
    %125 = vector.load %arg11[%c10, %c0_112] : memref<102x32xbf16, #tpu.memory_space<vmem>>, vector<80x32xbf16>
    %c3_113 = arith.constant 3 : index
    %c0_114 = arith.constant 0 : index
    %c0_115 = arith.constant 0 : index
    %126 = vector.load %arg4[%c3_113, %c0_114, %c0_115] : memref<9x32x64xbf16, #tpu.memory_space<vmem>>, vector<1x32x64xbf16>
    %127 = vector.shape_cast %126 : vector<1x32x64xbf16> to vector<32x64xbf16>
    %cst_116 = arith.constant dense<0.000000e+00> : vector<80x64xf32>
    %128 = tpu.matmul %125, %127, %cst_116 {dimension_numbers = #tpu.dot_dimension_numbers<[1], [0], [0], [1], [0, 0, 1, 1], [], []>} : vector<80x32xbf16>, vector<32x64xbf16>, vector<80x64xf32> -> vector<80x64xf32>
    %129 = arith.addf %124, %128 : vector<80x64xf32>
    %c11_117 = arith.constant 11 : index
    %c0_118 = arith.constant 0 : index
    %130 = vector.load %arg11[%c11_117, %c0_118] : memref<102x32xbf16, #tpu.memory_space<vmem>>, vector<80x32xbf16>
    %c4_119 = arith.constant 4 : index
    %c0_120 = arith.constant 0 : index
    %c0_121 = arith.constant 0 : index
    %131 = vector.load %arg4[%c4_119, %c0_120, %c0_121] : memref<9x32x64xbf16, #tpu.memory_space<vmem>>, vector<1x32x64xbf16>
    %132 = vector.shape_cast %131 : vector<1x32x64xbf16> to vector<32x64xbf16>
    %cst_122 = arith.constant dense<0.000000e+00> : vector<80x64xf32>
    %133 = tpu.matmul %130, %132, %cst_122 {dimension_numbers = #tpu.dot_dimension_numbers<[1], [0], [0], [1], [0, 0, 1, 1], [], []>} : vector<80x32xbf16>, vector<32x64xbf16>, vector<80x64xf32> -> vector<80x64xf32>
    %134 = arith.addf %129, %133 : vector<80x64xf32>
    %c12 = arith.constant 12 : index
    %c0_123 = arith.constant 0 : index
    %135 = vector.load %arg11[%c12, %c0_123] : memref<102x32xbf16, #tpu.memory_space<vmem>>, vector<80x32xbf16>
    %c5_124 = arith.constant 5 : index
    %c0_125 = arith.constant 0 : index
    %c0_126 = arith.constant 0 : index
    %136 = vector.load %arg4[%c5_124, %c0_125, %c0_126] : memref<9x32x64xbf16, #tpu.memory_space<vmem>>, vector<1x32x64xbf16>
    %137 = vector.shape_cast %136 : vector<1x32x64xbf16> to vector<32x64xbf16>
    %cst_127 = arith.constant dense<0.000000e+00> : vector<80x64xf32>
    %138 = tpu.matmul %135, %137, %cst_127 {dimension_numbers = #tpu.dot_dimension_numbers<[1], [0], [0], [1], [0, 0, 1, 1], [], []>} : vector<80x32xbf16>, vector<32x64xbf16>, vector<80x64xf32> -> vector<80x64xf32>
    %139 = arith.addf %134, %138 : vector<80x64xf32>
    %c20_128 = arith.constant 20 : index
    %c0_129 = arith.constant 0 : index
    %140 = vector.load %arg11[%c20_128, %c0_129] : memref<102x32xbf16, #tpu.memory_space<vmem>>, vector<80x32xbf16>
    %c6_130 = arith.constant 6 : index
    %c0_131 = arith.constant 0 : index
    %c0_132 = arith.constant 0 : index
    %141 = vector.load %arg4[%c6_130, %c0_131, %c0_132] : memref<9x32x64xbf16, #tpu.memory_space<vmem>>, vector<1x32x64xbf16>
    %142 = vector.shape_cast %141 : vector<1x32x64xbf16> to vector<32x64xbf16>
    %cst_133 = arith.constant dense<0.000000e+00> : vector<80x64xf32>
    %143 = tpu.matmul %140, %142, %cst_133 {dimension_numbers = #tpu.dot_dimension_numbers<[1], [0], [0], [1], [0, 0, 1, 1], [], []>} : vector<80x32xbf16>, vector<32x64xbf16>, vector<80x64xf32> -> vector<80x64xf32>
    %144 = arith.addf %139, %143 : vector<80x64xf32>
    %c21_134 = arith.constant 21 : index
    %c0_135 = arith.constant 0 : index
    %145 = vector.load %arg11[%c21_134, %c0_135] : memref<102x32xbf16, #tpu.memory_space<vmem>>, vector<80x32xbf16>
    %c7_136 = arith.constant 7 : index
    %c0_137 = arith.constant 0 : index
    %c0_138 = arith.constant 0 : index
    %146 = vector.load %arg4[%c7_136, %c0_137, %c0_138] : memref<9x32x64xbf16, #tpu.memory_space<vmem>>, vector<1x32x64xbf16>
    %147 = vector.shape_cast %146 : vector<1x32x64xbf16> to vector<32x64xbf16>
    %cst_139 = arith.constant dense<0.000000e+00> : vector<80x64xf32>
    %148 = tpu.matmul %145, %147, %cst_139 {dimension_numbers = #tpu.dot_dimension_numbers<[1], [0], [0], [1], [0, 0, 1, 1], [], []>} : vector<80x32xbf16>, vector<32x64xbf16>, vector<80x64xf32> -> vector<80x64xf32>
    %149 = arith.addf %144, %148 : vector<80x64xf32>
    %c22 = arith.constant 22 : index
    %c0_140 = arith.constant 0 : index
    %150 = vector.load %arg11[%c22, %c0_140] : memref<102x32xbf16, #tpu.memory_space<vmem>>, vector<80x32xbf16>
    %c8_141 = arith.constant 8 : index
    %c0_142 = arith.constant 0 : index
    %c0_143 = arith.constant 0 : index
    %151 = vector.load %arg4[%c8_141, %c0_142, %c0_143] : memref<9x32x64xbf16, #tpu.memory_space<vmem>>, vector<1x32x64xbf16>
    %152 = vector.shape_cast %151 : vector<1x32x64xbf16> to vector<32x64xbf16>
    %cst_144 = arith.constant dense<0.000000e+00> : vector<80x64xf32>
    %153 = tpu.matmul %150, %152, %cst_144 {dimension_numbers = #tpu.dot_dimension_numbers<[1], [0], [0], [1], [0, 0, 1, 1], [], []>} : vector<80x32xbf16>, vector<32x64xbf16>, vector<80x64xf32> -> vector<80x64xf32>
    %154 = arith.addf %149, %153 : vector<80x64xf32>
    %c0_145 = arith.constant 0 : index
    %c0_146 = arith.constant 0 : index
    %155 = vector.load %arg5[%c0_145, %c0_146] : memref<1x64xf32, #tpu.memory_space<vmem>>, vector<1x64xf32>
    %156 = vector.broadcast %155 : vector<1x64xf32> to vector<80x64xf32>
    %157 = arith.addf %154, %156 : vector<80x64xf32>
    %cst_147 = arith.constant 0.000000e+00 : f32
    %158 = vector.broadcast %cst_147 : f32 to vector<80x64xf32>
    %159 = arith.maximumf %157, %158 : vector<80x64xf32>
    %c0_148 = arith.constant 0 : index
    %c0_149 = arith.constant 0 : index
    %160 = vector.load %arg12[%c0_148, %c0_149] : memref<80x64xf32, #tpu.memory_space<vmem>>, vector<80x64xf32>
    tpu.vector_store %arg12[%c0_148, %c0_149], %159 {strides = array<i32>} : memref<80x64xf32, #tpu.memory_space<vmem>>, vector<80x64xf32>,
    %c0_150 = arith.constant 0 : index
    %c0_151 = arith.constant 0 : index
    %161 = tpu.strided_load %arg12[%c0_150, %c0_151] {strides = array<i32: 2, 1>} : memref<80x64xf32, #tpu.memory_space<vmem>>, vector<40x64xf32>
    %c1_152 = arith.constant 1 : index
    %c0_153 = arith.constant 0 : index
    %162 = tpu.strided_load %arg12[%c1_152, %c0_153] {strides = array<i32: 2, 1>} : memref<80x64xf32, #tpu.memory_space<vmem>>, vector<40x64xf32>
    %163 = arith.maximumf %161, %162 : vector<40x64xf32>
    %c0_154 = arith.constant 0 : index
    %c0_155 = arith.constant 0 : index
    %164 = vector.load %arg13[%c0_154, %c0_155] : memref<40x64xf32, #tpu.memory_space<vmem>>, vector<40x64xf32>
    tpu.vector_store %arg13[%c0_154, %c0_155], %163 {strides = array<i32>} : memref<40x64xf32, #tpu.memory_space<vmem>>, vector<40x64xf32>,
    %c0_156 = arith.constant 0 : index
    %c0_157 = arith.constant 0 : index
    %165 = vector.load %arg13[%c0_156, %c0_157] : memref<40x64xf32, #tpu.memory_space<vmem>>, vector<4x64xf32>
    %c5_158 = arith.constant 5 : index
    %c0_159 = arith.constant 0 : index
    %166 = vector.load %arg13[%c5_158, %c0_159] : memref<40x64xf32, #tpu.memory_space<vmem>>, vector<4x64xf32>
    %167 = arith.maximumf %165, %166 : vector<4x64xf32>
    %168 = arith.truncf %167 : vector<4x64xf32> to vector<4x64xbf16>
    %c7_160 = arith.constant 7 : index
    %c0_161 = arith.constant 0 : index
    %169 = vector.load %arg14[%c7_160, %c0_161] : memref<38x64xbf16, #tpu.memory_space<vmem>>, vector<4x64xbf16>
    tpu.vector_store %arg14[%c7_160, %c0_161], %168 {strides = array<i32>} : memref<38x64xbf16, #tpu.memory_space<vmem>>, vector<4x64xbf16>,
    %c10_162 = arith.constant 10 : index
    %c0_163 = arith.constant 0 : index
    %170 = vector.load %arg13[%c10_162, %c0_163] : memref<40x64xf32, #tpu.memory_space<vmem>>, vector<4x64xf32>
    %c15 = arith.constant 15 : index
    %c0_164 = arith.constant 0 : index
    %171 = vector.load %arg13[%c15, %c0_164] : memref<40x64xf32, #tpu.memory_space<vmem>>, vector<4x64xf32>
    %172 = arith.maximumf %170, %171 : vector<4x64xf32>
    %173 = arith.truncf %172 : vector<4x64xf32> to vector<4x64xbf16>
    %c13 = arith.constant 13 : index
    %c0_165 = arith.constant 0 : index
    %174 = vector.load %arg14[%c13, %c0_165] : memref<38x64xbf16, #tpu.memory_space<vmem>>, vector<4x64xbf16>
    tpu.vector_store %arg14[%c13, %c0_165], %173 {strides = array<i32>} : memref<38x64xbf16, #tpu.memory_space<vmem>>, vector<4x64xbf16>,
    %c20_166 = arith.constant 20 : index
    %c0_167 = arith.constant 0 : index
    %175 = vector.load %arg13[%c20_166, %c0_167] : memref<40x64xf32, #tpu.memory_space<vmem>>, vector<4x64xf32>
    %c25 = arith.constant 25 : index
    %c0_168 = arith.constant 0 : index
    %176 = vector.load %arg13[%c25, %c0_168] : memref<40x64xf32, #tpu.memory_space<vmem>>, vector<4x64xf32>
    %177 = arith.maximumf %175, %176 : vector<4x64xf32>
    %178 = arith.truncf %177 : vector<4x64xf32> to vector<4x64xbf16>
    %c19_169 = arith.constant 19 : index
    %c0_170 = arith.constant 0 : index
    %179 = vector.load %arg14[%c19_169, %c0_170] : memref<38x64xbf16, #tpu.memory_space<vmem>>, vector<4x64xbf16>
    tpu.vector_store %arg14[%c19_169, %c0_170], %178 {strides = array<i32>} : memref<38x64xbf16, #tpu.memory_space<vmem>>, vector<4x64xbf16>,
    %c30 = arith.constant 30 : index
    %c0_171 = arith.constant 0 : index
    %180 = vector.load %arg13[%c30, %c0_171] : memref<40x64xf32, #tpu.memory_space<vmem>>, vector<4x64xf32>
    %c35 = arith.constant 35 : index
    %c0_172 = arith.constant 0 : index
    %181 = vector.load %arg13[%c35, %c0_172] : memref<40x64xf32, #tpu.memory_space<vmem>>, vector<4x64xf32>
    %182 = arith.maximumf %180, %181 : vector<4x64xf32>
    %183 = arith.truncf %182 : vector<4x64xf32> to vector<4x64xbf16>
    %c25_173 = arith.constant 25 : index
    %c0_174 = arith.constant 0 : index
    %184 = vector.load %arg14[%c25_173, %c0_174] : memref<38x64xbf16, #tpu.memory_space<vmem>>, vector<4x64xbf16>
    tpu.vector_store %arg14[%c25_173, %c0_174], %183 {strides = array<i32>} : memref<38x64xbf16, #tpu.memory_space<vmem>>, vector<4x64xbf16>,
    %cst_175 = arith.constant 0.000000e+00 : f32
    %185 = vector.broadcast %cst_175 : f32 to vector<24x128xf32>
    %c0_176 = arith.constant 0 : index
    %c0_177 = arith.constant 0 : index
    %186 = vector.load %arg14[%c0_176, %c0_177] : memref<38x64xbf16, #tpu.memory_space<vmem>>, vector<24x64xbf16>
    %c0_178 = arith.constant 0 : index
    %c0_179 = arith.constant 0 : index
    %c0_180 = arith.constant 0 : index
    %187 = vector.load %arg6[%c0_178, %c0_179, %c0_180] : memref<9x64x128xbf16, #tpu.memory_space<vmem>>, vector<1x64x128xbf16>
    %188 = vector.shape_cast %187 : vector<1x64x128xbf16> to vector<64x128xbf16>
    %cst_181 = arith.constant dense<0.000000e+00> : vector<24x128xf32>
    %189 = tpu.matmul %186, %188, %cst_181 {dimension_numbers = #tpu.dot_dimension_numbers<[1], [0], [0], [1], [0, 0, 1, 1], [], []>} : vector<24x64xbf16>, vector<64x128xbf16>, vector<24x128xf32> -> vector<24x128xf32>
    %190 = arith.addf %185, %189 : vector<24x128xf32>
    %c1_182 = arith.constant 1 : index
    %c0_183 = arith.constant 0 : index
    %191 = vector.load %arg14[%c1_182, %c0_183] : memref<38x64xbf16, #tpu.memory_space<vmem>>, vector<24x64xbf16>
    %c1_184 = arith.constant 1 : index
    %c0_185 = arith.constant 0 : index
    %c0_186 = arith.constant 0 : index
    %192 = vector.load %arg6[%c1_184, %c0_185, %c0_186] : memref<9x64x128xbf16, #tpu.memory_space<vmem>>, vector<1x64x128xbf16>
    %193 = vector.shape_cast %192 : vector<1x64x128xbf16> to vector<64x128xbf16>
    %cst_187 = arith.constant dense<0.000000e+00> : vector<24x128xf32>
    %194 = tpu.matmul %191, %193, %cst_187 {dimension_numbers = #tpu.dot_dimension_numbers<[1], [0], [0], [1], [0, 0, 1, 1], [], []>} : vector<24x64xbf16>, vector<64x128xbf16>, vector<24x128xf32> -> vector<24x128xf32>
    %195 = arith.addf %190, %194 : vector<24x128xf32>
    %c2_188 = arith.constant 2 : index
    %c0_189 = arith.constant 0 : index
    %196 = vector.load %arg14[%c2_188, %c0_189] : memref<38x64xbf16, #tpu.memory_space<vmem>>, vector<24x64xbf16>
    %c2_190 = arith.constant 2 : index
    %c0_191 = arith.constant 0 : index
    %c0_192 = arith.constant 0 : index
    %197 = vector.load %arg6[%c2_190, %c0_191, %c0_192] : memref<9x64x128xbf16, #tpu.memory_space<vmem>>, vector<1x64x128xbf16>
    %198 = vector.shape_cast %197 : vector<1x64x128xbf16> to vector<64x128xbf16>
    %cst_193 = arith.constant dense<0.000000e+00> : vector<24x128xf32>
    %199 = tpu.matmul %196, %198, %cst_193 {dimension_numbers = #tpu.dot_dimension_numbers<[1], [0], [0], [1], [0, 0, 1, 1], [], []>} : vector<24x64xbf16>, vector<64x128xbf16>, vector<24x128xf32> -> vector<24x128xf32>
    %200 = arith.addf %195, %199 : vector<24x128xf32>
    %c6_194 = arith.constant 6 : index
    %c0_195 = arith.constant 0 : index
    %201 = vector.load %arg14[%c6_194, %c0_195] : memref<38x64xbf16, #tpu.memory_space<vmem>>, vector<24x64xbf16>
    %c3_196 = arith.constant 3 : index
    %c0_197 = arith.constant 0 : index
    %c0_198 = arith.constant 0 : index
    %202 = vector.load %arg6[%c3_196, %c0_197, %c0_198] : memref<9x64x128xbf16, #tpu.memory_space<vmem>>, vector<1x64x128xbf16>
    %203 = vector.shape_cast %202 : vector<1x64x128xbf16> to vector<64x128xbf16>
    %cst_199 = arith.constant dense<0.000000e+00> : vector<24x128xf32>
    %204 = tpu.matmul %201, %203, %cst_199 {dimension_numbers = #tpu.dot_dimension_numbers<[1], [0], [0], [1], [0, 0, 1, 1], [], []>} : vector<24x64xbf16>, vector<64x128xbf16>, vector<24x128xf32> -> vector<24x128xf32>
    %205 = arith.addf %200, %204 : vector<24x128xf32>
    %c7_200 = arith.constant 7 : index
    %c0_201 = arith.constant 0 : index
    %206 = vector.load %arg14[%c7_200, %c0_201] : memref<38x64xbf16, #tpu.memory_space<vmem>>, vector<24x64xbf16>
    %c4_202 = arith.constant 4 : index
    %c0_203 = arith.constant 0 : index
    %c0_204 = arith.constant 0 : index
    %207 = vector.load %arg6[%c4_202, %c0_203, %c0_204] : memref<9x64x128xbf16, #tpu.memory_space<vmem>>, vector<1x64x128xbf16>
    %208 = vector.shape_cast %207 : vector<1x64x128xbf16> to vector<64x128xbf16>
    %cst_205 = arith.constant dense<0.000000e+00> : vector<24x128xf32>
    %209 = tpu.matmul %206, %208, %cst_205 {dimension_numbers = #tpu.dot_dimension_numbers<[1], [0], [0], [1], [0, 0, 1, 1], [], []>} : vector<24x64xbf16>, vector<64x128xbf16>, vector<24x128xf32> -> vector<24x128xf32>
    %210 = arith.addf %205, %209 : vector<24x128xf32>
    %c8_206 = arith.constant 8 : index
    %c0_207 = arith.constant 0 : index
    %211 = vector.load %arg14[%c8_206, %c0_207] : memref<38x64xbf16, #tpu.memory_space<vmem>>, vector<24x64xbf16>
    %c5_208 = arith.constant 5 : index
    %c0_209 = arith.constant 0 : index
    %c0_210 = arith.constant 0 : index
    %212 = vector.load %arg6[%c5_208, %c0_209, %c0_210] : memref<9x64x128xbf16, #tpu.memory_space<vmem>>, vector<1x64x128xbf16>
    %213 = vector.shape_cast %212 : vector<1x64x128xbf16> to vector<64x128xbf16>
    %cst_211 = arith.constant dense<0.000000e+00> : vector<24x128xf32>
    %214 = tpu.matmul %211, %213, %cst_211 {dimension_numbers = #tpu.dot_dimension_numbers<[1], [0], [0], [1], [0, 0, 1, 1], [], []>} : vector<24x64xbf16>, vector<64x128xbf16>, vector<24x128xf32> -> vector<24x128xf32>
    %215 = arith.addf %210, %214 : vector<24x128xf32>
    %c12_212 = arith.constant 12 : index
    %c0_213 = arith.constant 0 : index
    %216 = vector.load %arg14[%c12_212, %c0_213] : memref<38x64xbf16, #tpu.memory_space<vmem>>, vector<24x64xbf16>
    %c6_214 = arith.constant 6 : index
    %c0_215 = arith.constant 0 : index
    %c0_216 = arith.constant 0 : index
    %217 = vector.load %arg6[%c6_214, %c0_215, %c0_216] : memref<9x64x128xbf16, #tpu.memory_space<vmem>>, vector<1x64x128xbf16>
    %218 = vector.shape_cast %217 : vector<1x64x128xbf16> to vector<64x128xbf16>
    %cst_217 = arith.constant dense<0.000000e+00> : vector<24x128xf32>
    %219 = tpu.matmul %216, %218, %cst_217 {dimension_numbers = #tpu.dot_dimension_numbers<[1], [0], [0], [1], [0, 0, 1, 1], [], []>} : vector<24x64xbf16>, vector<64x128xbf16>, vector<24x128xf32> -> vector<24x128xf32>
    %220 = arith.addf %215, %219 : vector<24x128xf32>
    %c13_218 = arith.constant 13 : index
    %c0_219 = arith.constant 0 : index
    %221 = vector.load %arg14[%c13_218, %c0_219] : memref<38x64xbf16, #tpu.memory_space<vmem>>, vector<24x64xbf16>
    %c7_220 = arith.constant 7 : index
    %c0_221 = arith.constant 0 : index
    %c0_222 = arith.constant 0 : index
    %222 = vector.load %arg6[%c7_220, %c0_221, %c0_222] : memref<9x64x128xbf16, #tpu.memory_space<vmem>>, vector<1x64x128xbf16>
    %223 = vector.shape_cast %222 : vector<1x64x128xbf16> to vector<64x128xbf16>
    %cst_223 = arith.constant dense<0.000000e+00> : vector<24x128xf32>
    %224 = tpu.matmul %221, %223, %cst_223 {dimension_numbers = #tpu.dot_dimension_numbers<[1], [0], [0], [1], [0, 0, 1, 1], [], []>} : vector<24x64xbf16>, vector<64x128xbf16>, vector<24x128xf32> -> vector<24x128xf32>
    %225 = arith.addf %220, %224 : vector<24x128xf32>
    %c14 = arith.constant 14 : index
    %c0_224 = arith.constant 0 : index
    %226 = vector.load %arg14[%c14, %c0_224] : memref<38x64xbf16, #tpu.memory_space<vmem>>, vector<24x64xbf16>
    %c8_225 = arith.constant 8 : index
    %c0_226 = arith.constant 0 : index
    %c0_227 = arith.constant 0 : index
    %227 = vector.load %arg6[%c8_225, %c0_226, %c0_227] : memref<9x64x128xbf16, #tpu.memory_space<vmem>>, vector<1x64x128xbf16>
    %228 = vector.shape_cast %227 : vector<1x64x128xbf16> to vector<64x128xbf16>
    %cst_228 = arith.constant dense<0.000000e+00> : vector<24x128xf32>
    %229 = tpu.matmul %226, %228, %cst_228 {dimension_numbers = #tpu.dot_dimension_numbers<[1], [0], [0], [1], [0, 0, 1, 1], [], []>} : vector<24x64xbf16>, vector<64x128xbf16>, vector<24x128xf32> -> vector<24x128xf32>
    %230 = arith.addf %225, %229 : vector<24x128xf32>
    %c0_229 = arith.constant 0 : index
    %c0_230 = arith.constant 0 : index
    %231 = vector.load %arg7[%c0_229, %c0_230] : memref<1x128xf32, #tpu.memory_space<vmem>>, vector<1x128xf32>
    %232 = vector.broadcast %231 : vector<1x128xf32> to vector<24x128xf32>
    %233 = arith.addf %230, %232 : vector<24x128xf32>
    %cst_231 = arith.constant 0.000000e+00 : f32
    %234 = vector.broadcast %cst_231 : f32 to vector<24x128xf32>
    %235 = arith.maximumf %233, %234 : vector<24x128xf32>
    %c0_232 = arith.constant 0 : index
    %c0_233 = arith.constant 0 : index
    %236 = vector.load %arg15[%c0_232, %c0_233] : memref<24x128xf32, #tpu.memory_space<vmem>>, vector<24x128xf32>
    tpu.vector_store %arg15[%c0_232, %c0_233], %235 {strides = array<i32>} : memref<24x128xf32, #tpu.memory_space<vmem>>, vector<24x128xf32>,
    %c0_234 = arith.constant 0 : index
    %c0_235 = arith.constant 0 : index
    %237 = tpu.strided_load %arg15[%c0_234, %c0_235] {strides = array<i32: 2, 1>} : memref<24x128xf32, #tpu.memory_space<vmem>>, vector<12x128xf32>
    %c1_236 = arith.constant 1 : index
    %c0_237 = arith.constant 0 : index
    %238 = tpu.strided_load %arg15[%c1_236, %c0_237] {strides = array<i32: 2, 1>} : memref<24x128xf32, #tpu.memory_space<vmem>>, vector<12x128xf32>
    %239 = arith.maximumf %237, %238 : vector<12x128xf32>
    %c0_238 = arith.constant 0 : index
    %c0_239 = arith.constant 0 : index
    %240 = vector.load %arg16[%c0_238, %c0_239] : memref<12x128xf32, #tpu.memory_space<vmem>>, vector<12x128xf32>
    tpu.vector_store %arg16[%c0_238, %c0_239], %239 {strides = array<i32>} : memref<12x128xf32, #tpu.memory_space<vmem>>, vector<12x128xf32>,
    %c0_240 = arith.constant 0 : index
    %c0_241 = arith.constant 0 : index
    %241 = vector.load %arg16[%c0_240, %c0_241] : memref<12x128xf32, #tpu.memory_space<vmem>>, vector<2x128xf32>
    %c3_242 = arith.constant 3 : index
    %c0_243 = arith.constant 0 : index
    %242 = vector.load %arg16[%c3_242, %c0_243] : memref<12x128xf32, #tpu.memory_space<vmem>>, vector<2x128xf32>
    %243 = arith.maximumf %241, %242 : vector<2x128xf32>
    %c0_244 = arith.constant 0 : index
    %c0_245 = arith.constant 0 : index
    %c0_246 = arith.constant 0 : index
    %244 = vector.load %arg8[%c0_244, %c0_245, %c0_246] : memref<1x4x128xf32, #tpu.memory_space<vmem>>, vector<1x2x128xf32>
    %245 = vector.shape_cast %244 : vector<1x2x128xf32> to vector<2x128xf32>
    %246 = vector.shape_cast %243 : vector<2x128xf32> to vector<1x2x128xf32>
    tpu.vector_store %arg8[%c0_244, %c0_245, %c0_246], %246 {strides = array<i32>} : memref<1x4x128xf32, #tpu.memory_space<vmem>>, vector<1x2x128xf32>,
    %c6_247 = arith.constant 6 : index
    %c0_248 = arith.constant 0 : index
    %247 = vector.load %arg16[%c6_247, %c0_248] : memref<12x128xf32, #tpu.memory_space<vmem>>, vector<2x128xf32>
    %c9_249 = arith.constant 9 : index
    %c0_250 = arith.constant 0 : index
    %248 = vector.load %arg16[%c9_249, %c0_250] : memref<12x128xf32, #tpu.memory_space<vmem>>, vector<2x128xf32>
    %249 = arith.maximumf %247, %248 : vector<2x128xf32>
    %c0_251 = arith.constant 0 : index
    %c2_252 = arith.constant 2 : index
    %c0_253 = arith.constant 0 : index
    %250 = vector.load %arg8[%c0_251, %c2_252, %c0_253] : memref<1x4x128xf32, #tpu.memory_space<vmem>>, vector<1x2x128xf32>
    %251 = vector.shape_cast %250 : vector<1x2x128xf32> to vector<2x128xf32>
    %252 = vector.shape_cast %249 : vector<2x128xf32> to vector<1x2x128xf32>
    tpu.vector_store %arg8[%c0_251, %c2_252, %c0_253], %252 {strides = array<i32>} : memref<1x4x128xf32, #tpu.memory_space<vmem>>, vector<1x2x128xf32>,
    return
  }
  func.func @transform_0(%arg0: i32) -> (i32, i32, i32) {
    %c0_i32 = arith.constant 0 : i32
    %c0_i32_0 = arith.constant 0 : i32
    %c0_i32_1 = arith.constant 0 : i32
    return %arg0, %c0_i32, %c0_i32_0 : i32, i32, i32
  }
  func.func @transform_1(%arg0: i32) -> (i32, i32, i32) {
    %c0_i32 = arith.constant 0 : i32
    %c0_i32_0 = arith.constant 0 : i32
    %c0_i32_1 = arith.constant 0 : i32
    %c0_i32_2 = arith.constant 0 : i32
    return %c0_i32, %c0_i32_0, %c0_i32_1 : i32, i32, i32
  }
  func.func @transform_2(%arg0: i32) -> (i32, i32) {
    %c0_i32 = arith.constant 0 : i32
    %c0_i32_0 = arith.constant 0 : i32
    %c0_i32_1 = arith.constant 0 : i32
    return %c0_i32, %c0_i32_0 : i32, i32
  }
  func.func @transform_3(%arg0: i32) -> (i32, i32, i32) {
    %c0_i32 = arith.constant 0 : i32
    %c0_i32_0 = arith.constant 0 : i32
    %c0_i32_1 = arith.constant 0 : i32
    %c0_i32_2 = arith.constant 0 : i32
    return %c0_i32, %c0_i32_0, %c0_i32_1 : i32, i32, i32
  }
  func.func @transform_4(%arg0: i32) -> (i32, i32) {
    %c0_i32 = arith.constant 0 : i32
    %c0_i32_0 = arith.constant 0 : i32
    %c0_i32_1 = arith.constant 0 : i32
    return %c0_i32, %c0_i32_0 : i32, i32
  }
  func.func @transform_5(%arg0: i32) -> (i32, i32, i32) {
    %c0_i32 = arith.constant 0 : i32
    %c0_i32_0 = arith.constant 0 : i32
    %c0_i32_1 = arith.constant 0 : i32
    %c0_i32_2 = arith.constant 0 : i32
    return %c0_i32, %c0_i32_0, %c0_i32_1 : i32, i32, i32
  }
  func.func @transform_6(%arg0: i32) -> (i32, i32) {
    %c0_i32 = arith.constant 0 : i32
    %c0_i32_0 = arith.constant 0 : i32
    %c0_i32_1 = arith.constant 0 : i32
    return %c0_i32, %c0_i32_0 : i32, i32
  }
  func.func @transform_7(%arg0: i32) -> (i32, i32, i32) {
    %c0_i32 = arith.constant 0 : i32
    %c0_i32_0 = arith.constant 0 : i32
    %c0_i32_1 = arith.constant 0 : i32
    return %arg0, %c0_i32, %c0_i32_0 : i32, i32, i32
  }
}

</mosaic_0001>

<llo_original>
// kernel: tpu_custom_call.1
$region0: #{tpu_custom_call.1}
  #allocation0 [shape = 'u32[]', space=smem, size = 0x4, offset = 0x4, fixed_abs, tag = 'smem constant byte address 0x4 - core index']
  #allocation1 [shape = 'u32[144,128]{1,0:T(1,128)}', space=vmem, size = 0x12000, scoped, tag = 'internal scratch']
  #allocation2 [shape = 'f32[288,32]{1,0:T(8,128)}', space=vmem, size = 0x24000, scoped, tag = 'scratch operand']
  #allocation3 [shape = 'f32[144,32]{1,0:T(8,128)}', space=vmem, size = 0x12000, scoped, tag = 'scratch operand']
  #allocation4 [shape = 'bf16[102,32]{1,0:T(8,128)(2,1)}', space=vmem, size = 0x6800, scoped, tag = 'scratch operand']
  #allocation5 [shape = 'f32[80,64]{1,0:T(8,128)}', space=vmem, size = 0xa000, scoped, tag = 'scratch operand']
  #allocation6 [shape = 'f32[40,64]{1,0:T(8,128)}', space=vmem, size = 0x5000, scoped, tag = 'scratch operand']
  #allocation7 [shape = 'bf16[38,64]{1,0:T(8,128)(2,1)}', space=vmem, size = 0x2800, scoped, tag = 'scratch operand']
  #allocation8 [shape = 'f32[24,128]{1,0:T(8,128)}', space=vmem, size = 0x3000, scoped, tag = 'scratch operand']
  #allocation9 [shape = 'f32[12,128]{1,0:T(8,128)}', space=vmem, size = 0x2000, scoped, tag = 'scratch operand']
  %s0 = inlined_call_operand.vmem [shape: bf16[4,326,3], index: 0, kind: input, shape index: {}]
  %s1 = inlined_call_operand.vmem [shape: bf16[9,3,32], index: 1, kind: input, shape index: {}]
  %s2 = inlined_call_operand.vmem [shape: f32[1,32], index: 2, kind: input, shape index: {}]
  %s3 = inlined_call_operand.vmem [shape: bf16[9,32,64], index: 3, kind: input, shape index: {}]
  %s4 = inlined_call_operand.vmem [shape: f32[1,64], index: 4, kind: input, shape index: {}]
  %s5 = inlined_call_operand.vmem [shape: bf16[9,64,128], index: 5, kind: input, shape index: {}]
  %s6 = inlined_call_operand.vmem [shape: f32[1,128], index: 6, kind: input, shape index: {}]
  %s7 = inlined_call_operand.hbm [shape: f32[4,4,128], index: 7, kind: output, shape index: {}]
  %s8 = sld [smem:[#allocation0]]
  $region61: #{tpu_custom_call.1} parent=0
    _
  %s10 = ssub.s32 1, %s8
  %s11 = scalar_select 0, %s10, %s8
  $region1: #{tpu_custom_call.1} parent=0
    #allocation10 [shape = 'u8[4096]{0}', space=vmem, size = 0x1000, scoped, tag = 'output window, operand 0']
    #allocation11 [shape = 's32[2]{0}', space=sflag, size = 0x8, scoped, tag = 'scoped memory for tpu_custom_call.1']
    %12 = vsyncpa [#allocation11], 0
    %s13 = scalar_lea.sflag [#allocation11], 1
    %14 = vsyncpa %s13, 0
    loop: start=0, step=1, limit=6
    $region2: #{tpu_custom_call.1} parent=1 // loop_pre_header
      _
    $region3: #{tpu_custom_call.1} parent=1 // loop_header
      %s16 = sphi 0, %s20
      %p17 = scmp.ge.s32.totalorder %s16, 6
      %s26 = sphi 0, %s28
      %s29 = sphi 0, %s26
      %s30 = sphi 0, %s29
      %s46 = sphi 0, %s30
      %s50 = sphi 0, %s50
      %s52 = sphi 0, %s50
      %s53 = sphi 0, %s52
      %s67 = sphi 0, %s53
      %s71 = sphi 0, %s71
      %s73 = sphi 0, %s71
      %s74 = sphi 0, %s73
      %s88 = sphi 0, %s74
      %s92 = sphi 0, %s92
      %s94 = sphi 0, %s92
      %s95 = sphi 0, %s94
      %s109 = sphi 0, %s95
      %s113 = sphi 0, %s113
      %s115 = sphi 0, %s113
      %s116 = sphi 0, %s115
      %s130 = sphi 0, %s116
      %s134 = sphi 0, %s134
      %s136 = sphi 0, %s134
      %s137 = sphi 0, %s136
      %s151 = sphi 0, %s137
      %s155 = sphi 0, %s155
      %s157 = sphi 0, %s155
      %s158 = sphi 0, %s157
      %s172 = sphi 0, %s158
      %s178 = sphi 0, %s180
      %s181 = sphi 0, %s178
      %s182 = sphi 0, %s181
      %s198 = sphi 0, %s182
    $region4: #{tpu_custom_call.1} parent=1 // loop_header_branch
      %19 = sbr.rel (%p17) target = $region8
    $region5: #{tpu_custom_call.1} parent=1 // loop_body
      %s21 = ssub.s32 %s16, 1
      %s22 = ssub.s32 %s16, 2
      %s23 = sadd.s32 %s16, 1
      %s24 = ssub.s32 %s16, %s23
      %p25 = scmp.eq.s32.totalorder %s24, 0
      %s27 = sadd.s32 %s26, 1
      %s28 = scalar_select %p25, %s26, %s27
      %p31 = pneg %p25
      %p32 = scmp.eq.s32.totalorder %s16, 3
      %p33 = por %p31, %p32
      %p34 = scmp.ne.s32.totalorder %s26, %s29
      %p35 = scmp.eq.s32.totalorder %s16, 0
      %p36 = por %p34, %p35
      %p37 = scmp.ne.s32.totalorder %s26, %s29
      %p38 = scmp.eq.s32.totalorder %s21, 3
      %p39 = por %p37, %p38
      %p40 = scmp.ne.s32.totalorder %s29, %s30
      %p41 = scmp.eq.s32.totalorder %s21, 0
      %p42 = por %p40, %p41
      %p43 = scmp.ne.s32.totalorder %s29, %s30
      %p44 = scmp.eq.s32.totalorder %s22, 3
      %p45 = por %p43, %p44
      %p47 = scmp.ne.s32.totalorder %s30, %s46
      %p48 = scmp.eq.s32.totalorder %s22, 0
      %p49 = por %p47, %p48
      %s51 = sadd.s32 %s50, 1
      %p54 = scmp.eq.s32.totalorder %s16, 3
      %p55 = scmp.ne.s32.totalorder %s50, %s52
      %p56 = scmp.eq.s32.totalorder %s16, 0
      %p57 = por %p55, %p56
      %p58 = scmp.ne.s32.totalorder %s50, %s52
      %p59 = scmp.eq.s32.totalorder %s21, 3
      %p60 = por %p58, %p59
      %p61 = scmp.ne.s32.totalorder %s52, %s53
      %p62 = scmp.eq.s32.totalorder %s21, 0
      %p63 = por %p61, %p62
      %p64 = scmp.ne.s32.totalorder %s52, %s53
      %p65 = scmp.eq.s32.totalorder %s22, 3
      %p66 = por %p64, %p65
      %p68 = scmp.ne.s32.totalorder %s53, %s67
      %p69 = scmp.eq.s32.totalorder %s22, 0
      %p70 = por %p68, %p69
      %s72 = sadd.s32 %s71, 1
      %p75 = scmp.eq.s32.totalorder %s16, 3
      %p76 = scmp.ne.s32.totalorder %s71, %s73
      %p77 = scmp.eq.s32.totalorder %s16, 0
      %p78 = por %p76, %p77
      %p79 = scmp.ne.s32.totalorder %s71, %s73
      %p80 = scmp.eq.s32.totalorder %s21, 3
      %p81 = por %p79, %p80
      %p82 = scmp.ne.s32.totalorder %s73, %s74
      %p83 = scmp.eq.s32.totalorder %s21, 0
      %p84 = por %p82, %p83
      %p85 = scmp.ne.s32.totalorder %s73, %s74
      %p86 = scmp.eq.s32.totalorder %s22, 3
      %p87 = por %p85, %p86
      %p89 = scmp.ne.s32.totalorder %s74, %s88
      %p90 = scmp.eq.s32.totalorder %s22, 0
      %p91 = por %p89, %p90
      %s93 = sadd.s32 %s92, 1
      %p96 = scmp.eq.s32.totalorder %s16, 3
      %p97 = scmp.ne.s32.totalorder %s92, %s94
      %p98 = scmp.eq.s32.totalorder %s16, 0
      %p99 = por %p97, %p98
      %p100 = scmp.ne.s32.totalorder %s92, %s94
      %p101 = scmp.eq.s32.totalorder %s21, 3
      %p102 = por %p100, %p101
      %p103 = scmp.ne.s32.totalorder %s94, %s95
      %p104 = scmp.eq.s32.totalorder %s21, 0
      %p105 = por %p103, %p104
      %p106 = scmp.ne.s32.totalorder %s94, %s95
      %p107 = scmp.eq.s32.totalorder %s22, 3
      %p108 = por %p106, %p107
      %p110 = scmp.ne.s32.totalorder %s95, %s109
      %p111 = scmp.eq.s32.totalorder %s22, 0
      %p112 = por %p110, %p111
      %s114 = sadd.s32 %s113, 1
      %p117 = scmp.eq.s32.totalorder %s16, 3
      %p118 = scmp.ne.s32.totalorder %s113, %s115
      %p119 = scmp.eq.s32.totalorder %s16, 0
      %p120 = por %p118, %p119
      %p121 = scmp.ne.s32.totalorder %s113, %s115
      %p122 = scmp.eq.s32.totalorder %s21, 3
      %p123 = por %p121, %p122
      %p124 = scmp.ne.s32.totalorder %s115, %s116
      %p125 = scmp.eq.s32.totalorder %s21, 0
      %p126 = por %p124, %p125
      %p127 = scmp.ne.s32.totalorder %s115, %s116
      %p128 = scmp.eq.s32.totalorder %s22, 3
      %p129 = por %p127, %p128
      %p131 = scmp.ne.s32.totalorder %s116, %s130
      %p132 = scmp.eq.s32.totalorder %s22, 0
      %p133 = por %p131, %p132
      %s135 = sadd.s32 %s134, 1
      %p138 = scmp.eq.s32.totalorder %s16, 3
      %p139 = scmp.ne.s32.totalorder %s134, %s136
      %p140 = scmp.eq.s32.totalorder %s16, 0
      %p141 = por %p139, %p140
      %p142 = scmp.ne.s32.totalorder %s134, %s136
      %p143 = scmp.eq.s32.totalorder %s21, 3
      %p144 = por %p142, %p143
      %p145 = scmp.ne.s32.totalorder %s136, %s137
      %p146 = scmp.eq.s32.totalorder %s21, 0
      %p147 = por %p145, %p146
      %p148 = scmp.ne.s32.totalorder %s136, %s137
      %p149 = scmp.eq.s32.totalorder %s22, 3
      %p150 = por %p148, %p149
      %p152 = scmp.ne.s32.totalorder %s137, %s151
      %p153 = scmp.eq.s32.totalorder %s22, 0
      %p154 = por %p152, %p153
      %s156 = sadd.s32 %s155, 1
      %p159 = scmp.eq.s32.totalorder %s16, 3
      %p160 = scmp.ne.s32.totalorder %s155, %s157
      %p161 = scmp.eq.s32.totalorder %s16, 0
      %p162 = por %p160, %p161
      %p163 = scmp.ne.s32.totalorder %s155, %s157
      %p164 = scmp.eq.s32.totalorder %s21, 3
      %p165 = por %p163, %p164
      %p166 = scmp.ne.s32.totalorder %s157, %s158
      %p167 = scmp.eq.s32.totalorder %s21, 0
      %p168 = por %p166, %p167
      %p169 = scmp.ne.s32.totalorder %s157, %s158
      %p170 = scmp.eq.s32.totalorder %s22, 3
      %p171 = por %p169, %p170
      %p173 = scmp.ne.s32.totalorder %s158, %s172
      %p174 = scmp.eq.s32.totalorder %s22, 0
      %p175 = por %p173, %p174
      %s176 = ssub.s32 %s16, %s23
      %p177 = scmp.eq.s32.totalorder %s176, 0
      %s179 = sadd.s32 %s178, 1
      %s180 = scalar_select %p177, %s178, %s179
      %p183 = pneg %p177
      %p184 = scmp.eq.s32.totalorder %s16, 3
      %p185 = por %p183, %p184
      %p186 = scmp.ne.s32.totalorder %s178, %s181
      %p187 = scmp.eq.s32.totalorder %s16, 0
      %p188 = por %p186, %p187
      %p189 = scmp.ne.s32.totalorder %s178, %s181
      %p190 = scmp.eq.s32.totalorder %s21, 3
      %p191 = por %p189, %p190
      %p192 = scmp.ne.s32.totalorder %s181, %s182
      %p193 = scmp.eq.s32.totalorder %s21, 0
      %p194 = por %p192, %p193
      %p195 = scmp.ne.s32.totalorder %s181, %s182
      %p196 = scmp.eq.s32.totalorder %s22, 3
      %p197 = por %p195, %p196
      %p199 = scmp.ne.s32.totalorder %s182, %s198
      %p200 = scmp.eq.s32.totalorder %s22, 0
      %p201 = por %p199, %p200
      %p202 = scmp.le.s32.totalorder 1, %s16
      %p203 = scmp.lt.s32.totalorder %s16, 5
      %p204 = pnand %p202, %p203
      %p205 = pneg %p204
      // Predicated region
      $region9: #{tpu_custom_call.1} parent=5 // pred_check
        _
      $region10: #{tpu_custom_call.1} parent=5 // pred_check_branch
        %207 = sbr.rel (%p204) target = $region12
      $region11: #{tpu_custom_call.1} parent=5 // pred_region
        %s208 = ssub.s32 %s16, 1
        // Predicated region
        $region13: #{tpu_custom_call.1} parent=11 // pred_check
          %p209 = pneg %p63
        $region14: #{tpu_custom_call.1} parent=11 // pred_check_branch
          %211 = sbr.rel (%p209) target = $region16
        $region15: #{tpu_custom_call.1} parent=11 // pred_region
          _
        $region16: #{tpu_custom_call.1} parent=11 // pred_fallthru
          _
        // Predicated region
        $region17: #{tpu_custom_call.1} parent=11 // pred_check
          %p212 = pneg %p84
        $region18: #{tpu_custom_call.1} parent=11 // pred_check_branch
          %214 = sbr.rel (%p212) target = $region20
        $region19: #{tpu_custom_call.1} parent=11 // pred_region
          _
        $region20: #{tpu_custom_call.1} parent=11 // pred_fallthru
          _
        // Predicated region
        $region21: #{tpu_custom_call.1} parent=11 // pred_check
          %p215 = pneg %p105
        $region22: #{tpu_custom_call.1} parent=11 // pred_check_branch
          %217 = sbr.rel (%p215) target = $region24
        $region23: #{tpu_custom_call.1} parent=11 // pred_region
          _
        $region24: #{tpu_custom_call.1} parent=11 // pred_fallthru
          _
        // Predicated region
        $region25: #{tpu_custom_call.1} parent=11 // pred_check
          %p218 = pneg %p126
        $region26: #{tpu_custom_call.1} parent=11 // pred_check_branch
          %220 = sbr.rel (%p218) target = $region28
        $region27: #{tpu_custom_call.1} parent=11 // pred_region
          _
        $region28: #{tpu_custom_call.1} parent=11 // pred_fallthru
          _
        // Predicated region
        $region29: #{tpu_custom_call.1} parent=11 // pred_check
          %p221 = pneg %p147
        $region30: #{tpu_custom_call.1} parent=11 // pred_check_branch
          %223 = sbr.rel (%p221) target = $region32
        $region31: #{tpu_custom_call.1} parent=11 // pred_region
          _
        $region32: #{tpu_custom_call.1} parent=11 // pred_fallthru
          _
        // Predicated region
        $region33: #{tpu_custom_call.1} parent=11 // pred_check
          %p224 = pneg %p168
        $region34: #{tpu_custom_call.1} parent=11 // pred_check_branch
          %226 = sbr.rel (%p224) target = $region36
        $region35: #{tpu_custom_call.1} parent=11 // pred_region
          _
        $region36: #{tpu_custom_call.1} parent=11 // pred_fallthru
          _
      $region12: #{tpu_custom_call.1} parent=5 // pred_fallthru
        _
      %p227 = scmp.lt.s32.totalorder %s16, 4
      // Predicated region
      $region37: #{tpu_custom_call.1} parent=5 // pred_check
        %p228 = pneg %p227
      $region38: #{tpu_custom_call.1} parent=5 // pred_check_branch
        %230 = sbr.rel (%p228) target = $region40
      $region39: #{tpu_custom_call.1} parent=5 // pred_region
        // Predicated region
        $region41: #{tpu_custom_call.1} parent=39 // pred_check
          %p231 = pneg %p36
        $region42: #{tpu_custom_call.1} parent=39 // pred_check_branch
          %233 = sbr.rel (%p231) target = $region44
        $region43: #{tpu_custom_call.1} parent=39 // pred_region
          %p234 = scmp.lt.s32.totalorder %s16, 3
          %s235 = scalar_select %p234, %s16, 3
          %s236 = smul.addr %s235, 41
          %s237 = smul.addr %s236, 4
          %s238 = scalar_lea.vmem %s0, %s237
        $region44: #{tpu_custom_call.1} parent=39 // pred_fallthru
          _
      $region40: #{tpu_custom_call.1} parent=5 // pred_fallthru
        _
      %p239 = scmp.le.s32.totalorder 1, %s16
      %p240 = scmp.lt.s32.totalorder %s16, 5
      %p241 = pnand %p239, %p240
      %p242 = pneg %p241
      // Predicated region
      $region45: #{tpu_custom_call.1} parent=5 // pred_check
        _
      $region46: #{tpu_custom_call.1} parent=5 // pred_check_branch
        %244 = sbr.rel (%p241) target = $region48
      $region47: #{tpu_custom_call.1} parent=5 // pred_region
        %s245 = ssub.s32 %s16, 1
        %p246 = scmp.lt.s32.totalorder %s21, 3
        %s247 = scalar_select %p246, %s21, 3
        %s248 = smul.addr %s247, 41
        %s249 = smul.addr %s248, 4
        %s250 = scalar_lea.vmem %s0, %s249
        %p251 = pneg %p42
        %p252 = pneg %p39
        %p253 = pneg %p63
        %p254 = pneg %p60
        %p255 = pneg %p84
        %p256 = pneg %p81
        %p257 = pneg %p105
        %p258 = pneg %p102
        %p259 = pneg %p126
        %p260 = pneg %p123
        %p261 = pneg %p147
        %p262 = pneg %p144
        %p263 = pneg %p168
        %p264 = pneg %p165
        %p265 = pneg %p194
        %p266 = pneg %p191
        %s267 = sand.u32 %s181, 1
        %s268 = scalar_lea.sflag [#allocation11], %s267
        %s269 = sand.u32 %s181, 1
        %s270 = smul.addr %s269, 4
        %s271 = scalar_lea.vmem [#allocation10], %s270
        %p272 = scmp.lt.s32.totalorder %s21, 3
        %s273 = scalar_select %p272, %s21, 3
        %s274 = smul.addr %s273, 41
        %s275 = smul.addr %s274, 4
        %s276 = scalar_lea.vmem %s0, %s275
        %vm278 = vcmask 257024
        %279 = vst.msk [vmem:[#allocation4] sm:$0xf] %vm278, 0
        %280 = vst.msk [vmem:[#allocation4 + $0x4] sm:$0xf] %vm278, 0
        %281 = vst.msk [vmem:[#allocation4 + $0x8] sm:$0xf] %vm278, 0
        %282 = vst.msk [vmem:[#allocation4 + $0xc] sm:$0xf] %vm278, 0
        %283 = vst.msk [vmem:[#allocation4 + $0x10] sm:$0xf] %vm278, 0
        %284 = vst.msk [vmem:[#allocation4 + $0x14] sm:$0xf] %vm278, 0
        %285 = vst.msk [vmem:[#allocation4 + $0x18] sm:$0xf] %vm278, 0
        %286 = vst.msk [vmem:[#allocation4 + $0x1c] sm:$0xf] %vm278, 0
        %287 = vst.msk [vmem:[#allocation4 + $0x20] sm:$0xf] %vm278, 0
        %288 = vst.msk [vmem:[#allocation4 + $0x24] sm:$0xf] %vm278, 0
        %289 = vst.msk [vmem:[#allocation4 + $0x28] sm:$0xf] %vm278, 0
        %290 = vst.msk [vmem:[#allocation4 + $0x2c] sm:$0xf] %vm278, 0
        %vm291 = vcmask 256000
        %292 = vst.msk [vmem:[#allocation4 + $0x30] sm:$0x7] %vm291, 0
        %v293 = vld [vmem:[%s276] sm:$0xf]
        %v294 = vld [vmem:[%s276 + $0x4] sm:$0xf]
        %v295 = vld [vmem:[%s276 + $0x8] sm:$0xf]
        %v296 = vld [vmem:[%s276 + $0xc] sm:$0xf]
        %v297 = vld [vmem:[%s276 + $0x10] sm:$0xf]
        %v298 = vld [vmem:[%s276 + $0x14] sm:$0xf]
        %v299 = vld [vmem:[%s276 + $0x18] sm:$0xf]
        %v300 = vld [vmem:[%s276 + $0x1c] sm:$0xf]
        %v301 = vld [vmem:[%s276 + $0x20] sm:$0xf]
        %v302 = vld [vmem:[%s276 + $0x24] sm:$0xf]
        %v303 = vld [vmem:[%s276 + $0x28] sm:$0xf]
        %v304 = vld [vmem:[%s276 + $0x2c] sm:$0xf]
        %v305 = vld [vmem:[%s276 + $0x30] sm:$0xf]
        %v306 = vld [vmem:[%s276 + $0x34] sm:$0xf]
        %v307 = vld [vmem:[%s276 + $0x38] sm:$0xf]
        %v308 = vld [vmem:[%s276 + $0x3c] sm:$0xf]
        %v309 = vld [vmem:[%s276 + $0x40] sm:$0xf]
        %v310 = vld [vmem:[%s276 + $0x44] sm:$0xf]
        %v311 = vld [vmem:[%s276 + $0x48] sm:$0xf]
        %v312 = vld [vmem:[%s276 + $0x4c] sm:$0xf]
        %v313 = vld [vmem:[%s276 + $0x50] sm:$0xf]
        %v314 = vld [vmem:[%s276 + $0x54] sm:$0xf]
        %v315 = vld [vmem:[%s276 + $0x58] sm:$0xf]
        %v316 = vld [vmem:[%s276 + $0x5c] sm:$0xf]
        %v317 = vld [vmem:[%s276 + $0x60] sm:$0xf]
        %v318 = vld [vmem:[%s276 + $0x64] sm:$0xf]
        %v319 = vld [vmem:[%s276 + $0x68] sm:$0xf]
        %v320 = vld [vmem:[%s276 + $0x6c] sm:$0xf]
        %v321 = vld [vmem:[%s276 + $0x70] sm:$0xf]
        %v322 = vld [vmem:[%s276 + $0x74] sm:$0xf]
        %v323 = vld [vmem:[%s276 + $0x78] sm:$0xf]
        %v324 = vld [vmem:[%s276 + $0x7c] sm:$0xf]
        %v325 = vld [vmem:[%s276 + $0x80] sm:$0xf]
        %v326 = vld [vmem:[%s276 + $0x84] sm:$0xf]
        %v327 = vld [vmem:[%s276 + $0x88] sm:$0xf]
        %v328 = vld [vmem:[%s276 + $0x8c] sm:$0xf]
        %v329 = vld [vmem:[%s1] sm:$0x3]
        %v330 = vld [vmem:[%s276 + $0x90] sm:$0x1]
        %s331 = scalar_lea.vmem %s1, 2
        %v332 = vld [vmem:[%s331] sm:$0x3]
        %v370 = vunpack.c.l.b16 %v293
        %v371 = vunpack.c.l.b16 %v294
        %v372 = vunpack.c.l.b16 %v295
        %v373 = vunpack.c.l.b16 %v296
        %v374 = vunpack.c.l.b16 %v297
        %v375 = vunpack.c.l.b16 %v298
        %v376 = vunpack.c.l.b16 %v299
        %v377 = vunpack.c.l.b16 %v300
        %v378 = vunpack.c.l.b16 %v301
        %v379 = vunpack.c.l.b16 %v302
        %v380 = vunpack.c.l.b16 %v303
        %v381 = vunpack.c.l.b16 %v304
        %v382 = vunpack.c.l.b16 %v305
        %v383 = vunpack.c.l.b16 %v306
        %v384 = vunpack.c.l.b16 %v307
        %v385 = vunpack.c.l.b16 %v308
        %v386 = vunpack.c.l.b16 %v309
        %v387 = vunpack.c.l.b16 %v310
        %v388 = vunpack.c.l.b16 %v311
        %v389 = vunpack.c.l.b16 %v312
        %v390 = vunpack.c.l.b16 %v313
        %v391 = vunpack.c.l.b16 %v314
        %v392 = vunpack.c.l.b16 %v315
        %v393 = vunpack.c.l.b16 %v316
        %v394 = vunpack.c.l.b16 %v317
        %v395 = vunpack.c.l.b16 %v318
        %v396 = vunpack.c.l.b16 %v319
        %v397 = vunpack.c.l.b16 %v320
        %v398 = vunpack.c.l.b16 %v321
        %v399 = vunpack.c.l.b16 %v322
        %v400 = vunpack.c.l.b16 %v323
        %v401 = vunpack.c.l.b16 %v324
        %v402 = vunpack.c.l.b16 %v325
        %v403 = vunpack.c.l.b16 %v326
        %v404 = vunpack.c.l.b16 %v327
        %v405 = vunpack.c.l.b16 %v328
        %v406 = vunpack.c.l.b16 %v330
        %v407 = vpack.c.b16 %v371, %v370
        %v408 = vpack.c.b16 %v373, %v372
        %v409 = vpack.c.b16 %v375, %v374
        %v410 = vpack.c.b16 %v377, %v376
        %v411 = vpack.c.b16 %v379, %v378
        %v412 = vpack.c.b16 %v381, %v380
        %v413 = vpack.c.b16 %v383, %v382
        %v414 = vpack.c.b16 %v385, %v384
        %v415 = vpack.c.b16 %v387, %v386
        %v416 = vpack.c.b16 %v389, %v388
        %v417 = vpack.c.b16 %v391, %v390
        %v418 = vpack.c.b16 %v393, %v392
        %v419 = vpack.c.b16 %v395, %v394
        %v420 = vpack.c.b16 %v397, %v396
        %v421 = vpack.c.b16 %v399, %v398
        %v422 = vpack.c.b16 %v401, %v400
        %v423 = vpack.c.b16 %v403, %v402
        %v424 = vpack.c.b16 %v405, %v404
        %v425 = vpack.c.b16 %v406, %v406
        %vm426 = vsmask.f32 7424
        %v428 = vshrl.u32 %v407, 16
        %v430 = vshll.u32 %v407, 16
        %v432 = vrot.slane %v430, 1
        %v433 = vor.u32 %v428, %v432
        %v435 = vshll.u32 %v408, 16
        %v437 = vrot.slane %v435, 1
        %v438 = vsel %vm426, %v433, %v437
        %v439 = vshrl.u32 %v408, 16
        %v441 = vor.u32 %v439, %v437
        %v443 = vshll.u32 %v409, 16
        %v445 = vrot.slane %v443, 1
        %v446 = vsel %vm426, %v441, %v445
        %v447 = vshrl.u32 %v409, 16
        %v449 = vor.u32 %v447, %v445
        %v451 = vshll.u32 %v410, 16
        %v453 = vrot.slane %v451, 1
        %v454 = vsel %vm426, %v449, %v453
        %v455 = vshrl.u32 %v410, 16
        %v457 = vor.u32 %v455, %v453
        %v459 = vshll.u32 %v411, 16
        %v461 = vrot.slane %v459, 1
        %v462 = vsel %vm426, %v457, %v461
        %v463 = vshrl.u32 %v411, 16
        %v465 = vor.u32 %v463, %v461
        %v467 = vshll.u32 %v412, 16
        %v469 = vrot.slane %v467, 1
        %v470 = vsel %vm426, %v465, %v469
        %v471 = vshrl.u32 %v412, 16
        %v473 = vor.u32 %v471, %v469
        %v475 = vshll.u32 %v413, 16
        %v477 = vrot.slane %v475, 1
        %v478 = vsel %vm426, %v473, %v477
        %v479 = vshrl.u32 %v413, 16
        %v481 = vor.u32 %v479, %v477
        %v483 = vshll.u32 %v414, 16
        %v485 = vrot.slane %v483, 1
        %v486 = vsel %vm426, %v481, %v485
        %v487 = vshrl.u32 %v414, 16
        %v489 = vor.u32 %v487, %v485
        %v491 = vshll.u32 %v415, 16
        %v493 = vrot.slane %v491, 1
        %v494 = vsel %vm426, %v489, %v493
        %v495 = vshrl.u32 %v415, 16
        %v497 = vor.u32 %v495, %v493
        %v499 = vshll.u32 %v416, 16
        %v501 = vrot.slane %v499, 1
        %v502 = vsel %vm426, %v497, %v501
        %v503 = vshrl.u32 %v416, 16
        %v505 = vor.u32 %v503, %v501
        %v507 = vshll.u32 %v417, 16
        %v509 = vrot.slane %v507, 1
        %v510 = vsel %vm426, %v505, %v509
        %v511 = vshrl.u32 %v417, 16
        %v513 = vor.u32 %v511, %v509
        %v515 = vshll.u32 %v418, 16
        %v517 = vrot.slane %v515, 1
        %v518 = vsel %vm426, %v513, %v517
        %v519 = vshrl.u32 %v418, 16
        %v521 = vor.u32 %v519, %v517
        %v523 = vshll.u32 %v419, 16
        %v525 = vrot.slane %v523, 1
        %v526 = vsel %vm426, %v521, %v525
        %v527 = vshrl.u32 %v419, 16
        %v529 = vor.u32 %v527, %v525
        %v531 = vshll.u32 %v420, 16
        %v533 = vrot.slane %v531, 1
        %v534 = vsel %vm426, %v529, %v533
        %v535 = vshrl.u32 %v420, 16
        %v537 = vor.u32 %v535, %v533
        %v539 = vshll.u32 %v421, 16
        %v541 = vrot.slane %v539, 1
        %v542 = vsel %vm426, %v537, %v541
        %v543 = vshrl.u32 %v421, 16
        %v545 = vor.u32 %v543, %v541
        %v547 = vshll.u32 %v422, 16
        %v549 = vrot.slane %v547, 1
        %v550 = vsel %vm426, %v545, %v549
        %v551 = vshrl.u32 %v422, 16
        %v553 = vor.u32 %v551, %v549
        %v555 = vshll.u32 %v423, 16
        %v557 = vrot.slane %v555, 1
        %v558 = vsel %vm426, %v553, %v557
        %v559 = vshrl.u32 %v423, 16
        %v561 = vor.u32 %v559, %v557
        %v563 = vshll.u32 %v424, 16
        %v565 = vrot.slane %v563, 1
        %v566 = vsel %vm426, %v561, %v565
        %v567 = vshrl.u32 %v424, 16
        %v569 = vor.u32 %v567, %v565
        %v571 = vshll.u32 %v425, 16
        %v573 = vrot.slane %v571, 1
        %v574 = vsel %vm426, %v569, %v573
        %vm575 = vcmask 23552
        %v577 = vsel %vm575, %v438, 0
        %v580 = vsel %vm575, %v446, 0
        %v583 = vsel %vm575, %v454, 0
        %v586 = vsel %vm575, %v462, 0
        %v589 = vsel %vm575, %v470, 0
        %v592 = vsel %vm575, %v478, 0
        %v595 = vsel %vm575, %v486, 0
        %v598 = vsel %vm575, %v494, 0
        %v601 = vsel %vm575, %v502, 0
        %v604 = vsel %vm575, %v510, 0
        %v607 = vsel %vm575, %v518, 0
        %v610 = vsel %vm575, %v526, 0
        %v613 = vsel %vm575, %v534, 0
        %v616 = vsel %vm575, %v542, 0
        %v619 = vsel %vm575, %v550, 0
        %v622 = vsel %vm575, %v558, 0
        %v625 = vsel %vm575, %v566, 0
        %v628 = vsel %vm575, %v574, 0
        %vm630 = vcmask 1040384
        %vm631 = vcmask 1041408
        %v632 = vsel %vm630, 4294967295, 65535
        %v633 = vsel %vm631, %v632, 0
        %v635 = vand.u32 %v332, %v633
        %637 = vmatprep.subr.bf16.mxu0 0
        %638 = vmatpush1.bf16.msra.mxu0 %v635
        %639 = vmatprep.subr.bf16.mxu0 0
        %640 = vmatpush1.bf16.msra.mxu0 0
        %641 = vmatprep.subr.bf16.mxu0 0
        %642 = vmatpush1.bf16.msra.mxu0 0
        %643 = vmatprep.subr.bf16.mxu0 0
        %644 = vmatpush1.bf16.msra.mxu0 0
        %645 = vmatprep.subr.bf16.mxu0 0
        %646 = vmatpush1.bf16.msra.mxu0 0
        %647 = vmatprep.subr.bf16.mxu0 0
        %648 = vmatpush1.bf16.msra.mxu0 0
        %649 = vmatprep.subr.bf16.mxu0 0
        %650 = vmatpush1.bf16.msra.mxu0 0
        %651 = vmatprep.subr.bf16.mxu0 0
        %652 = vmatpush1.bf16.msra.mxu0 0
        %653 = vmatprep.subr.bf16.mxu0 0
        %654 = vmatpush1.bf16.msra.mxu0 0
        %655 = vmatprep.subr.bf16.mxu0 0
        %656 = vmatpush1.bf16.msra.mxu0 0
        %657 = vmatprep.subr.bf16.mxu0 0
        %658 = vmatpush1.bf16.msra.mxu0 0
        %659 = vmatprep.subr.bf16.mxu0 0
        %660 = vmatpush1.bf16.msra.mxu0 0
        %661 = vmatprep.subr.bf16.mxu0 0
        %662 = vmatpush1.bf16.msra.mxu0 0
        %663 = vmatprep.subr.bf16.mxu0 0
        %664 = vmatpush1.bf16.msra.mxu0 0
        %665 = vmatprep.subr.bf16.mxu0 0
        %666 = vmatpush1.bf16.msra.mxu0 0
        %667 = vmatprep.subr.bf16.mxu0 0
        %668 = vmatpush1.bf16.msra.mxu0 0
        %669 = vmatprep.mubr.bf16.mxu0 0
        %670 = vmatmul.mubr.bf16.gmra.mrb[0].mxu0 %v577
        %v671 = vpop.f32.mrb[0].mxu0
        %v672 = vadd.f32 0.0, %v671
        %v673 = vpop.f32.mrb[0].mxu0
        %v674 = vpop.f32.mrb[0].mxu0
        %v675 = vadd.f32 0.0, %v674
        %v676 = vpop.f32.mrb[0].mxu0
        %677 = vmatprep.mubr.bf16.mxu0 0
        %678 = vmatmul.mubr.bf16.gmra.mrb[0].mxu0 %v580
        %v679 = vpop.f32.mrb[0].mxu0
        %v680 = vadd.f32 0.0, %v679
        %v681 = vpop.f32.mrb[0].mxu0
        %v682 = vpop.f32.mrb[0].mxu0
        %v683 = vadd.f32 0.0, %v682
        %v684 = vpop.f32.mrb[0].mxu0
        %685 = vmatprep.mubr.bf16.mxu0 0
        %686 = vmatmul.mubr.bf16.gmra.mrb[0].mxu0 %v583
        %v687 = vpop.f32.mrb[0].mxu0
        %v688 = vadd.f32 0.0, %v687
        %v689 = vpop.f32.mrb[0].mxu0
        %v690 = vpop.f32.mrb[0].mxu0
        %v691 = vadd.f32 0.0, %v690
        %v692 = vpop.f32.mrb[0].mxu0
        %693 = vmatprep.mubr.bf16.mxu0 0
        %694 = vmatmul.mubr.bf16.gmra.mrb[0].mxu0 %v586
        %v695 = vpop.f32.mrb[0].mxu0
        %v696 = vadd.f32 0.0, %v695
        %v697 = vpop.f32.mrb[0].mxu0
        %v698 = vpop.f32.mrb[0].mxu0
        %v699 = vadd.f32 0.0, %v698
        %v700 = vpop.f32.mrb[0].mxu0
        %701 = vmatprep.mubr.bf16.mxu0 0
        %702 = vmatmul.mubr.bf16.gmra.mrb[0].mxu0 %v589
        %v703 = vpop.f32.mrb[0].mxu0
        %v704 = vadd.f32 0.0, %v703
        %v705 = vpop.f32.mrb[0].mxu0
        %v706 = vpop.f32.mrb[0].mxu0
        %v707 = vadd.f32 0.0, %v706
        %v708 = vpop.f32.mrb[0].mxu0
        %709 = vmatprep.mubr.bf16.mxu0 0
        %710 = vmatmul.mubr.bf16.gmra.mrb[0].mxu0 %v592
        %v711 = vpop.f32.mrb[0].mxu0
        %v712 = vadd.f32 0.0, %v711
        %v713 = vpop.f32.mrb[0].mxu0
        %v714 = vpop.f32.mrb[0].mxu0
        %v715 = vadd.f32 0.0, %v714
        %v716 = vpop.f32.mrb[0].mxu0
        %717 = vmatprep.mubr.bf16.mxu0 0
        %718 = vmatmul.mubr.bf16.gmra.mrb[0].mxu0 %v595
        %v719 = vpop.f32.mrb[0].mxu0
        %v720 = vadd.f32 0.0, %v719
        %v721 = vpop.f32.mrb[0].mxu0
        %v722 = vpop.f32.mrb[0].mxu0
        %v723 = vadd.f32 0.0, %v722
        %v724 = vpop.f32.mrb[0].mxu0
        %725 = vmatprep.mubr.bf16.mxu0 0
        %726 = vmatmul.mubr.bf16.gmra.mrb[0].mxu0 %v598
        %v727 = vpop.f32.mrb[0].mxu0
        %v728 = vadd.f32 0.0, %v727
        %v729 = vpop.f32.mrb[0].mxu0
        %v730 = vpop.f32.mrb[0].mxu0
        %v731 = vadd.f32 0.0, %v730
        %v732 = vpop.f32.mrb[0].mxu0
        %733 = vmatprep.mubr.bf16.mxu0 0
        %734 = vmatmul.mubr.bf16.gmra.mrb[0].mxu0 %v601
        %v735 = vpop.f32.mrb[0].mxu0
        %v736 = vadd.f32 0.0, %v735
        %v737 = vpop.f32.mrb[0].mxu0
        %v738 = vpop.f32.mrb[0].mxu0
        %v739 = vadd.f32 0.0, %v738
        %v740 = vpop.f32.mrb[0].mxu0
        %741 = vmatprep.mubr.bf16.mxu0 0
        %742 = vmatmul.mubr.bf16.gmra.mrb[0].mxu0 %v604
        %v743 = vpop.f32.mrb[0].mxu0
        %v744 = vadd.f32 0.0, %v743
        %v745 = vpop.f32.mrb[0].mxu0
        %v746 = vpop.f32.mrb[0].mxu0
        %v747 = vadd.f32 0.0, %v746
        %v748 = vpop.f32.mrb[0].mxu0
        %749 = vmatprep.mubr.bf16.mxu0 0
        %750 = vmatmul.mubr.bf16.gmra.mrb[0].mxu0 %v607
        %v751 = vpop.f32.mrb[0].mxu0
        %v752 = vadd.f32 0.0, %v751
        %v753 = vpop.f32.mrb[0].mxu0
        %v754 = vpop.f32.mrb[0].mxu0
        %v755 = vadd.f32 0.0, %v754
        %v756 = vpop.f32.mrb[0].mxu0
        %757 = vmatprep.mubr.bf16.mxu0 0
        %758 = vmatmul.mubr.bf16.gmra.mrb[0].mxu0 %v610
        %v759 = vpop.f32.mrb[0].mxu0
        %v760 = vadd.f32 0.0, %v759
        %v761 = vpop.f32.mrb[0].mxu0
        %v762 = vpop.f32.mrb[0].mxu0
        %v763 = vadd.f32 0.0, %v762
        %v764 = vpop.f32.mrb[0].mxu0
        %765 = vmatprep.mubr.bf16.mxu0 0
        %766 = vmatmul.mubr.bf16.gmra.mrb[0].mxu0 %v613
        %v767 = vpop.f32.mrb[0].mxu0
        %v768 = vadd.f32 0.0, %v767
        %v769 = vpop.f32.mrb[0].mxu0
        %v770 = vpop.f32.mrb[0].mxu0
        %v771 = vadd.f32 0.0, %v770
        %v772 = vpop.f32.mrb[0].mxu0
        %773 = vmatprep.mubr.bf16.mxu0 0
        %774 = vmatmul.mubr.bf16.gmra.mrb[0].mxu0 %v616
        %v775 = vpop.f32.mrb[0].mxu0
        %v776 = vadd.f32 0.0, %v775
        %v777 = vpop.f32.mrb[0].mxu0
        %v778 = vpop.f32.mrb[0].mxu0
        %v779 = vadd.f32 0.0, %v778
        %v780 = vpop.f32.mrb[0].mxu0
        %781 = vmatprep.mubr.bf16.mxu0 0
        %782 = vmatmul.mubr.bf16.gmra.mrb[0].mxu0 %v619
        %v783 = vpop.f32.mrb[0].mxu0
        %v784 = vadd.f32 0.0, %v783
        %v785 = vpop.f32.mrb[0].mxu0
        %v786 = vpop.f32.mrb[0].mxu0
        %v787 = vadd.f32 0.0, %v786
        %v788 = vpop.f32.mrb[0].mxu0
        %789 = vmatprep.mubr.bf16.mxu0 0
        %790 = vmatmul.mubr.bf16.gmra.mrb[0].mxu0 %v622
        %v791 = vpop.f32.mrb[0].mxu0
        %v792 = vadd.f32 0.0, %v791
        %v793 = vpop.f32.mrb[0].mxu0
        %v794 = vpop.f32.mrb[0].mxu0
        %v795 = vadd.f32 0.0, %v794
        %v796 = vpop.f32.mrb[0].mxu0
        %797 = vmatprep.mubr.bf16.mxu0 0
        %798 = vmatmul.mubr.bf16.gmra.mrb[0].mxu0 %v625
        %v799 = vpop.f32.mrb[0].mxu0
        %v800 = vadd.f32 0.0, %v799
        %v801 = vpop.f32.mrb[0].mxu0
        %v802 = vpop.f32.mrb[0].mxu0
        %v803 = vadd.f32 0.0, %v802
        %v804 = vpop.f32.mrb[0].mxu0
        %805 = vmatprep.mubr.bf16.mxu0 0
        %806 = vmatmul.mubr.bf16.gmra.mrb[0].mxu0 %v628
        %v807 = vpop.f32.mrb[0].mxu0
        %v808 = vadd.f32 0.0, %v807
        %v809 = vpop.f32.mrb[0].mxu0
        %v810 = vpop.f32.mrb[0].mxu0
        %v811 = vadd.f32 0.0, %v810
        %v812 = vpop.f32.mrb[0].mxu0
        %813 = vdwg.mxu0
        %v814 = vsel %vm575, %v407, 0
        %v816 = vsel %vm575, %v408, 0
        %v818 = vsel %vm575, %v409, 0
        %v820 = vsel %vm575, %v410, 0
        %v822 = vsel %vm575, %v411, 0
        %v824 = vsel %vm575, %v412, 0
        %v826 = vsel %vm575, %v413, 0
        %v828 = vsel %vm575, %v414, 0
        %v830 = vsel %vm575, %v415, 0
        %v832 = vsel %vm575, %v416, 0
        %v834 = vsel %vm575, %v417, 0
        %v836 = vsel %vm575, %v418, 0
        %v838 = vsel %vm575, %v419, 0
        %v840 = vsel %vm575, %v420, 0
        %v842 = vsel %vm575, %v421, 0
        %v844 = vsel %vm575, %v422, 0
        %v846 = vsel %vm575, %v423, 0
        %v848 = vsel %vm575, %v424, 0
        %v851 = vand.u32 %v329, %v633
        %853 = vmatprep.subr.bf16.mxu0 0
        %854 = vmatpush1.bf16.msra.mxu0 %v851
        %855 = vmatprep.subr.bf16.mxu0 0
        %856 = vmatpush1.bf16.msra.mxu0 0
        %857 = vmatprep.subr.bf16.mxu0 0
        %858 = vmatpush1.bf16.msra.mxu0 0
        %859 = vmatprep.subr.bf16.mxu0 0
        %860 = vmatpush1.bf16.msra.mxu0 0
        %861 = vmatprep.subr.bf16.mxu0 0
        %862 = vmatpush1.bf16.msra.mxu0 0
        %863 = vmatprep.subr.bf16.mxu0 0
        %864 = vmatpush1.bf16.msra.mxu0 0
        %865 = vmatprep.subr.bf16.mxu0 0
        %866 = vmatpush1.bf16.msra.mxu0 0
        %867 = vmatprep.subr.bf16.mxu0 0
        %868 = vmatpush1.bf16.msra.mxu0 0
        %869 = vmatprep.subr.bf16.mxu0 0
        %870 = vmatpush1.bf16.msra.mxu0 0
        %871 = vmatprep.subr.bf16.mxu0 0
        %872 = vmatpush1.bf16.msra.mxu0 0
        %873 = vmatprep.subr.bf16.mxu0 0
        %874 = vmatpush1.bf16.msra.mxu0 0
        %875 = vmatprep.subr.bf16.mxu0 0
        %876 = vmatpush1.bf16.msra.mxu0 0
        %877 = vmatprep.subr.bf16.mxu0 0
        %878 = vmatpush1.bf16.msra.mxu0 0
        %879 = vmatprep.subr.bf16.mxu0 0
        %880 = vmatpush1.bf16.msra.mxu0 0
        %881 = vmatprep.subr.bf16.mxu0 0
        %882 = vmatpush1.bf16.msra.mxu0 0
        %883 = vmatprep.subr.bf16.mxu0 0
        %884 = vmatpush1.bf16.msra.mxu0 0
        %885 = vmatprep.mubr.bf16.mxu0 0
        %886 = vmatmul.mubr.bf16.gmra.mrb[0].mxu0 %v814
        %v887 = vpop.f32.mrb[0].mxu0
        %v888 = vadd.f32 %v672, %v887
        %v889 = vpop.f32.mrb[0].mxu0
        %v890 = vpop.f32.mrb[0].mxu0
        %v891 = vadd.f32 %v675, %v890
        %v892 = vpop.f32.mrb[0].mxu0
        %893 = vmatprep.mubr.bf16.mxu0 0
        %894 = vmatmul.mubr.bf16.gmra.mrb[0].mxu0 %v816
        %v895 = vpop.f32.mrb[0].mxu0
        %v896 = vadd.f32 %v680, %v895
        %v897 = vpop.f32.mrb[0].mxu0
        %v898 = vpop.f32.mrb[0].mxu0
        %v899 = vadd.f32 %v683, %v898
        %v900 = vpop.f32.mrb[0].mxu0
        %901 = vmatprep.mubr.bf16.mxu0 0
        %902 = vmatmul.mubr.bf16.gmra.mrb[0].mxu0 %v818
        %v903 = vpop.f32.mrb[0].mxu0
        %v904 = vadd.f32 %v688, %v903
        %v905 = vpop.f32.mrb[0].mxu0
        %v906 = vpop.f32.mrb[0].mxu0
        %v907 = vadd.f32 %v691, %v906
        %v908 = vpop.f32.mrb[0].mxu0
        %909 = vmatprep.mubr.bf16.mxu0 0
        %910 = vmatmul.mubr.bf16.gmra.mrb[0].mxu0 %v820
        %v911 = vpop.f32.mrb[0].mxu0
        %v912 = vadd.f32 %v696, %v911
        %v913 = vpop.f32.mrb[0].mxu0
        %v914 = vpop.f32.mrb[0].mxu0
        %v915 = vadd.f32 %v699, %v914
        %v916 = vpop.f32.mrb[0].mxu0
        %917 = vmatprep.mubr.bf16.mxu0 0
        %918 = vmatmul.mubr.bf16.gmra.mrb[0].mxu0 %v822
        %v919 = vpop.f32.mrb[0].mxu0
        %v920 = vadd.f32 %v704, %v919
        %v921 = vpop.f32.mrb[0].mxu0
        %v922 = vpop.f32.mrb[0].mxu0
        %v923 = vadd.f32 %v707, %v922
        %v924 = vpop.f32.mrb[0].mxu0
        %925 = vmatprep.mubr.bf16.mxu0 0
        %926 = vmatmul.mubr.bf16.gmra.mrb[0].mxu0 %v824
        %v927 = vpop.f32.mrb[0].mxu0
        %v928 = vadd.f32 %v712, %v927
        %v929 = vpop.f32.mrb[0].mxu0
        %v930 = vpop.f32.mrb[0].mxu0
        %v931 = vadd.f32 %v715, %v930
        %v932 = vpop.f32.mrb[0].mxu0
        %933 = vmatprep.mubr.bf16.mxu0 0
        %934 = vmatmul.mubr.bf16.gmra.mrb[0].mxu0 %v826
        %v935 = vpop.f32.mrb[0].mxu0
        %v936 = vadd.f32 %v720, %v935
        %v937 = vpop.f32.mrb[0].mxu0
        %v938 = vpop.f32.mrb[0].mxu0
        %v939 = vadd.f32 %v723, %v938
        %v940 = vpop.f32.mrb[0].mxu0
        %941 = vmatprep.mubr.bf16.mxu0 0
        %942 = vmatmul.mubr.bf16.gmra.mrb[0].mxu0 %v828
        %v943 = vpop.f32.mrb[0].mxu0
        %v944 = vadd.f32 %v728, %v943
        %v945 = vpop.f32.mrb[0].mxu0
        %v946 = vpop.f32.mrb[0].mxu0
        %v947 = vadd.f32 %v731, %v946
        %v948 = vpop.f32.mrb[0].mxu0
        %949 = vmatprep.mubr.bf16.mxu0 0
        %950 = vmatmul.mubr.bf16.gmra.mrb[0].mxu0 %v830
        %v951 = vpop.f32.mrb[0].mxu0
        %v952 = vadd.f32 %v736, %v951
        %v953 = vpop.f32.mrb[0].mxu0
        %v954 = vpop.f32.mrb[0].mxu0
        %v955 = vadd.f32 %v739, %v954
        %v956 = vpop.f32.mrb[0].mxu0
        %957 = vmatprep.mubr.bf16.mxu0 0
        %958 = vmatmul.mubr.bf16.gmra.mrb[0].mxu0 %v832
        %v959 = vpop.f32.mrb[0].mxu0
        %v960 = vadd.f32 %v744, %v959
        %v961 = vpop.f32.mrb[0].mxu0
        %v962 = vpop.f32.mrb[0].mxu0
        %v963 = vadd.f32 %v747, %v962
        %v964 = vpop.f32.mrb[0].mxu0
        %965 = vmatprep.mubr.bf16.mxu0 0
        %966 = vmatmul.mubr.bf16.gmra.mrb[0].mxu0 %v834
        %v967 = vpop.f32.mrb[0].mxu0
        %v968 = vadd.f32 %v752, %v967
        %v969 = vpop.f32.mrb[0].mxu0
        %v970 = vpop.f32.mrb[0].mxu0
        %v971 = vadd.f32 %v755, %v970
        %v972 = vpop.f32.mrb[0].mxu0
        %973 = vmatprep.mubr.bf16.mxu0 0
        %974 = vmatmul.mubr.bf16.gmra.mrb[0].mxu0 %v836
        %v975 = vpop.f32.mrb[0].mxu0
        %v976 = vadd.f32 %v760, %v975
        %v977 = vpop.f32.mrb[0].mxu0
        %v978 = vpop.f32.mrb[0].mxu0
        %v979 = vadd.f32 %v763, %v978
        %v980 = vpop.f32.mrb[0].mxu0
        %981 = vmatprep.mubr.bf16.mxu0 0
        %982 = vmatmul.mubr.bf16.gmra.mrb[0].mxu0 %v838
        %v983 = vpop.f32.mrb[0].mxu0
        %v984 = vadd.f32 %v768, %v983
        %v985 = vpop.f32.mrb[0].mxu0
        %v986 = vpop.f32.mrb[0].mxu0
        %v987 = vadd.f32 %v771, %v986
        %v988 = vpop.f32.mrb[0].mxu0
        %989 = vmatprep.mubr.bf16.mxu0 0
        %990 = vmatmul.mubr.bf16.gmra.mrb[0].mxu0 %v840
        %v991 = vpop.f32.mrb[0].mxu0
        %v992 = vadd.f32 %v776, %v991
        %v993 = vpop.f32.mrb[0].mxu0
        %v994 = vpop.f32.mrb[0].mxu0
        %v995 = vadd.f32 %v779, %v994
        %v996 = vpop.f32.mrb[0].mxu0
        %997 = vmatprep.mubr.bf16.mxu0 0
        %998 = vmatmul.mubr.bf16.gmra.mrb[0].mxu0 %v842
        %v999 = vpop.f32.mrb[0].mxu0
        %v1000 = vadd.f32 %v784, %v999
        %v1001 = vpop.f32.mrb[0].mxu0
        %v1002 = vpop.f32.mrb[0].mxu0
        %v1003 = vadd.f32 %v787, %v1002
        %v1004 = vpop.f32.mrb[0].mxu0
        %1005 = vmatprep.mubr.bf16.mxu0 0
        %1006 = vmatmul.mubr.bf16.gmra.mrb[0].mxu0 %v844
        %v1007 = vpop.f32.mrb[0].mxu0
        %v1008 = vadd.f32 %v792, %v1007
        %v1009 = vpop.f32.mrb[0].mxu0
        %v1010 = vpop.f32.mrb[0].mxu0
        %v1011 = vadd.f32 %v795, %v1010
        %v1012 = vpop.f32.mrb[0].mxu0
        %1013 = vmatprep.mubr.bf16.mxu0 0
        %1014 = vmatmul.mubr.bf16.gmra.mrb[0].mxu0 %v846
        %v1015 = vpop.f32.mrb[0].mxu0
        %v1016 = vadd.f32 %v800, %v1015
        %v1017 = vpop.f32.mrb[0].mxu0
        %v1018 = vpop.f32.mrb[0].mxu0
        %v1019 = vadd.f32 %v803, %v1018
        %v1020 = vpop.f32.mrb[0].mxu0
        %1021 = vmatprep.mubr.bf16.mxu0 0
        %1022 = vmatmul.mubr.bf16.gmra.mrb[0].mxu0 %v848
        %v1023 = vpop.f32.mrb[0].mxu0
        %v1024 = vadd.f32 %v808, %v1023
        %v1025 = vpop.f32.mrb[0].mxu0
        %v1026 = vpop.f32.mrb[0].mxu0
        %v1027 = vadd.f32 %v811, %v1026
        %v1028 = vpop.f32.mrb[0].mxu0
        %1029 = vdwg.mxu0
        %v1030 = vld [vmem:[%s276] sm:$0xe]
        %s1031 = scalar_lea.vmem %s1, 4
        %v1032 = vld [vmem:[%s1031] sm:$0x3]
        %v1034 = vunpack.c.l.b16 %v1030
        %v1035 = vpack.c.b16 %v371, %v1034
        %vm1036 = vcmask 1046528
        %v1037 = vrot.slane %v1035, 1
        %v1038 = vrot.slane %v408, 1
        %v1039 = vsel %vm1036, %v1037, %v1038
        %v1040 = vrot.slane %v409, 1
        %v1041 = vsel %vm1036, %v1038, %v1040
        %v1042 = vrot.slane %v410, 1
        %v1043 = vsel %vm1036, %v1040, %v1042
        %v1044 = vrot.slane %v411, 1
        %v1045 = vsel %vm1036, %v1042, %v1044
        %v1046 = vrot.slane %v412, 1
        %v1047 = vsel %vm1036, %v1044, %v1046
        %v1048 = vrot.slane %v413, 1
        %v1049 = vsel %vm1036, %v1046, %v1048
        %v1050 = vrot.slane %v414, 1
        %v1051 = vsel %vm1036, %v1048, %v1050
        %v1052 = vrot.slane %v415, 1
        %v1053 = vsel %vm1036, %v1050, %v1052
        %v1054 = vrot.slane %v416, 1
        %v1055 = vsel %vm1036, %v1052, %v1054
        %v1056 = vrot.slane %v417, 1
        %v1057 = vsel %vm1036, %v1054, %v1056
        %v1058 = vrot.slane %v418, 1
        %v1059 = vsel %vm1036, %v1056, %v1058
        %v1060 = vrot.slane %v419, 1
        %v1061 = vsel %vm1036, %v1058, %v1060
        %v1062 = vrot.slane %v420, 1
        %v1063 = vsel %vm1036, %v1060, %v1062
        %v1064 = vrot.slane %v421, 1
        %v1065 = vsel %vm1036, %v1062, %v1064
        %v1066 = vrot.slane %v422, 1
        %v1067 = vsel %vm1036, %v1064, %v1066
        %v1068 = vrot.slane %v423, 1
        %v1069 = vsel %vm1036, %v1066, %v1068
        %v1070 = vrot.slane %v424, 1
        %v1071 = vsel %vm1036, %v1068, %v1070
        %v1072 = vrot.slane %v425, 1
        %v1073 = vsel %vm1036, %v1070, %v1072
        %v1075 = vsel %vm575, %v1039, 0
        %v1078 = vsel %vm575, %v1041, 0
        %v1081 = vsel %vm575, %v1043, 0
        %v1084 = vsel %vm575, %v1045, 0
        %v1087 = vsel %vm575, %v1047, 0
        %v1090 = vsel %vm575, %v1049, 0
        %v1093 = vsel %vm575, %v1051, 0
        %v1096 = vsel %vm575, %v1053, 0
        %v1099 = vsel %vm575, %v1055, 0
        %v1102 = vsel %vm575, %v1057, 0
        %v1105 = vsel %vm575, %v1059, 0
        %v1108 = vsel %vm575, %v1061, 0
        %v1111 = vsel %vm575, %v1063, 0
        %v1114 = vsel %vm575, %v1065, 0
        %v1117 = vsel %vm575, %v1067, 0
        %v1120 = vsel %vm575, %v1069, 0
        %v1123 = vsel %vm575, %v1071, 0
        %v1126 = vsel %vm575, %v1073, 0
        %v1129 = vand.u32 %v1032, %v633
        %1131 = vmatprep.subr.bf16.mxu0 0
        %1132 = vmatpush1.bf16.msra.mxu0 %v1129
        %1133 = vmatprep.subr.bf16.mxu0 0
        %1134 = vmatpush1.bf16.msra.mxu0 0
        %1135 = vmatprep.subr.bf16.mxu0 0
        %1136 = vmatpush1.bf16.msra.mxu0 0
        %1137 = vmatprep.subr.bf16.mxu0 0
        %1138 = vmatpush1.bf16.msra.mxu0 0
        %1139 = vmatprep.subr.bf16.mxu0 0
        %1140 = vmatpush1.bf16.msra.mxu0 0
        %1141 = vmatprep.subr.bf16.mxu0 0
        %1142 = vmatpush1.bf16.msra.mxu0 0
        %1143 = vmatprep.subr.bf16.mxu0 0
        %1144 = vmatpush1.bf16.msra.mxu0 0
        %1145 = vmatprep.subr.bf16.mxu0 0
        %1146 = vmatpush1.bf16.msra.mxu0 0
        %1147 = vmatprep.subr.bf16.mxu0 0
        %1148 = vmatpush1.bf16.msra.mxu0 0
        %1149 = vmatprep.subr.bf16.mxu0 0
        %1150 = vmatpush1.bf16.msra.mxu0 0
        %1151 = vmatprep.subr.bf16.mxu0 0
        %1152 = vmatpush1.bf16.msra.mxu0 0
        %1153 = vmatprep.subr.bf16.mxu0 0
        %1154 = vmatpush1.bf16.msra.mxu0 0
        %1155 = vmatprep.subr.bf16.mxu0 0
        %1156 = vmatpush1.bf16.msra.mxu0 0
        %1157 = vmatprep.subr.bf16.mxu0 0
        %1158 = vmatpush1.bf16.msra.mxu0 0
        %1159 = vmatprep.subr.bf16.mxu0 0
        %1160 = vmatpush1.bf16.msra.mxu0 0
        %1161 = vmatprep.subr.bf16.mxu0 0
        %1162 = vmatpush1.bf16.msra.mxu0 0
        %1163 = vmatprep.mubr.bf16.mxu0 0
        %1164 = vmatmul.mubr.bf16.gmra.mrb[0].mxu0 %v1075
        %v1165 = vpop.f32.mrb[0].mxu0
        %v1166 = vadd.f32 0.0, %v1165
        %v1167 = vpop.f32.mrb[0].mxu0
        %v1168 = vpop.f32.mrb[0].mxu0
        %v1169 = vadd.f32 0.0, %v1168
        %v1170 = vpop.f32.mrb[0].mxu0
        %1171 = vmatprep.mubr.bf16.mxu0 0
        %1172 = vmatmul.mubr.bf16.gmra.mrb[0].mxu0 %v1078
        %v1173 = vpop.f32.mrb[0].mxu0
        %v1174 = vadd.f32 0.0, %v1173
        %v1175 = vpop.f32.mrb[0].mxu0
        %v1176 = vpop.f32.mrb[0].mxu0
        %v1177 = vadd.f32 0.0, %v1176
        %v1178 = vpop.f32.mrb[0].mxu0
        %1179 = vmatprep.mubr.bf16.mxu0 0
        %1180 = vmatmul.mubr.bf16.gmra.mrb[0].mxu0 %v1081
        %v1181 = vpop.f32.mrb[0].mxu0
        %v1182 = vadd.f32 0.0, %v1181
        %v1183 = vpop.f32.mrb[0].mxu0
        %v1184 = vpop.f32.mrb[0].mxu0
        %v1185 = vadd.f32 0.0, %v1184
        %v1186 = vpop.f32.mrb[0].mxu0
        %1187 = vmatprep.mubr.bf16.mxu0 0
        %1188 = vmatmul.mubr.bf16.gmra.mrb[0].mxu0 %v1084
        %v1189 = vpop.f32.mrb[0].mxu0
        %v1190 = vadd.f32 0.0, %v1189
        %v1191 = vpop.f32.mrb[0].mxu0
        %v1192 = vpop.f32.mrb[0].mxu0
        %v1193 = vadd.f32 0.0, %v1192
        %v1194 = vpop.f32.mrb[0].mxu0
        %1195 = vmatprep.mubr.bf16.mxu0 0
        %1196 = vmatmul.mubr.bf16.gmra.mrb[0].mxu0 %v1087
        %v1197 = vpop.f32.mrb[0].mxu0
        %v1198 = vadd.f32 0.0, %v1197
        %v1199 = vpop.f32.mrb[0].mxu0
        %v1200 = vpop.f32.mrb[0].mxu0
        %v1201 = vadd.f32 0.0, %v1200
        %v1202 = vpop.f32.mrb[0].mxu0
        %1203 = vmatprep.mubr.bf16.mxu0 0
        %1204 = vmatmul.mubr.bf16.gmra.mrb[0].mxu0 %v1090
        %v1205 = vpop.f32.mrb[0].mxu0
        %v1206 = vadd.f32 0.0, %v1205
        %v1207 = vpop.f32.mrb[0].mxu0
        %v1208 = vpop.f32.mrb[0].mxu0
        %v1209 = vadd.f32 0.0, %v1208
        %v1210 = vpop.f32.mrb[0].mxu0
        %1211 = vmatprep.mubr.bf16.mxu0 0
        %1212 = vmatmul.mubr.bf16.gmra.mrb[0].mxu0 %v1093
        %v1213 = vpop.f32.mrb[0].mxu0
        %v1214 = vadd.f32 0.0, %v1213
        %v1215 = vpop.f32.mrb[0].mxu0
        %v1216 = vpop.f32.mrb[0].mxu0
        %v1217 = vadd.f32 0.0, %v1216
        %v1218 = vpop.f32.mrb[0].mxu0
        %1219 = vmatprep.mubr.bf16.mxu0 0
        %1220 = vmatmul.mubr.bf16.gmra.mrb[0].mxu0 %v1096
        %v1221 = vpop.f32.mrb[0].mxu0
        %v1222 = vadd.f32 0.0, %v1221
        %v1223 = vpop.f32.mrb[0].mxu0
        %v1224 = vpop.f32.mrb[0].mxu0
        %v1225 = vadd.f32 0.0, %v1224
        %v1226 = vpop.f32.mrb[0].mxu0
        %1227 = vmatprep.mubr.bf16.mxu0 0
        %1228 = vmatmul.mubr.bf16.gmra.mrb[0].mxu0 %v1099
        %v1229 = vpop.f32.mrb[0].mxu0
        %v1230 = vadd.f32 0.0, %v1229
        %v1231 = vpop.f32.mrb[0].mxu0
        %v1232 = vpop.f32.mrb[0].mxu0
        %v1233 = vadd.f32 0.0, %v1232
        %v1234 = vpop.f32.mrb[0].mxu0
        %1235 = vmatprep.mubr.bf16.mxu0 0
        %1236 = vmatmul.mubr.bf16.gmra.mrb[0].mxu0 %v1102
        %v1237 = vpop.f32.mrb[0].mxu0
        %v1238 = vadd.f32 0.0, %v1237
        %v1239 = vpop.f32.mrb[0].mxu0
        %v1240 = vpop.f32.mrb[0].mxu0
        %v1241 = vadd.f32 0.0, %v1240
        %v1242 = vpop.f32.mrb[0].mxu0
        %1243 = vmatprep.mubr.bf16.mxu0 0
        %1244 = vmatmul.mubr.bf16.gmra.mrb[0].mxu0 %v1105
        %v1245 = vpop.f32.mrb[0].mxu0
        %v1246 = vadd.f32 0.0, %v1245
        %v1247 = vpop.f32.mrb[0].mxu0
        %v1248 = vpop.f32.mrb[0].mxu0
        %v1249 = vadd.f32 0.0, %v1248
        %v1250 = vpop.f32.mrb[0].mxu0
        %1251 = vmatprep.mubr.bf16.mxu0 0
        %1252 = vmatmul.mubr.bf16.gmra.mrb[0].mxu0 %v1108
        %v1253 = vpop.f32.mrb[0].mxu0
        %v1254 = vadd.f32 0.0, %v1253
        %v1255 = vpop.f32.mrb[0].mxu0
        %v1256 = vpop.f32.mrb[0].mxu0
        %v1257 = vadd.f32 0.0, %v1256
        %v1258 = vpop.f32.mrb[0].mxu0
        %1259 = vmatprep.mubr.bf16.mxu0 0
        %1260 = vmatmul.mubr.bf16.gmra.mrb[0].mxu0 %v1111
        %v1261 = vpop.f32.mrb[0].mxu0
        %v1262 = vadd.f32 0.0, %v1261
        %v1263 = vpop.f32.mrb[0].mxu0
        %v1264 = vpop.f32.mrb[0].mxu0
        %v1265 = vadd.f32 0.0, %v1264
        %v1266 = vpop.f32.mrb[0].mxu0
        %1267 = vmatprep.mubr.bf16.mxu0 0
        %1268 = vmatmul.mubr.bf16.gmra.mrb[0].mxu0 %v1114
        %v1269 = vpop.f32.mrb[0].mxu0
        %v1270 = vadd.f32 0.0, %v1269
        %v1271 = vpop.f32.mrb[0].mxu0
        %v1272 = vpop.f32.mrb[0].mxu0
        %v1273 = vadd.f32 0.0, %v1272
        %v1274 = vpop.f32.mrb[0].mxu0
        %1275 = vmatprep.mubr.bf16.mxu0 0
        %1276 = vmatmul.mubr.bf16.gmra.mrb[0].mxu0 %v1117
        %v1277 = vpop.f32.mrb[0].mxu0
        %v1278 = vadd.f32 0.0, %v1277
        %v1279 = vpop.f32.mrb[0].mxu0
        %v1280 = vpop.f32.mrb[0].mxu0
        %v1281 = vadd.f32 0.0, %v1280
        %v1282 = vpop.f32.mrb[0].mxu0
        %1283 = vmatprep.mubr.bf16.mxu0 0
        %1284 = vmatmul.mubr.bf16.gmra.mrb[0].mxu0 %v1120
        %v1285 = vpop.f32.mrb[0].mxu0
        %v1286 = vadd.f32 0.0, %v1285
        %v1287 = vpop.f32.mrb[0].mxu0
        %v1288 = vpop.f32.mrb[0].mxu0
        %v1289 = vadd.f32 0.0, %v1288
        %v1290 = vpop.f32.mrb[0].mxu0
        %1291 = vmatprep.mubr.bf16.mxu0 0
        %1292 = vmatmul.mubr.bf16.gmra.mrb[0].mxu0 %v1123
        %v1293 = vpop.f32.mrb[0].mxu0
        %v1294 = vadd.f32 0.0, %v1293
        %v1295 = vpop.f32.mrb[0].mxu0
        %v1296 = vpop.f32.mrb[0].mxu0
        %v1297 = vadd.f32 0.0, %v1296
        %v1298 = vpop.f32.mrb[0].mxu0
        %1299 = vmatprep.mubr.bf16.mxu0 0
        %1300 = vmatmul.mubr.bf16.gmra.mrb[0].mxu0 %v1126
        %v1301 = vpop.f32.mrb[0].mxu0
        %v1302 = vadd.f32 0.0, %v1301
        %v1303 = vpop.f32.mrb[0].mxu0
        %v1304 = vpop.f32.mrb[0].mxu0
        %v1305 = vadd.f32 0.0, %v1304
        %v1306 = vpop.f32.mrb[0].mxu0
        %1307 = vdwg.mxu0
        %v1308 = vadd.f32 %v888, %v1166
        %v1309 = vadd.f32 %v891, %v1169
        %v1310 = vadd.f32 %v896, %v1174
        %v1311 = vadd.f32 %v899, %v1177
        %v1312 = vadd.f32 %v904, %v1182
        %v1313 = vadd.f32 %v907, %v1185
        %v1314 = vadd.f32 %v912, %v1190
        %v1315 = vadd.f32 %v915, %v1193
        %v1316 = vadd.f32 %v920, %v1198
        %v1317 = vadd.f32 %v923, %v1201
        %v1318 = vadd.f32 %v928, %v1206
        %v1319 = vadd.f32 %v931, %v1209
        %v1320 = vadd.f32 %v936, %v1214
        %v1321 = vadd.f32 %v939, %v1217
        %v1322 = vadd.f32 %v944, %v1222
        %v1323 = vadd.f32 %v947, %v1225
        %v1324 = vadd.f32 %v952, %v1230
        %v1325 = vadd.f32 %v955, %v1233
        %v1326 = vadd.f32 %v960, %v1238
        %v1327 = vadd.f32 %v963, %v1241
        %v1328 = vadd.f32 %v968, %v1246
        %v1329 = vadd.f32 %v971, %v1249
        %v1330 = vadd.f32 %v976, %v1254
        %v1331 = vadd.f32 %v979, %v1257
        %v1332 = vadd.f32 %v984, %v1262
        %v1333 = vadd.f32 %v987, %v1265
        %v1334 = vadd.f32 %v992, %v1270
        %v1335 = vadd.f32 %v995, %v1273
        %v1336 = vadd.f32 %v1000, %v1278
        %v1337 = vadd.f32 %v1003, %v1281
        %v1338 = vadd.f32 %v1008, %v1286
        %v1339 = vadd.f32 %v1011, %v1289
        %v1340 = vadd.f32 %v1016, %v1294
        %v1341 = vadd.f32 %v1019, %v1297
        %v1342 = vadd.f32 %v1024, %v1302
        %v1343 = vadd.f32 %v1027, %v1305
        %v1344 = vld [vmem:[%s276 + $0x8] sm:$0xe]
        %v1345 = vld [vmem:[%s276 + $0xc] sm:$0xf]
        %v1346 = vld [vmem:[%s276 + $0x10] sm:$0xf]
        %v1347 = vld [vmem:[%s276 + $0x14] sm:$0xf]
        %v1348 = vld [vmem:[%s276 + $0x18] sm:$0xf]
        %v1349 = vld [vmem:[%s276 + $0x1c] sm:$0xf]
        %v1350 = vld [vmem:[%s276 + $0x20] sm:$0xf]
        %v1351 = vld [vmem:[%s276 + $0x24] sm:$0xf]
        %v1352 = vld [vmem:[%s276 + $0x28] sm:$0xf]
        %v1353 = vld [vmem:[%s276 + $0x2c] sm:$0xf]
        %v1354 = vld [vmem:[%s276 + $0x30] sm:$0xf]
        %v1355 = vld [vmem:[%s276 + $0x34] sm:$0xf]
        %v1356 = vld [vmem:[%s276 + $0x38] sm:$0xf]
        %v1357 = vld [vmem:[%s276 + $0x3c] sm:$0xf]
        %v1358 = vld [vmem:[%s276 + $0x40] sm:$0xf]
        %v1359 = vld [vmem:[%s276 + $0x44] sm:$0xf]
        %v1360 = vld [vmem:[%s276 + $0x48] sm:$0xf]
        %v1361 = vld [vmem:[%s276 + $0x4c] sm:$0xf]
        %v1362 = vld [vmem:[%s276 + $0x50] sm:$0xf]
        %v1363 = vld [vmem:[%s276 + $0x54] sm:$0xf]
        %v1364 = vld [vmem:[%s276 + $0x58] sm:$0xf]
        %v1365 = vld [vmem:[%s276 + $0x5c] sm:$0xf]
        %v1366 = vld [vmem:[%s276 + $0x60] sm:$0xf]
        %v1367 = vld [vmem:[%s276 + $0x64] sm:$0xf]
        %v1368 = vld [vmem:[%s276 + $0x68] sm:$0xf]
        %v1369 = vld [vmem:[%s276 + $0x6c] sm:$0xf]
        %v1370 = vld [vmem:[%s276 + $0x70] sm:$0xf]
        %v1371 = vld [vmem:[%s276 + $0x74] sm:$0xf]
        %v1372 = vld [vmem:[%s276 + $0x78] sm:$0xf]
        %v1373 = vld [vmem:[%s276 + $0x7c] sm:$0xf]
        %v1374 = vld [vmem:[%s276 + $0x80] sm:$0xf]
        %v1375 = vld [vmem:[%s276 + $0x84] sm:$0xf]
        %v1376 = vld [vmem:[%s276 + $0x88] sm:$0xf]
        %v1377 = vld [vmem:[%s276 + $0x8c] sm:$0xf]
        %v1378 = vld [vmem:[%s276 + $0x90] sm:$0xf]
        %v1379 = vld [vmem:[%s276 + $0x94] sm:$0xf]
        %v1380 = vld [vmem:[%s276 + $0x98] sm:$0x1]
        %s1381 = scalar_lea.vmem %s1, 6
        %v1382 = vld [vmem:[%s1381] sm:$0x3]
        %v1420 = vunpack.c.l.b16 %v1344
        %v1421 = vunpack.c.l.b16 %v1345
        %v1422 = vunpack.c.l.b16 %v1346
        %v1423 = vunpack.c.l.b16 %v1347
        %v1424 = vunpack.c.l.b16 %v1348
        %v1425 = vunpack.c.l.b16 %v1349
        %v1426 = vunpack.c.l.b16 %v1350
        %v1427 = vunpack.c.l.b16 %v1351
        %v1428 = vunpack.c.l.b16 %v1352
        %v1429 = vunpack.c.l.b16 %v1353
        %v1430 = vunpack.c.l.b16 %v1354
        %v1431 = vunpack.c.l.b16 %v1355
        %v1432 = vunpack.c.l.b16 %v1356
        %v1433 = vunpack.c.l.b16 %v1357
        %v1434 = vunpack.c.l.b16 %v1358
        %v1435 = vunpack.c.l.b16 %v1359
        %v1436 = vunpack.c.l.b16 %v1360
        %v1437 = vunpack.c.l.b16 %v1361
        %v1438 = vunpack.c.l.b16 %v1362
        %v1439 = vunpack.c.l.b16 %v1363
        %v1440 = vunpack.c.l.b16 %v1364
        %v1441 = vunpack.c.l.b16 %v1365
        %v1442 = vunpack.c.l.b16 %v1366
        %v1443 = vunpack.c.l.b16 %v1367
        %v1444 = vunpack.c.l.b16 %v1368
        %v1445 = vunpack.c.l.b16 %v1369
        %v1446 = vunpack.c.l.b16 %v1370
        %v1447 = vunpack.c.l.b16 %v1371
        %v1448 = vunpack.c.l.b16 %v1372
        %v1449 = vunpack.c.l.b16 %v1373
        %v1450 = vunpack.c.l.b16 %v1374
        %v1451 = vunpack.c.l.b16 %v1375
        %v1452 = vunpack.c.l.b16 %v1376
        %v1453 = vunpack.c.l.b16 %v1377
        %v1454 = vunpack.c.l.b16 %v1378
        %v1455 = vunpack.c.l.b16 %v1379
        %v1456 = vunpack.c.l.b16 %v1380
        %v1457 = vpack.c.b16 %v1421, %v1420
        %v1458 = vpack.c.b16 %v1423, %v1422
        %v1459 = vpack.c.b16 %v1425, %v1424
        %v1460 = vpack.c.b16 %v1427, %v1426
        %v1461 = vpack.c.b16 %v1429, %v1428
        %v1462 = vpack.c.b16 %v1431, %v1430
        %v1463 = vpack.c.b16 %v1433, %v1432
        %v1464 = vpack.c.b16 %v1435, %v1434
        %v1465 = vpack.c.b16 %v1437, %v1436
        %v1466 = vpack.c.b16 %v1439, %v1438
        %v1467 = vpack.c.b16 %v1441, %v1440
        %v1468 = vpack.c.b16 %v1443, %v1442
        %v1469 = vpack.c.b16 %v1445, %v1444
        %v1470 = vpack.c.b16 %v1447, %v1446
        %v1471 = vpack.c.b16 %v1449, %v1448
        %v1472 = vpack.c.b16 %v1451, %v1450
        %v1473 = vpack.c.b16 %v1453, %v1452
        %v1474 = vpack.c.b16 %v1455, %v1454
        %v1475 = vpack.c.b16 %v1456, %v1456
        %v1476 = vrot.slane %v1457, 1
        %v1477 = vrot.slane %v1458, 1
        %v1478 = vsel %vm1036, %v1476, %v1477
        %v1479 = vrot.slane %v1459, 1
        %v1480 = vsel %vm1036, %v1477, %v1479
        %v1481 = vrot.slane %v1460, 1
        %v1482 = vsel %vm1036, %v1479, %v1481
        %v1483 = vrot.slane %v1461, 1
        %v1484 = vsel %vm1036, %v1481, %v1483
        %v1485 = vrot.slane %v1462, 1
        %v1486 = vsel %vm1036, %v1483, %v1485
        %v1487 = vrot.slane %v1463, 1
        %v1488 = vsel %vm1036, %v1485, %v1487
        %v1489 = vrot.slane %v1464, 1
        %v1490 = vsel %vm1036, %v1487, %v1489
        %v1491 = vrot.slane %v1465, 1
        %v1492 = vsel %vm1036, %v1489, %v1491
        %v1493 = vrot.slane %v1466, 1
        %v1494 = vsel %vm1036, %v1491, %v1493
        %v1495 = vrot.slane %v1467, 1
        %v1496 = vsel %vm1036, %v1493, %v1495
        %v1497 = vrot.slane %v1468, 1
        %v1498 = vsel %vm1036, %v1495, %v1497
        %v1499 = vrot.slane %v1469, 1
        %v1500 = vsel %vm1036, %v1497, %v1499
        %v1501 = vrot.slane %v1470, 1
        %v1502 = vsel %vm1036, %v1499, %v1501
        %v1503 = vrot.slane %v1471, 1
        %v1504 = vsel %vm1036, %v1501, %v1503
        %v1505 = vrot.slane %v1472, 1
        %v1506 = vsel %vm1036, %v1503, %v1505
        %v1507 = vrot.slane %v1473, 1
        %v1508 = vsel %vm1036, %v1505, %v1507
        %v1509 = vrot.slane %v1474, 1
        %v1510 = vsel %vm1036, %v1507, %v1509
        %v1511 = vrot.slane %v1475, 1
        %v1512 = vsel %vm1036, %v1509, %v1511
        %v1514 = vsel %vm575, %v1478, 0
        %v1517 = vsel %vm575, %v1480, 0
        %v1520 = vsel %vm575, %v1482, 0
        %v1523 = vsel %vm575, %v1484, 0
        %v1526 = vsel %vm575, %v1486, 0
        %v1529 = vsel %vm575, %v1488, 0
        %v1532 = vsel %vm575, %v1490, 0
        %v1535 = vsel %vm575, %v1492, 0
        %v1538 = vsel %vm575, %v1494, 0
        %v1541 = vsel %vm575, %v1496, 0
        %v1544 = vsel %vm575, %v1498, 0
        %v1547 = vsel %vm575, %v1500, 0
        %v1550 = vsel %vm575, %v1502, 0
        %v1553 = vsel %vm575, %v1504, 0
        %v1556 = vsel %vm575, %v1506, 0
        %v1559 = vsel %vm575, %v1508, 0
        %v1562 = vsel %vm575, %v1510, 0
        %v1565 = vsel %vm575, %v1512, 0
        %v1568 = vand.u32 %v1382, %v633
        %1570 = vmatprep.subr.bf16.mxu0 0
        %1571 = vmatpush1.bf16.msra.mxu0 %v1568
        %1572 = vmatprep.subr.bf16.mxu0 0
        %1573 = vmatpush1.bf16.msra.mxu0 0
        %1574 = vmatprep.subr.bf16.mxu0 0
        %1575 = vmatpush1.bf16.msra.mxu0 0
        %1576 = vmatprep.subr.bf16.mxu0 0
        %1577 = vmatpush1.bf16.msra.mxu0 0
        %1578 = vmatprep.subr.bf16.mxu0 0
        %1579 = vmatpush1.bf16.msra.mxu0 0
        %1580 = vmatprep.subr.bf16.mxu0 0
        %1581 = vmatpush1.bf16.msra.mxu0 0
        %1582 = vmatprep.subr.bf16.mxu0 0
        %1583 = vmatpush1.bf16.msra.mxu0 0
        %1584 = vmatprep.subr.bf16.mxu0 0
        %1585 = vmatpush1.bf16.msra.mxu0 0
        %1586 = vmatprep.subr.bf16.mxu0 0
        %1587 = vmatpush1.bf16.msra.mxu0 0
        %1588 = vmatprep.subr.bf16.mxu0 0
        %1589 = vmatpush1.bf16.msra.mxu0 0
        %1590 = vmatprep.subr.bf16.mxu0 0
        %1591 = vmatpush1.bf16.msra.mxu0 0
        %1592 = vmatprep.subr.bf16.mxu0 0
        %1593 = vmatpush1.bf16.msra.mxu0 0
        %1594 = vmatprep.subr.bf16.mxu0 0
        %1595 = vmatpush1.bf16.msra.mxu0 0
        %1596 = vmatprep.subr.bf16.mxu0 0
        %1597 = vmatpush1.bf16.msra.mxu0 0
        %1598 = vmatprep.subr.bf16.mxu0 0
        %1599 = vmatpush1.bf16.msra.mxu0 0
        %1600 = vmatprep.subr.bf16.mxu0 0
        %1601 = vmatpush1.bf16.msra.mxu0 0
        %1602 = vmatprep.mubr.bf16.mxu0 0
        %1603 = vmatmul.mubr.bf16.gmra.mrb[0].mxu0 %v1514
        %v1604 = vpop.f32.mrb[0].mxu0
        %v1605 = vadd.f32 0.0, %v1604
        %v1606 = vpop.f32.mrb[0].mxu0
        %v1607 = vpop.f32.mrb[0].mxu0
        %v1608 = vadd.f32 0.0, %v1607
        %v1609 = vpop.f32.mrb[0].mxu0
        %1610 = vmatprep.mubr.bf16.mxu0 0
        %1611 = vmatmul.mubr.bf16.gmra.mrb[0].mxu0 %v1517
        %v1612 = vpop.f32.mrb[0].mxu0
        %v1613 = vadd.f32 0.0, %v1612
        %v1614 = vpop.f32.mrb[0].mxu0
        %v1615 = vpop.f32.mrb[0].mxu0
        %v1616 = vadd.f32 0.0, %v1615
        %v1617 = vpop.f32.mrb[0].mxu0
        %1618 = vmatprep.mubr.bf16.mxu0 0
        %1619 = vmatmul.mubr.bf16.gmra.mrb[0].mxu0 %v1520
        %v1620 = vpop.f32.mrb[0].mxu0
        %v1621 = vadd.f32 0.0, %v1620
        %v1622 = vpop.f32.mrb[0].mxu0
        %v1623 = vpop.f32.mrb[0].mxu0
        %v1624 = vadd.f32 0.0, %v1623
        %v1625 = vpop.f32.mrb[0].mxu0
        %1626 = vmatprep.mubr.bf16.mxu0 0
        %1627 = vmatmul.mubr.bf16.gmra.mrb[0].mxu0 %v1523
        %v1628 = vpop.f32.mrb[0].mxu0
        %v1629 = vadd.f32 0.0, %v1628
        %v1630 = vpop.f32.mrb[0].mxu0
        %v1631 = vpop.f32.mrb[0].mxu0
        %v1632 = vadd.f32 0.0, %v1631
        %v1633 = vpop.f32.mrb[0].mxu0
        %1634 = vmatprep.mubr.bf16.mxu0 0
        %1635 = vmatmul.mubr.bf16.gmra.mrb[0].mxu0 %v1526
        %v1636 = vpop.f32.mrb[0].mxu0
        %v1637 = vadd.f32 0.0, %v1636
        %v1638 = vpop.f32.mrb[0].mxu0
        %v1639 = vpop.f32.mrb[0].mxu0
        %v1640 = vadd.f32 0.0, %v1639
        %v1641 = vpop.f32.mrb[0].mxu0
        %1642 = vmatprep.mubr.bf16.mxu0 0
        %1643 = vmatmul.mubr.bf16.gmra.mrb[0].mxu0 %v1529
        %v1644 = vpop.f32.mrb[0].mxu0
        %v1645 = vadd.f32 0.0, %v1644
        %v1646 = vpop.f32.mrb[0].mxu0
        %v1647 = vpop.f32.mrb[0].mxu0
        %v1648 = vadd.f32 0.0, %v1647
        %v1649 = vpop.f32.mrb[0].mxu0
        %1650 = vmatprep.mubr.bf16.mxu0 0
        %1651 = vmatmul.mubr.bf16.gmra.mrb[0].mxu0 %v1532
        %v1652 = vpop.f32.mrb[0].mxu0
        %v1653 = vadd.f32 0.0, %v1652
        %v1654 = vpop.f32.mrb[0].mxu0
        %v1655 = vpop.f32.mrb[0].mxu0
        %v1656 = vadd.f32 0.0, %v1655
        %v1657 = vpop.f32.mrb[0].mxu0
        %1658 = vmatprep.mubr.bf16.mxu0 0
        %1659 = vmatmul.mubr.bf16.gmra.mrb[0].mxu0 %v1535
        %v1660 = vpop.f32.mrb[0].mxu0
        %v1661 = vadd.f32 0.0, %v1660
        %v1662 = vpop.f32.mrb[0].mxu0
        %v1663 = vpop.f32.mrb[0].mxu0
        %v1664 = vadd.f32 0.0, %v1663
        %v1665 = vpop.f32.mrb[0].mxu0
        %1666 = vmatprep.mubr.bf16.mxu0 0
        %1667 = vmatmul.mubr.bf16.gmra.mrb[0].mxu0 %v1538
        %v1668 = vpop.f32.mrb[0].mxu0
        %v1669 = vadd.f32 0.0, %v1668
        %v1670 = vpop.f32.mrb[0].mxu0
        %v1671 = vpop.f32.mrb[0].mxu0
        %v1672 = vadd.f32 0.0, %v1671
        %v1673 = vpop.f32.mrb[0].mxu0
        %1674 = vmatprep.mubr.bf16.mxu0 0
        %1675 = vmatmul.mubr.bf16.gmra.mrb[0].mxu0 %v1541
        %v1676 = vpop.f32.mrb[0].mxu0
        %v1677 = vadd.f32 0.0, %v1676
        %v1678 = vpop.f32.mrb[0].mxu0
        %v1679 = vpop.f32.mrb[0].mxu0
        %v1680 = vadd.f32 0.0, %v1679
        %v1681 = vpop.f32.mrb[0].mxu0
        %1682 = vmatprep.mubr.bf16.mxu0 0
        %1683 = vmatmul.mubr.bf16.gmra.mrb[0].mxu0 %v1544
        %v1684 = vpop.f32.mrb[0].mxu0
        %v1685 = vadd.f32 0.0, %v1684
        %v1686 = vpop.f32.mrb[0].mxu0
        %v1687 = vpop.f32.mrb[0].mxu0
        %v1688 = vadd.f32 0.0, %v1687
        %v1689 = vpop.f32.mrb[0].mxu0
        %1690 = vmatprep.mubr.bf16.mxu0 0
        %1691 = vmatmul.mubr.bf16.gmra.mrb[0].mxu0 %v1547
        %v1692 = vpop.f32.mrb[0].mxu0
        %v1693 = vadd.f32 0.0, %v1692
        %v1694 = vpop.f32.mrb[0].mxu0
        %v1695 = vpop.f32.mrb[0].mxu0
        %v1696 = vadd.f32 0.0, %v1695
        %v1697 = vpop.f32.mrb[0].mxu0
        %1698 = vmatprep.mubr.bf16.mxu0 0
        %1699 = vmatmul.mubr.bf16.gmra.mrb[0].mxu0 %v1550
        %v1700 = vpop.f32.mrb[0].mxu0
        %v1701 = vadd.f32 0.0, %v1700
        %v1702 = vpop.f32.mrb[0].mxu0
        %v1703 = vpop.f32.mrb[0].mxu0
        %v1704 = vadd.f32 0.0, %v1703
        %v1705 = vpop.f32.mrb[0].mxu0
        %1706 = vmatprep.mubr.bf16.mxu0 0
        %1707 = vmatmul.mubr.bf16.gmra.mrb[0].mxu0 %v1553
        %v1708 = vpop.f32.mrb[0].mxu0
        %v1709 = vadd.f32 0.0, %v1708
        %v1710 = vpop.f32.mrb[0].mxu0
        %v1711 = vpop.f32.mrb[0].mxu0
        %v1712 = vadd.f32 0.0, %v1711
        %v1713 = vpop.f32.mrb[0].mxu0
        %1714 = vmatprep.mubr.bf16.mxu0 0
        %1715 = vmatmul.mubr.bf16.gmra.mrb[0].mxu0 %v1556
        %v1716 = vpop.f32.mrb[0].mxu0
        %v1717 = vadd.f32 0.0, %v1716
        %v1718 = vpop.f32.mrb[0].mxu0
        %v1719 = vpop.f32.mrb[0].mxu0
        %v1720 = vadd.f32 0.0, %v1719
        %v1721 = vpop.f32.mrb[0].mxu0
        %1722 = vmatprep.mubr.bf16.mxu0 0
        %1723 = vmatmul.mubr.bf16.gmra.mrb[0].mxu0 %v1559
        %v1724 = vpop.f32.mrb[0].mxu0
        %v1725 = vadd.f32 0.0, %v1724
        %v1726 = vpop.f32.mrb[0].mxu0
        %v1727 = vpop.f32.mrb[0].mxu0
        %v1728 = vadd.f32 0.0, %v1727
        %v1729 = vpop.f32.mrb[0].mxu0
        %1730 = vmatprep.mubr.bf16.mxu0 0
        %1731 = vmatmul.mubr.bf16.gmra.mrb[0].mxu0 %v1562
        %v1732 = vpop.f32.mrb[0].mxu0
        %v1733 = vadd.f32 0.0, %v1732
        %v1734 = vpop.f32.mrb[0].mxu0
        %v1735 = vpop.f32.mrb[0].mxu0
        %v1736 = vadd.f32 0.0, %v1735
        %v1737 = vpop.f32.mrb[0].mxu0
        %1738 = vmatprep.mubr.bf16.mxu0 0
        %1739 = vmatmul.mubr.bf16.gmra.mrb[0].mxu0 %v1565
        %v1740 = vpop.f32.mrb[0].mxu0
        %v1741 = vadd.f32 0.0, %v1740
        %v1742 = vpop.f32.mrb[0].mxu0
        %v1743 = vpop.f32.mrb[0].mxu0
        %v1744 = vadd.f32 0.0, %v1743
        %v1745 = vpop.f32.mrb[0].mxu0
        %1746 = vdwg.mxu0
        %v1747 = vadd.f32 %v1308, %v1605
        %v1748 = vadd.f32 %v1309, %v1608
        %v1749 = vadd.f32 %v1310, %v1613
        %v1750 = vadd.f32 %v1311, %v1616
        %v1751 = vadd.f32 %v1312, %v1621
        %v1752 = vadd.f32 %v1313, %v1624
        %v1753 = vadd.f32 %v1314, %v1629
        %v1754 = vadd.f32 %v1315, %v1632
        %v1755 = vadd.f32 %v1316, %v1637
        %v1756 = vadd.f32 %v1317, %v1640
        %v1757 = vadd.f32 %v1318, %v1645
        %v1758 = vadd.f32 %v1319, %v1648
        %v1759 = vadd.f32 %v1320, %v1653
        %v1760 = vadd.f32 %v1321, %v1656
        %v1761 = vadd.f32 %v1322, %v1661
        %v1762 = vadd.f32 %v1323, %v1664
        %v1763 = vadd.f32 %v1324, %v1669
        %v1764 = vadd.f32 %v1325, %v1672
        %v1765 = vadd.f32 %v1326, %v1677
        %v1766 = vadd.f32 %v1327, %v1680
        %v1767 = vadd.f32 %v1328, %v1685
        %v1768 = vadd.f32 %v1329, %v1688
        %v1769 = vadd.f32 %v1330, %v1693
        %v1770 = vadd.f32 %v1331, %v1696
        %v1771 = vadd.f32 %v1332, %v1701
        %v1772 = vadd.f32 %v1333, %v1704
        %v1773 = vadd.f32 %v1334, %v1709
        %v1774 = vadd.f32 %v1335, %v1712
        %v1775 = vadd.f32 %v1336, %v1717
        %v1776 = vadd.f32 %v1337, %v1720
        %v1777 = vadd.f32 %v1338, %v1725
        %v1778 = vadd.f32 %v1339, %v1728
        %v1779 = vadd.f32 %v1340, %v1733
        %v1780 = vadd.f32 %v1341, %v1736
        %v1781 = vadd.f32 %v1342, %v1741
        %v1782 = vadd.f32 %v1343, %v1744
        %v1783 = vld [vmem:[%s276 + $0x98] sm:$0x3]
        %s1784 = scalar_lea.vmem %s1, 8
        %v1785 = vld [vmem:[%s1784] sm:$0x3]
        %v1787 = vunpack.c.l.b16 %v1783
        %v1788 = vpack.c.b16 %v1787, %v1787
        %vm1789 = vsmask.f32 6400
        %v1791 = vshrl.u32 %v1457, 16
        %v1793 = vrot.slane %v1791, 1
        %v1794 = vshll.u32 %v1457, 16
        %v1796 = vrot.slane %v1794, 2
        %v1797 = vor.u32 %v1793, %v1796
        %v1799 = vshrl.u32 %v1458, 16
        %v1801 = vrot.slane %v1799, 1
        %v1802 = vshll.u32 %v1458, 16
        %v1804 = vrot.slane %v1802, 2
        %v1805 = vor.u32 %v1801, %v1804
        %v1806 = vsel %vm1789, %v1797, %v1805
        %v1808 = vshrl.u32 %v1459, 16
        %v1810 = vrot.slane %v1808, 1
        %v1811 = vshll.u32 %v1459, 16
        %v1813 = vrot.slane %v1811, 2
        %v1814 = vor.u32 %v1810, %v1813
        %v1815 = vsel %vm1789, %v1805, %v1814
        %v1817 = vshrl.u32 %v1460, 16
        %v1819 = vrot.slane %v1817, 1
        %v1820 = vshll.u32 %v1460, 16
        %v1822 = vrot.slane %v1820, 2
        %v1823 = vor.u32 %v1819, %v1822
        %v1824 = vsel %vm1789, %v1814, %v1823
        %v1826 = vshrl.u32 %v1461, 16
        %v1828 = vrot.slane %v1826, 1
        %v1829 = vshll.u32 %v1461, 16
        %v1831 = vrot.slane %v1829, 2
        %v1832 = vor.u32 %v1828, %v1831
        %v1833 = vsel %vm1789, %v1823, %v1832
        %v1835 = vshrl.u32 %v1462, 16
        %v1837 = vrot.slane %v1835, 1
        %v1838 = vshll.u32 %v1462, 16
        %v1840 = vrot.slane %v1838, 2
        %v1841 = vor.u32 %v1837, %v1840
        %v1842 = vsel %vm1789, %v1832, %v1841
        %v1844 = vshrl.u32 %v1463, 16
        %v1846 = vrot.slane %v1844, 1
        %v1847 = vshll.u32 %v1463, 16
        %v1849 = vrot.slane %v1847, 2
        %v1850 = vor.u32 %v1846, %v1849
        %v1851 = vsel %vm1789, %v1841, %v1850
        %v1853 = vshrl.u32 %v1464, 16
        %v1855 = vrot.slane %v1853, 1
        %v1856 = vshll.u32 %v1464, 16
        %v1858 = vrot.slane %v1856, 2
        %v1859 = vor.u32 %v1855, %v1858
        %v1860 = vsel %vm1789, %v1850, %v1859
        %v1862 = vshrl.u32 %v1465, 16
        %v1864 = vrot.slane %v1862, 1
        %v1865 = vshll.u32 %v1465, 16
        %v1867 = vrot.slane %v1865, 2
        %v1868 = vor.u32 %v1864, %v1867
        %v1869 = vsel %vm1789, %v1859, %v1868
        %v1871 = vshrl.u32 %v1466, 16
        %v1873 = vrot.slane %v1871, 1
        %v1874 = vshll.u32 %v1466, 16
        %v1876 = vrot.slane %v1874, 2
        %v1877 = vor.u32 %v1873, %v1876
        %v1878 = vsel %vm1789, %v1868, %v1877
        %v1880 = vshrl.u32 %v1467, 16
        %v1882 = vrot.slane %v1880, 1
        %v1883 = vshll.u32 %v1467, 16
        %v1885 = vrot.slane %v1883, 2
        %v1886 = vor.u32 %v1882, %v1885
        %v1887 = vsel %vm1789, %v1877, %v1886
        %v1889 = vshrl.u32 %v1468, 16
        %v1891 = vrot.slane %v1889, 1
        %v1892 = vshll.u32 %v1468, 16
        %v1894 = vrot.slane %v1892, 2
        %v1895 = vor.u32 %v1891, %v1894
        %v1896 = vsel %vm1789, %v1886, %v1895
        %v1898 = vshrl.u32 %v1469, 16
        %v1900 = vrot.slane %v1898, 1
        %v1901 = vshll.u32 %v1469, 16
        %v1903 = vrot.slane %v1901, 2
        %v1904 = vor.u32 %v1900, %v1903
        %v1905 = vsel %vm1789, %v1895, %v1904
        %v1907 = vshrl.u32 %v1470, 16
        %v1909 = vrot.slane %v1907, 1
        %v1910 = vshll.u32 %v1470, 16
        %v1912 = vrot.slane %v1910, 2
        %v1913 = vor.u32 %v1909, %v1912
        %v1914 = vsel %vm1789, %v1904, %v1913
        %v1916 = vshrl.u32 %v1471, 16
        %v1918 = vrot.slane %v1916, 1
        %v1919 = vshll.u32 %v1471, 16
        %v1921 = vrot.slane %v1919, 2
        %v1922 = vor.u32 %v1918, %v1921
        %v1923 = vsel %vm1789, %v1913, %v1922
        %v1925 = vshrl.u32 %v1472, 16
        %v1927 = vrot.slane %v1925, 1
        %v1928 = vshll.u32 %v1472, 16
        %v1930 = vrot.slane %v1928, 2
        %v1931 = vor.u32 %v1927, %v1930
        %v1932 = vsel %vm1789, %v1922, %v1931
        %v1934 = vshrl.u32 %v1473, 16
        %v1936 = vrot.slane %v1934, 1
        %v1937 = vshll.u32 %v1473, 16
        %v1939 = vrot.slane %v1937, 2
        %v1940 = vor.u32 %v1936, %v1939
        %v1941 = vsel %vm1789, %v1931, %v1940
        %v1943 = vshrl.u32 %v1474, 16
        %v1945 = vrot.slane %v1943, 1
        %v1946 = vshll.u32 %v1474, 16
        %v1948 = vrot.slane %v1946, 2
        %v1949 = vor.u32 %v1945, %v1948
        %v1950 = vsel %vm1789, %v1940, %v1949
        %v1952 = vshrl.u32 %v1788, 16
        %v1954 = vrot.slane %v1952, 1
        %v1955 = vshll.u32 %v1788, 16
        %v1957 = vrot.slane %v1955, 2
        %v1958 = vor.u32 %v1954, %v1957
        %v1959 = vsel %vm1789, %v1949, %v1958
        %v1961 = vsel %vm575, %v1806, 0
        %v1964 = vsel %vm575, %v1815, 0
        %v1967 = vsel %vm575, %v1824, 0
        %v1970 = vsel %vm575, %v1833, 0
        %v1973 = vsel %vm575, %v1842, 0
        %v1976 = vsel %vm575, %v1851, 0
        %v1979 = vsel %vm575, %v1860, 0
        %v1982 = vsel %vm575, %v1869, 0
        %v1985 = vsel %vm575, %v1878, 0
        %v1988 = vsel %vm575, %v1887, 0
        %v1991 = vsel %vm575, %v1896, 0
        %v1994 = vsel %vm575, %v1905, 0
        %v1997 = vsel %vm575, %v1914, 0
        %v2000 = vsel %vm575, %v1923, 0
        %v2003 = vsel %vm575, %v1932, 0
        %v2006 = vsel %vm575, %v1941, 0
        %v2009 = vsel %vm575, %v1950, 0
        %v2012 = vsel %vm575, %v1959, 0
        %v2015 = vand.u32 %v1785, %v633
        %2017 = vmatprep.subr.bf16.mxu0 0
        %2018 = vmatpush1.bf16.msra.mxu0 %v2015
        %2019 = vmatprep.subr.bf16.mxu0 0
        %2020 = vmatpush1.bf16.msra.mxu0 0
        %2021 = vmatprep.subr.bf16.mxu0 0
        %2022 = vmatpush1.bf16.msra.mxu0 0
        %2023 = vmatprep.subr.bf16.mxu0 0
        %2024 = vmatpush1.bf16.msra.mxu0 0
        %2025 = vmatprep.subr.bf16.mxu0 0
        %2026 = vmatpush1.bf16.msra.mxu0 0
        %2027 = vmatprep.subr.bf16.mxu0 0
        %2028 = vmatpush1.bf16.msra.mxu0 0
        %2029 = vmatprep.subr.bf16.mxu0 0
        %2030 = vmatpush1.bf16.msra.mxu0 0
        %2031 = vmatprep.subr.bf16.mxu0 0
        %2032 = vmatpush1.bf16.msra.mxu0 0
        %2033 = vmatprep.subr.bf16.mxu0 0
        %2034 = vmatpush1.bf16.msra.mxu0 0
        %2035 = vmatprep.subr.bf16.mxu0 0
        %2036 = vmatpush1.bf16.msra.mxu0 0
        %2037 = vmatprep.subr.bf16.mxu0 0
        %2038 = vmatpush1.bf16.msra.mxu0 0
        %2039 = vmatprep.subr.bf16.mxu0 0
        %2040 = vmatpush1.bf16.msra.mxu0 0
        %2041 = vmatprep.subr.bf16.mxu0 0
        %2042 = vmatpush1.bf16.msra.mxu0 0
        %2043 = vmatprep.subr.bf16.mxu0 0
        %2044 = vmatpush1.bf16.msra.mxu0 0
        %2045 = vmatprep.subr.bf16.mxu0 0
        %2046 = vmatpush1.bf16.msra.mxu0 0
        %2047 = vmatprep.subr.bf16.mxu0 0
        %2048 = vmatpush1.bf16.msra.mxu0 0
        %2049 = vmatprep.mubr.bf16.mxu0 0
        %2050 = vmatmul.mubr.bf16.gmra.mrb[0].mxu0 %v1961
        %v2051 = vpop.f32.mrb[0].mxu0
        %v2052 = vadd.f32 0.0, %v2051
        %v2053 = vpop.f32.mrb[0].mxu0
        %v2054 = vpop.f32.mrb[0].mxu0
        %v2055 = vadd.f32 0.0, %v2054
        %v2056 = vpop.f32.mrb[0].mxu0
        %2057 = vmatprep.mubr.bf16.mxu0 0
        %2058 = vmatmul.mubr.bf16.gmra.mrb[0].mxu0 %v1964
        %v2059 = vpop.f32.mrb[0].mxu0
        %v2060 = vadd.f32 0.0, %v2059
        %v2061 = vpop.f32.mrb[0].mxu0
        %v2062 = vpop.f32.mrb[0].mxu0
        %v2063 = vadd.f32 0.0, %v2062
        %v2064 = vpop.f32.mrb[0].mxu0
        %2065 = vmatprep.mubr.bf16.mxu0 0
        %2066 = vmatmul.mubr.bf16.gmra.mrb[0].mxu0 %v1967
        %v2067 = vpop.f32.mrb[0].mxu0
        %v2068 = vadd.f32 0.0, %v2067
        %v2069 = vpop.f32.mrb[0].mxu0
        %v2070 = vpop.f32.mrb[0].mxu0
        %v2071 = vadd.f32 0.0, %v2070
        %v2072 = vpop.f32.mrb[0].mxu0
        %2073 = vmatprep.mubr.bf16.mxu0 0
        %2074 = vmatmul.mubr.bf16.gmra.mrb[0].mxu0 %v1970
        %v2075 = vpop.f32.mrb[0].mxu0
        %v2076 = vadd.f32 0.0, %v2075
        %v2077 = vpop.f32.mrb[0].mxu0
        %v2078 = vpop.f32.mrb[0].mxu0
        %v2079 = vadd.f32 0.0, %v2078
        %v2080 = vpop.f32.mrb[0].mxu0
        %2081 = vmatprep.mubr.bf16.mxu0 0
        %2082 = vmatmul.mubr.bf16.gmra.mrb[0].mxu0 %v1973
        %v2083 = vpop.f32.mrb[0].mxu0
        %v2084 = vadd.f32 0.0, %v2083
        %v2085 = vpop.f32.mrb[0].mxu0
        %v2086 = vpop.f32.mrb[0].mxu0
        %v2087 = vadd.f32 0.0, %v2086
        %v2088 = vpop.f32.mrb[0].mxu0
        %2089 = vmatprep.mubr.bf16.mxu0 0
        %2090 = vmatmul.mubr.bf16.gmra.mrb[0].mxu0 %v1976
        %v2091 = vpop.f32.mrb[0].mxu0
        %v2092 = vadd.f32 0.0, %v2091
        %v2093 = vpop.f32.mrb[0].mxu0
        %v2094 = vpop.f32.mrb[0].mxu0
        %v2095 = vadd.f32 0.0, %v2094
        %v2096 = vpop.f32.mrb[0].mxu0
        %2097 = vmatprep.mubr.bf16.mxu0 0
        %2098 = vmatmul.mubr.bf16.gmra.mrb[0].mxu0 %v1979
        %v2099 = vpop.f32.mrb[0].mxu0
        %v2100 = vadd.f32 0.0, %v2099
        %v2101 = vpop.f32.mrb[0].mxu0
        %v2102 = vpop.f32.mrb[0].mxu0
        %v2103 = vadd.f32 0.0, %v2102
        %v2104 = vpop.f32.mrb[0].mxu0
        %2105 = vmatprep.mubr.bf16.mxu0 0
        %2106 = vmatmul.mubr.bf16.gmra.mrb[0].mxu0 %v1982
        %v2107 = vpop.f32.mrb[0].mxu0
        %v2108 = vadd.f32 0.0, %v2107
        %v2109 = vpop.f32.mrb[0].mxu0
        %v2110 = vpop.f32.mrb[0].mxu0
        %v2111 = vadd.f32 0.0, %v2110
        %v2112 = vpop.f32.mrb[0].mxu0
        %2113 = vmatprep.mubr.bf16.mxu0 0
        %2114 = vmatmul.mubr.bf16.gmra.mrb[0].mxu0 %v1985
        %v2115 = vpop.f32.mrb[0].mxu0
        %v2116 = vadd.f32 0.0, %v2115
        %v2117 = vpop.f32.mrb[0].mxu0
        %v2118 = vpop.f32.mrb[0].mxu0
        %v2119 = vadd.f32 0.0, %v2118
        %v2120 = vpop.f32.mrb[0].mxu0
        %2121 = vmatprep.mubr.bf16.mxu0 0
        %2122 = vmatmul.mubr.bf16.gmra.mrb[0].mxu0 %v1988
        %v2123 = vpop.f32.mrb[0].mxu0
        %v2124 = vadd.f32 0.0, %v2123
        %v2125 = vpop.f32.mrb[0].mxu0
        %v2126 = vpop.f32.mrb[0].mxu0
        %v2127 = vadd.f32 0.0, %v2126
        %v2128 = vpop.f32.mrb[0].mxu0
        %2129 = vmatprep.mubr.bf16.mxu0 0
        %2130 = vmatmul.mubr.bf16.gmra.mrb[0].mxu0 %v1991
        %v2131 = vpop.f32.mrb[0].mxu0
        %v2132 = vadd.f32 0.0, %v2131
        %v2133 = vpop.f32.mrb[0].mxu0
        %v2134 = vpop.f32.mrb[0].mxu0
        %v2135 = vadd.f32 0.0, %v2134
        %v2136 = vpop.f32.mrb[0].mxu0
        %2137 = vmatprep.mubr.bf16.mxu0 0
        %2138 = vmatmul.mubr.bf16.gmra.mrb[0].mxu0 %v1994
        %v2139 = vpop.f32.mrb[0].mxu0
        %v2140 = vadd.f32 0.0, %v2139
        %v2141 = vpop.f32.mrb[0].mxu0
        %v2142 = vpop.f32.mrb[0].mxu0
        %v2143 = vadd.f32 0.0, %v2142
        %v2144 = vpop.f32.mrb[0].mxu0
        %2145 = vmatprep.mubr.bf16.mxu0 0
        %2146 = vmatmul.mubr.bf16.gmra.mrb[0].mxu0 %v1997
        %v2147 = vpop.f32.mrb[0].mxu0
        %v2148 = vadd.f32 0.0, %v2147
        %v2149 = vpop.f32.mrb[0].mxu0
        %v2150 = vpop.f32.mrb[0].mxu0
        %v2151 = vadd.f32 0.0, %v2150
        %v2152 = vpop.f32.mrb[0].mxu0
        %2153 = vmatprep.mubr.bf16.mxu0 0
        %2154 = vmatmul.mubr.bf16.gmra.mrb[0].mxu0 %v2000
        %v2155 = vpop.f32.mrb[0].mxu0
        %v2156 = vadd.f32 0.0, %v2155
        %v2157 = vpop.f32.mrb[0].mxu0
        %v2158 = vpop.f32.mrb[0].mxu0
        %v2159 = vadd.f32 0.0, %v2158
        %v2160 = vpop.f32.mrb[0].mxu0
        %2161 = vmatprep.mubr.bf16.mxu0 0
        %2162 = vmatmul.mubr.bf16.gmra.mrb[0].mxu0 %v2003
        %v2163 = vpop.f32.mrb[0].mxu0
        %v2164 = vadd.f32 0.0, %v2163
        %v2165 = vpop.f32.mrb[0].mxu0
        %v2166 = vpop.f32.mrb[0].mxu0
        %v2167 = vadd.f32 0.0, %v2166
        %v2168 = vpop.f32.mrb[0].mxu0
        %2169 = vmatprep.mubr.bf16.mxu0 0
        %2170 = vmatmul.mubr.bf16.gmra.mrb[0].mxu0 %v2006
        %v2171 = vpop.f32.mrb[0].mxu0
        %v2172 = vadd.f32 0.0, %v2171
        %v2173 = vpop.f32.mrb[0].mxu0
        %v2174 = vpop.f32.mrb[0].mxu0
        %v2175 = vadd.f32 0.0, %v2174
        %v2176 = vpop.f32.mrb[0].mxu0
        %2177 = vmatprep.mubr.bf16.mxu0 0
        %2178 = vmatmul.mubr.bf16.gmra.mrb[0].mxu0 %v2009
        %v2179 = vpop.f32.mrb[0].mxu0
        %v2180 = vadd.f32 0.0, %v2179
        %v2181 = vpop.f32.mrb[0].mxu0
        %v2182 = vpop.f32.mrb[0].mxu0
        %v2183 = vadd.f32 0.0, %v2182
        %v2184 = vpop.f32.mrb[0].mxu0
        %2185 = vmatprep.mubr.bf16.mxu0 0
        %2186 = vmatmul.mubr.bf16.gmra.mrb[0].mxu0 %v2012
        %v2187 = vpop.f32.mrb[0].mxu0
        %v2188 = vadd.f32 0.0, %v2187
        %v2189 = vpop.f32.mrb[0].mxu0
        %v2190 = vpop.f32.mrb[0].mxu0
        %v2191 = vadd.f32 0.0, %v2190
        %v2192 = vpop.f32.mrb[0].mxu0
        %2193 = vdwg.mxu0
        %v2194 = vadd.f32 %v1747, %v2052
        %v2195 = vadd.f32 %v1748, %v2055
        %v2196 = vadd.f32 %v1749, %v2060
        %v2197 = vadd.f32 %v1750, %v2063
        %v2198 = vadd.f32 %v1751, %v2068
        %v2199 = vadd.f32 %v1752, %v2071
        %v2200 = vadd.f32 %v1753, %v2076
        %v2201 = vadd.f32 %v1754, %v2079
        %v2202 = vadd.f32 %v1755, %v2084
        %v2203 = vadd.f32 %v1756, %v2087
        %v2204 = vadd.f32 %v1757, %v2092
        %v2205 = vadd.f32 %v1758, %v2095
        %v2206 = vadd.f32 %v1759, %v2100
        %v2207 = vadd.f32 %v1760, %v2103
        %v2208 = vadd.f32 %v1761, %v2108
        %v2209 = vadd.f32 %v1762, %v2111
        %v2210 = vadd.f32 %v1763, %v2116
        %v2211 = vadd.f32 %v1764, %v2119
        %v2212 = vadd.f32 %v1765, %v2124
        %v2213 = vadd.f32 %v1766, %v2127
        %v2214 = vadd.f32 %v1767, %v2132
        %v2215 = vadd.f32 %v1768, %v2135
        %v2216 = vadd.f32 %v1769, %v2140
        %v2217 = vadd.f32 %v1770, %v2143
        %v2218 = vadd.f32 %v1771, %v2148
        %v2219 = vadd.f32 %v1772, %v2151
        %v2220 = vadd.f32 %v1773, %v2156
        %v2221 = vadd.f32 %v1774, %v2159
        %v2222 = vadd.f32 %v1775, %v2164
        %v2223 = vadd.f32 %v1776, %v2167
        %v2224 = vadd.f32 %v1777, %v2172
        %v2225 = vadd.f32 %v1778, %v2175
        %v2226 = vadd.f32 %v1779, %v2180
        %v2227 = vadd.f32 %v1780, %v2183
        %v2228 = vadd.f32 %v1781, %v2188
        %v2229 = vadd.f32 %v1782, %v2191
        %v2230 = vld [vmem:[%s276 + $0x8] sm:$0xc]
        %s2231 = scalar_lea.vmem %s1, 10
        %v2232 = vld [vmem:[%s2231] sm:$0x3]
        %v2234 = vunpack.c.l.b16 %v2230
        %v2235 = vpack.c.b16 %v1421, %v2234
        %vm2236 = vcmask 1045504
        %v2237 = vrot.slane %v2235, 2
        %v2238 = vrot.slane %v1458, 2
        %v2239 = vsel %vm2236, %v2237, %v2238
        %v2240 = vrot.slane %v1459, 2
        %v2241 = vsel %vm2236, %v2238, %v2240
        %v2242 = vrot.slane %v1460, 2
        %v2243 = vsel %vm2236, %v2240, %v2242
        %v2244 = vrot.slane %v1461, 2
        %v2245 = vsel %vm2236, %v2242, %v2244
        %v2246 = vrot.slane %v1462, 2
        %v2247 = vsel %vm2236, %v2244, %v2246
        %v2248 = vrot.slane %v1463, 2
        %v2249 = vsel %vm2236, %v2246, %v2248
        %v2250 = vrot.slane %v1464, 2
        %v2251 = vsel %vm2236, %v2248, %v2250
        %v2252 = vrot.slane %v1465, 2
        %v2253 = vsel %vm2236, %v2250, %v2252
        %v2254 = vrot.slane %v1466, 2
        %v2255 = vsel %vm2236, %v2252, %v2254
        %v2256 = vrot.slane %v1467, 2
        %v2257 = vsel %vm2236, %v2254, %v2256
        %v2258 = vrot.slane %v1468, 2
        %v2259 = vsel %vm2236, %v2256, %v2258
        %v2260 = vrot.slane %v1469, 2
        %v2261 = vsel %vm2236, %v2258, %v2260
        %v2262 = vrot.slane %v1470, 2
        %v2263 = vsel %vm2236, %v2260, %v2262
        %v2264 = vrot.slane %v1471, 2
        %v2265 = vsel %vm2236, %v2262, %v2264
        %v2266 = vrot.slane %v1472, 2
        %v2267 = vsel %vm2236, %v2264, %v2266
        %v2268 = vrot.slane %v1473, 2
        %v2269 = vsel %vm2236, %v2266, %v2268
        %v2270 = vrot.slane %v1474, 2
        %v2271 = vsel %vm2236, %v2268, %v2270
        %v2272 = vrot.slane %v1788, 2
        %v2273 = vsel %vm2236, %v2270, %v2272
        %v2275 = vsel %vm575, %v2239, 0
        %v2278 = vsel %vm575, %v2241, 0
        %v2281 = vsel %vm575, %v2243, 0
        %v2284 = vsel %vm575, %v2245, 0
        %v2287 = vsel %vm575, %v2247, 0
        %v2290 = vsel %vm575, %v2249, 0
        %v2293 = vsel %vm575, %v2251, 0
        %v2296 = vsel %vm575, %v2253, 0
        %v2299 = vsel %vm575, %v2255, 0
        %v2302 = vsel %vm575, %v2257, 0
        %v2305 = vsel %vm575, %v2259, 0
        %v2308 = vsel %vm575, %v2261, 0
        %v2311 = vsel %vm575, %v2263, 0
        %v2314 = vsel %vm575, %v2265, 0
        %v2317 = vsel %vm575, %v2267, 0
        %v2320 = vsel %vm575, %v2269, 0
        %v2323 = vsel %vm575, %v2271, 0
        %v2326 = vsel %vm575, %v2273, 0
        %v2329 = vand.u32 %v2232, %v633
        %2331 = vmatprep.subr.bf16.mxu0 0
        %2332 = vmatpush1.bf16.msra.mxu0 %v2329
        %2333 = vmatprep.subr.bf16.mxu0 0
        %2334 = vmatpush1.bf16.msra.mxu0 0
        %2335 = vmatprep.subr.bf16.mxu0 0
        %2336 = vmatpush1.bf16.msra.mxu0 0
        %2337 = vmatprep.subr.bf16.mxu0 0
        %2338 = vmatpush1.bf16.msra.mxu0 0
        %2339 = vmatprep.subr.bf16.mxu0 0
        %2340 = vmatpush1.bf16.msra.mxu0 0
        %2341 = vmatprep.subr.bf16.mxu0 0
        %2342 = vmatpush1.bf16.msra.mxu0 0
        %2343 = vmatprep.subr.bf16.mxu0 0
        %2344 = vmatpush1.bf16.msra.mxu0 0
        %2345 = vmatprep.subr.bf16.mxu0 0
        %2346 = vmatpush1.bf16.msra.mxu0 0
        %2347 = vmatprep.subr.bf16.mxu0 0
        %2348 = vmatpush1.bf16.msra.mxu0 0
        %2349 = vmatprep.subr.bf16.mxu0 0
        %2350 = vmatpush1.bf16.msra.mxu0 0
        %2351 = vmatprep.subr.bf16.mxu0 0
        %2352 = vmatpush1.bf16.msra.mxu0 0
        %2353 = vmatprep.subr.bf16.mxu0 0
        %2354 = vmatpush1.bf16.msra.mxu0 0
        %2355 = vmatprep.subr.bf16.mxu0 0
        %2356 = vmatpush1.bf16.msra.mxu0 0
        %2357 = vmatprep.subr.bf16.mxu0 0
        %2358 = vmatpush1.bf16.msra.mxu0 0
        %2359 = vmatprep.subr.bf16.mxu0 0
        %2360 = vmatpush1.bf16.msra.mxu0 0
        %2361 = vmatprep.subr.bf16.mxu0 0
        %2362 = vmatpush1.bf16.msra.mxu0 0
        %2363 = vmatprep.mubr.bf16.mxu0 0
        %2364 = vmatmul.mubr.bf16.gmra.mrb[0].mxu0 %v2275
        %v2365 = vpop.f32.mrb[0].mxu0
        %v2366 = vadd.f32 0.0, %v2365
        %v2367 = vpop.f32.mrb[0].mxu0
        %v2368 = vpop.f32.mrb[0].mxu0
        %v2369 = vadd.f32 0.0, %v2368
        %v2370 = vpop.f32.mrb[0].mxu0
        %2371 = vmatprep.mubr.bf16.mxu0 0
        %2372 = vmatmul.mubr.bf16.gmra.mrb[0].mxu0 %v2278
        %v2373 = vpop.f32.mrb[0].mxu0
        %v2374 = vadd.f32 0.0, %v2373
        %v2375 = vpop.f32.mrb[0].mxu0
        %v2376 = vpop.f32.mrb[0].mxu0
        %v2377 = vadd.f32 0.0, %v2376
        %v2378 = vpop.f32.mrb[0].mxu0
        %2379 = vmatprep.mubr.bf16.mxu0 0
        %2380 = vmatmul.mubr.bf16.gmra.mrb[0].mxu0 %v2281
        %v2381 = vpop.f32.mrb[0].mxu0
        %v2382 = vadd.f32 0.0, %v2381
        %v2383 = vpop.f32.mrb[0].mxu0
        %v2384 = vpop.f32.mrb[0].mxu0
        %v2385 = vadd.f32 0.0, %v2384
        %v2386 = vpop.f32.mrb[0].mxu0
        %2387 = vmatprep.mubr.bf16.mxu0 0
        %2388 = vmatmul.mubr.bf16.gmra.mrb[0].mxu0 %v2284
        %v2389 = vpop.f32.mrb[0].mxu0
        %v2390 = vadd.f32 0.0, %v2389
        %v2391 = vpop.f32.mrb[0].mxu0
        %v2392 = vpop.f32.mrb[0].mxu0
        %v2393 = vadd.f32 0.0, %v2392
        %v2394 = vpop.f32.mrb[0].mxu0
        %2395 = vmatprep.mubr.bf16.mxu0 0
        %2396 = vmatmul.mubr.bf16.gmra.mrb[0].mxu0 %v2287
        %v2397 = vpop.f32.mrb[0].mxu0
        %v2398 = vadd.f32 0.0, %v2397
        %v2399 = vpop.f32.mrb[0].mxu0
        %v2400 = vpop.f32.mrb[0].mxu0
        %v2401 = vadd.f32 0.0, %v2400
        %v2402 = vpop.f32.mrb[0].mxu0
        %2403 = vmatprep.mubr.bf16.mxu0 0
        %2404 = vmatmul.mubr.bf16.gmra.mrb[0].mxu0 %v2290
        %v2405 = vpop.f32.mrb[0].mxu0
        %v2406 = vadd.f32 0.0, %v2405
        %v2407 = vpop.f32.mrb[0].mxu0
        %v2408 = vpop.f32.mrb[0].mxu0
        %v2409 = vadd.f32 0.0, %v2408
        %v2410 = vpop.f32.mrb[0].mxu0
        %2411 = vmatprep.mubr.bf16.mxu0 0
        %2412 = vmatmul.mubr.bf16.gmra.mrb[0].mxu0 %v2293
        %v2413 = vpop.f32.mrb[0].mxu0
        %v2414 = vadd.f32 0.0, %v2413
        %v2415 = vpop.f32.mrb[0].mxu0
        %v2416 = vpop.f32.mrb[0].mxu0
        %v2417 = vadd.f32 0.0, %v2416
        %v2418 = vpop.f32.mrb[0].mxu0
        %2419 = vmatprep.mubr.bf16.mxu0 0
        %2420 = vmatmul.mubr.bf16.gmra.mrb[0].mxu0 %v2296
        %v2421 = vpop.f32.mrb[0].mxu0
        %v2422 = vadd.f32 0.0, %v2421
        %v2423 = vpop.f32.mrb[0].mxu0
        %v2424 = vpop.f32.mrb[0].mxu0
        %v2425 = vadd.f32 0.0, %v2424
        %v2426 = vpop.f32.mrb[0].mxu0
        %2427 = vmatprep.mubr.bf16.mxu0 0
        %2428 = vmatmul.mubr.bf16.gmra.mrb[0].mxu0 %v2299
        %v2429 = vpop.f32.mrb[0].mxu0
        %v2430 = vadd.f32 0.0, %v2429
        %v2431 = vpop.f32.mrb[0].mxu0
        %v2432 = vpop.f32.mrb[0].mxu0
        %v2433 = vadd.f32 0.0, %v2432
        %v2434 = vpop.f32.mrb[0].mxu0
        %2435 = vmatprep.mubr.bf16.mxu0 0
        %2436 = vmatmul.mubr.bf16.gmra.mrb[0].mxu0 %v2302
        %v2437 = vpop.f32.mrb[0].mxu0
        %v2438 = vadd.f32 0.0, %v2437
        %v2439 = vpop.f32.mrb[0].mxu0
        %v2440 = vpop.f32.mrb[0].mxu0
        %v2441 = vadd.f32 0.0, %v2440
        %v2442 = vpop.f32.mrb[0].mxu0
        %2443 = vmatprep.mubr.bf16.mxu0 0
        %2444 = vmatmul.mubr.bf16.gmra.mrb[0].mxu0 %v2305
        %v2445 = vpop.f32.mrb[0].mxu0
        %v2446 = vadd.f32 0.0, %v2445
        %v2447 = vpop.f32.mrb[0].mxu0
        %v2448 = vpop.f32.mrb[0].mxu0
        %v2449 = vadd.f32 0.0, %v2448
        %v2450 = vpop.f32.mrb[0].mxu0
        %2451 = vmatprep.mubr.bf16.mxu0 0
        %2452 = vmatmul.mubr.bf16.gmra.mrb[0].mxu0 %v2308
        %v2453 = vpop.f32.mrb[0].mxu0
        %v2454 = vadd.f32 0.0, %v2453
        %v2455 = vpop.f32.mrb[0].mxu0
        %v2456 = vpop.f32.mrb[0].mxu0
        %v2457 = vadd.f32 0.0, %v2456
        %v2458 = vpop.f32.mrb[0].mxu0
        %2459 = vmatprep.mubr.bf16.mxu0 0
        %2460 = vmatmul.mubr.bf16.gmra.mrb[0].mxu0 %v2311
        %v2461 = vpop.f32.mrb[0].mxu0
        %v2462 = vadd.f32 0.0, %v2461
        %v2463 = vpop.f32.mrb[0].mxu0
        %v2464 = vpop.f32.mrb[0].mxu0
        %v2465 = vadd.f32 0.0, %v2464
        %v2466 = vpop.f32.mrb[0].mxu0
        %2467 = vmatprep.mubr.bf16.mxu0 0
        %2468 = vmatmul.mubr.bf16.gmra.mrb[0].mxu0 %v2314
        %v2469 = vpop.f32.mrb[0].mxu0
        %v2470 = vadd.f32 0.0, %v2469
        %v2471 = vpop.f32.mrb[0].mxu0
        %v2472 = vpop.f32.mrb[0].mxu0
        %v2473 = vadd.f32 0.0, %v2472
        %v2474 = vpop.f32.mrb[0].mxu0
        %2475 = vmatprep.mubr.bf16.mxu0 0
        %2476 = vmatmul.mubr.bf16.gmra.mrb[0].mxu0 %v2317
        %v2477 = vpop.f32.mrb[0].mxu0
        %v2478 = vadd.f32 0.0, %v2477
        %v2479 = vpop.f32.mrb[0].mxu0
        %v2480 = vpop.f32.mrb[0].mxu0
        %v2481 = vadd.f32 0.0, %v2480
        %v2482 = vpop.f32.mrb[0].mxu0
        %2483 = vmatprep.mubr.bf16.mxu0 0
        %2484 = vmatmul.mubr.bf16.gmra.mrb[0].mxu0 %v2320
        %v2485 = vpop.f32.mrb[0].mxu0
        %v2486 = vadd.f32 0.0, %v2485
        %v2487 = vpop.f32.mrb[0].mxu0
        %v2488 = vpop.f32.mrb[0].mxu0
        %v2489 = vadd.f32 0.0, %v2488
        %v2490 = vpop.f32.mrb[0].mxu0
        %2491 = vmatprep.mubr.bf16.mxu0 0
        %2492 = vmatmul.mubr.bf16.gmra.mrb[0].mxu0 %v2323
        %v2493 = vpop.f32.mrb[0].mxu0
        %v2494 = vadd.f32 0.0, %v2493
        %v2495 = vpop.f32.mrb[0].mxu0
        %v2496 = vpop.f32.mrb[0].mxu0
        %v2497 = vadd.f32 0.0, %v2496
        %v2498 = vpop.f32.mrb[0].mxu0
        %2499 = vmatprep.mubr.bf16.mxu0 0
        %2500 = vmatmul.mubr.bf16.gmra.mrb[0].mxu0 %v2326
        %v2501 = vpop.f32.mrb[0].mxu0
        %v2502 = vadd.f32 0.0, %v2501
        %v2503 = vpop.f32.mrb[0].mxu0
        %v2504 = vpop.f32.mrb[0].mxu0
        %v2505 = vadd.f32 0.0, %v2504
        %v2506 = vpop.f32.mrb[0].mxu0
        %2507 = vdwg.mxu0
        %v2508 = vadd.f32 %v2194, %v2366
        %v2509 = vadd.f32 %v2195, %v2369
        %v2510 = vadd.f32 %v2196, %v2374
        %v2511 = vadd.f32 %v2197, %v2377
        %v2512 = vadd.f32 %v2198, %v2382
        %v2513 = vadd.f32 %v2199, %v2385
        %v2514 = vadd.f32 %v2200, %v2390
        %v2515 = vadd.f32 %v2201, %v2393
        %v2516 = vadd.f32 %v2202, %v2398
        %v2517 = vadd.f32 %v2203, %v2401
        %v2518 = vadd.f32 %v2204, %v2406
        %v2519 = vadd.f32 %v2205, %v2409
        %v2520 = vadd.f32 %v2206, %v2414
        %v2521 = vadd.f32 %v2207, %v2417
        %v2522 = vadd.f32 %v2208, %v2422
        %v2523 = vadd.f32 %v2209, %v2425
        %v2524 = vadd.f32 %v2210, %v2430
        %v2525 = vadd.f32 %v2211, %v2433
        %v2526 = vadd.f32 %v2212, %v2438
        %v2527 = vadd.f32 %v2213, %v2441
        %v2528 = vadd.f32 %v2214, %v2446
        %v2529 = vadd.f32 %v2215, %v2449
        %v2530 = vadd.f32 %v2216, %v2454
        %v2531 = vadd.f32 %v2217, %v2457
        %v2532 = vadd.f32 %v2218, %v2462
        %v2533 = vadd.f32 %v2219, %v2465
        %v2534 = vadd.f32 %v2220, %v2470
        %v2535 = vadd.f32 %v2221, %v2473
        %v2536 = vadd.f32 %v2222, %v2478
        %v2537 = vadd.f32 %v2223, %v2481
        %v2538 = vadd.f32 %v2224, %v2486
        %v2539 = vadd.f32 %v2225, %v2489
        %v2540 = vadd.f32 %v2226, %v2494
        %v2541 = vadd.f32 %v2227, %v2497
        %v2542 = vadd.f32 %v2228, %v2502
        %v2543 = vadd.f32 %v2229, %v2505
        %v2544 = vld [vmem:[%s276 + $0x10] sm:$0xc]
        %v2545 = vld [vmem:[%s276 + $0x14] sm:$0xf]
        %v2546 = vld [vmem:[%s276 + $0x18] sm:$0xf]
        %v2547 = vld [vmem:[%s276 + $0x1c] sm:$0xf]
        %v2548 = vld [vmem:[%s276 + $0x20] sm:$0xf]
        %v2549 = vld [vmem:[%s276 + $0x24] sm:$0xf]
        %v2550 = vld [vmem:[%s276 + $0x28] sm:$0xf]
        %v2551 = vld [vmem:[%s276 + $0x2c] sm:$0xf]
        %v2552 = vld [vmem:[%s276 + $0x30] sm:$0xf]
        %v2553 = vld [vmem:[%s276 + $0x34] sm:$0xf]
        %v2554 = vld [vmem:[%s276 + $0x38] sm:$0xf]
        %v2555 = vld [vmem:[%s276 + $0x3c] sm:$0xf]
        %v2556 = vld [vmem:[%s276 + $0x40] sm:$0xf]
        %v2557 = vld [vmem:[%s276 + $0x44] sm:$0xf]
        %v2558 = vld [vmem:[%s276 + $0x48] sm:$0xf]
        %v2559 = vld [vmem:[%s276 + $0x4c] sm:$0xf]
        %v2560 = vld [vmem:[%s276 + $0x50] sm:$0xf]
        %v2561 = vld [vmem:[%s276 + $0x54] sm:$0xf]
        %v2562 = vld [vmem:[%s276 + $0x58] sm:$0xf]
        %v2563 = vld [vmem:[%s276 + $0x5c] sm:$0xf]
        %v2564 = vld [vmem:[%s276 + $0x60] sm:$0xf]
        %v2565 = vld [vmem:[%s276 + $0x64] sm:$0xf]
        %v2566 = vld [vmem:[%s276 + $0x68] sm:$0xf]
        %v2567 = vld [vmem:[%s276 + $0x6c] sm:$0xf]
        %v2568 = vld [vmem:[%s276 + $0x70] sm:$0xf]
        %v2569 = vld [vmem:[%s276 + $0x74] sm:$0xf]
        %v2570 = vld [vmem:[%s276 + $0x78] sm:$0xf]
        %v2571 = vld [vmem:[%s276 + $0x7c] sm:$0xf]
        %v2572 = vld [vmem:[%s276 + $0x80] sm:$0xf]
        %v2573 = vld [vmem:[%s276 + $0x84] sm:$0xf]
        %v2574 = vld [vmem:[%s276 + $0x88] sm:$0xf]
        %v2575 = vld [vmem:[%s276 + $0x8c] sm:$0xf]
        %v2576 = vld [vmem:[%s276 + $0x90] sm:$0xf]
        %v2577 = vld [vmem:[%s276 + $0x94] sm:$0xf]
        %v2578 = vld [vmem:[%s276 + $0x98] sm:$0xf]
        %v2579 = vld [vmem:[%s276 + $0x9c] sm:$0xf]
        %v2580 = vld [vmem:[%s276 + $0xa0] sm:$0x3]
        %s2581 = scalar_lea.vmem %s1, 12
        %v2582 = vld [vmem:[%s2581] sm:$0x3]
        %v2620 = vunpack.c.l.b16 %v2544
        %v2621 = vunpack.c.l.b16 %v2545
        %v2622 = vunpack.c.l.b16 %v2546
        %v2623 = vunpack.c.l.b16 %v2547
        %v2624 = vunpack.c.l.b16 %v2548
        %v2625 = vunpack.c.l.b16 %v2549
        %v2626 = vunpack.c.l.b16 %v2550
        %v2627 = vunpack.c.l.b16 %v2551
        %v2628 = vunpack.c.l.b16 %v2552
        %v2629 = vunpack.c.l.b16 %v2553
        %v2630 = vunpack.c.l.b16 %v2554
        %v2631 = vunpack.c.l.b16 %v2555
        %v2632 = vunpack.c.l.b16 %v2556
        %v2633 = vunpack.c.l.b16 %v2557
        %v2634 = vunpack.c.l.b16 %v2558
        %v2635 = vunpack.c.l.b16 %v2559
        %v2636 = vunpack.c.l.b16 %v2560
        %v2637 = vunpack.c.l.b16 %v2561
        %v2638 = vunpack.c.l.b16 %v2562
        %v2639 = vunpack.c.l.b16 %v2563
        %v2640 = vunpack.c.l.b16 %v2564
        %v2641 = vunpack.c.l.b16 %v2565
        %v2642 = vunpack.c.l.b16 %v2566
        %v2643 = vunpack.c.l.b16 %v2567
        %v2644 = vunpack.c.l.b16 %v2568
        %v2645 = vunpack.c.l.b16 %v2569
        %v2646 = vunpack.c.l.b16 %v2570
        %v2647 = vunpack.c.l.b16 %v2571
        %v2648 = vunpack.c.l.b16 %v2572
        %v2649 = vunpack.c.l.b16 %v2573
        %v2650 = vunpack.c.l.b16 %v2574
        %v2651 = vunpack.c.l.b16 %v2575
        %v2652 = vunpack.c.l.b16 %v2576
        %v2653 = vunpack.c.l.b16 %v2577
        %v2654 = vunpack.c.l.b16 %v2578
        %v2655 = vunpack.c.l.b16 %v2579
        %v2656 = vunpack.c.l.b16 %v2580
        %v2657 = vpack.c.b16 %v2621, %v2620
        %v2658 = vpack.c.b16 %v2623, %v2622
        %v2659 = vpack.c.b16 %v2625, %v2624
        %v2660 = vpack.c.b16 %v2627, %v2626
        %v2661 = vpack.c.b16 %v2629, %v2628
        %v2662 = vpack.c.b16 %v2631, %v2630
        %v2663 = vpack.c.b16 %v2633, %v2632
        %v2664 = vpack.c.b16 %v2635, %v2634
        %v2665 = vpack.c.b16 %v2637, %v2636
        %v2666 = vpack.c.b16 %v2639, %v2638
        %v2667 = vpack.c.b16 %v2641, %v2640
        %v2668 = vpack.c.b16 %v2643, %v2642
        %v2669 = vpack.c.b16 %v2645, %v2644
        %v2670 = vpack.c.b16 %v2647, %v2646
        %v2671 = vpack.c.b16 %v2649, %v2648
        %v2672 = vpack.c.b16 %v2651, %v2650
        %v2673 = vpack.c.b16 %v2653, %v2652
        %v2674 = vpack.c.b16 %v2655, %v2654
        %v2675 = vpack.c.b16 %v2656, %v2656
        %v2676 = vrot.slane %v2657, 2
        %v2677 = vrot.slane %v2658, 2
        %v2678 = vsel %vm2236, %v2676, %v2677
        %v2679 = vrot.slane %v2659, 2
        %v2680 = vsel %vm2236, %v2677, %v2679
        %v2681 = vrot.slane %v2660, 2
        %v2682 = vsel %vm2236, %v2679, %v2681
        %v2683 = vrot.slane %v2661, 2
        %v2684 = vsel %vm2236, %v2681, %v2683
        %v2685 = vrot.slane %v2662, 2
        %v2686 = vsel %vm2236, %v2683, %v2685
        %v2687 = vrot.slane %v2663, 2
        %v2688 = vsel %vm2236, %v2685, %v2687
        %v2689 = vrot.slane %v2664, 2
        %v2690 = vsel %vm2236, %v2687, %v2689
        %v2691 = vrot.slane %v2665, 2
        %v2692 = vsel %vm2236, %v2689, %v2691
        %v2693 = vrot.slane %v2666, 2
        %v2694 = vsel %vm2236, %v2691, %v2693
        %v2695 = vrot.slane %v2667, 2
        %v2696 = vsel %vm2236, %v2693, %v2695
        %v2697 = vrot.slane %v2668, 2
        %v2698 = vsel %vm2236, %v2695, %v2697
        %v2699 = vrot.slane %v2669, 2
        %v2700 = vsel %vm2236, %v2697, %v2699
        %v2701 = vrot.slane %v2670, 2
        %v2702 = vsel %vm2236, %v2699, %v2701
        %v2703 = vrot.slane %v2671, 2
        %v2704 = vsel %vm2236, %v2701, %v2703
        %v2705 = vrot.slane %v2672, 2
        %v2706 = vsel %vm2236, %v2703, %v2705
        %v2707 = vrot.slane %v2673, 2
        %v2708 = vsel %vm2236, %v2705, %v2707
        %v2709 = vrot.slane %v2674, 2
        %v2710 = vsel %vm2236, %v2707, %v2709
        %v2711 = vrot.slane %v2675, 2
        %v2712 = vsel %vm2236, %v2709, %v2711
        %v2714 = vsel %vm575, %v2678, 0
        %v2717 = vsel %vm575, %v2680, 0
        %v2720 = vsel %vm575, %v2682, 0
        %v2723 = vsel %vm575, %v2684, 0
        %v2726 = vsel %vm575, %v2686, 0
        %v2729 = vsel %vm575, %v2688, 0
        %v2732 = vsel %vm575, %v2690, 0
        %v2735 = vsel %vm575, %v2692, 0
        %v2738 = vsel %vm575, %v2694, 0
        %v2741 = vsel %vm575, %v2696, 0
        %v2744 = vsel %vm575, %v2698, 0
        %v2747 = vsel %vm575, %v2700, 0
        %v2750 = vsel %vm575, %v2702, 0
        %v2753 = vsel %vm575, %v2704, 0
        %v2756 = vsel %vm575, %v2706, 0
        %v2759 = vsel %vm575, %v2708, 0
        %v2762 = vsel %vm575, %v2710, 0
        %v2765 = vsel %vm575, %v2712, 0
        %v2768 = vand.u32 %v2582, %v633
        %2770 = vmatprep.subr.bf16.mxu0 0
        %2771 = vmatpush1.bf16.msra.mxu0 %v2768
        %2772 = vmatprep.subr.bf16.mxu0 0
        %2773 = vmatpush1.bf16.msra.mxu0 0
        %2774 = vmatprep.subr.bf16.mxu0 0
        %2775 = vmatpush1.bf16.msra.mxu0 0
        %2776 = vmatprep.subr.bf16.mxu0 0
        %2777 = vmatpush1.bf16.msra.mxu0 0
        %2778 = vmatprep.subr.bf16.mxu0 0
        %2779 = vmatpush1.bf16.msra.mxu0 0
        %2780 = vmatprep.subr.bf16.mxu0 0
        %2781 = vmatpush1.bf16.msra.mxu0 0
        %2782 = vmatprep.subr.bf16.mxu0 0
        %2783 = vmatpush1.bf16.msra.mxu0 0
        %2784 = vmatprep.subr.bf16.mxu0 0
        %2785 = vmatpush1.bf16.msra.mxu0 0
        %2786 = vmatprep.subr.bf16.mxu0 0
        %2787 = vmatpush1.bf16.msra.mxu0 0
        %2788 = vmatprep.subr.bf16.mxu0 0
        %2789 = vmatpush1.bf16.msra.mxu0 0
        %2790 = vmatprep.subr.bf16.mxu0 0
        %2791 = vmatpush1.bf16.msra.mxu0 0
        %2792 = vmatprep.subr.bf16.mxu0 0
        %2793 = vmatpush1.bf16.msra.mxu0 0
        %2794 = vmatprep.subr.bf16.mxu0 0
        %2795 = vmatpush1.bf16.msra.mxu0 0
        %2796 = vmatprep.subr.bf16.mxu0 0
        %2797 = vmatpush1.bf16.msra.mxu0 0
        %2798 = vmatprep.subr.bf16.mxu0 0
        %2799 = vmatpush1.bf16.msra.mxu0 0
        %2800 = vmatprep.subr.bf16.mxu0 0
        %2801 = vmatpush1.bf16.msra.mxu0 0
        %2802 = vmatprep.mubr.bf16.mxu0 0
        %2803 = vmatmul.mubr.bf16.gmra.mrb[0].mxu0 %v2714
        %v2804 = vpop.f32.mrb[0].mxu0
        %v2805 = vadd.f32 0.0, %v2804
        %v2806 = vpop.f32.mrb[0].mxu0
        %v2807 = vpop.f32.mrb[0].mxu0
        %v2808 = vadd.f32 0.0, %v2807
        %v2809 = vpop.f32.mrb[0].mxu0
        %2810 = vmatprep.mubr.bf16.mxu0 0
        %2811 = vmatmul.mubr.bf16.gmra.mrb[0].mxu0 %v2717
        %v2812 = vpop.f32.mrb[0].mxu0
        %v2813 = vadd.f32 0.0, %v2812
        %v2814 = vpop.f32.mrb[0].mxu0
        %v2815 = vpop.f32.mrb[0].mxu0
        %v2816 = vadd.f32 0.0, %v2815
        %v2817 = vpop.f32.mrb[0].mxu0
        %2818 = vmatprep.mubr.bf16.mxu0 0
        %2819 = vmatmul.mubr.bf16.gmra.mrb[0].mxu0 %v2720
        %v2820 = vpop.f32.mrb[0].mxu0
        %v2821 = vadd.f32 0.0, %v2820
        %v2822 = vpop.f32.mrb[0].mxu0
        %v2823 = vpop.f32.mrb[0].mxu0
        %v2824 = vadd.f32 0.0, %v2823
        %v2825 = vpop.f32.mrb[0].mxu0
        %2826 = vmatprep.mubr.bf16.mxu0 0
        %2827 = vmatmul.mubr.bf16.gmra.mrb[0].mxu0 %v2723
        %v2828 = vpop.f32.mrb[0].mxu0
        %v2829 = vadd.f32 0.0, %v2828
        %v2830 = vpop.f32.mrb[0].mxu0
        %v2831 = vpop.f32.mrb[0].mxu0
        %v2832 = vadd.f32 0.0, %v2831
        %v2833 = vpop.f32.mrb[0].mxu0
        %2834 = vmatprep.mubr.bf16.mxu0 0
        %2835 = vmatmul.mubr.bf16.gmra.mrb[0].mxu0 %v2726
        %v2836 = vpop.f32.mrb[0].mxu0
        %v2837 = vadd.f32 0.0, %v2836
        %v2838 = vpop.f32.mrb[0].mxu0
        %v2839 = vpop.f32.mrb[0].mxu0
        %v2840 = vadd.f32 0.0, %v2839
        %v2841 = vpop.f32.mrb[0].mxu0
        %2842 = vmatprep.mubr.bf16.mxu0 0
        %2843 = vmatmul.mubr.bf16.gmra.mrb[0].mxu0 %v2729
        %v2844 = vpop.f32.mrb[0].mxu0
        %v2845 = vadd.f32 0.0, %v2844
        %v2846 = vpop.f32.mrb[0].mxu0
        %v2847 = vpop.f32.mrb[0].mxu0
        %v2848 = vadd.f32 0.0, %v2847
        %v2849 = vpop.f32.mrb[0].mxu0
        %2850 = vmatprep.mubr.bf16.mxu0 0
        %2851 = vmatmul.mubr.bf16.gmra.mrb[0].mxu0 %v2732
        %v2852 = vpop.f32.mrb[0].mxu0
        %v2853 = vadd.f32 0.0, %v2852
        %v2854 = vpop.f32.mrb[0].mxu0
        %v2855 = vpop.f32.mrb[0].mxu0
        %v2856 = vadd.f32 0.0, %v2855
        %v2857 = vpop.f32.mrb[0].mxu0
        %2858 = vmatprep.mubr.bf16.mxu0 0
        %2859 = vmatmul.mubr.bf16.gmra.mrb[0].mxu0 %v2735
        %v2860 = vpop.f32.mrb[0].mxu0
        %v2861 = vadd.f32 0.0, %v2860
        %v2862 = vpop.f32.mrb[0].mxu0
        %v2863 = vpop.f32.mrb[0].mxu0
        %v2864 = vadd.f32 0.0, %v2863
        %v2865 = vpop.f32.mrb[0].mxu0
        %2866 = vmatprep.mubr.bf16.mxu0 0
        %2867 = vmatmul.mubr.bf16.gmra.mrb[0].mxu0 %v2738
        %v2868 = vpop.f32.mrb[0].mxu0
        %v2869 = vadd.f32 0.0, %v2868
        %v2870 = vpop.f32.mrb[0].mxu0
        %v2871 = vpop.f32.mrb[0].mxu0
        %v2872 = vadd.f32 0.0, %v2871
        %v2873 = vpop.f32.mrb[0].mxu0
        %2874 = vmatprep.mubr.bf16.mxu0 0
        %2875 = vmatmul.mubr.bf16.gmra.mrb[0].mxu0 %v2741
        %v2876 = vpop.f32.mrb[0].mxu0
        %v2877 = vadd.f32 0.0, %v2876
        %v2878 = vpop.f32.mrb[0].mxu0
        %v2879 = vpop.f32.mrb[0].mxu0
        %v2880 = vadd.f32 0.0, %v2879
        %v2881 = vpop.f32.mrb[0].mxu0
        %2882 = vmatprep.mubr.bf16.mxu0 0
        %2883 = vmatmul.mubr.bf16.gmra.mrb[0].mxu0 %v2744
        %v2884 = vpop.f32.mrb[0].mxu0
        %v2885 = vadd.f32 0.0, %v2884
        %v2886 = vpop.f32.mrb[0].mxu0
        %v2887 = vpop.f32.mrb[0].mxu0
        %v2888 = vadd.f32 0.0, %v2887
        %v2889 = vpop.f32.mrb[0].mxu0
        %2890 = vmatprep.mubr.bf16.mxu0 0
        %2891 = vmatmul.mubr.bf16.gmra.mrb[0].mxu0 %v2747
        %v2892 = vpop.f32.mrb[0].mxu0
        %v2893 = vadd.f32 0.0, %v2892
        %v2894 = vpop.f32.mrb[0].mxu0
        %v2895 = vpop.f32.mrb[0].mxu0
        %v2896 = vadd.f32 0.0, %v2895
        %v2897 = vpop.f32.mrb[0].mxu0
        %2898 = vmatprep.mubr.bf16.mxu0 0
        %2899 = vmatmul.mubr.bf16.gmra.mrb[0].mxu0 %v2750
        %v2900 = vpop.f32.mrb[0].mxu0
        %v2901 = vadd.f32 0.0, %v2900
        %v2902 = vpop.f32.mrb[0].mxu0
        %v2903 = vpop.f32.mrb[0].mxu0
        %v2904 = vadd.f32 0.0, %v2903
        %v2905 = vpop.f32.mrb[0].mxu0
        %2906 = vmatprep.mubr.bf16.mxu0 0
        %2907 = vmatmul.mubr.bf16.gmra.mrb[0].mxu0 %v2753
        %v2908 = vpop.f32.mrb[0].mxu0
        %v2909 = vadd.f32 0.0, %v2908
        %v2910 = vpop.f32.mrb[0].mxu0
        %v2911 = vpop.f32.mrb[0].mxu0
        %v2912 = vadd.f32 0.0, %v2911
        %v2913 = vpop.f32.mrb[0].mxu0
        %2914 = vmatprep.mubr.bf16.mxu0 0
        %2915 = vmatmul.mubr.bf16.gmra.mrb[0].mxu0 %v2756
        %v2916 = vpop.f32.mrb[0].mxu0
        %v2917 = vadd.f32 0.0, %v2916
        %v2918 = vpop.f32.mrb[0].mxu0
        %v2919 = vpop.f32.mrb[0].mxu0
        %v2920 = vadd.f32 0.0, %v2919
        %v2921 = vpop.f32.mrb[0].mxu0
        %2922 = vmatprep.mubr.bf16.mxu0 0
        %2923 = vmatmul.mubr.bf16.gmra.mrb[0].mxu0 %v2759
        %v2924 = vpop.f32.mrb[0].mxu0
        %v2925 = vadd.f32 0.0, %v2924
        %v2926 = vpop.f32.mrb[0].mxu0
        %v2927 = vpop.f32.mrb[0].mxu0
        %v2928 = vadd.f32 0.0, %v2927
        %v2929 = vpop.f32.mrb[0].mxu0
        %2930 = vmatprep.mubr.bf16.mxu0 0
        %2931 = vmatmul.mubr.bf16.gmra.mrb[0].mxu0 %v2762
        %v2932 = vpop.f32.mrb[0].mxu0
        %v2933 = vadd.f32 0.0, %v2932
        %v2934 = vpop.f32.mrb[0].mxu0
        %v2935 = vpop.f32.mrb[0].mxu0
        %v2936 = vadd.f32 0.0, %v2935
        %v2937 = vpop.f32.mrb[0].mxu0
        %2938 = vmatprep.mubr.bf16.mxu0 0
        %2939 = vmatmul.mubr.bf16.gmra.mrb[0].mxu0 %v2765
        %v2940 = vpop.f32.mrb[0].mxu0
        %v2941 = vadd.f32 0.0, %v2940
        %v2942 = vpop.f32.mrb[0].mxu0
        %v2943 = vpop.f32.mrb[0].mxu0
        %v2944 = vadd.f32 0.0, %v2943
        %v2945 = vpop.f32.mrb[0].mxu0
        %2946 = vdwg.mxu0
        %v2947 = vadd.f32 %v2508, %v2805
        %v2948 = vadd.f32 %v2509, %v2808
        %v2949 = vadd.f32 %v2510, %v2813
        %v2950 = vadd.f32 %v2511, %v2816
        %v2951 = vadd.f32 %v2512, %v2821
        %v2952 = vadd.f32 %v2513, %v2824
        %v2953 = vadd.f32 %v2514, %v2829
        %v2954 = vadd.f32 %v2515, %v2832
        %v2955 = vadd.f32 %v2516, %v2837
        %v2956 = vadd.f32 %v2517, %v2840
        %v2957 = vadd.f32 %v2518, %v2845
        %v2958 = vadd.f32 %v2519, %v2848
        %v2959 = vadd.f32 %v2520, %v2853
        %v2960 = vadd.f32 %v2521, %v2856
        %v2961 = vadd.f32 %v2522, %v2861
        %v2962 = vadd.f32 %v2523, %v2864
        %v2963 = vadd.f32 %v2524, %v2869
        %v2964 = vadd.f32 %v2525, %v2872
        %v2965 = vadd.f32 %v2526, %v2877
        %v2966 = vadd.f32 %v2527, %v2880
        %v2967 = vadd.f32 %v2528, %v2885
        %v2968 = vadd.f32 %v2529, %v2888
        %v2969 = vadd.f32 %v2530, %v2893
        %v2970 = vadd.f32 %v2531, %v2896
        %v2971 = vadd.f32 %v2532, %v2901
        %v2972 = vadd.f32 %v2533, %v2904
        %v2973 = vadd.f32 %v2534, %v2909
        %v2974 = vadd.f32 %v2535, %v2912
        %v2975 = vadd.f32 %v2536, %v2917
        %v2976 = vadd.f32 %v2537, %v2920
        %v2977 = vadd.f32 %v2538, %v2925
        %v2978 = vadd.f32 %v2539, %v2928
        %v2979 = vadd.f32 %v2540, %v2933
        %v2980 = vadd.f32 %v2541, %v2936
        %v2981 = vadd.f32 %v2542, %v2941
        %v2982 = vadd.f32 %v2543, %v2944
        %v2983 = vld [vmem:[%s276 + $0xa0] sm:$0x7]
        %s2984 = scalar_lea.vmem %s1, 14
        %v2985 = vld [vmem:[%s2984] sm:$0x3]
        %v2987 = vunpack.c.l.b16 %v2983
        %v2988 = vpack.c.b16 %v2987, %v2987
        %vm2989 = vsmask.f32 5376
        %v2991 = vshrl.u32 %v2657, 16
        %v2993 = vrot.slane %v2991, 2
        %v2994 = vshll.u32 %v2657, 16
        %v2996 = vrot.slane %v2994, 3
        %v2997 = vor.u32 %v2993, %v2996
        %v2999 = vshrl.u32 %v2658, 16
        %v3001 = vrot.slane %v2999, 2
        %v3002 = vshll.u32 %v2658, 16
        %v3004 = vrot.slane %v3002, 3
        %v3005 = vor.u32 %v3001, %v3004
        %v3006 = vsel %vm2989, %v2997, %v3005
        %v3008 = vshrl.u32 %v2659, 16
        %v3010 = vrot.slane %v3008, 2
        %v3011 = vshll.u32 %v2659, 16
        %v3013 = vrot.slane %v3011, 3
        %v3014 = vor.u32 %v3010, %v3013
        %v3015 = vsel %vm2989, %v3005, %v3014
        %v3017 = vshrl.u32 %v2660, 16
        %v3019 = vrot.slane %v3017, 2
        %v3020 = vshll.u32 %v2660, 16
        %v3022 = vrot.slane %v3020, 3
        %v3023 = vor.u32 %v3019, %v3022
        %v3024 = vsel %vm2989, %v3014, %v3023
        %v3026 = vshrl.u32 %v2661, 16
        %v3028 = vrot.slane %v3026, 2
        %v3029 = vshll.u32 %v2661, 16
        %v3031 = vrot.slane %v3029, 3
        %v3032 = vor.u32 %v3028, %v3031
        %v3033 = vsel %vm2989, %v3023, %v3032
        %v3035 = vshrl.u32 %v2662, 16
        %v3037 = vrot.slane %v3035, 2
        %v3038 = vshll.u32 %v2662, 16
        %v3040 = vrot.slane %v3038, 3
        %v3041 = vor.u32 %v3037, %v3040
        %v3042 = vsel %vm2989, %v3032, %v3041
        %v3044 = vshrl.u32 %v2663, 16
        %v3046 = vrot.slane %v3044, 2
        %v3047 = vshll.u32 %v2663, 16
        %v3049 = vrot.slane %v3047, 3
        %v3050 = vor.u32 %v3046, %v3049
        %v3051 = vsel %vm2989, %v3041, %v3050
        %v3053 = vshrl.u32 %v2664, 16
        %v3055 = vrot.slane %v3053, 2
        %v3056 = vshll.u32 %v2664, 16
        %v3058 = vrot.slane %v3056, 3
        %v3059 = vor.u32 %v3055, %v3058
        %v3060 = vsel %vm2989, %v3050, %v3059
        %v3062 = vshrl.u32 %v2665, 16
        %v3064 = vrot.slane %v3062, 2
        %v3065 = vshll.u32 %v2665, 16
        %v3067 = vrot.slane %v3065, 3
        %v3068 = vor.u32 %v3064, %v3067
        %v3069 = vsel %vm2989, %v3059, %v3068
        %v3071 = vshrl.u32 %v2666, 16
        %v3073 = vrot.slane %v3071, 2
        %v3074 = vshll.u32 %v2666, 16
        %v3076 = vrot.slane %v3074, 3
        %v3077 = vor.u32 %v3073, %v3076
        %v3078 = vsel %vm2989, %v3068, %v3077
        %v3080 = vshrl.u32 %v2667, 16
        %v3082 = vrot.slane %v3080, 2
        %v3083 = vshll.u32 %v2667, 16
        %v3085 = vrot.slane %v3083, 3
        %v3086 = vor.u32 %v3082, %v3085
        %v3087 = vsel %vm2989, %v3077, %v3086
        %v3089 = vshrl.u32 %v2668, 16
        %v3091 = vrot.slane %v3089, 2
        %v3092 = vshll.u32 %v2668, 16
        %v3094 = vrot.slane %v3092, 3
        %v3095 = vor.u32 %v3091, %v3094
        %v3096 = vsel %vm2989, %v3086, %v3095
        %v3098 = vshrl.u32 %v2669, 16
        %v3100 = vrot.slane %v3098, 2
        %v3101 = vshll.u32 %v2669, 16
        %v3103 = vrot.slane %v3101, 3
        %v3104 = vor.u32 %v3100, %v3103
        %v3105 = vsel %vm2989, %v3095, %v3104
        %v3107 = vshrl.u32 %v2670, 16
        %v3109 = vrot.slane %v3107, 2
        %v3110 = vshll.u32 %v2670, 16
        %v3112 = vrot.slane %v3110, 3
        %v3113 = vor.u32 %v3109, %v3112
        %v3114 = vsel %vm2989, %v3104, %v3113
        %v3116 = vshrl.u32 %v2671, 16
        %v3118 = vrot.slane %v3116, 2
        %v3119 = vshll.u32 %v2671, 16
        %v3121 = vrot.slane %v3119, 3
        %v3122 = vor.u32 %v3118, %v3121
        %v3123 = vsel %vm2989, %v3113, %v3122
        %v3125 = vshrl.u32 %v2672, 16
        %v3127 = vrot.slane %v3125, 2
        %v3128 = vshll.u32 %v2672, 16
        %v3130 = vrot.slane %v3128, 3
        %v3131 = vor.u32 %v3127, %v3130
        %v3132 = vsel %vm2989, %v3122, %v3131
        %v3134 = vshrl.u32 %v2673, 16
        %v3136 = vrot.slane %v3134, 2
        %v3137 = vshll.u32 %v2673, 16
        %v3139 = vrot.slane %v3137, 3
        %v3140 = vor.u32 %v3136, %v3139
        %v3141 = vsel %vm2989, %v3131, %v3140
        %v3143 = vshrl.u32 %v2674, 16
        %v3145 = vrot.slane %v3143, 2
        %v3146 = vshll.u32 %v2674, 16
        %v3148 = vrot.slane %v3146, 3
        %v3149 = vor.u32 %v3145, %v3148
        %v3150 = vsel %vm2989, %v3140, %v3149
        %v3152 = vshrl.u32 %v2988, 16
        %v3154 = vrot.slane %v3152, 2
        %v3155 = vshll.u32 %v2988, 16
        %v3157 = vrot.slane %v3155, 3
        %v3158 = vor.u32 %v3154, %v3157
        %v3159 = vsel %vm2989, %v3149, %v3158
        %v3161 = vsel %vm575, %v3006, 0
        %v3164 = vsel %vm575, %v3015, 0
        %v3167 = vsel %vm575, %v3024, 0
        %v3170 = vsel %vm575, %v3033, 0
        %v3173 = vsel %vm575, %v3042, 0
        %v3176 = vsel %vm575, %v3051, 0
        %v3179 = vsel %vm575, %v3060, 0
        %v3182 = vsel %vm575, %v3069, 0
        %v3185 = vsel %vm575, %v3078, 0
        %v3188 = vsel %vm575, %v3087, 0
        %v3191 = vsel %vm575, %v3096, 0
        %v3194 = vsel %vm575, %v3105, 0
        %v3197 = vsel %vm575, %v3114, 0
        %v3200 = vsel %vm575, %v3123, 0
        %v3203 = vsel %vm575, %v3132, 0
        %v3206 = vsel %vm575, %v3141, 0
        %v3209 = vsel %vm575, %v3150, 0
        %v3212 = vsel %vm575, %v3159, 0
        %v3215 = vand.u32 %v2985, %v633
        %3217 = vmatprep.subr.bf16.mxu0 0
        %3218 = vmatpush1.bf16.msra.mxu0 %v3215
        %3219 = vmatprep.subr.bf16.mxu0 0
        %3220 = vmatpush1.bf16.msra.mxu0 0
        %3221 = vmatprep.subr.bf16.mxu0 0
        %3222 = vmatpush1.bf16.msra.mxu0 0
        %3223 = vmatprep.subr.bf16.mxu0 0
        %3224 = vmatpush1.bf16.msra.mxu0 0
        %3225 = vmatprep.subr.bf16.mxu0 0
        %3226 = vmatpush1.bf16.msra.mxu0 0
        %3227 = vmatprep.subr.bf16.mxu0 0
        %3228 = vmatpush1.bf16.msra.mxu0 0
        %3229 = vmatprep.subr.bf16.mxu0 0
        %3230 = vmatpush1.bf16.msra.mxu0 0
        %3231 = vmatprep.subr.bf16.mxu0 0
        %3232 = vmatpush1.bf16.msra.mxu0 0
        %3233 = vmatprep.subr.bf16.mxu0 0
        %3234 = vmatpush1.bf16.msra.mxu0 0
        %3235 = vmatprep.subr.bf16.mxu0 0
        %3236 = vmatpush1.bf16.msra.mxu0 0
        %3237 = vmatprep.subr.bf16.mxu0 0
        %3238 = vmatpush1.bf16.msra.mxu0 0
        %3239 = vmatprep.subr.bf16.mxu0 0
        %3240 = vmatpush1.bf16.msra.mxu0 0
        %3241 = vmatprep.subr.bf16.mxu0 0
        %3242 = vmatpush1.bf16.msra.mxu0 0
        %3243 = vmatprep.subr.bf16.mxu0 0
        %3244 = vmatpush1.bf16.msra.mxu0 0
        %3245 = vmatprep.subr.bf16.mxu0 0
        %3246 = vmatpush1.bf16.msra.mxu0 0
        %3247 = vmatprep.subr.bf16.mxu0 0
        %3248 = vmatpush1.bf16.msra.mxu0 0
        %3249 = vmatprep.mubr.bf16.mxu0 0
        %3250 = vmatmul.mubr.bf16.gmra.mrb[0].mxu0 %v3161
        %v3251 = vpop.f32.mrb[0].mxu0
        %v3252 = vadd.f32 0.0, %v3251
        %v3253 = vpop.f32.mrb[0].mxu0
        %v3254 = vpop.f32.mrb[0].mxu0
        %v3255 = vadd.f32 0.0, %v3254
        %v3256 = vpop.f32.mrb[0].mxu0
        %3257 = vmatprep.mubr.bf16.mxu0 0
        %3258 = vmatmul.mubr.bf16.gmra.mrb[0].mxu0 %v3164
        %v3259 = vpop.f32.mrb[0].mxu0
        %v3260 = vadd.f32 0.0, %v3259
        %v3261 = vpop.f32.mrb[0].mxu0
        %v3262 = vpop.f32.mrb[0].mxu0
        %v3263 = vadd.f32 0.0, %v3262
        %v3264 = vpop.f32.mrb[0].mxu0
        %3265 = vmatprep.mubr.bf16.mxu0 0
        %3266 = vmatmul.mubr.bf16.gmra.mrb[0].mxu0 %v3167
        %v3267 = vpop.f32.mrb[0].mxu0
        %v3268 = vadd.f32 0.0, %v3267
        %v3269 = vpop.f32.mrb[0].mxu0
        %v3270 = vpop.f32.mrb[0].mxu0
        %v3271 = vadd.f32 0.0, %v3270
        %v3272 = vpop.f32.mrb[0].mxu0
        %3273 = vmatprep.mubr.bf16.mxu0 0
        %3274 = vmatmul.mubr.bf16.gmra.mrb[0].mxu0 %v3170
        %v3275 = vpop.f32.mrb[0].mxu0
        %v3276 = vadd.f32 0.0, %v3275
        %v3277 = vpop.f32.mrb[0].mxu0
        %v3278 = vpop.f32.mrb[0].mxu0
        %v3279 = vadd.f32 0.0, %v3278
        %v3280 = vpop.f32.mrb[0].mxu0
        %3281 = vmatprep.mubr.bf16.mxu0 0
        %3282 = vmatmul.mubr.bf16.gmra.mrb[0].mxu0 %v3173
        %v3283 = vpop.f32.mrb[0].mxu0
        %v3284 = vadd.f32 0.0, %v3283
        %v3285 = vpop.f32.mrb[0].mxu0
        %v3286 = vpop.f32.mrb[0].mxu0
        %v3287 = vadd.f32 0.0, %v3286
        %v3288 = vpop.f32.mrb[0].mxu0
        %3289 = vmatprep.mubr.bf16.mxu0 0
        %3290 = vmatmul.mubr.bf16.gmra.mrb[0].mxu0 %v3176
        %v3291 = vpop.f32.mrb[0].mxu0
        %v3292 = vadd.f32 0.0, %v3291
        %v3293 = vpop.f32.mrb[0].mxu0
        %v3294 = vpop.f32.mrb[0].mxu0
        %v3295 = vadd.f32 0.0, %v3294
        %v3296 = vpop.f32.mrb[0].mxu0
        %3297 = vmatprep.mubr.bf16.mxu0 0
        %3298 = vmatmul.mubr.bf16.gmra.mrb[0].mxu0 %v3179
        %v3299 = vpop.f32.mrb[0].mxu0
        %v3300 = vadd.f32 0.0, %v3299
        %v3301 = vpop.f32.mrb[0].mxu0
        %v3302 = vpop.f32.mrb[0].mxu0
        %v3303 = vadd.f32 0.0, %v3302
        %v3304 = vpop.f32.mrb[0].mxu0
        %3305 = vmatprep.mubr.bf16.mxu0 0
        %3306 = vmatmul.mubr.bf16.gmra.mrb[0].mxu0 %v3182
        %v3307 = vpop.f32.mrb[0].mxu0
        %v3308 = vadd.f32 0.0, %v3307
        %v3309 = vpop.f32.mrb[0].mxu0
        %v3310 = vpop.f32.mrb[0].mxu0
        %v3311 = vadd.f32 0.0, %v3310
        %v3312 = vpop.f32.mrb[0].mxu0
        %3313 = vmatprep.mubr.bf16.mxu0 0
        %3314 = vmatmul.mubr.bf16.gmra.mrb[0].mxu0 %v3185
        %v3315 = vpop.f32.mrb[0].mxu0
        %v3316 = vadd.f32 0.0, %v3315
        %v3317 = vpop.f32.mrb[0].mxu0
        %v3318 = vpop.f32.mrb[0].mxu0
        %v3319 = vadd.f32 0.0, %v3318
        %v3320 = vpop.f32.mrb[0].mxu0
        %3321 = vmatprep.mubr.bf16.mxu0 0
        %3322 = vmatmul.mubr.bf16.gmra.mrb[0].mxu0 %v3188
        %v3323 = vpop.f32.mrb[0].mxu0
        %v3324 = vadd.f32 0.0, %v3323
        %v3325 = vpop.f32.mrb[0].mxu0
        %v3326 = vpop.f32.mrb[0].mxu0
        %v3327 = vadd.f32 0.0, %v3326
        %v3328 = vpop.f32.mrb[0].mxu0
        %3329 = vmatprep.mubr.bf16.mxu0 0
        %3330 = vmatmul.mubr.bf16.gmra.mrb[0].mxu0 %v3191
        %v3331 = vpop.f32.mrb[0].mxu0
        %v3332 = vadd.f32 0.0, %v3331
        %v3333 = vpop.f32.mrb[0].mxu0
        %v3334 = vpop.f32.mrb[0].mxu0
        %v3335 = vadd.f32 0.0, %v3334
        %v3336 = vpop.f32.mrb[0].mxu0
        %3337 = vmatprep.mubr.bf16.mxu0 0
        %3338 = vmatmul.mubr.bf16.gmra.mrb[0].mxu0 %v3194
        %v3339 = vpop.f32.mrb[0].mxu0
        %v3340 = vadd.f32 0.0, %v3339
        %v3341 = vpop.f32.mrb[0].mxu0
        %v3342 = vpop.f32.mrb[0].mxu0
        %v3343 = vadd.f32 0.0, %v3342
        %v3344 = vpop.f32.mrb[0].mxu0
        %3345 = vmatprep.mubr.bf16.mxu0 0
        %3346 = vmatmul.mubr.bf16.gmra.mrb[0].mxu0 %v3197
        %v3347 = vpop.f32.mrb[0].mxu0
        %v3348 = vadd.f32 0.0, %v3347
        %v3349 = vpop.f32.mrb[0].mxu0
        %v3350 = vpop.f32.mrb[0].mxu0
        %v3351 = vadd.f32 0.0, %v3350
        %v3352 = vpop.f32.mrb[0].mxu0
        %3353 = vmatprep.mubr.bf16.mxu0 0
        %3354 = vmatmul.mubr.bf16.gmra.mrb[0].mxu0 %v3200
        %v3355 = vpop.f32.mrb[0].mxu0
        %v3356 = vadd.f32 0.0, %v3355
        %v3357 = vpop.f32.mrb[0].mxu0
        %v3358 = vpop.f32.mrb[0].mxu0
        %v3359 = vadd.f32 0.0, %v3358
        %v3360 = vpop.f32.mrb[0].mxu0
        %3361 = vmatprep.mubr.bf16.mxu0 0
        %3362 = vmatmul.mubr.bf16.gmra.mrb[0].mxu0 %v3203
        %v3363 = vpop.f32.mrb[0].mxu0
        %v3364 = vadd.f32 0.0, %v3363
        %v3365 = vpop.f32.mrb[0].mxu0
        %v3366 = vpop.f32.mrb[0].mxu0
        %v3367 = vadd.f32 0.0, %v3366
        %v3368 = vpop.f32.mrb[0].mxu0
        %3369 = vmatprep.mubr.bf16.mxu0 0
        %3370 = vmatmul.mubr.bf16.gmra.mrb[0].mxu0 %v3206
        %v3371 = vpop.f32.mrb[0].mxu0
        %v3372 = vadd.f32 0.0, %v3371
        %v3373 = vpop.f32.mrb[0].mxu0
        %v3374 = vpop.f32.mrb[0].mxu0
        %v3375 = vadd.f32 0.0, %v3374
        %v3376 = vpop.f32.mrb[0].mxu0
        %3377 = vmatprep.mubr.bf16.mxu0 0
        %3378 = vmatmul.mubr.bf16.gmra.mrb[0].mxu0 %v3209
        %v3379 = vpop.f32.mrb[0].mxu0
        %v3380 = vadd.f32 0.0, %v3379
        %v3381 = vpop.f32.mrb[0].mxu0
        %v3382 = vpop.f32.mrb[0].mxu0
        %v3383 = vadd.f32 0.0, %v3382
        %v3384 = vpop.f32.mrb[0].mxu0
        %3385 = vmatprep.mubr.bf16.mxu0 0
        %3386 = vmatmul.mubr.bf16.gmra.mrb[0].mxu0 %v3212
        %v3387 = vpop.f32.mrb[0].mxu0
        %v3388 = vadd.f32 0.0, %v3387
        %v3389 = vpop.f32.mrb[0].mxu0
        %v3390 = vpop.f32.mrb[0].mxu0
        %v3391 = vadd.f32 0.0, %v3390
        %v3392 = vpop.f32.mrb[0].mxu0
        %3393 = vdwg.mxu0
        %v3394 = vadd.f32 %v2947, %v3252
        %v3395 = vadd.f32 %v2948, %v3255
        %v3396 = vadd.f32 %v2949, %v3260
        %v3397 = vadd.f32 %v2950, %v3263
        %v3398 = vadd.f32 %v2951, %v3268
        %v3399 = vadd.f32 %v2952, %v3271
        %v3400 = vadd.f32 %v2953, %v3276
        %v3401 = vadd.f32 %v2954, %v3279
        %v3402 = vadd.f32 %v2955, %v3284
        %v3403 = vadd.f32 %v2956, %v3287
        %v3404 = vadd.f32 %v2957, %v3292
        %v3405 = vadd.f32 %v2958, %v3295
        %v3406 = vadd.f32 %v2959, %v3300
        %v3407 = vadd.f32 %v2960, %v3303
        %v3408 = vadd.f32 %v2961, %v3308
        %v3409 = vadd.f32 %v2962, %v3311
        %v3410 = vadd.f32 %v2963, %v3316
        %v3411 = vadd.f32 %v2964, %v3319
        %v3412 = vadd.f32 %v2965, %v3324
        %v3413 = vadd.f32 %v2966, %v3327
        %v3414 = vadd.f32 %v2967, %v3332
        %v3415 = vadd.f32 %v2968, %v3335
        %v3416 = vadd.f32 %v2969, %v3340
        %v3417 = vadd.f32 %v2970, %v3343
        %v3418 = vadd.f32 %v2971, %v3348
        %v3419 = vadd.f32 %v2972, %v3351
        %v3420 = vadd.f32 %v2973, %v3356
        %v3421 = vadd.f32 %v2974, %v3359
        %v3422 = vadd.f32 %v2975, %v3364
        %v3423 = vadd.f32 %v2976, %v3367
        %v3424 = vadd.f32 %v2977, %v3372
        %v3425 = vadd.f32 %v2978, %v3375
        %v3426 = vadd.f32 %v2979, %v3380
        %v3427 = vadd.f32 %v2980, %v3383
        %v3428 = vadd.f32 %v2981, %v3388
        %v3429 = vadd.f32 %v2982, %v3391
        %v3430 = vld [vmem:[%s276 + $0x10] sm:$0x8]
        %s3431 = scalar_lea.vmem %s1, 16
        %v3432 = vld [vmem:[%s3431] sm:$0x3]
        %v3434 = vunpack.c.l.b16 %v3430
        %v3435 = vpack.c.b16 %v2621, %v3434
        %vm3436 = vcmask 1044480
        %v3437 = vrot.slane %v3435, 3
        %v3438 = vrot.slane %v2658, 3
        %v3439 = vsel %vm3436, %v3437, %v3438
        %v3440 = vrot.slane %v2659, 3
        %v3441 = vsel %vm3436, %v3438, %v3440
        %v3442 = vrot.slane %v2660, 3
        %v3443 = vsel %vm3436, %v3440, %v3442
        %v3444 = vrot.slane %v2661, 3
        %v3445 = vsel %vm3436, %v3442, %v3444
        %v3446 = vrot.slane %v2662, 3
        %v3447 = vsel %vm3436, %v3444, %v3446
        %v3448 = vrot.slane %v2663, 3
        %v3449 = vsel %vm3436, %v3446, %v3448
        %v3450 = vrot.slane %v2664, 3
        %v3451 = vsel %vm3436, %v3448, %v3450
        %v3452 = vrot.slane %v2665, 3
        %v3453 = vsel %vm3436, %v3450, %v3452
        %v3454 = vrot.slane %v2666, 3
        %v3455 = vsel %vm3436, %v3452, %v3454
        %v3456 = vrot.slane %v2667, 3
        %v3457 = vsel %vm3436, %v3454, %v3456
        %v3458 = vrot.slane %v2668, 3
        %v3459 = vsel %vm3436, %v3456, %v3458
        %v3460 = vrot.slane %v2669, 3
        %v3461 = vsel %vm3436, %v3458, %v3460
        %v3462 = vrot.slane %v2670, 3
        %v3463 = vsel %vm3436, %v3460, %v3462
        %v3464 = vrot.slane %v2671, 3
        %v3465 = vsel %vm3436, %v3462, %v3464
        %v3466 = vrot.slane %v2672, 3
        %v3467 = vsel %vm3436, %v3464, %v3466
        %v3468 = vrot.slane %v2673, 3
        %v3469 = vsel %vm3436, %v3466, %v3468
        %v3470 = vrot.slane %v2674, 3
        %v3471 = vsel %vm3436, %v3468, %v3470
        %v3472 = vrot.slane %v2988, 3
        %v3473 = vsel %vm3436, %v3470, %v3472
        %v3475 = vsel %vm575, %v3439, 0
        %v3478 = vsel %vm575, %v3441, 0
        %v3481 = vsel %vm575, %v3443, 0
        %v3484 = vsel %vm575, %v3445, 0
        %v3487 = vsel %vm575, %v3447, 0
        %v3490 = vsel %vm575, %v3449, 0
        %v3493 = vsel %vm575, %v3451, 0
        %v3496 = vsel %vm575, %v3453, 0
        %v3499 = vsel %vm575, %v3455, 0
        %v3502 = vsel %vm575, %v3457, 0
        %v3505 = vsel %vm575, %v3459, 0
        %v3508 = vsel %vm575, %v3461, 0
        %v3511 = vsel %vm575, %v3463, 0
        %v3514 = vsel %vm575, %v3465, 0
        %v3517 = vsel %vm575, %v3467, 0
        %v3520 = vsel %vm575, %v3469, 0
        %v3523 = vsel %vm575, %v3471, 0
        %v3526 = vsel %vm575, %v3473, 0
        %v3529 = vand.u32 %v3432, %v633
        %3531 = vmatprep.subr.bf16.mxu0 0
        %3532 = vmatpush1.bf16.msra.mxu0 %v3529
        %3533 = vmatprep.subr.bf16.mxu0 0
        %3534 = vmatpush1.bf16.msra.mxu0 0
        %3535 = vmatprep.subr.bf16.mxu0 0
        %3536 = vmatpush1.bf16.msra.mxu0 0
        %3537 = vmatprep.subr.bf16.mxu0 0
        %3538 = vmatpush1.bf16.msra.mxu0 0
        %3539 = vmatprep.subr.bf16.mxu0 0
        %3540 = vmatpush1.bf16.msra.mxu0 0
        %3541 = vmatprep.subr.bf16.mxu0 0
        %3542 = vmatpush1.bf16.msra.mxu0 0
        %3543 = vmatprep.subr.bf16.mxu0 0
        %3544 = vmatpush1.bf16.msra.mxu0 0
        %3545 = vmatprep.subr.bf16.mxu0 0
        %3546 = vmatpush1.bf16.msra.mxu0 0
        %3547 = vmatprep.subr.bf16.mxu0 0
        %3548 = vmatpush1.bf16.msra.mxu0 0
        %3549 = vmatprep.subr.bf16.mxu0 0
        %3550 = vmatpush1.bf16.msra.mxu0 0
        %3551 = vmatprep.subr.bf16.mxu0 0
        %3552 = vmatpush1.bf16.msra.mxu0 0
        %3553 = vmatprep.subr.bf16.mxu0 0
        %3554 = vmatpush1.bf16.msra.mxu0 0
        %3555 = vmatprep.subr.bf16.mxu0 0
        %3556 = vmatpush1.bf16.msra.mxu0 0
        %3557 = vmatprep.subr.bf16.mxu0 0
        %3558 = vmatpush1.bf16.msra.mxu0 0
        %3559 = vmatprep.subr.bf16.mxu0 0
        %3560 = vmatpush1.bf16.msra.mxu0 0
        %3561 = vmatprep.subr.bf16.mxu0 0
        %3562 = vmatpush1.bf16.msra.mxu0 0
        %3563 = vmatprep.mubr.bf16.mxu0 0
        %3564 = vmatmul.mubr.bf16.gmra.mrb[0].mxu0 %v3475
        %v3565 = vpop.f32.mrb[0].mxu0
        %v3566 = vadd.f32 0.0, %v3565
        %v3567 = vpop.f32.mrb[0].mxu0
        %v3568 = vpop.f32.mrb[0].mxu0
        %v3569 = vadd.f32 0.0, %v3568
        %v3570 = vpop.f32.mrb[0].mxu0
        %3571 = vmatprep.mubr.bf16.mxu0 0
        %3572 = vmatmul.mubr.bf16.gmra.mrb[0].mxu0 %v3478
        %v3573 = vpop.f32.mrb[0].mxu0
        %v3574 = vadd.f32 0.0, %v3573
        %v3575 = vpop.f32.mrb[0].mxu0
        %v3576 = vpop.f32.mrb[0].mxu0
        %v3577 = vadd.f32 0.0, %v3576
        %v3578 = vpop.f32.mrb[0].mxu0
        %3579 = vmatprep.mubr.bf16.mxu0 0
        %3580 = vmatmul.mubr.bf16.gmra.mrb[0].mxu0 %v3481
        %v3581 = vpop.f32.mrb[0].mxu0
        %v3582 = vadd.f32 0.0, %v3581
        %v3583 = vpop.f32.mrb[0].mxu0
        %v3584 = vpop.f32.mrb[0].mxu0
        %v3585 = vadd.f32 0.0, %v3584
        %v3586 = vpop.f32.mrb[0].mxu0
        %3587 = vmatprep.mubr.bf16.mxu0 0
        %3588 = vmatmul.mubr.bf16.gmra.mrb[0].mxu0 %v3484
        %v3589 = vpop.f32.mrb[0].mxu0
        %v3590 = vadd.f32 0.0, %v3589
        %v3591 = vpop.f32.mrb[0].mxu0
        %v3592 = vpop.f32.mrb[0].mxu0
        %v3593 = vadd.f32 0.0, %v3592
        %v3594 = vpop.f32.mrb[0].mxu0
        %3595 = vmatprep.mubr.bf16.mxu0 0
        %3596 = vmatmul.mubr.bf16.gmra.mrb[0].mxu0 %v3487
        %v3597 = vpop.f32.mrb[0].mxu0
        %v3598 = vadd.f32 0.0, %v3597
        %v3599 = vpop.f32.mrb[0].mxu0
        %v3600 = vpop.f32.mrb[0].mxu0
        %v3601 = vadd.f32 0.0, %v3600
        %v3602 = vpop.f32.mrb[0].mxu0
        %3603 = vmatprep.mubr.bf16.mxu0 0
        %3604 = vmatmul.mubr.bf16.gmra.mrb[0].mxu0 %v3490
        %v3605 = vpop.f32.mrb[0].mxu0
        %v3606 = vadd.f32 0.0, %v3605
        %v3607 = vpop.f32.mrb[0].mxu0
        %v3608 = vpop.f32.mrb[0].mxu0
        %v3609 = vadd.f32 0.0, %v3608
        %v3610 = vpop.f32.mrb[0].mxu0
        %3611 = vmatprep.mubr.bf16.mxu0 0
        %3612 = vmatmul.mubr.bf16.gmra.mrb[0].mxu0 %v3493
        %v3613 = vpop.f32.mrb[0].mxu0
        %v3614 = vadd.f32 0.0, %v3613
        %v3615 = vpop.f32.mrb[0].mxu0
        %v3616 = vpop.f32.mrb[0].mxu0
        %v3617 = vadd.f32 0.0, %v3616
        %v3618 = vpop.f32.mrb[0].mxu0
        %3619 = vmatprep.mubr.bf16.mxu0 0
        %3620 = vmatmul.mubr.bf16.gmra.mrb[0].mxu0 %v3496
        %v3621 = vpop.f32.mrb[0].mxu0
        %v3622 = vadd.f32 0.0, %v3621
        %v3623 = vpop.f32.mrb[0].mxu0
        %v3624 = vpop.f32.mrb[0].mxu0
        %v3625 = vadd.f32 0.0, %v3624
        %v3626 = vpop.f32.mrb[0].mxu0
        %3627 = vmatprep.mubr.bf16.mxu0 0
        %3628 = vmatmul.mubr.bf16.gmra.mrb[0].mxu0 %v3499
        %v3629 = vpop.f32.mrb[0].mxu0
        %v3630 = vadd.f32 0.0, %v3629
        %v3631 = vpop.f32.mrb[0].mxu0
        %v3632 = vpop.f32.mrb[0].mxu0
        %v3633 = vadd.f32 0.0, %v3632
        %v3634 = vpop.f32.mrb[0].mxu0
        %3635 = vmatprep.mubr.bf16.mxu0 0
        %3636 = vmatmul.mubr.bf16.gmra.mrb[0].mxu0 %v3502
        %v3637 = vpop.f32.mrb[0].mxu0
        %v3638 = vadd.f32 0.0, %v3637
        %v3639 = vpop.f32.mrb[0].mxu0
        %v3640 = vpop.f32.mrb[0].mxu0
        %v3641 = vadd.f32 0.0, %v3640
        %v3642 = vpop.f32.mrb[0].mxu0
        %3643 = vmatprep.mubr.bf16.mxu0 0
        %3644 = vmatmul.mubr.bf16.gmra.mrb[0].mxu0 %v3505
        %v3645 = vpop.f32.mrb[0].mxu0
        %v3646 = vadd.f32 0.0, %v3645
        %v3647 = vpop.f32.mrb[0].mxu0
        %v3648 = vpop.f32.mrb[0].mxu0
        %v3649 = vadd.f32 0.0, %v3648
        %v3650 = vpop.f32.mrb[0].mxu0
        %3651 = vmatprep.mubr.bf16.mxu0 0
        %3652 = vmatmul.mubr.bf16.gmra.mrb[0].mxu0 %v3508
        %v3653 = vpop.f32.mrb[0].mxu0
        %v3654 = vadd.f32 0.0, %v3653
        %v3655 = vpop.f32.mrb[0].mxu0
        %v3656 = vpop.f32.mrb[0].mxu0
        %v3657 = vadd.f32 0.0, %v3656
        %v3658 = vpop.f32.mrb[0].mxu0
        %3659 = vmatprep.mubr.bf16.mxu0 0
        %3660 = vmatmul.mubr.bf16.gmra.mrb[0].mxu0 %v3511
        %v3661 = vpop.f32.mrb[0].mxu0
        %v3662 = vadd.f32 0.0, %v3661
        %v3663 = vpop.f32.mrb[0].mxu0
        %v3664 = vpop.f32.mrb[0].mxu0
        %v3665 = vadd.f32 0.0, %v3664
        %v3666 = vpop.f32.mrb[0].mxu0
        %3667 = vmatprep.mubr.bf16.mxu0 0
        %3668 = vmatmul.mubr.bf16.gmra.mrb[0].mxu0 %v3514
        %v3669 = vpop.f32.mrb[0].mxu0
        %v3670 = vadd.f32 0.0, %v3669
        %v3671 = vpop.f32.mrb[0].mxu0
        %v3672 = vpop.f32.mrb[0].mxu0
        %v3673 = vadd.f32 0.0, %v3672
        %v3674 = vpop.f32.mrb[0].mxu0
        %3675 = vmatprep.mubr.bf16.mxu0 0
        %3676 = vmatmul.mubr.bf16.gmra.mrb[0].mxu0 %v3517
        %v3677 = vpop.f32.mrb[0].mxu0
        %v3678 = vadd.f32 0.0, %v3677
        %v3679 = vpop.f32.mrb[0].mxu0
        %v3680 = vpop.f32.mrb[0].mxu0
        %v3681 = vadd.f32 0.0, %v3680
        %v3682 = vpop.f32.mrb[0].mxu0
        %3683 = vmatprep.mubr.bf16.mxu0 0
        %3684 = vmatmul.mubr.bf16.gmra.mrb[0].mxu0 %v3520
        %v3685 = vpop.f32.mrb[0].mxu0
        %v3686 = vadd.f32 0.0, %v3685
        %v3687 = vpop.f32.mrb[0].mxu0
        %v3688 = vpop.f32.mrb[0].mxu0
        %v3689 = vadd.f32 0.0, %v3688
        %v3690 = vpop.f32.mrb[0].mxu0
        %3691 = vmatprep.mubr.bf16.mxu0 0
        %3692 = vmatmul.mubr.bf16.gmra.mrb[0].mxu0 %v3523
        %v3693 = vpop.f32.mrb[0].mxu0
        %v3694 = vadd.f32 0.0, %v3693
        %v3695 = vpop.f32.mrb[0].mxu0
        %v3696 = vpop.f32.mrb[0].mxu0
        %v3697 = vadd.f32 0.0, %v3696
        %v3698 = vpop.f32.mrb[0].mxu0
        %3699 = vmatprep.mubr.bf16.mxu0 0
        %3700 = vmatmul.mubr.bf16.gmra.mrb[0].mxu0 %v3526
        %v3701 = vpop.f32.mrb[0].mxu0
        %v3702 = vadd.f32 0.0, %v3701
        %v3703 = vpop.f32.mrb[0].mxu0
        %v3704 = vpop.f32.mrb[0].mxu0
        %v3705 = vadd.f32 0.0, %v3704
        %v3706 = vpop.f32.mrb[0].mxu0
        %3707 = vdwg.mxu0
        %v3708 = vadd.f32 %v3394, %v3566
        %v3709 = vadd.f32 %v3395, %v3569
        %v3710 = vadd.f32 %v3396, %v3574
        %v3711 = vadd.f32 %v3397, %v3577
        %v3712 = vadd.f32 %v3398, %v3582
        %v3713 = vadd.f32 %v3399, %v3585
        %v3714 = vadd.f32 %v3400, %v3590
        %v3715 = vadd.f32 %v3401, %v3593
        %v3716 = vadd.f32 %v3402, %v3598
        %v3717 = vadd.f32 %v3403, %v3601
        %v3718 = vadd.f32 %v3404, %v3606
        %v3719 = vadd.f32 %v3405, %v3609
        %v3720 = vadd.f32 %v3406, %v3614
        %v3721 = vadd.f32 %v3407, %v3617
        %v3722 = vadd.f32 %v3408, %v3622
        %v3723 = vadd.f32 %v3409, %v3625
        %v3724 = vadd.f32 %v3410, %v3630
        %v3725 = vadd.f32 %v3411, %v3633
        %v3726 = vadd.f32 %v3412, %v3638
        %v3727 = vadd.f32 %v3413, %v3641
        %v3728 = vadd.f32 %v3414, %v3646
        %v3729 = vadd.f32 %v3415, %v3649
        %v3730 = vadd.f32 %v3416, %v3654
        %v3731 = vadd.f32 %v3417, %v3657
        %v3732 = vadd.f32 %v3418, %v3662
        %v3733 = vadd.f32 %v3419, %v3665
        %v3734 = vadd.f32 %v3420, %v3670
        %v3735 = vadd.f32 %v3421, %v3673
        %v3736 = vadd.f32 %v3422, %v3678
        %v3737 = vadd.f32 %v3423, %v3681
        %v3738 = vadd.f32 %v3424, %v3686
        %v3739 = vadd.f32 %v3425, %v3689
        %v3740 = vadd.f32 %v3426, %v3694
        %v3741 = vadd.f32 %v3427, %v3697
        %v3742 = vadd.f32 %v3428, %v3702
        %v3743 = vadd.f32 %v3429, %v3705
        %v3744 = vld [vmem:[%s2] sm:$0x1]
        %v3746 = vlaneseq
        %v3747 = vshrl.u32 %v3746, 7
        %v3748 = vsub.s32 0, %v3747
        %v3749 = vrot.slane %v3744, %v3748
        %v3751 = vadd.f32 %v3708, %v3749
        %v3752 = vadd.f32 %v3709, %v3749
        %v3753 = vadd.f32 %v3710, %v3749
        %v3754 = vadd.f32 %v3711, %v3749
        %v3755 = vadd.f32 %v3712, %v3749
        %v3756 = vadd.f32 %v3713, %v3749
        %v3757 = vadd.f32 %v3714, %v3749
        %v3758 = vadd.f32 %v3715, %v3749
        %v3759 = vadd.f32 %v3716, %v3749
        %v3760 = vadd.f32 %v3717, %v3749
        %v3761 = vadd.f32 %v3718, %v3749
        %v3762 = vadd.f32 %v3719, %v3749
        %v3763 = vadd.f32 %v3720, %v3749
        %v3764 = vadd.f32 %v3721, %v3749
        %v3765 = vadd.f32 %v3722, %v3749
        %v3766 = vadd.f32 %v3723, %v3749
        %v3767 = vadd.f32 %v3724, %v3749
        %v3768 = vadd.f32 %v3725, %v3749
        %v3769 = vadd.f32 %v3726, %v3749
        %v3770 = vadd.f32 %v3727, %v3749
        %v3771 = vadd.f32 %v3728, %v3749
        %v3772 = vadd.f32 %v3729, %v3749
        %v3773 = vadd.f32 %v3730, %v3749
        %v3774 = vadd.f32 %v3731, %v3749
        %v3775 = vadd.f32 %v3732, %v3749
        %v3776 = vadd.f32 %v3733, %v3749
        %v3777 = vadd.f32 %v3734, %v3749
        %v3778 = vadd.f32 %v3735, %v3749
        %v3779 = vadd.f32 %v3736, %v3749
        %v3780 = vadd.f32 %v3737, %v3749
        %v3781 = vadd.f32 %v3738, %v3749
        %v3782 = vadd.f32 %v3739, %v3749
        %v3783 = vadd.f32 %v3740, %v3749
        %v3784 = vadd.f32 %v3741, %v3749
        %v3785 = vadd.f32 %v3742, %v3749
        %v3786 = vadd.f32 %v3743, %v3749
        %v3787 = vmax.f32 %v3751, 0.0
        %v3788 = vmax.f32 %v3752, 0.0
        %v3789 = vmax.f32 %v3753, 0.0
        %v3790 = vmax.f32 %v3754, 0.0
        %v3791 = vmax.f32 %v3755, 0.0
        %v3792 = vmax.f32 %v3756, 0.0
        %v3793 = vmax.f32 %v3757, 0.0
        %v3794 = vmax.f32 %v3758, 0.0
        %v3795 = vmax.f32 %v3759, 0.0
        %v3796 = vmax.f32 %v3760, 0.0
        %v3797 = vmax.f32 %v3761, 0.0
        %v3798 = vmax.f32 %v3762, 0.0
        %v3799 = vmax.f32 %v3763, 0.0
        %v3800 = vmax.f32 %v3764, 0.0
        %v3801 = vmax.f32 %v3765, 0.0
        %v3802 = vmax.f32 %v3766, 0.0
        %v3803 = vmax.f32 %v3767, 0.0
        %v3804 = vmax.f32 %v3768, 0.0
        %v3805 = vmax.f32 %v3769, 0.0
        %v3806 = vmax.f32 %v3770, 0.0
        %v3807 = vmax.f32 %v3771, 0.0
        %v3808 = vmax.f32 %v3772, 0.0
        %v3809 = vmax.f32 %v3773, 0.0
        %v3810 = vmax.f32 %v3774, 0.0
        %v3811 = vmax.f32 %v3775, 0.0
        %v3812 = vmax.f32 %v3776, 0.0
        %v3813 = vmax.f32 %v3777, 0.0
        %v3814 = vmax.f32 %v3778, 0.0
        %v3815 = vmax.f32 %v3779, 0.0
        %v3816 = vmax.f32 %v3780, 0.0
        %v3817 = vmax.f32 %v3781, 0.0
        %v3818 = vmax.f32 %v3782, 0.0
        %v3819 = vmax.f32 %v3783, 0.0
        %v3820 = vmax.f32 %v3784, 0.0
        %v3821 = vmax.f32 %v3785, 0.0
        %v3822 = vmax.f32 %v3786, 0.0
        %vm3823 = vcmask 261120
        %3824 = vst.msk [vmem:[#allocation2] sm:$0xff] %vm3823, %v3787
        %3825 = vst.msk [vmem:[#allocation2 + $0x8] sm:$0xff] %vm3823, %v3788
        %3826 = vst.msk [vmem:[#allocation2 + $0x10] sm:$0xff] %vm3823, %v3789
        %3827 = vst.msk [vmem:[#allocation2 + $0x18] sm:$0xff] %vm3823, %v3790
        %3828 = vst.msk [vmem:[#allocation2 + $0x20] sm:$0xff] %vm3823, %v3791
        %3829 = vst.msk [vmem:[#allocation2 + $0x28] sm:$0xff] %vm3823, %v3792
        %3830 = vst.msk [vmem:[#allocation2 + $0x30] sm:$0xff] %vm3823, %v3793
        %3831 = vst.msk [vmem:[#allocation2 + $0x38] sm:$0xff] %vm3823, %v3794
        %3832 = vst.msk [vmem:[#allocation2 + $0x40] sm:$0xff] %vm3823, %v3795
        %3833 = vst.msk [vmem:[#allocation2 + $0x48] sm:$0xff] %vm3823, %v3796
        %3834 = vst.msk [vmem:[#allocation2 + $0x50] sm:$0xff] %vm3823, %v3797
        %3835 = vst.msk [vmem:[#allocation2 + $0x58] sm:$0xff] %vm3823, %v3798
        %3836 = vst.msk [vmem:[#allocation2 + $0x60] sm:$0xff] %vm3823, %v3799
        %3837 = vst.msk [vmem:[#allocation2 + $0x68] sm:$0xff] %vm3823, %v3800
        %3838 = vst.msk [vmem:[#allocation2 + $0x70] sm:$0xff] %vm3823, %v3801
        %3839 = vst.msk [vmem:[#allocation2 + $0x78] sm:$0xff] %vm3823, %v3802
        %3840 = vst.msk [vmem:[#allocation2 + $0x80] sm:$0xff] %vm3823, %v3803
        %3841 = vst.msk [vmem:[#allocation2 + $0x88] sm:$0xff] %vm3823, %v3804
        %3842 = vst.msk [vmem:[#allocation2 + $0x90] sm:$0xff] %vm3823, %v3805
        %3843 = vst.msk [vmem:[#allocation2 + $0x98] sm:$0xff] %vm3823, %v3806
        %3844 = vst.msk [vmem:[#allocation2 + $0xa0] sm:$0xff] %vm3823, %v3807
        %3845 = vst.msk [vmem:[#allocation2 + $0xa8] sm:$0xff] %vm3823, %v3808
        %3846 = vst.msk [vmem:[#allocation2 + $0xb0] sm:$0xff] %vm3823, %v3809
        %3847 = vst.msk [vmem:[#allocation2 + $0xb8] sm:$0xff] %vm3823, %v3810
        %3848 = vst.msk [vmem:[#allocation2 + $0xc0] sm:$0xff] %vm3823, %v3811
        %3849 = vst.msk [vmem:[#allocation2 + $0xc8] sm:$0xff] %vm3823, %v3812
        %3850 = vst.msk [vmem:[#allocation2 + $0xd0] sm:$0xff] %vm3823, %v3813
        %3851 = vst.msk [vmem:[#allocation2 + $0xd8] sm:$0xff] %vm3823, %v3814
        %3852 = vst.msk [vmem:[#allocation2 + $0xe0] sm:$0xff] %vm3823, %v3815
        %3853 = vst.msk [vmem:[#allocation2 + $0xe8] sm:$0xff] %vm3823, %v3816
        %3854 = vst.msk [vmem:[#allocation2 + $0xf0] sm:$0xff] %vm3823, %v3817
        %3855 = vst.msk [vmem:[#allocation2 + $0xf8] sm:$0xff] %vm3823, %v3818
        %3856 = vst.msk [vmem:[#allocation2 + $0x100] sm:$0xff] %vm3823, %v3819
        %3857 = vst.msk [vmem:[#allocation2 + $0x108] sm:$0xff] %vm3823, %v3820
        %3858 = vst.msk [vmem:[#allocation2 + $0x110] sm:$0xff] %vm3823, %v3821
        %3859 = vst.msk [vmem:[#allocation2 + $0x118] sm:$0xff] %vm3823, %v3822
        %v3860 = vld [vmem:[#allocation2] ss:$2 sm:$0xff]
        %s3861 = scalar_lea.vmem [#allocation2], 16
        %v3862 = vld [vmem:[%s3861] ss:$2 sm:$0xff]
        %s3863 = scalar_lea.vmem [#allocation2], 32
        %v3864 = vld [vmem:[%s3863] ss:$2 sm:$0xff]
        %s3865 = scalar_lea.vmem [#allocation2], 48
        %v3866 = vld [vmem:[%s3865] ss:$2 sm:$0xff]
        %s3867 = scalar_lea.vmem [#allocation2], 64
        %v3868 = vld [vmem:[%s3867] ss:$2 sm:$0xff]
        %s3869 = scalar_lea.vmem [#allocation2], 80
        %v3870 = vld [vmem:[%s3869] ss:$2 sm:$0xff]
        %s3871 = scalar_lea.vmem [#allocation2], 96
        %v3872 = vld [vmem:[%s3871] ss:$2 sm:$0xff]
        %s3873 = scalar_lea.vmem [#allocation2], 112
        %v3874 = vld [vmem:[%s3873] ss:$2 sm:$0xff]
        %s3875 = scalar_lea.vmem [#allocation2], 128
        %v3876 = vld [vmem:[%s3875] ss:$2 sm:$0xff]
        %s3877 = scalar_lea.vmem [#allocation2], 144
        %v3878 = vld [vmem:[%s3877] ss:$2 sm:$0xff]
        %s3879 = scalar_lea.vmem [#allocation2], 160
        %v3880 = vld [vmem:[%s3879] ss:$2 sm:$0xff]
        %s3881 = scalar_lea.vmem [#allocation2], 176
        %v3882 = vld [vmem:[%s3881] ss:$2 sm:$0xff]
        %s3883 = scalar_lea.vmem [#allocation2], 192
        %v3884 = vld [vmem:[%s3883] ss:$2 sm:$0xff]
        %s3885 = scalar_lea.vmem [#allocation2], 208
        %v3886 = vld [vmem:[%s3885] ss:$2 sm:$0xff]
        %s3887 = scalar_lea.vmem [#allocation2], 224
        %v3888 = vld [vmem:[%s3887] ss:$2 sm:$0xff]
        %s3889 = scalar_lea.vmem [#allocation2], 240
        %v3890 = vld [vmem:[%s3889] ss:$2 sm:$0xff]
        %s3891 = scalar_lea.vmem [#allocation2], 256
        %v3892 = vld [vmem:[%s3891] ss:$2 sm:$0xff]
        %s3893 = scalar_lea.vmem [#allocation2], 272
        %v3894 = vld [vmem:[%s3893] ss:$2 sm:$0xff]
        %s3895 = scalar_lea.vmem [#allocation2], 1
        %v3896 = vld [vmem:[%s3895] ss:$2 sm:$0xff]
        %s3897 = scalar_lea.vmem [#allocation2], 17
        %v3898 = vld [vmem:[%s3897] ss:$2 sm:$0xff]
        %s3899 = scalar_lea.vmem [#allocation2], 33
        %v3900 = vld [vmem:[%s3899] ss:$2 sm:$0xff]
        %s3901 = scalar_lea.vmem [#allocation2], 49
        %v3902 = vld [vmem:[%s3901] ss:$2 sm:$0xff]
        %s3903 = scalar_lea.vmem [#allocation2], 65
        %v3904 = vld [vmem:[%s3903] ss:$2 sm:$0xff]
        %s3905 = scalar_lea.vmem [#allocation2], 81
        %v3906 = vld [vmem:[%s3905] ss:$2 sm:$0xff]
        %s3907 = scalar_lea.vmem [#allocation2], 97
        %v3908 = vld [vmem:[%s3907] ss:$2 sm:$0xff]
        %s3909 = scalar_lea.vmem [#allocation2], 113
        %v3910 = vld [vmem:[%s3909] ss:$2 sm:$0xff]
        %s3911 = scalar_lea.vmem [#allocation2], 129
        %v3912 = vld [vmem:[%s3911] ss:$2 sm:$0xff]
        %s3913 = scalar_lea.vmem [#allocation2], 145
        %v3914 = vld [vmem:[%s3913] ss:$2 sm:$0xff]
        %s3915 = scalar_lea.vmem [#allocation2], 161
        %v3916 = vld [vmem:[%s3915] ss:$2 sm:$0xff]
        %s3917 = scalar_lea.vmem [#allocation2], 177
        %v3918 = vld [vmem:[%s3917] ss:$2 sm:$0xff]
        %s3919 = scalar_lea.vmem [#allocation2], 193
        %v3920 = vld [vmem:[%s3919] ss:$2 sm:$0xff]
        %s3921 = scalar_lea.vmem [#allocation2], 209
        %v3922 = vld [vmem:[%s3921] ss:$2 sm:$0xff]
        %s3923 = scalar_lea.vmem [#allocation2], 225
        %v3924 = vld [vmem:[%s3923] ss:$2 sm:$0xff]
        %s3925 = scalar_lea.vmem [#allocation2], 241
        %v3926 = vld [vmem:[%s3925] ss:$2 sm:$0xff]
        %s3927 = scalar_lea.vmem [#allocation2], 257
        %v3928 = vld [vmem:[%s3927] ss:$2 sm:$0xff]
        %s3929 = scalar_lea.vmem [#allocation2], 273
        %v3930 = vld [vmem:[%s3929] ss:$2 sm:$0xff]
        %v3931 = vmax.f32 %v3860, %v3896
        %v3932 = vmax.f32 %v3862, %v3898
        %v3933 = vmax.f32 %v3864, %v3900
        %v3934 = vmax.f32 %v3866, %v3902
        %v3935 = vmax.f32 %v3868, %v3904
        %v3936 = vmax.f32 %v3870, %v3906
        %v3937 = vmax.f32 %v3872, %v3908
        %v3938 = vmax.f32 %v3874, %v3910
        %v3939 = vmax.f32 %v3876, %v3912
        %v3940 = vmax.f32 %v3878, %v3914
        %v3941 = vmax.f32 %v3880, %v3916
        %v3942 = vmax.f32 %v3882, %v3918
        %v3943 = vmax.f32 %v3884, %v3920
        %v3944 = vmax.f32 %v3886, %v3922
        %v3945 = vmax.f32 %v3888, %v3924
        %v3946 = vmax.f32 %v3890, %v3926
        %v3947 = vmax.f32 %v3892, %v3928
        %v3948 = vmax.f32 %v3894, %v3930
        %3949 = vst.msk [vmem:[#allocation3] sm:$0xff] %vm3823, %v3931
        %3950 = vst.msk [vmem:[#allocation3 + $0x8] sm:$0xff] %vm3823, %v3932
        %3951 = vst.msk [vmem:[#allocation3 + $0x10] sm:$0xff] %vm3823, %v3933
        %3952 = vst.msk [vmem:[#allocation3 + $0x18] sm:$0xff] %vm3823, %v3934
        %3953 = vst.msk [vmem:[#allocation3 + $0x20] sm:$0xff] %vm3823, %v3935
        %3954 = vst.msk [vmem:[#allocation3 + $0x28] sm:$0xff] %vm3823, %v3936
        %3955 = vst.msk [vmem:[#allocation3 + $0x30] sm:$0xff] %vm3823, %v3937
        %3956 = vst.msk [vmem:[#allocation3 + $0x38] sm:$0xff] %vm3823, %v3938
        %3957 = vst.msk [vmem:[#allocation3 + $0x40] sm:$0xff] %vm3823, %v3939
        %3958 = vst.msk [vmem:[#allocation3 + $0x48] sm:$0xff] %vm3823, %v3940
        %3959 = vst.msk [vmem:[#allocation3 + $0x50] sm:$0xff] %vm3823, %v3941
        %3960 = vst.msk [vmem:[#allocation3 + $0x58] sm:$0xff] %vm3823, %v3942
        %3961 = vst.msk [vmem:[#allocation3 + $0x60] sm:$0xff] %vm3823, %v3943
        %3962 = vst.msk [vmem:[#allocation3 + $0x68] sm:$0xff] %vm3823, %v3944
        %3963 = vst.msk [vmem:[#allocation3 + $0x70] sm:$0xff] %vm3823, %v3945
        %3964 = vst.msk [vmem:[#allocation3 + $0x78] sm:$0xff] %vm3823, %v3946
        %3965 = vst.msk [vmem:[#allocation3 + $0x80] sm:$0xff] %vm3823, %v3947
        %3966 = vst.msk [vmem:[#allocation3 + $0x88] sm:$0xff] %vm3823, %v3948
        %v3967 = vld [vmem:[#allocation3] sm:$0xff]
        %v3968 = vld [vmem:[#allocation3 + $0x9] sm:$0xff]
        %v3969 = vmax.f32 %v3967, %v3968
        %v3970 = vpack.c.bf16 %v3969, %v3969
        %v3972 = vunpack.c.l.b16 %v3970
        %v3973 = vpack.c.b16 %v3972, %v3972
        %v3975 = vshrl.u32 %v3973, 16
        %v3977 = vrot.slane %v3975, 6
        %v3978 = vshll.u32 %v3973, 16
        %v3980 = vrot.slane %v3978, 7
        %v3981 = vor.u32 %v3977, %v3980
        %v3982 = vrot.slane %v3981, 4
        %vm3985 = vcmask 257025
        %vm3986 = vsmask.f32 7942
        %vm3987 = vmand %vm3985, %vm3986
        %v3988 = vld [vmem:[#allocation4 + $0x4] sm:$0xe]
        %v3989 = vsel %vm3987, %v3981, %v3988
        %3990 = vst [vmem:[#allocation4 + $0x4] sm:$0xe] %v3989
        %vm3991 = vcmask 254976
        %vm3992 = vsmask.f32 1280
        %vm3993 = vmand %vm3991, %vm3992
        %v3994 = vld [vmem:[#allocation4 + $0x8] sm:$0x3]
        %v3995 = vsel %vm3993, %v3982, %v3994
        %3996 = vst [vmem:[#allocation4 + $0x8] sm:$0x3] %v3995
        %v3997 = vld [vmem:[#allocation3 + $0x12] sm:$0xff]
        %v3998 = vld [vmem:[#allocation3 + $0x1b] sm:$0xff]
        %v3999 = vmax.f32 %v3997, %v3998
        %v4000 = vpack.c.bf16 %v3999, %v3999
        %v4002 = vunpack.c.l.b16 %v4000
        %v4003 = vpack.c.b16 %v4002, %v4002
        %v4005 = vshrl.u32 %v4003, 16
        %v4007 = vrot.slane %v4005, 5
        %v4008 = vshll.u32 %v4003, 16
        %v4010 = vrot.slane %v4008, 6
        %v4011 = vor.u32 %v4007, %v4010
        %v4012 = vrot.slane %v4011, 4
        %vm4015 = vcmask 257026
        %vm4016 = vsmask.f32 7946
        %vm4017 = vmand %vm4015, %vm4016
        %v4018 = vld [vmem:[#allocation4 + $0x8] sm:$0xc]
        %v4019 = vsel %vm4017, %v4011, %v4018
        %4020 = vst [vmem:[#allocation4 + $0x8] sm:$0xc] %v4019
        %vm4021 = vcmask 256000
        %vm4022 = vsmask.f32 2304
        %vm4023 = vmand %vm4021, %vm4022
        %v4024 = vld [vmem:[#allocation4 + $0xc] sm:$0x7]
        %v4025 = vsel %vm4023, %v4012, %v4024
        %4026 = vst [vmem:[#allocation4 + $0xc] sm:$0x7] %v4025
        %v4027 = vld [vmem:[#allocation3 + $0x24] sm:$0xff]
        %v4028 = vld [vmem:[#allocation3 + $0x2d] sm:$0xff]
        %v4029 = vmax.f32 %v4027, %v4028
        %v4030 = vpack.c.bf16 %v4029, %v4029
        %v4032 = vunpack.c.l.b16 %v4030
        %v4033 = vpack.c.b16 %v4032, %v4032
        %v4035 = vshll.u32 %v4033, 16
        %v4037 = vrot.slane %v4035, 5
        %v4038 = vshrl.u32 %v4033, 16
        %v4040 = vrot.slane %v4038, 4
        %v4041 = vor.u32 %v4040, %v4037
        %v4042 = vrot.slane %v4041, 4
        %vm4045 = vcmask 257027
        %vm4046 = vsmask.f32 7950
        %vm4047 = vmand %vm4045, %vm4046
        %v4048 = vld [vmem:[#allocation4 + $0xc] sm:$0x8]
        %v4049 = vsel %vm4047, %v4037, %v4048
        %4050 = vst [vmem:[#allocation4 + $0xc] sm:$0x8] %v4049
        %vm4051 = vcmask 257024
        %vm4052 = vsmask.f32 3328
        %vm4053 = vmand %vm4051, %vm4052
        %v4054 = vld [vmem:[#allocation4 + $0x10] sm:$0xf]
        %v4055 = vsel %vm4053, %v4042, %v4054
        %4056 = vst [vmem:[#allocation4 + $0x10] sm:$0xf] %v4055
        %v4057 = vld [vmem:[#allocation3 + $0x36] sm:$0xff]
        %v4058 = vld [vmem:[#allocation3 + $0x3f] sm:$0xff]
        %v4059 = vmax.f32 %v4057, %v4058
        %v4060 = vpack.c.bf16 %v4059, %v4059
        %v4062 = vunpack.c.l.b16 %v4060
        %v4063 = vpack.c.b16 %v4062, %v4062
        %v4065 = vshrl.u32 %v4063, 16
        %v4067 = vrot.slane %v4065, 7
        %v4068 = vshll.u32 %v4063, 16
        %v4070 = vor.u32 %v4067, %v4068
        %v4071 = vrot.slane %v4067, 4
        %vm4074 = vsmask.f32 7938
        %vm4075 = vmand %vm4051, %vm4074
        %v4076 = vld [vmem:[#allocation4 + $0x14] sm:$0xf]
        %v4077 = vsel %vm4075, %v4070, %v4076
        %4078 = vst [vmem:[#allocation4 + $0x14] sm:$0xf] %v4077
        %vm4079 = vcmask 253952
        %vm4080 = vsmask.f32 256
        %vm4081 = vmand %vm4079, %vm4080
        %v4082 = vld [vmem:[#allocation4 + $0x18] sm:$0x1]
        %v4083 = vsel %vm4081, %v4071, %v4082
        %4084 = vst [vmem:[#allocation4 + $0x18] sm:$0x1] %v4083
        %v4085 = vld [vmem:[#allocation3 + $0x48] sm:$0xff]
        %v4086 = vld [vmem:[#allocation3 + $0x51] sm:$0xff]
        %v4087 = vmax.f32 %v4085, %v4086
        %v4088 = vpack.c.bf16 %v4087, %v4087
        %v4090 = vunpack.c.l.b16 %v4088
        %v4091 = vpack.c.b16 %v4090, %v4090
        %v4093 = vshrl.u32 %v4091, 16
        %v4095 = vrot.slane %v4093, 6
        %v4096 = vshll.u32 %v4091, 16
        %v4098 = vrot.slane %v4096, 7
        %v4099 = vor.u32 %v4095, %v4098
        %v4100 = vrot.slane %v4099, 4
        %v4103 = vld [vmem:[#allocation4 + $0x18] sm:$0xe]
        %v4104 = vsel %vm3987, %v4099, %v4103
        %4105 = vst [vmem:[#allocation4 + $0x18] sm:$0xe] %v4104
        %v4106 = vld [vmem:[#allocation4 + $0x1c] sm:$0x3]
        %v4107 = vsel %vm3993, %v4100, %v4106
        %4108 = vst [vmem:[#allocation4 + $0x1c] sm:$0x3] %v4107
        %v4109 = vld [vmem:[#allocation3 + $0x5a] sm:$0xff]
        %v4110 = vld [vmem:[#allocation3 + $0x63] sm:$0xff]
        %v4111 = vmax.f32 %v4109, %v4110
        %v4112 = vpack.c.bf16 %v4111, %v4111
        %v4114 = vunpack.c.l.b16 %v4112
        %v4115 = vpack.c.b16 %v4114, %v4114
        %v4117 = vshrl.u32 %v4115, 16
        %v4119 = vrot.slane %v4117, 5
        %v4120 = vshll.u32 %v4115, 16
        %v4122 = vrot.slane %v4120, 6
        %v4123 = vor.u32 %v4119, %v4122
        %v4124 = vrot.slane %v4123, 4
        %v4127 = vld [vmem:[#allocation4 + $0x1c] sm:$0xc]
        %v4128 = vsel %vm4017, %v4123, %v4127
        %4129 = vst [vmem:[#allocation4 + $0x1c] sm:$0xc] %v4128
        %v4130 = vld [vmem:[#allocation4 + $0x20] sm:$0x7]
        %v4131 = vsel %vm4023, %v4124, %v4130
        %4132 = vst [vmem:[#allocation4 + $0x20] sm:$0x7] %v4131
        %v4133 = vld [vmem:[#allocation3 + $0x6c] sm:$0xff]
        %v4134 = vld [vmem:[#allocation3 + $0x75] sm:$0xff]
        %v4135 = vmax.f32 %v4133, %v4134
        %v4136 = vpack.c.bf16 %v4135, %v4135
        %v4138 = vunpack.c.l.b16 %v4136
        %v4139 = vpack.c.b16 %v4138, %v4138
        %v4141 = vshll.u32 %v4139, 16
        %v4143 = vrot.slane %v4141, 5
        %v4144 = vshrl.u32 %v4139, 16
        %v4146 = vrot.slane %v4144, 4
        %v4147 = vor.u32 %v4146, %v4143
        %v4148 = vrot.slane %v4147, 4
        %v4151 = vld [vmem:[#allocation4 + $0x20] sm:$0x8]
        %v4152 = vsel %vm4047, %v4143, %v4151
        %4153 = vst [vmem:[#allocation4 + $0x20] sm:$0x8] %v4152
        %v4154 = vld [vmem:[#allocation4 + $0x24] sm:$0xf]
        %v4155 = vsel %vm4053, %v4148, %v4154
        %4156 = vst [vmem:[#allocation4 + $0x24] sm:$0xf] %v4155
        %v4157 = vld [vmem:[#allocation3 + $0x7e] sm:$0xff]
        %v4158 = vld [vmem:[#allocation3 + $0x87] sm:$0xff]
        %v4159 = vmax.f32 %v4157, %v4158
        %v4160 = vpack.c.bf16 %v4159, %v4159
        %v4162 = vunpack.c.l.b16 %v4160
        %v4163 = vpack.c.b16 %v4162, %v4162
        %v4165 = vshrl.u32 %v4163, 16
        %v4167 = vrot.slane %v4165, 7
        %v4168 = vshll.u32 %v4163, 16
        %v4170 = vor.u32 %v4167, %v4168
        %v4171 = vrot.slane %v4167, 4
        %v4174 = vld [vmem:[#allocation4 + $0x28] sm:$0xf]
        %v4175 = vsel %vm4075, %v4170, %v4174
        %4176 = vst [vmem:[#allocation4 + $0x28] sm:$0xf] %v4175
        %v4177 = vld [vmem:[#allocation4 + $0x2c] sm:$0x1]
        %v4178 = vsel %vm4081, %v4171, %v4177
        %4179 = vst [vmem:[#allocation4 + $0x2c] sm:$0x1] %v4178
        %vm4180 = vcmask 519168
        %4181 = vst.msk [vmem:[#allocation7] sm:$0xf] %vm4180, 0
        %4182 = vst.msk [vmem:[#allocation7 + $0x4] sm:$0xf] %vm4180, 0
        %4183 = vst.msk [vmem:[#allocation7 + $0x8] sm:$0xf] %vm4180, 0
        %4184 = vst.msk [vmem:[#allocation7 + $0xc] sm:$0xf] %vm4180, 0
        %vm4185 = vcmask 518144
        %4186 = vst.msk [vmem:[#allocation7 + $0x10] sm:$0x7] %vm4185, 0
        %v4187 = vld [vmem:[#allocation4] sm:$0xf]
        %v4188 = vld [vmem:[#allocation4 + $0x4] sm:$0xf]
        %v4189 = vld [vmem:[#allocation4 + $0x8] sm:$0xf]
        %v4190 = vld [vmem:[#allocation4 + $0xc] sm:$0xf]
        %v4191 = vld [vmem:[#allocation4 + $0x10] sm:$0xf]
        %v4192 = vld [vmem:[#allocation4 + $0x14] sm:$0xf]
        %v4193 = vld [vmem:[#allocation4 + $0x18] sm:$0xf]
        %v4194 = vld [vmem:[#allocation4 + $0x1c] sm:$0xf]
        %v4195 = vld [vmem:[#allocation4 + $0x20] sm:$0xf]
        %v4196 = vld [vmem:[#allocation4 + $0x24] sm:$0xf]
        %v4197 = vld [vmem:[%s3] sm:$0xf]
        %v4198 = vld [vmem:[%s3 + $0x4] sm:$0xf]
        %v4199 = vld [vmem:[%s3 + $0x8] sm:$0xf]
        %v4200 = vld [vmem:[%s3 + $0xc] sm:$0xf]
        %v4201 = vld [vmem:[#allocation4 + $0x28] sm:$0x1]
        %s4202 = scalar_lea.vmem %s3, 16
        %v4203 = vld [vmem:[%s4202] sm:$0xf]
        %v4204 = vld [vmem:[%s4202 + $0x4] sm:$0xf]
        %v4205 = vld [vmem:[%s4202 + $0x8] sm:$0xf]
        %v4206 = vld [vmem:[%s4202 + $0xc] sm:$0xf]
        %v4218 = vunpack.c.l.b16 %v4187
        %v4219 = vunpack.c.l.b16 %v4188
        %v4220 = vunpack.c.l.b16 %v4189
        %v4221 = vunpack.c.l.b16 %v4190
        %v4222 = vunpack.c.l.b16 %v4191
        %v4223 = vunpack.c.l.b16 %v4192
        %v4224 = vunpack.c.l.b16 %v4193
        %v4225 = vunpack.c.l.b16 %v4194
        %v4226 = vunpack.c.l.b16 %v4195
        %v4227 = vunpack.c.l.b16 %v4196
        %v4228 = vunpack.c.l.b16 %v4201
        %v4229 = vpack.c.b16 %v4219, %v4218
        %v4230 = vpack.c.b16 %v4221, %v4220
        %v4231 = vpack.c.b16 %v4223, %v4222
        %v4232 = vpack.c.b16 %v4225, %v4224
        %v4233 = vpack.c.b16 %v4227, %v4226
        %v4234 = vpack.c.b16 %v4228, %v4228
        %v4236 = vshrl.u32 %v4229, 16
        %v4238 = vshll.u32 %v4229, 16
        %v4240 = vrot.slane %v4238, 1
        %v4241 = vor.u32 %v4236, %v4240
        %v4243 = vshll.u32 %v4230, 16
        %v4245 = vrot.slane %v4243, 1
        %v4246 = vsel %vm426, %v4241, %v4245
        %v4247 = vshrl.u32 %v4230, 16
        %v4249 = vor.u32 %v4247, %v4245
        %v4251 = vshll.u32 %v4231, 16
        %v4253 = vrot.slane %v4251, 1
        %v4254 = vsel %vm426, %v4249, %v4253
        %v4255 = vshrl.u32 %v4231, 16
        %v4257 = vor.u32 %v4255, %v4253
        %v4259 = vshll.u32 %v4232, 16
        %v4261 = vrot.slane %v4259, 1
        %v4262 = vsel %vm426, %v4257, %v4261
        %v4263 = vshrl.u32 %v4232, 16
        %v4265 = vor.u32 %v4263, %v4261
        %v4267 = vshll.u32 %v4233, 16
        %v4269 = vrot.slane %v4267, 1
        %v4270 = vsel %vm426, %v4265, %v4269
        %v4271 = vshrl.u32 %v4233, 16
        %v4273 = vor.u32 %v4271, %v4269
        %v4275 = vshll.u32 %v4234, 16
        %v4277 = vrot.slane %v4275, 1
        %v4278 = vsel %vm426, %v4273, %v4277
        %v4283 = vunpack.c.l.b16 %v4203
        %v4284 = vunpack.c.l.b16 %v4204
        %v4285 = vunpack.c.l.b16 %v4205
        %v4286 = vunpack.c.l.b16 %v4206
        %v4287 = vpack.c.b16 %v4284, %v4283
        %v4288 = vpack.c.b16 %v4286, %v4285
        %v4292 = vsel %vm3823, %v4246, 0
        %v4295 = vsel %vm3823, %v4254, 0
        %v4298 = vsel %vm3823, %v4262, 0
        %v4301 = vsel %vm3823, %v4270, 0
        %v4304 = vsel %vm3823, %v4278, 0
        %4306 = vmatprep.subr.bf16.mxu0 0
        %4307 = vmatpush1.bf16.msra.mxu0 %v4287
        %4308 = vmatprep.subr.bf16.mxu0 0
        %4309 = vmatpush1.bf16.msra.mxu0 %v4288
        %4310 = vmatprep.subr.bf16.mxu0 0
        %4311 = vmatpush1.bf16.msra.mxu0 0
        %4312 = vmatprep.subr.bf16.mxu0 0
        %4313 = vmatpush1.bf16.msra.mxu0 0
        %4314 = vmatprep.subr.bf16.mxu0 0
        %4315 = vmatpush1.bf16.msra.mxu0 0
        %4316 = vmatprep.subr.bf16.mxu0 0
        %4317 = vmatpush1.bf16.msra.mxu0 0
        %4318 = vmatprep.subr.bf16.mxu0 0
        %4319 = vmatpush1.bf16.msra.mxu0 0
        %4320 = vmatprep.subr.bf16.mxu0 0
        %4321 = vmatpush1.bf16.msra.mxu0 0
        %4322 = vmatprep.subr.bf16.mxu0 0
        %4323 = vmatpush1.bf16.msra.mxu0 0
        %4324 = vmatprep.subr.bf16.mxu0 0
        %4325 = vmatpush1.bf16.msra.mxu0 0
        %4326 = vmatprep.subr.bf16.mxu0 0
        %4327 = vmatpush1.bf16.msra.mxu0 0
        %4328 = vmatprep.subr.bf16.mxu0 0
        %4329 = vmatpush1.bf16.msra.mxu0 0
        %4330 = vmatprep.subr.bf16.mxu0 0
        %4331 = vmatpush1.bf16.msra.mxu0 0
        %4332 = vmatprep.subr.bf16.mxu0 0
        %4333 = vmatpush1.bf16.msra.mxu0 0
        %4334 = vmatprep.subr.bf16.mxu0 0
        %4335 = vmatpush1.bf16.msra.mxu0 0
        %4336 = vmatprep.subr.bf16.mxu0 0
        %4337 = vmatpush1.bf16.msra.mxu0 0
        %4338 = vmatprep.mubr.bf16.mxu0 0
        %4339 = vmatmul.mubr.bf16.gmra.mrb[0].mxu0 %v4292
        %v4340 = vpop.f32.mrb[0].mxu0
        %v4341 = vadd.f32 0.0, %v4340
        %v4342 = vpop.f32.mrb[0].mxu0
        %v4343 = vpop.f32.mrb[0].mxu0
        %v4344 = vadd.f32 0.0, %v4343
        %v4345 = vpop.f32.mrb[0].mxu0
        %4346 = vmatprep.mubr.bf16.mxu0 0
        %4347 = vmatmul.mubr.bf16.gmra.mrb[0].mxu0 %v4295
        %v4348 = vpop.f32.mrb[0].mxu0
        %v4349 = vadd.f32 0.0, %v4348
        %v4350 = vpop.f32.mrb[0].mxu0
        %v4351 = vpop.f32.mrb[0].mxu0
        %v4352 = vadd.f32 0.0, %v4351
        %v4353 = vpop.f32.mrb[0].mxu0
        %4354 = vmatprep.mubr.bf16.mxu0 0
        %4355 = vmatmul.mubr.bf16.gmra.mrb[0].mxu0 %v4298
        %v4356 = vpop.f32.mrb[0].mxu0
        %v4357 = vadd.f32 0.0, %v4356
        %v4358 = vpop.f32.mrb[0].mxu0
        %v4359 = vpop.f32.mrb[0].mxu0
        %v4360 = vadd.f32 0.0, %v4359
        %v4361 = vpop.f32.mrb[0].mxu0
        %4362 = vmatprep.mubr.bf16.mxu0 0
        %4363 = vmatmul.mubr.bf16.gmra.mrb[0].mxu0 %v4301
        %v4364 = vpop.f32.mrb[0].mxu0
        %v4365 = vadd.f32 0.0, %v4364
        %v4366 = vpop.f32.mrb[0].mxu0
        %v4367 = vpop.f32.mrb[0].mxu0
        %v4368 = vadd.f32 0.0, %v4367
        %v4369 = vpop.f32.mrb[0].mxu0
        %4370 = vmatprep.mubr.bf16.mxu0 0
        %4371 = vmatmul.mubr.bf16.gmra.mrb[0].mxu0 %v4304
        %v4372 = vpop.f32.mrb[0].mxu0
        %v4373 = vadd.f32 0.0, %v4372
        %v4374 = vpop.f32.mrb[0].mxu0
        %v4375 = vpop.f32.mrb[0].mxu0
        %v4376 = vadd.f32 0.0, %v4375
        %v4377 = vpop.f32.mrb[0].mxu0
        %4378 = vdwg.mxu0
        %v4383 = vunpack.c.l.b16 %v4197
        %v4384 = vunpack.c.l.b16 %v4198
        %v4385 = vunpack.c.l.b16 %v4199
        %v4386 = vunpack.c.l.b16 %v4200
        %v4387 = vpack.c.b16 %v4384, %v4383
        %v4388 = vpack.c.b16 %v4386, %v4385
        %v4391 = vsel %vm3823, %v4229, 0
        %v4393 = vsel %vm3823, %v4230, 0
        %v4395 = vsel %vm3823, %v4231, 0
        %v4397 = vsel %vm3823, %v4232, 0
        %v4399 = vsel %vm3823, %v4233, 0
        %4401 = vmatprep.subr.bf16.mxu0 0
        %4402 = vmatpush1.bf16.msra.mxu0 %v4387
        %4403 = vmatprep.subr.bf16.mxu0 0
        %4404 = vmatpush1.bf16.msra.mxu0 %v4388
        %4405 = vmatprep.subr.bf16.mxu0 0
        %4406 = vmatpush1.bf16.msra.mxu0 0
        %4407 = vmatprep.subr.bf16.mxu0 0
        %4408 = vmatpush1.bf16.msra.mxu0 0
        %4409 = vmatprep.subr.bf16.mxu0 0
        %4410 = vmatpush1.bf16.msra.mxu0 0
        %4411 = vmatprep.subr.bf16.mxu0 0
        %4412 = vmatpush1.bf16.msra.mxu0 0
        %4413 = vmatprep.subr.bf16.mxu0 0
        %4414 = vmatpush1.bf16.msra.mxu0 0
        %4415 = vmatprep.subr.bf16.mxu0 0
        %4416 = vmatpush1.bf16.msra.mxu0 0
        %4417 = vmatprep.subr.bf16.mxu0 0
        %4418 = vmatpush1.bf16.msra.mxu0 0
        %4419 = vmatprep.subr.bf16.mxu0 0
        %4420 = vmatpush1.bf16.msra.mxu0 0
        %4421 = vmatprep.subr.bf16.mxu0 0
        %4422 = vmatpush1.bf16.msra.mxu0 0
        %4423 = vmatprep.subr.bf16.mxu0 0
        %4424 = vmatpush1.bf16.msra.mxu0 0
        %4425 = vmatprep.subr.bf16.mxu0 0
        %4426 = vmatpush1.bf16.msra.mxu0 0
        %4427 = vmatprep.subr.bf16.mxu0 0
        %4428 = vmatpush1.bf16.msra.mxu0 0
        %4429 = vmatprep.subr.bf16.mxu0 0
        %4430 = vmatpush1.bf16.msra.mxu0 0
        %4431 = vmatprep.subr.bf16.mxu0 0
        %4432 = vmatpush1.bf16.msra.mxu0 0
        %4433 = vmatprep.mubr.bf16.mxu0 0
        %4434 = vmatmul.mubr.bf16.gmra.mrb[0].mxu0 %v4391
        %v4435 = vpop.f32.mrb[0].mxu0
        %v4436 = vadd.f32 %v4341, %v4435
        %v4437 = vpop.f32.mrb[0].mxu0
        %v4438 = vpop.f32.mrb[0].mxu0
        %v4439 = vadd.f32 %v4344, %v4438
        %v4440 = vpop.f32.mrb[0].mxu0
        %4441 = vmatprep.mubr.bf16.mxu0 0
        %4442 = vmatmul.mubr.bf16.gmra.mrb[0].mxu0 %v4393
        %v4443 = vpop.f32.mrb[0].mxu0
        %v4444 = vadd.f32 %v4349, %v4443
        %v4445 = vpop.f32.mrb[0].mxu0
        %v4446 = vpop.f32.mrb[0].mxu0
        %v4447 = vadd.f32 %v4352, %v4446
        %v4448 = vpop.f32.mrb[0].mxu0
        %4449 = vmatprep.mubr.bf16.mxu0 0
        %4450 = vmatmul.mubr.bf16.gmra.mrb[0].mxu0 %v4395
        %v4451 = vpop.f32.mrb[0].mxu0
        %v4452 = vadd.f32 %v4357, %v4451
        %v4453 = vpop.f32.mrb[0].mxu0
        %v4454 = vpop.f32.mrb[0].mxu0
        %v4455 = vadd.f32 %v4360, %v4454
        %v4456 = vpop.f32.mrb[0].mxu0
        %4457 = vmatprep.mubr.bf16.mxu0 0
        %4458 = vmatmul.mubr.bf16.gmra.mrb[0].mxu0 %v4397
        %v4459 = vpop.f32.mrb[0].mxu0
        %v4460 = vadd.f32 %v4365, %v4459
        %v4461 = vpop.f32.mrb[0].mxu0
        %v4462 = vpop.f32.mrb[0].mxu0
        %v4463 = vadd.f32 %v4368, %v4462
        %v4464 = vpop.f32.mrb[0].mxu0
        %4465 = vmatprep.mubr.bf16.mxu0 0
        %4466 = vmatmul.mubr.bf16.gmra.mrb[0].mxu0 %v4399
        %v4467 = vpop.f32.mrb[0].mxu0
        %v4468 = vadd.f32 %v4373, %v4467
        %v4469 = vpop.f32.mrb[0].mxu0
        %v4470 = vpop.f32.mrb[0].mxu0
        %v4471 = vadd.f32 %v4376, %v4470
        %v4472 = vpop.f32.mrb[0].mxu0
        %4473 = vdwg.mxu0
        %v4474 = vld [vmem:[#allocation4] sm:$0xe]
        %s4475 = scalar_lea.vmem %s3, 32
        %v4476 = vld [vmem:[%s4475] sm:$0xf]
        %v4477 = vld [vmem:[%s4475 + $0x4] sm:$0xf]
        %v4478 = vld [vmem:[%s4475 + $0x8] sm:$0xf]
        %v4479 = vld [vmem:[%s4475 + $0xc] sm:$0xf]
        %v4481 = vunpack.c.l.b16 %v4474
        %v4482 = vpack.c.b16 %v4219, %v4481
        %v4483 = vrot.slane %v4482, 1
        %v4484 = vrot.slane %v4230, 1
        %v4485 = vsel %vm1036, %v4483, %v4484
        %v4486 = vrot.slane %v4231, 1
        %v4487 = vsel %vm1036, %v4484, %v4486
        %v4488 = vrot.slane %v4232, 1
        %v4489 = vsel %vm1036, %v4486, %v4488
        %v4490 = vrot.slane %v4233, 1
        %v4491 = vsel %vm1036, %v4488, %v4490
        %v4492 = vrot.slane %v4234, 1
        %v4493 = vsel %vm1036, %v4490, %v4492
        %v4498 = vunpack.c.l.b16 %v4476
        %v4499 = vunpack.c.l.b16 %v4477
        %v4500 = vunpack.c.l.b16 %v4478
        %v4501 = vunpack.c.l.b16 %v4479
        %v4502 = vpack.c.b16 %v4499, %v4498
        %v4503 = vpack.c.b16 %v4501, %v4500
        %v4507 = vsel %vm3823, %v4485, 0
        %v4510 = vsel %vm3823, %v4487, 0
        %v4513 = vsel %vm3823, %v4489, 0
        %v4516 = vsel %vm3823, %v4491, 0
        %v4519 = vsel %vm3823, %v4493, 0
        %4521 = vmatprep.subr.bf16.mxu0 0
        %4522 = vmatpush1.bf16.msra.mxu0 %v4502
        %4523 = vmatprep.subr.bf16.mxu0 0
        %4524 = vmatpush1.bf16.msra.mxu0 %v4503
        %4525 = vmatprep.subr.bf16.mxu0 0
        %4526 = vmatpush1.bf16.msra.mxu0 0
        %4527 = vmatprep.subr.bf16.mxu0 0
        %4528 = vmatpush1.bf16.msra.mxu0 0
        %4529 = vmatprep.subr.bf16.mxu0 0
        %4530 = vmatpush1.bf16.msra.mxu0 0
        %4531 = vmatprep.subr.bf16.mxu0 0
        %4532 = vmatpush1.bf16.msra.mxu0 0
        %4533 = vmatprep.subr.bf16.mxu0 0
        %4534 = vmatpush1.bf16.msra.mxu0 0
        %4535 = vmatprep.subr.bf16.mxu0 0
        %4536 = vmatpush1.bf16.msra.mxu0 0
        %4537 = vmatprep.subr.bf16.mxu0 0
        %4538 = vmatpush1.bf16.msra.mxu0 0
        %4539 = vmatprep.subr.bf16.mxu0 0
        %4540 = vmatpush1.bf16.msra.mxu0 0
        %4541 = vmatprep.subr.bf16.mxu0 0
        %4542 = vmatpush1.bf16.msra.mxu0 0
        %4543 = vmatprep.subr.bf16.mxu0 0
        %4544 = vmatpush1.bf16.msra.mxu0 0
        %4545 = vmatprep.subr.bf16.mxu0 0
        %4546 = vmatpush1.bf16.msra.mxu0 0
        %4547 = vmatprep.subr.bf16.mxu0 0
        %4548 = vmatpush1.bf16.msra.mxu0 0
        %4549 = vmatprep.subr.bf16.mxu0 0
        %4550 = vmatpush1.bf16.msra.mxu0 0
        %4551 = vmatprep.subr.bf16.mxu0 0
        %4552 = vmatpush1.bf16.msra.mxu0 0
        %4553 = vmatprep.mubr.bf16.mxu0 0
        %4554 = vmatmul.mubr.bf16.gmra.mrb[0].mxu0 %v4507
        %v4555 = vpop.f32.mrb[0].mxu0
        %v4556 = vadd.f32 0.0, %v4555
        %v4557 = vpop.f32.mrb[0].mxu0
        %v4558 = vpop.f32.mrb[0].mxu0
        %v4559 = vadd.f32 0.0, %v4558
        %v4560 = vpop.f32.mrb[0].mxu0
        %4561 = vmatprep.mubr.bf16.mxu0 0
        %4562 = vmatmul.mubr.bf16.gmra.mrb[0].mxu0 %v4510
        %v4563 = vpop.f32.mrb[0].mxu0
        %v4564 = vadd.f32 0.0, %v4563
        %v4565 = vpop.f32.mrb[0].mxu0
        %v4566 = vpop.f32.mrb[0].mxu0
        %v4567 = vadd.f32 0.0, %v4566
        %v4568 = vpop.f32.mrb[0].mxu0
        %4569 = vmatprep.mubr.bf16.mxu0 0
        %4570 = vmatmul.mubr.bf16.gmra.mrb[0].mxu0 %v4513
        %v4571 = vpop.f32.mrb[0].mxu0
        %v4572 = vadd.f32 0.0, %v4571
        %v4573 = vpop.f32.mrb[0].mxu0
        %v4574 = vpop.f32.mrb[0].mxu0
        %v4575 = vadd.f32 0.0, %v4574
        %v4576 = vpop.f32.mrb[0].mxu0
        %4577 = vmatprep.mubr.bf16.mxu0 0
        %4578 = vmatmul.mubr.bf16.gmra.mrb[0].mxu0 %v4516
        %v4579 = vpop.f32.mrb[0].mxu0
        %v4580 = vadd.f32 0.0, %v4579
        %v4581 = vpop.f32.mrb[0].mxu0
        %v4582 = vpop.f32.mrb[0].mxu0
        %v4583 = vadd.f32 0.0, %v4582
        %v4584 = vpop.f32.mrb[0].mxu0
        %4585 = vmatprep.mubr.bf16.mxu0 0
        %4586 = vmatmul.mubr.bf16.gmra.mrb[0].mxu0 %v4519
        %v4587 = vpop.f32.mrb[0].mxu0
        %v4588 = vadd.f32 0.0, %v4587
        %v4589 = vpop.f32.mrb[0].mxu0
        %v4590 = vpop.f32.mrb[0].mxu0
        %v4591 = vadd.f32 0.0, %v4590
        %v4592 = vpop.f32.mrb[0].mxu0
        %4593 = vdwg.mxu0
        %v4594 = vadd.f32 %v4436, %v4556
        %v4595 = vadd.f32 %v4439, %v4559
        %v4596 = vadd.f32 %v4444, %v4564
        %v4597 = vadd.f32 %v4447, %v4567
        %v4598 = vadd.f32 %v4452, %v4572
        %v4599 = vadd.f32 %v4455, %v4575
        %v4600 = vadd.f32 %v4460, %v4580
        %v4601 = vadd.f32 %v4463, %v4583
        %v4602 = vadd.f32 %v4468, %v4588
        %v4603 = vadd.f32 %v4471, %v4591
        %v4604 = vld [vmem:[#allocation4 + $0x4] sm:$0xe]
        %v4605 = vld [vmem:[#allocation4 + $0x8] sm:$0xf]
        %v4606 = vld [vmem:[#allocation4 + $0xc] sm:$0xf]
        %v4607 = vld [vmem:[#allocation4 + $0x10] sm:$0xf]
        %v4608 = vld [vmem:[#allocation4 + $0x14] sm:$0xf]
        %v4609 = vld [vmem:[#allocation4 + $0x18] sm:$0xf]
        %v4610 = vld [vmem:[#allocation4 + $0x1c] sm:$0xf]
        %v4611 = vld [vmem:[#allocation4 + $0x20] sm:$0xf]
        %v4612 = vld [vmem:[#allocation4 + $0x24] sm:$0xf]
        %v4613 = vld [vmem:[#allocation4 + $0x28] sm:$0xf]
        %v4614 = vld [vmem:[#allocation4 + $0x2c] sm:$0x1]
        %s4615 = scalar_lea.vmem %s3, 48
        %v4616 = vld [vmem:[%s4615] sm:$0xf]
        %v4617 = vld [vmem:[%s4615 + $0x4] sm:$0xf]
        %v4618 = vld [vmem:[%s4615 + $0x8] sm:$0xf]
        %v4619 = vld [vmem:[%s4615 + $0xc] sm:$0xf]
        %v4631 = vunpack.c.l.b16 %v4604
        %v4632 = vunpack.c.l.b16 %v4605
        %v4633 = vunpack.c.l.b16 %v4606
        %v4634 = vunpack.c.l.b16 %v4607
        %v4635 = vunpack.c.l.b16 %v4608
        %v4636 = vunpack.c.l.b16 %v4609
        %v4637 = vunpack.c.l.b16 %v4610
        %v4638 = vunpack.c.l.b16 %v4611
        %v4639 = vunpack.c.l.b16 %v4612
        %v4640 = vunpack.c.l.b16 %v4613
        %v4641 = vunpack.c.l.b16 %v4614
        %v4642 = vpack.c.b16 %v4632, %v4631
        %v4643 = vpack.c.b16 %v4634, %v4633
        %v4644 = vpack.c.b16 %v4636, %v4635
        %v4645 = vpack.c.b16 %v4638, %v4637
        %v4646 = vpack.c.b16 %v4640, %v4639
        %v4647 = vpack.c.b16 %v4641, %v4641
        %v4648 = vrot.slane %v4642, 1
        %v4649 = vrot.slane %v4643, 1
        %v4650 = vsel %vm1036, %v4648, %v4649
        %v4651 = vrot.slane %v4644, 1
        %v4652 = vsel %vm1036, %v4649, %v4651
        %v4653 = vrot.slane %v4645, 1
        %v4654 = vsel %vm1036, %v4651, %v4653
        %v4655 = vrot.slane %v4646, 1
        %v4656 = vsel %vm1036, %v4653, %v4655
        %v4657 = vrot.slane %v4647, 1
        %v4658 = vsel %vm1036, %v4655, %v4657
        %v4663 = vunpack.c.l.b16 %v4616
        %v4664 = vunpack.c.l.b16 %v4617
        %v4665 = vunpack.c.l.b16 %v4618
        %v4666 = vunpack.c.l.b16 %v4619
        %v4667 = vpack.c.b16 %v4664, %v4663
        %v4668 = vpack.c.b16 %v4666, %v4665
        %v4672 = vsel %vm3823, %v4650, 0
        %v4675 = vsel %vm3823, %v4652, 0
        %v4678 = vsel %vm3823, %v4654, 0
        %v4681 = vsel %vm3823, %v4656, 0
        %v4684 = vsel %vm3823, %v4658, 0
        %4686 = vmatprep.subr.bf16.mxu0 0
        %4687 = vmatpush1.bf16.msra.mxu0 %v4667
        %4688 = vmatprep.subr.bf16.mxu0 0
        %4689 = vmatpush1.bf16.msra.mxu0 %v4668
        %4690 = vmatprep.subr.bf16.mxu0 0
        %4691 = vmatpush1.bf16.msra.mxu0 0
        %4692 = vmatprep.subr.bf16.mxu0 0
        %4693 = vmatpush1.bf16.msra.mxu0 0
        %4694 = vmatprep.subr.bf16.mxu0 0
        %4695 = vmatpush1.bf16.msra.mxu0 0
        %4696 = vmatprep.subr.bf16.mxu0 0
        %4697 = vmatpush1.bf16.msra.mxu0 0
        %4698 = vmatprep.subr.bf16.mxu0 0
        %4699 = vmatpush1.bf16.msra.mxu0 0
        %4700 = vmatprep.subr.bf16.mxu0 0
        %4701 = vmatpush1.bf16.msra.mxu0 0
        %4702 = vmatprep.subr.bf16.mxu0 0
        %4703 = vmatpush1.bf16.msra.mxu0 0
        %4704 = vmatprep.subr.bf16.mxu0 0
        %4705 = vmatpush1.bf16.msra.mxu0 0
        %4706 = vmatprep.subr.bf16.mxu0 0
        %4707 = vmatpush1.bf16.msra.mxu0 0
        %4708 = vmatprep.subr.bf16.mxu0 0
        %4709 = vmatpush1.bf16.msra.mxu0 0
        %4710 = vmatprep.subr.bf16.mxu0 0
        %4711 = vmatpush1.bf16.msra.mxu0 0
        %4712 = vmatprep.subr.bf16.mxu0 0
        %4713 = vmatpush1.bf16.msra.mxu0 0
        %4714 = vmatprep.subr.bf16.mxu0 0
        %4715 = vmatpush1.bf16.msra.mxu0 0
        %4716 = vmatprep.subr.bf16.mxu0 0
        %4717 = vmatpush1.bf16.msra.mxu0 0
        %4718 = vmatprep.mubr.bf16.mxu0 0
        %4719 = vmatmul.mubr.bf16.gmra.mrb[0].mxu0 %v4672
        %v4720 = vpop.f32.mrb[0].mxu0
        %v4721 = vadd.f32 0.0, %v4720
        %v4722 = vpop.f32.mrb[0].mxu0
        %v4723 = vpop.f32.mrb[0].mxu0
        %v4724 = vadd.f32 0.0, %v4723
        %v4725 = vpop.f32.mrb[0].mxu0
        %4726 = vmatprep.mubr.bf16.mxu0 0
        %4727 = vmatmul.mubr.bf16.gmra.mrb[0].mxu0 %v4675
        %v4728 = vpop.f32.mrb[0].mxu0
        %v4729 = vadd.f32 0.0, %v4728
        %v4730 = vpop.f32.mrb[0].mxu0
        %v4731 = vpop.f32.mrb[0].mxu0
        %v4732 = vadd.f32 0.0, %v4731
        %v4733 = vpop.f32.mrb[0].mxu0
        %4734 = vmatprep.mubr.bf16.mxu0 0
        %4735 = vmatmul.mubr.bf16.gmra.mrb[0].mxu0 %v4678
        %v4736 = vpop.f32.mrb[0].mxu0
        %v4737 = vadd.f32 0.0, %v4736
        %v4738 = vpop.f32.mrb[0].mxu0
        %v4739 = vpop.f32.mrb[0].mxu0
        %v4740 = vadd.f32 0.0, %v4739
        %v4741 = vpop.f32.mrb[0].mxu0
        %4742 = vmatprep.mubr.bf16.mxu0 0
        %4743 = vmatmul.mubr.bf16.gmra.mrb[0].mxu0 %v4681
        %v4744 = vpop.f32.mrb[0].mxu0
        %v4745 = vadd.f32 0.0, %v4744
        %v4746 = vpop.f32.mrb[0].mxu0
        %v4747 = vpop.f32.mrb[0].mxu0
        %v4748 = vadd.f32 0.0, %v4747
        %v4749 = vpop.f32.mrb[0].mxu0
        %4750 = vmatprep.mubr.bf16.mxu0 0
        %4751 = vmatmul.mubr.bf16.gmra.mrb[0].mxu0 %v4684
        %v4752 = vpop.f32.mrb[0].mxu0
        %v4753 = vadd.f32 0.0, %v4752
        %v4754 = vpop.f32.mrb[0].mxu0
        %v4755 = vpop.f32.mrb[0].mxu0
        %v4756 = vadd.f32 0.0, %v4755
        %v4757 = vpop.f32.mrb[0].mxu0
        %4758 = vdwg.mxu0
        %v4759 = vadd.f32 %v4594, %v4721
        %v4760 = vadd.f32 %v4595, %v4724
        %v4761 = vadd.f32 %v4596, %v4729
        %v4762 = vadd.f32 %v4597, %v4732
        %v4763 = vadd.f32 %v4598, %v4737
        %v4764 = vadd.f32 %v4599, %v4740
        %v4765 = vadd.f32 %v4600, %v4745
        %v4766 = vadd.f32 %v4601, %v4748
        %v4767 = vadd.f32 %v4602, %v4753
        %v4768 = vadd.f32 %v4603, %v4756
        %v4769 = vld [vmem:[#allocation4 + $0x2c] sm:$0x3]
        %s4770 = scalar_lea.vmem %s3, 64
        %v4771 = vld [vmem:[%s4770] sm:$0xf]
        %v4772 = vld [vmem:[%s4770 + $0x4] sm:$0xf]
        %v4773 = vld [vmem:[%s4770 + $0x8] sm:$0xf]
        %v4774 = vld [vmem:[%s4770 + $0xc] sm:$0xf]
        %v4776 = vunpack.c.l.b16 %v4769
        %v4777 = vpack.c.b16 %v4776, %v4776
        %v4779 = vshrl.u32 %v4642, 16
        %v4781 = vrot.slane %v4779, 1
        %v4782 = vshll.u32 %v4642, 16
        %v4784 = vrot.slane %v4782, 2
        %v4785 = vor.u32 %v4781, %v4784
        %v4787 = vshrl.u32 %v4643, 16
        %v4789 = vrot.slane %v4787, 1
        %v4790 = vshll.u32 %v4643, 16
        %v4792 = vrot.slane %v4790, 2
        %v4793 = vor.u32 %v4789, %v4792
        %v4794 = vsel %vm1789, %v4785, %v4793
        %v4796 = vshrl.u32 %v4644, 16
        %v4798 = vrot.slane %v4796, 1
        %v4799 = vshll.u32 %v4644, 16
        %v4801 = vrot.slane %v4799, 2
        %v4802 = vor.u32 %v4798, %v4801
        %v4803 = vsel %vm1789, %v4793, %v4802
        %v4805 = vshrl.u32 %v4645, 16
        %v4807 = vrot.slane %v4805, 1
        %v4808 = vshll.u32 %v4645, 16
        %v4810 = vrot.slane %v4808, 2
        %v4811 = vor.u32 %v4807, %v4810
        %v4812 = vsel %vm1789, %v4802, %v4811
        %v4814 = vshrl.u32 %v4646, 16
        %v4816 = vrot.slane %v4814, 1
        %v4817 = vshll.u32 %v4646, 16
        %v4819 = vrot.slane %v4817, 2
        %v4820 = vor.u32 %v4816, %v4819
        %v4821 = vsel %vm1789, %v4811, %v4820
        %v4823 = vshrl.u32 %v4777, 16
        %v4825 = vrot.slane %v4823, 1
        %v4826 = vshll.u32 %v4777, 16
        %v4828 = vrot.slane %v4826, 2
        %v4829 = vor.u32 %v4825, %v4828
        %v4830 = vsel %vm1789, %v4820, %v4829
        %v4835 = vunpack.c.l.b16 %v4771
        %v4836 = vunpack.c.l.b16 %v4772
        %v4837 = vunpack.c.l.b16 %v4773
        %v4838 = vunpack.c.l.b16 %v4774
        %v4839 = vpack.c.b16 %v4836, %v4835
        %v4840 = vpack.c.b16 %v4838, %v4837
        %v4844 = vsel %vm3823, %v4794, 0
        %v4847 = vsel %vm3823, %v4803, 0
        %v4850 = vsel %vm3823, %v4812, 0
        %v4853 = vsel %vm3823, %v4821, 0
        %v4856 = vsel %vm3823, %v4830, 0
        %4858 = vmatprep.subr.bf16.mxu0 0
        %4859 = vmatpush1.bf16.msra.mxu0 %v4839
        %4860 = vmatprep.subr.bf16.mxu0 0
        %4861 = vmatpush1.bf16.msra.mxu0 %v4840
        %4862 = vmatprep.subr.bf16.mxu0 0
        %4863 = vmatpush1.bf16.msra.mxu0 0
        %4864 = vmatprep.subr.bf16.mxu0 0
        %4865 = vmatpush1.bf16.msra.mxu0 0
        %4866 = vmatprep.subr.bf16.mxu0 0
        %4867 = vmatpush1.bf16.msra.mxu0 0
        %4868 = vmatprep.subr.bf16.mxu0 0
        %4869 = vmatpush1.bf16.msra.mxu0 0
        %4870 = vmatprep.subr.bf16.mxu0 0
        %4871 = vmatpush1.bf16.msra.mxu0 0
        %4872 = vmatprep.subr.bf16.mxu0 0
        %4873 = vmatpush1.bf16.msra.mxu0 0
        %4874 = vmatprep.subr.bf16.mxu0 0
        %4875 = vmatpush1.bf16.msra.mxu0 0
        %4876 = vmatprep.subr.bf16.mxu0 0
        %4877 = vmatpush1.bf16.msra.mxu0 0
        %4878 = vmatprep.subr.bf16.mxu0 0
        %4879 = vmatpush1.bf16.msra.mxu0 0
        %4880 = vmatprep.subr.bf16.mxu0 0
        %4881 = vmatpush1.bf16.msra.mxu0 0
        %4882 = vmatprep.subr.bf16.mxu0 0
        %4883 = vmatpush1.bf16.msra.mxu0 0
        %4884 = vmatprep.subr.bf16.mxu0 0
        %4885 = vmatpush1.bf16.msra.mxu0 0
        %4886 = vmatprep.subr.bf16.mxu0 0
        %4887 = vmatpush1.bf16.msra.mxu0 0
        %4888 = vmatprep.subr.bf16.mxu0 0
        %4889 = vmatpush1.bf16.msra.mxu0 0
        %4890 = vmatprep.mubr.bf16.mxu0 0
        %4891 = vmatmul.mubr.bf16.gmra.mrb[0].mxu0 %v4844
        %v4892 = vpop.f32.mrb[0].mxu0
        %v4893 = vadd.f32 0.0, %v4892
        %v4894 = vpop.f32.mrb[0].mxu0
        %v4895 = vpop.f32.mrb[0].mxu0
        %v4896 = vadd.f32 0.0, %v4895
        %v4897 = vpop.f32.mrb[0].mxu0
        %4898 = vmatprep.mubr.bf16.mxu0 0
        %4899 = vmatmul.mubr.bf16.gmra.mrb[0].mxu0 %v4847
        %v4900 = vpop.f32.mrb[0].mxu0
        %v4901 = vadd.f32 0.0, %v4900
        %v4902 = vpop.f32.mrb[0].mxu0
        %v4903 = vpop.f32.mrb[0].mxu0
        %v4904 = vadd.f32 0.0, %v4903
        %v4905 = vpop.f32.mrb[0].mxu0
        %4906 = vmatprep.mubr.bf16.mxu0 0
        %4907 = vmatmul.mubr.bf16.gmra.mrb[0].mxu0 %v4850
        %v4908 = vpop.f32.mrb[0].mxu0
        %v4909 = vadd.f32 0.0, %v4908
        %v4910 = vpop.f32.mrb[0].mxu0
        %v4911 = vpop.f32.mrb[0].mxu0
        %v4912 = vadd.f32 0.0, %v4911
        %v4913 = vpop.f32.mrb[0].mxu0
        %4914 = vmatprep.mubr.bf16.mxu0 0
        %4915 = vmatmul.mubr.bf16.gmra.mrb[0].mxu0 %v4853
        %v4916 = vpop.f32.mrb[0].mxu0
        %v4917 = vadd.f32 0.0, %v4916
        %v4918 = vpop.f32.mrb[0].mxu0
        %v4919 = vpop.f32.mrb[0].mxu0
        %v4920 = vadd.f32 0.0, %v4919
        %v4921 = vpop.f32.mrb[0].mxu0
        %4922 = vmatprep.mubr.bf16.mxu0 0
        %4923 = vmatmul.mubr.bf16.gmra.mrb[0].mxu0 %v4856
        %v4924 = vpop.f32.mrb[0].mxu0
        %v4925 = vadd.f32 0.0, %v4924
        %v4926 = vpop.f32.mrb[0].mxu0
        %v4927 = vpop.f32.mrb[0].mxu0
        %v4928 = vadd.f32 0.0, %v4927
        %v4929 = vpop.f32.mrb[0].mxu0
        %4930 = vdwg.mxu0
        %v4931 = vadd.f32 %v4759, %v4893
        %v4932 = vadd.f32 %v4760, %v4896
        %v4933 = vadd.f32 %v4761, %v4901
        %v4934 = vadd.f32 %v4762, %v4904
        %v4935 = vadd.f32 %v4763, %v4909
        %v4936 = vadd.f32 %v4764, %v4912
        %v4937 = vadd.f32 %v4765, %v4917
        %v4938 = vadd.f32 %v4766, %v4920
        %v4939 = vadd.f32 %v4767, %v4925
        %v4940 = vadd.f32 %v4768, %v4928
        %v4941 = vld [vmem:[#allocation4 + $0x4] sm:$0xc]
        %s4942 = scalar_lea.vmem %s3, 80
        %v4943 = vld [vmem:[%s4942] sm:$0xf]
        %v4944 = vld [vmem:[%s4942 + $0x4] sm:$0xf]
        %v4945 = vld [vmem:[%s4942 + $0x8] sm:$0xf]
        %v4946 = vld [vmem:[%s4942 + $0xc] sm:$0xf]
        %v4948 = vunpack.c.l.b16 %v4941
        %v4949 = vpack.c.b16 %v4632, %v4948
        %v4950 = vrot.slane %v4949, 2
        %v4951 = vrot.slane %v4643, 2
        %v4952 = vsel %vm2236, %v4950, %v4951
        %v4953 = vrot.slane %v4644, 2
        %v4954 = vsel %vm2236, %v4951, %v4953
        %v4955 = vrot.slane %v4645, 2
        %v4956 = vsel %vm2236, %v4953, %v4955
        %v4957 = vrot.slane %v4646, 2
        %v4958 = vsel %vm2236, %v4955, %v4957
        %v4959 = vrot.slane %v4777, 2
        %v4960 = vsel %vm2236, %v4957, %v4959
        %v4965 = vunpack.c.l.b16 %v4943
        %v4966 = vunpack.c.l.b16 %v4944
        %v4967 = vunpack.c.l.b16 %v4945
        %v4968 = vunpack.c.l.b16 %v4946
        %v4969 = vpack.c.b16 %v4966, %v4965
        %v4970 = vpack.c.b16 %v4968, %v4967
        %v4974 = vsel %vm3823, %v4952, 0
        %v4977 = vsel %vm3823, %v4954, 0
        %v4980 = vsel %vm3823, %v4956, 0
        %v4983 = vsel %vm3823, %v4958, 0
        %v4986 = vsel %vm3823, %v4960, 0
        %4988 = vmatprep.subr.bf16.mxu0 0
        %4989 = vmatpush1.bf16.msra.mxu0 %v4969
        %4990 = vmatprep.subr.bf16.mxu0 0
        %4991 = vmatpush1.bf16.msra.mxu0 %v4970
        %4992 = vmatprep.subr.bf16.mxu0 0
        %4993 = vmatpush1.bf16.msra.mxu0 0
        %4994 = vmatprep.subr.bf16.mxu0 0
        %4995 = vmatpush1.bf16.msra.mxu0 0
        %4996 = vmatprep.subr.bf16.mxu0 0
        %4997 = vmatpush1.bf16.msra.mxu0 0
        %4998 = vmatprep.subr.bf16.mxu0 0
        %4999 = vmatpush1.bf16.msra.mxu0 0
        %5000 = vmatprep.subr.bf16.mxu0 0
        %5001 = vmatpush1.bf16.msra.mxu0 0
        %5002 = vmatprep.subr.bf16.mxu0 0
        %5003 = vmatpush1.bf16.msra.mxu0 0
        %5004 = vmatprep.subr.bf16.mxu0 0
        %5005 = vmatpush1.bf16.msra.mxu0 0
        %5006 = vmatprep.subr.bf16.mxu0 0
        %5007 = vmatpush1.bf16.msra.mxu0 0
        %5008 = vmatprep.subr.bf16.mxu0 0
        %5009 = vmatpush1.bf16.msra.mxu0 0
        %5010 = vmatprep.subr.bf16.mxu0 0
        %5011 = vmatpush1.bf16.msra.mxu0 0
        %5012 = vmatprep.subr.bf16.mxu0 0
        %5013 = vmatpush1.bf16.msra.mxu0 0
        %5014 = vmatprep.subr.bf16.mxu0 0
        %5015 = vmatpush1.bf16.msra.mxu0 0
        %5016 = vmatprep.subr.bf16.mxu0 0
        %5017 = vmatpush1.bf16.msra.mxu0 0
        %5018 = vmatprep.subr.bf16.mxu0 0
        %5019 = vmatpush1.bf16.msra.mxu0 0
        %5020 = vmatprep.mubr.bf16.mxu0 0
        %5021 = vmatmul.mubr.bf16.gmra.mrb[0].mxu0 %v4974
        %v5022 = vpop.f32.mrb[0].mxu0
        %v5023 = vadd.f32 0.0, %v5022
        %v5024 = vpop.f32.mrb[0].mxu0
        %v5025 = vpop.f32.mrb[0].mxu0
        %v5026 = vadd.f32 0.0, %v5025
        %v5027 = vpop.f32.mrb[0].mxu0
        %5028 = vmatprep.mubr.bf16.mxu0 0
        %5029 = vmatmul.mubr.bf16.gmra.mrb[0].mxu0 %v4977
        %v5030 = vpop.f32.mrb[0].mxu0
        %v5031 = vadd.f32 0.0, %v5030
        %v5032 = vpop.f32.mrb[0].mxu0
        %v5033 = vpop.f32.mrb[0].mxu0
        %v5034 = vadd.f32 0.0, %v5033
        %v5035 = vpop.f32.mrb[0].mxu0
        %5036 = vmatprep.mubr.bf16.mxu0 0
        %5037 = vmatmul.mubr.bf16.gmra.mrb[0].mxu0 %v4980
        %v5038 = vpop.f32.mrb[0].mxu0
        %v5039 = vadd.f32 0.0, %v5038
        %v5040 = vpop.f32.mrb[0].mxu0
        %v5041 = vpop.f32.mrb[0].mxu0
        %v5042 = vadd.f32 0.0, %v5041
        %v5043 = vpop.f32.mrb[0].mxu0
        %5044 = vmatprep.mubr.bf16.mxu0 0
        %5045 = vmatmul.mubr.bf16.gmra.mrb[0].mxu0 %v4983
        %v5046 = vpop.f32.mrb[0].mxu0
        %v5047 = vadd.f32 0.0, %v5046
        %v5048 = vpop.f32.mrb[0].mxu0
        %v5049 = vpop.f32.mrb[0].mxu0
        %v5050 = vadd.f32 0.0, %v5049
        %v5051 = vpop.f32.mrb[0].mxu0
        %5052 = vmatprep.mubr.bf16.mxu0 0
        %5053 = vmatmul.mubr.bf16.gmra.mrb[0].mxu0 %v4986
        %v5054 = vpop.f32.mrb[0].mxu0
        %v5055 = vadd.f32 0.0, %v5054
        %v5056 = vpop.f32.mrb[0].mxu0
        %v5057 = vpop.f32.mrb[0].mxu0
        %v5058 = vadd.f32 0.0, %v5057
        %v5059 = vpop.f32.mrb[0].mxu0
        %5060 = vdwg.mxu0
        %v5061 = vadd.f32 %v4931, %v5023
        %v5062 = vadd.f32 %v4932, %v5026
        %v5063 = vadd.f32 %v4933, %v5031
        %v5064 = vadd.f32 %v4934, %v5034
        %v5065 = vadd.f32 %v4935, %v5039
        %v5066 = vadd.f32 %v4936, %v5042
        %v5067 = vadd.f32 %v4937, %v5047
        %v5068 = vadd.f32 %v4938, %v5050
        %v5069 = vadd.f32 %v4939, %v5055
        %v5070 = vadd.f32 %v4940, %v5058
        %v5071 = vld [vmem:[#allocation4 + $0x8] sm:$0xc]
        %v5072 = vld [vmem:[#allocation4 + $0xc] sm:$0xf]
        %v5073 = vld [vmem:[#allocation4 + $0x10] sm:$0xf]
        %v5074 = vld [vmem:[#allocation4 + $0x14] sm:$0xf]
        %v5075 = vld [vmem:[#allocation4 + $0x18] sm:$0xf]
        %v5076 = vld [vmem:[#allocation4 + $0x1c] sm:$0xf]
        %v5077 = vld [vmem:[#allocation4 + $0x20] sm:$0xf]
        %v5078 = vld [vmem:[#allocation4 + $0x24] sm:$0xf]
        %v5079 = vld [vmem:[#allocation4 + $0x28] sm:$0xf]
        %v5080 = vld [vmem:[#allocation4 + $0x2c] sm:$0xf]
        %v5081 = vld [vmem:[#allocation4 + $0x30] sm:$0x3]
        %s5082 = scalar_lea.vmem %s3, 96
        %v5083 = vld [vmem:[%s5082] sm:$0xf]
        %v5084 = vld [vmem:[%s5082 + $0x4] sm:$0xf]
        %v5085 = vld [vmem:[%s5082 + $0x8] sm:$0xf]
        %v5086 = vld [vmem:[%s5082 + $0xc] sm:$0xf]
        %v5098 = vunpack.c.l.b16 %v5071
        %v5099 = vunpack.c.l.b16 %v5072
        %v5100 = vunpack.c.l.b16 %v5073
        %v5101 = vunpack.c.l.b16 %v5074
        %v5102 = vunpack.c.l.b16 %v5075
        %v5103 = vunpack.c.l.b16 %v5076
        %v5104 = vunpack.c.l.b16 %v5077
        %v5105 = vunpack.c.l.b16 %v5078
        %v5106 = vunpack.c.l.b16 %v5079
        %v5107 = vunpack.c.l.b16 %v5080
        %v5108 = vunpack.c.l.b16 %v5081
        %v5109 = vpack.c.b16 %v5099, %v5098
        %v5110 = vpack.c.b16 %v5101, %v5100
        %v5111 = vpack.c.b16 %v5103, %v5102
        %v5112 = vpack.c.b16 %v5105, %v5104
        %v5113 = vpack.c.b16 %v5107, %v5106
        %v5114 = vpack.c.b16 %v5108, %v5108
        %v5115 = vrot.slane %v5109, 2
        %v5116 = vrot.slane %v5110, 2
        %v5117 = vsel %vm2236, %v5115, %v5116
        %v5118 = vrot.slane %v5111, 2
        %v5119 = vsel %vm2236, %v5116, %v5118
        %v5120 = vrot.slane %v5112, 2
        %v5121 = vsel %vm2236, %v5118, %v5120
        %v5122 = vrot.slane %v5113, 2
        %v5123 = vsel %vm2236, %v5120, %v5122
        %v5124 = vrot.slane %v5114, 2
        %v5125 = vsel %vm2236, %v5122, %v5124
        %v5130 = vunpack.c.l.b16 %v5083
        %v5131 = vunpack.c.l.b16 %v5084
        %v5132 = vunpack.c.l.b16 %v5085
        %v5133 = vunpack.c.l.b16 %v5086
        %v5134 = vpack.c.b16 %v5131, %v5130
        %v5135 = vpack.c.b16 %v5133, %v5132
        %v5139 = vsel %vm3823, %v5117, 0
        %v5142 = vsel %vm3823, %v5119, 0
        %v5145 = vsel %vm3823, %v5121, 0
        %v5148 = vsel %vm3823, %v5123, 0
        %v5151 = vsel %vm3823, %v5125, 0
        %5153 = vmatprep.subr.bf16.mxu0 0
        %5154 = vmatpush1.bf16.msra.mxu0 %v5134
        %5155 = vmatprep.subr.bf16.mxu0 0
        %5156 = vmatpush1.bf16.msra.mxu0 %v5135
        %5157 = vmatprep.subr.bf16.mxu0 0
        %5158 = vmatpush1.bf16.msra.mxu0 0
        %5159 = vmatprep.subr.bf16.mxu0 0
        %5160 = vmatpush1.bf16.msra.mxu0 0
        %5161 = vmatprep.subr.bf16.mxu0 0
        %5162 = vmatpush1.bf16.msra.mxu0 0
        %5163 = vmatprep.subr.bf16.mxu0 0
        %5164 = vmatpush1.bf16.msra.mxu0 0
        %5165 = vmatprep.subr.bf16.mxu0 0
        %5166 = vmatpush1.bf16.msra.mxu0 0
        %5167 = vmatprep.subr.bf16.mxu0 0
        %5168 = vmatpush1.bf16.msra.mxu0 0
        %5169 = vmatprep.subr.bf16.mxu0 0
        %5170 = vmatpush1.bf16.msra.mxu0 0
        %5171 = vmatprep.subr.bf16.mxu0 0
        %5172 = vmatpush1.bf16.msra.mxu0 0
        %5173 = vmatprep.subr.bf16.mxu0 0
        %5174 = vmatpush1.bf16.msra.mxu0 0
        %5175 = vmatprep.subr.bf16.mxu0 0
        %5176 = vmatpush1.bf16.msra.mxu0 0
        %5177 = vmatprep.subr.bf16.mxu0 0
        %5178 = vmatpush1.bf16.msra.mxu0 0
        %5179 = vmatprep.subr.bf16.mxu0 0
        %5180 = vmatpush1.bf16.msra.mxu0 0
        %5181 = vmatprep.subr.bf16.mxu0 0
        %5182 = vmatpush1.bf16.msra.mxu0 0
        %5183 = vmatprep.subr.bf16.mxu0 0
        %5184 = vmatpush1.bf16.msra.mxu0 0
        %5185 = vmatprep.mubr.bf16.mxu0 0
        %5186 = vmatmul.mubr.bf16.gmra.mrb[0].mxu0 %v5139
        %v5187 = vpop.f32.mrb[0].mxu0
        %v5188 = vadd.f32 0.0, %v5187
        %v5189 = vpop.f32.mrb[0].mxu0
        %v5190 = vpop.f32.mrb[0].mxu0
        %v5191 = vadd.f32 0.0, %v5190
        %v5192 = vpop.f32.mrb[0].mxu0
        %5193 = vmatprep.mubr.bf16.mxu0 0
        %5194 = vmatmul.mubr.bf16.gmra.mrb[0].mxu0 %v5142
        %v5195 = vpop.f32.mrb[0].mxu0
        %v5196 = vadd.f32 0.0, %v5195
        %v5197 = vpop.f32.mrb[0].mxu0
        %v5198 = vpop.f32.mrb[0].mxu0
        %v5199 = vadd.f32 0.0, %v5198
        %v5200 = vpop.f32.mrb[0].mxu0
        %5201 = vmatprep.mubr.bf16.mxu0 0
        %5202 = vmatmul.mubr.bf16.gmra.mrb[0].mxu0 %v5145
        %v5203 = vpop.f32.mrb[0].mxu0
        %v5204 = vadd.f32 0.0, %v5203
        %v5205 = vpop.f32.mrb[0].mxu0
        %v5206 = vpop.f32.mrb[0].mxu0
        %v5207 = vadd.f32 0.0, %v5206
        %v5208 = vpop.f32.mrb[0].mxu0
        %5209 = vmatprep.mubr.bf16.mxu0 0
        %5210 = vmatmul.mubr.bf16.gmra.mrb[0].mxu0 %v5148
        %v5211 = vpop.f32.mrb[0].mxu0
        %v5212 = vadd.f32 0.0, %v5211
        %v5213 = vpop.f32.mrb[0].mxu0
        %v5214 = vpop.f32.mrb[0].mxu0
        %v5215 = vadd.f32 0.0, %v5214
        %v5216 = vpop.f32.mrb[0].mxu0
        %5217 = vmatprep.mubr.bf16.mxu0 0
        %5218 = vmatmul.mubr.bf16.gmra.mrb[0].mxu0 %v5151
        %v5219 = vpop.f32.mrb[0].mxu0
        %v5220 = vadd.f32 0.0, %v5219
        %v5221 = vpop.f32.mrb[0].mxu0
        %v5222 = vpop.f32.mrb[0].mxu0
        %v5223 = vadd.f32 0.0, %v5222
        %v5224 = vpop.f32.mrb[0].mxu0
        %5225 = vdwg.mxu0
        %v5226 = vadd.f32 %v5061, %v5188
        %v5227 = vadd.f32 %v5062, %v5191
        %v5228 = vadd.f32 %v5063, %v5196
        %v5229 = vadd.f32 %v5064, %v5199
        %v5230 = vadd.f32 %v5065, %v5204
        %v5231 = vadd.f32 %v5066, %v5207
        %v5232 = vadd.f32 %v5067, %v5212
        %v5233 = vadd.f32 %v5068, %v5215
        %v5234 = vadd.f32 %v5069, %v5220
        %v5235 = vadd.f32 %v5070, %v5223
        %v5236 = vld [vmem:[#allocation4 + $0x30] sm:$0x7]
        %s5237 = scalar_lea.vmem %s3, 112
        %v5238 = vld [vmem:[%s5237] sm:$0xf]
        %v5239 = vld [vmem:[%s5237 + $0x4] sm:$0xf]
        %v5240 = vld [vmem:[%s5237 + $0x8] sm:$0xf]
        %v5241 = vld [vmem:[%s5237 + $0xc] sm:$0xf]
        %v5243 = vunpack.c.l.b16 %v5236
        %v5244 = vpack.c.b16 %v5243, %v5243
        %v5246 = vshrl.u32 %v5109, 16
        %v5248 = vrot.slane %v5246, 2
        %v5249 = vshll.u32 %v5109, 16
        %v5251 = vrot.slane %v5249, 3
        %v5252 = vor.u32 %v5248, %v5251
        %v5254 = vshrl.u32 %v5110, 16
        %v5256 = vrot.slane %v5254, 2
        %v5257 = vshll.u32 %v5110, 16
        %v5259 = vrot.slane %v5257, 3
        %v5260 = vor.u32 %v5256, %v5259
        %v5261 = vsel %vm2989, %v5252, %v5260
        %v5263 = vshrl.u32 %v5111, 16
        %v5265 = vrot.slane %v5263, 2
        %v5266 = vshll.u32 %v5111, 16
        %v5268 = vrot.slane %v5266, 3
        %v5269 = vor.u32 %v5265, %v5268
        %v5270 = vsel %vm2989, %v5260, %v5269
        %v5272 = vshrl.u32 %v5112, 16
        %v5274 = vrot.slane %v5272, 2
        %v5275 = vshll.u32 %v5112, 16
        %v5277 = vrot.slane %v5275, 3
        %v5278 = vor.u32 %v5274, %v5277
        %v5279 = vsel %vm2989, %v5269, %v5278
        %v5281 = vshrl.u32 %v5113, 16
        %v5283 = vrot.slane %v5281, 2
        %v5284 = vshll.u32 %v5113, 16
        %v5286 = vrot.slane %v5284, 3
        %v5287 = vor.u32 %v5283, %v5286
        %v5288 = vsel %vm2989, %v5278, %v5287
        %v5290 = vshrl.u32 %v5244, 16
        %v5292 = vrot.slane %v5290, 2
        %v5293 = vshll.u32 %v5244, 16
        %v5295 = vrot.slane %v5293, 3
        %v5296 = vor.u32 %v5292, %v5295
        %v5297 = vsel %vm2989, %v5287, %v5296
        %v5302 = vunpack.c.l.b16 %v5238
        %v5303 = vunpack.c.l.b16 %v5239
        %v5304 = vunpack.c.l.b16 %v5240
        %v5305 = vunpack.c.l.b16 %v5241
        %v5306 = vpack.c.b16 %v5303, %v5302
        %v5307 = vpack.c.b16 %v5305, %v5304
        %v5311 = vsel %vm3823, %v5261, 0
        %v5314 = vsel %vm3823, %v5270, 0
        %v5317 = vsel %vm3823, %v5279, 0
        %v5320 = vsel %vm3823, %v5288, 0
        %v5323 = vsel %vm3823, %v5297, 0
        %5325 = vmatprep.subr.bf16.mxu0 0
        %5326 = vmatpush1.bf16.msra.mxu0 %v5306
        %5327 = vmatprep.subr.bf16.mxu0 0
        %5328 = vmatpush1.bf16.msra.mxu0 %v5307
        %5329 = vmatprep.subr.bf16.mxu0 0
        %5330 = vmatpush1.bf16.msra.mxu0 0
        %5331 = vmatprep.subr.bf16.mxu0 0
        %5332 = vmatpush1.bf16.msra.mxu0 0
        %5333 = vmatprep.subr.bf16.mxu0 0
        %5334 = vmatpush1.bf16.msra.mxu0 0
        %5335 = vmatprep.subr.bf16.mxu0 0
        %5336 = vmatpush1.bf16.msra.mxu0 0
        %5337 = vmatprep.subr.bf16.mxu0 0
        %5338 = vmatpush1.bf16.msra.mxu0 0
        %5339 = vmatprep.subr.bf16.mxu0 0
        %5340 = vmatpush1.bf16.msra.mxu0 0
        %5341 = vmatprep.subr.bf16.mxu0 0
        %5342 = vmatpush1.bf16.msra.mxu0 0
        %5343 = vmatprep.subr.bf16.mxu0 0
        %5344 = vmatpush1.bf16.msra.mxu0 0
        %5345 = vmatprep.subr.bf16.mxu0 0
        %5346 = vmatpush1.bf16.msra.mxu0 0
        %5347 = vmatprep.subr.bf16.mxu0 0
        %5348 = vmatpush1.bf16.msra.mxu0 0
        %5349 = vmatprep.subr.bf16.mxu0 0
        %5350 = vmatpush1.bf16.msra.mxu0 0
        %5351 = vmatprep.subr.bf16.mxu0 0
        %5352 = vmatpush1.bf16.msra.mxu0 0
        %5353 = vmatprep.subr.bf16.mxu0 0
        %5354 = vmatpush1.bf16.msra.mxu0 0
        %5355 = vmatprep.subr.bf16.mxu0 0
        %5356 = vmatpush1.bf16.msra.mxu0 0
        %5357 = vmatprep.mubr.bf16.mxu0 0
        %5358 = vmatmul.mubr.bf16.gmra.mrb[0].mxu0 %v5311
        %v5359 = vpop.f32.mrb[0].mxu0
        %v5360 = vadd.f32 0.0, %v5359
        %v5361 = vpop.f32.mrb[0].mxu0
        %v5362 = vpop.f32.mrb[0].mxu0
        %v5363 = vadd.f32 0.0, %v5362
        %v5364 = vpop.f32.mrb[0].mxu0
        %5365 = vmatprep.mubr.bf16.mxu0 0
        %5366 = vmatmul.mubr.bf16.gmra.mrb[0].mxu0 %v5314
        %v5367 = vpop.f32.mrb[0].mxu0
        %v5368 = vadd.f32 0.0, %v5367
        %v5369 = vpop.f32.mrb[0].mxu0
        %v5370 = vpop.f32.mrb[0].mxu0
        %v5371 = vadd.f32 0.0, %v5370
        %v5372 = vpop.f32.mrb[0].mxu0
        %5373 = vmatprep.mubr.bf16.mxu0 0
        %5374 = vmatmul.mubr.bf16.gmra.mrb[0].mxu0 %v5317
        %v5375 = vpop.f32.mrb[0].mxu0
        %v5376 = vadd.f32 0.0, %v5375
        %v5377 = vpop.f32.mrb[0].mxu0
        %v5378 = vpop.f32.mrb[0].mxu0
        %v5379 = vadd.f32 0.0, %v5378
        %v5380 = vpop.f32.mrb[0].mxu0
        %5381 = vmatprep.mubr.bf16.mxu0 0
        %5382 = vmatmul.mubr.bf16.gmra.mrb[0].mxu0 %v5320
        %v5383 = vpop.f32.mrb[0].mxu0
        %v5384 = vadd.f32 0.0, %v5383
        %v5385 = vpop.f32.mrb[0].mxu0
        %v5386 = vpop.f32.mrb[0].mxu0
        %v5387 = vadd.f32 0.0, %v5386
        %v5388 = vpop.f32.mrb[0].mxu0
        %5389 = vmatprep.mubr.bf16.mxu0 0
        %5390 = vmatmul.mubr.bf16.gmra.mrb[0].mxu0 %v5323
        %v5391 = vpop.f32.mrb[0].mxu0
        %v5392 = vadd.f32 0.0, %v5391
        %v5393 = vpop.f32.mrb[0].mxu0
        %v5394 = vpop.f32.mrb[0].mxu0
        %v5395 = vadd.f32 0.0, %v5394
        %v5396 = vpop.f32.mrb[0].mxu0
        %5397 = vdwg.mxu0
        %v5398 = vadd.f32 %v5226, %v5360
        %v5399 = vadd.f32 %v5227, %v5363
        %v5400 = vadd.f32 %v5228, %v5368
        %v5401 = vadd.f32 %v5229, %v5371
        %v5402 = vadd.f32 %v5230, %v5376
        %v5403 = vadd.f32 %v5231, %v5379
        %v5404 = vadd.f32 %v5232, %v5384
        %v5405 = vadd.f32 %v5233, %v5387
        %v5406 = vadd.f32 %v5234, %v5392
        %v5407 = vadd.f32 %v5235, %v5395
        %v5408 = vld [vmem:[#allocation4 + $0x8] sm:$0x8]
        %s5409 = scalar_lea.vmem %s3, 128
        %v5410 = vld [vmem:[%s5409] sm:$0xf]
        %v5411 = vld [vmem:[%s5409 + $0x4] sm:$0xf]
        %v5412 = vld [vmem:[%s5409 + $0x8] sm:$0xf]
        %v5413 = vld [vmem:[%s5409 + $0xc] sm:$0xf]
        %v5415 = vunpack.c.l.b16 %v5408
        %v5416 = vpack.c.b16 %v5099, %v5415
        %v5417 = vrot.slane %v5416, 3
        %v5418 = vrot.slane %v5110, 3
        %v5419 = vsel %vm3436, %v5417, %v5418
        %v5420 = vrot.slane %v5111, 3
        %v5421 = vsel %vm3436, %v5418, %v5420
        %v5422 = vrot.slane %v5112, 3
        %v5423 = vsel %vm3436, %v5420, %v5422
        %v5424 = vrot.slane %v5113, 3
        %v5425 = vsel %vm3436, %v5422, %v5424
        %v5426 = vrot.slane %v5244, 3
        %v5427 = vsel %vm3436, %v5424, %v5426
        %v5432 = vunpack.c.l.b16 %v5410
        %v5433 = vunpack.c.l.b16 %v5411
        %v5434 = vunpack.c.l.b16 %v5412
        %v5435 = vunpack.c.l.b16 %v5413
        %v5436 = vpack.c.b16 %v5433, %v5432
        %v5437 = vpack.c.b16 %v5435, %v5434
        %v5441 = vsel %vm3823, %v5419, 0
        %v5444 = vsel %vm3823, %v5421, 0
        %v5447 = vsel %vm3823, %v5423, 0
        %v5450 = vsel %vm3823, %v5425, 0
        %v5453 = vsel %vm3823, %v5427, 0
        %5455 = vmatprep.subr.bf16.mxu0 0
        %5456 = vmatpush1.bf16.msra.mxu0 %v5436
        %5457 = vmatprep.subr.bf16.mxu0 0
        %5458 = vmatpush1.bf16.msra.mxu0 %v5437
        %5459 = vmatprep.subr.bf16.mxu0 0
        %5460 = vmatpush1.bf16.msra.mxu0 0
        %5461 = vmatprep.subr.bf16.mxu0 0
        %5462 = vmatpush1.bf16.msra.mxu0 0
        %5463 = vmatprep.subr.bf16.mxu0 0
        %5464 = vmatpush1.bf16.msra.mxu0 0
        %5465 = vmatprep.subr.bf16.mxu0 0
        %5466 = vmatpush1.bf16.msra.mxu0 0
        %5467 = vmatprep.subr.bf16.mxu0 0
        %5468 = vmatpush1.bf16.msra.mxu0 0
        %5469 = vmatprep.subr.bf16.mxu0 0
        %5470 = vmatpush1.bf16.msra.mxu0 0
        %5471 = vmatprep.subr.bf16.mxu0 0
        %5472 = vmatpush1.bf16.msra.mxu0 0
        %5473 = vmatprep.subr.bf16.mxu0 0
        %5474 = vmatpush1.bf16.msra.mxu0 0
        %5475 = vmatprep.subr.bf16.mxu0 0
        %5476 = vmatpush1.bf16.msra.mxu0 0
        %5477 = vmatprep.subr.bf16.mxu0 0
        %5478 = vmatpush1.bf16.msra.mxu0 0
        %5479 = vmatprep.subr.bf16.mxu0 0
        %5480 = vmatpush1.bf16.msra.mxu0 0
        %5481 = vmatprep.subr.bf16.mxu0 0
        %5482 = vmatpush1.bf16.msra.mxu0 0
        %5483 = vmatprep.subr.bf16.mxu0 0
        %5484 = vmatpush1.bf16.msra.mxu0 0
        %5485 = vmatprep.subr.bf16.mxu0 0
        %5486 = vmatpush1.bf16.msra.mxu0 0
        %5487 = vmatprep.mubr.bf16.mxu0 0
        %5488 = vmatmul.mubr.bf16.gmra.mrb[0].mxu0 %v5441
        %v5489 = vpop.f32.mrb[0].mxu0
        %v5490 = vadd.f32 0.0, %v5489
        %v5491 = vpop.f32.mrb[0].mxu0
        %v5492 = vpop.f32.mrb[0].mxu0
        %v5493 = vadd.f32 0.0, %v5492
        %v5494 = vpop.f32.mrb[0].mxu0
        %5495 = vmatprep.mubr.bf16.mxu0 0
        %5496 = vmatmul.mubr.bf16.gmra.mrb[0].mxu0 %v5444
        %v5497 = vpop.f32.mrb[0].mxu0
        %v5498 = vadd.f32 0.0, %v5497
        %v5499 = vpop.f32.mrb[0].mxu0
        %v5500 = vpop.f32.mrb[0].mxu0
        %v5501 = vadd.f32 0.0, %v5500
        %v5502 = vpop.f32.mrb[0].mxu0
        %5503 = vmatprep.mubr.bf16.mxu0 0
        %5504 = vmatmul.mubr.bf16.gmra.mrb[0].mxu0 %v5447
        %v5505 = vpop.f32.mrb[0].mxu0
        %v5506 = vadd.f32 0.0, %v5505
        %v5507 = vpop.f32.mrb[0].mxu0
        %v5508 = vpop.f32.mrb[0].mxu0
        %v5509 = vadd.f32 0.0, %v5508
        %v5510 = vpop.f32.mrb[0].mxu0
        %5511 = vmatprep.mubr.bf16.mxu0 0
        %5512 = vmatmul.mubr.bf16.gmra.mrb[0].mxu0 %v5450
        %v5513 = vpop.f32.mrb[0].mxu0
        %v5514 = vadd.f32 0.0, %v5513
        %v5515 = vpop.f32.mrb[0].mxu0
        %v5516 = vpop.f32.mrb[0].mxu0
        %v5517 = vadd.f32 0.0, %v5516
        %v5518 = vpop.f32.mrb[0].mxu0
        %5519 = vmatprep.mubr.bf16.mxu0 0
        %5520 = vmatmul.mubr.bf16.gmra.mrb[0].mxu0 %v5453
        %v5521 = vpop.f32.mrb[0].mxu0
        %v5522 = vadd.f32 0.0, %v5521
        %v5523 = vpop.f32.mrb[0].mxu0
        %v5524 = vpop.f32.mrb[0].mxu0
        %v5525 = vadd.f32 0.0, %v5524
        %v5526 = vpop.f32.mrb[0].mxu0
        %5527 = vdwg.mxu0
        %v5528 = vadd.f32 %v5398, %v5490
        %v5529 = vadd.f32 %v5399, %v5493
        %v5530 = vadd.f32 %v5400, %v5498
        %v5531 = vadd.f32 %v5401, %v5501
        %v5532 = vadd.f32 %v5402, %v5506
        %v5533 = vadd.f32 %v5403, %v5509
        %v5534 = vadd.f32 %v5404, %v5514
        %v5535 = vadd.f32 %v5405, %v5517
        %v5536 = vadd.f32 %v5406, %v5522
        %v5537 = vadd.f32 %v5407, %v5525
        %v5538 = vld [vmem:[%s4] sm:$0x1]
        %v5540 = vlaneseq
        %v5541 = vshrl.u32 %v5540, 7
        %v5542 = vsub.s32 0, %v5541
        %v5543 = vrot.slane %v5538, %v5542
        %v5545 = vadd.f32 %v5528, %v5543
        %v5546 = vadd.f32 %v5529, %v5543
        %v5547 = vadd.f32 %v5530, %v5543
        %v5548 = vadd.f32 %v5531, %v5543
        %v5549 = vadd.f32 %v5532, %v5543
        %v5550 = vadd.f32 %v5533, %v5543
        %v5551 = vadd.f32 %v5534, %v5543
        %v5552 = vadd.f32 %v5535, %v5543
        %v5553 = vadd.f32 %v5536, %v5543
        %v5554 = vadd.f32 %v5537, %v5543
        %v5555 = vmax.f32 %v5545, 0.0
        %v5556 = vmax.f32 %v5546, 0.0
        %v5557 = vmax.f32 %v5547, 0.0
        %v5558 = vmax.f32 %v5548, 0.0
        %v5559 = vmax.f32 %v5549, 0.0
        %v5560 = vmax.f32 %v5550, 0.0
        %v5561 = vmax.f32 %v5551, 0.0
        %v5562 = vmax.f32 %v5552, 0.0
        %v5563 = vmax.f32 %v5553, 0.0
        %v5564 = vmax.f32 %v5554, 0.0
        %vm5565 = vcmask 523264
        %5566 = vst.msk [vmem:[#allocation5] sm:$0xff] %vm5565, %v5555
        %5567 = vst.msk [vmem:[#allocation5 + $0x8] sm:$0xff] %vm5565, %v5556
        %5568 = vst.msk [vmem:[#allocation5 + $0x10] sm:$0xff] %vm5565, %v5557
        %5569 = vst.msk [vmem:[#allocation5 + $0x18] sm:$0xff] %vm5565, %v5558
        %5570 = vst.msk [vmem:[#allocation5 + $0x20] sm:$0xff] %vm5565, %v5559
        %5571 = vst.msk [vmem:[#allocation5 + $0x28] sm:$0xff] %vm5565, %v5560
        %5572 = vst.msk [vmem:[#allocation5 + $0x30] sm:$0xff] %vm5565, %v5561
        %5573 = vst.msk [vmem:[#allocation5 + $0x38] sm:$0xff] %vm5565, %v5562
        %5574 = vst.msk [vmem:[#allocation5 + $0x40] sm:$0xff] %vm5565, %v5563
        %5575 = vst.msk [vmem:[#allocation5 + $0x48] sm:$0xff] %vm5565, %v5564
        %v5576 = vld [vmem:[#allocation5] ss:$2 sm:$0xff]
        %s5577 = scalar_lea.vmem [#allocation5], 16
        %v5578 = vld [vmem:[%s5577] ss:$2 sm:$0xff]
        %s5579 = scalar_lea.vmem [#allocation5], 32
        %v5580 = vld [vmem:[%s5579] ss:$2 sm:$0xff]
        %s5581 = scalar_lea.vmem [#allocation5], 48
        %v5582 = vld [vmem:[%s5581] ss:$2 sm:$0xff]
        %s5583 = scalar_lea.vmem [#allocation5], 64
        %v5584 = vld [vmem:[%s5583] ss:$2 sm:$0xff]
        %s5585 = scalar_lea.vmem [#allocation5], 1
        %v5586 = vld [vmem:[%s5585] ss:$2 sm:$0xff]
        %s5587 = scalar_lea.vmem [#allocation5], 17
        %v5588 = vld [vmem:[%s5587] ss:$2 sm:$0xff]
        %s5589 = scalar_lea.vmem [#allocation5], 33
        %v5590 = vld [vmem:[%s5589] ss:$2 sm:$0xff]
        %s5591 = scalar_lea.vmem [#allocation5], 49
        %v5592 = vld [vmem:[%s5591] ss:$2 sm:$0xff]
        %s5593 = scalar_lea.vmem [#allocation5], 65
        %v5594 = vld [vmem:[%s5593] ss:$2 sm:$0xff]
        %v5595 = vmax.f32 %v5576, %v5586
        %v5596 = vmax.f32 %v5578, %v5588
        %v5597 = vmax.f32 %v5580, %v5590
        %v5598 = vmax.f32 %v5582, %v5592
        %v5599 = vmax.f32 %v5584, %v5594
        %5600 = vst.msk [vmem:[#allocation6] sm:$0xff] %vm5565, %v5595
        %5601 = vst.msk [vmem:[#allocation6 + $0x8] sm:$0xff] %vm5565, %v5596
        %5602 = vst.msk [vmem:[#allocation6 + $0x10] sm:$0xff] %vm5565, %v5597
        %5603 = vst.msk [vmem:[#allocation6 + $0x18] sm:$0xff] %vm5565, %v5598
        %5604 = vst.msk [vmem:[#allocation6 + $0x20] sm:$0xff] %vm5565, %v5599
        %v5605 = vld [vmem:[#allocation6] sm:$0xf]
        %v5606 = vld [vmem:[#allocation6 + $0x5] sm:$0xf]
        %v5607 = vmax.f32 %v5605, %v5606
        %v5608 = vpack.c.bf16 %v5607, %v5607
        %v5610 = vunpack.c.l.b16 %v5608
        %v5611 = vpack.c.b16 %v5610, %v5610
        %v5613 = vshll.u32 %v5611, 16
        %v5615 = vrot.slane %v5613, 5
        %v5616 = vshrl.u32 %v5611, 16
        %v5618 = vrot.slane %v5616, 4
        %v5619 = vor.u32 %v5618, %v5615
        %v5620 = vrot.slane %v5619, 4
        %vm5623 = vcmask 519171
        %vm5624 = vmand %vm5623, %vm4046
        %v5625 = vld [vmem:[#allocation7] sm:$0x8]
        %v5626 = vsel %vm5624, %v5615, %v5625
        %5627 = vst [vmem:[#allocation7] sm:$0x8] %v5626
        %vm5628 = vcmask 517120
        %vm5629 = vmand %vm5628, %vm3992
        %v5630 = vld [vmem:[#allocation7 + $0x4] sm:$0x3]
        %v5631 = vsel %vm5629, %v5620, %v5630
        %5632 = vst [vmem:[#allocation7 + $0x4] sm:$0x3] %v5631
        %v5633 = vld [vmem:[#allocation6 + $0xa] sm:$0xf]
        %v5634 = vld [vmem:[#allocation6 + $0xf] sm:$0xf]
        %v5635 = vmax.f32 %v5633, %v5634
        %v5636 = vpack.c.bf16 %v5635, %v5635
        %v5638 = vunpack.c.l.b16 %v5636
        %v5639 = vpack.c.b16 %v5638, %v5638
        %v5641 = vshrl.u32 %v5639, 16
        %v5643 = vrot.slane %v5641, 5
        %v5644 = vshll.u32 %v5639, 16
        %v5646 = vrot.slane %v5644, 6
        %v5647 = vor.u32 %v5643, %v5646
        %v5648 = vrot.slane %v5643, 4
        %vm5651 = vcmask 519170
        %vm5652 = vmand %vm5651, %vm4016
        %v5653 = vld [vmem:[#allocation7 + $0x4] sm:$0xc]
        %v5654 = vsel %vm5652, %v5647, %v5653
        %5655 = vst [vmem:[#allocation7 + $0x4] sm:$0xc] %v5654
        %vm5656 = vcmask 516096
        %vm5657 = vmand %vm5656, %vm4080
        %v5658 = vld [vmem:[#allocation7 + $0x8] sm:$0x1]
        %v5659 = vsel %vm5657, %v5648, %v5658
        %5660 = vst [vmem:[#allocation7 + $0x8] sm:$0x1] %v5659
        %v5661 = vld [vmem:[#allocation6 + $0x14] sm:$0xf]
        %v5662 = vld [vmem:[#allocation6 + $0x19] sm:$0xf]
        %v5663 = vmax.f32 %v5661, %v5662
        %v5664 = vpack.c.bf16 %v5663, %v5663
        %v5666 = vunpack.c.l.b16 %v5664
        %v5667 = vpack.c.b16 %v5666, %v5666
        %v5669 = vshrl.u32 %v5667, 16
        %v5671 = vrot.slane %v5669, 6
        %v5672 = vshll.u32 %v5667, 16
        %v5674 = vrot.slane %v5672, 7
        %v5675 = vor.u32 %v5671, %v5674
        %vm5677 = vcmask 519169
        %vm5678 = vsmask.f32 3334
        %vm5679 = vmand %vm5677, %vm5678
        %v5680 = vld [vmem:[#allocation7 + $0x8] sm:$0xe]
        %v5681 = vsel %vm5679, %v5675, %v5680
        %5682 = vst [vmem:[#allocation7 + $0x8] sm:$0xe] %v5681
        %v5683 = vld [vmem:[#allocation6 + $0x1e] sm:$0xf]
        %v5684 = vld [vmem:[#allocation6 + $0x23] sm:$0xf]
        %v5685 = vmax.f32 %v5683, %v5684
        %v5686 = vpack.c.bf16 %v5685, %v5685
        %v5688 = vunpack.c.l.b16 %v5686
        %v5689 = vpack.c.b16 %v5688, %v5688
        %v5691 = vshrl.u32 %v5689, 16
        %v5693 = vrot.slane %v5691, 7
        %v5694 = vshll.u32 %v5689, 16
        %v5696 = vor.u32 %v5693, %v5694
        %vm5698 = vcmask 518144
        %vm5699 = vsmask.f32 2306
        %vm5700 = vmand %vm5698, %vm5699
        %v5701 = vld [vmem:[#allocation7 + $0xc] sm:$0x7]
        %v5702 = vsel %vm5700, %v5696, %v5701
        %5703 = vst [vmem:[#allocation7 + $0xc] sm:$0x7] %v5702
        %v5704 = vld [vmem:[#allocation7] sm:$0xf]
        %v5705 = vld [vmem:[#allocation7 + $0x4] sm:$0xf]
        %v5706 = vld [vmem:[#allocation7 + $0x8] sm:$0xf]
        %v5707 = vld [vmem:[%s5] sm:$0xf]
        %v5708 = vld [vmem:[%s5 + $0x4] sm:$0xf]
        %v5709 = vld [vmem:[%s5 + $0x8] sm:$0xf]
        %v5710 = vld [vmem:[%s5 + $0xc] sm:$0xf]
        %v5711 = vld [vmem:[%s5 + $0x10] sm:$0xf]
        %v5712 = vld [vmem:[%s5 + $0x14] sm:$0xf]
        %v5713 = vld [vmem:[%s5 + $0x18] sm:$0xf]
        %v5714 = vld [vmem:[%s5 + $0x1c] sm:$0xf]
        %v5715 = vld [vmem:[#allocation7 + $0xc] sm:$0x1]
        %s5716 = scalar_lea.vmem %s5, 32
        %v5717 = vld [vmem:[%s5716] sm:$0xf]
        %v5718 = vld [vmem:[%s5716 + $0x4] sm:$0xf]
        %v5719 = vld [vmem:[%s5716 + $0x8] sm:$0xf]
        %v5720 = vld [vmem:[%s5716 + $0xc] sm:$0xf]
        %v5721 = vld [vmem:[%s5716 + $0x10] sm:$0xf]
        %v5722 = vld [vmem:[%s5716 + $0x14] sm:$0xf]
        %v5723 = vld [vmem:[%s5716 + $0x18] sm:$0xf]
        %v5724 = vld [vmem:[%s5716 + $0x1c] sm:$0xf]
        %v5729 = vunpack.c.l.b16 %v5704
        %v5730 = vunpack.c.l.b16 %v5705
        %v5731 = vunpack.c.l.b16 %v5706
        %v5732 = vunpack.c.l.b16 %v5715
        %v5733 = vpack.c.b16 %v5730, %v5729
        %v5734 = vpack.c.b16 %v5732, %v5731
        %v5736 = vshrl.u32 %v5733, 16
        %v5738 = vshll.u32 %v5733, 16
        %v5740 = vrot.slane %v5738, 1
        %v5741 = vor.u32 %v5736, %v5740
        %v5743 = vshll.u32 %v5734, 16
        %v5745 = vrot.slane %v5743, 1
        %v5746 = vsel %vm426, %v5741, %v5745
        %v5747 = vshrl.u32 %v5734, 16
        %v5749 = vor.u32 %v5747, %v5745
        %v5758 = vunpack.c.l.b16 %v5717
        %v5759 = vunpack.c.l.b16 %v5718
        %v5760 = vunpack.c.l.b16 %v5719
        %v5761 = vunpack.c.l.b16 %v5720
        %v5762 = vunpack.c.l.b16 %v5721
        %v5763 = vunpack.c.l.b16 %v5722
        %v5764 = vunpack.c.l.b16 %v5723
        %v5765 = vunpack.c.l.b16 %v5724
        %v5766 = vpack.c.b16 %v5759, %v5758
        %v5767 = vpack.c.b16 %v5761, %v5760
        %v5768 = vpack.c.b16 %v5763, %v5762
        %v5769 = vpack.c.b16 %v5765, %v5764
        %v5775 = vsel %vm5565, %v5746, 0
        %v5778 = vsel %vm5565, %v5749, 0
        %5780 = vmatprep.subr.bf16.mxu0 0
        %5781 = vmatpush1.bf16.msra.mxu0 %v5766
        %5782 = vmatprep.subr.bf16.mxu0 0
        %5783 = vmatpush1.bf16.msra.mxu0 %v5767
        %5784 = vmatprep.subr.bf16.mxu0 0
        %5785 = vmatpush1.bf16.msra.mxu0 %v5768
        %5786 = vmatprep.subr.bf16.mxu0 0
        %5787 = vmatpush1.bf16.msra.mxu0 %v5769
        %5788 = vmatprep.subr.bf16.mxu0 0
        %5789 = vmatpush1.bf16.msra.mxu0 0
        %5790 = vmatprep.subr.bf16.mxu0 0
        %5791 = vmatpush1.bf16.msra.mxu0 0
        %5792 = vmatprep.subr.bf16.mxu0 0
        %5793 = vmatpush1.bf16.msra.mxu0 0
        %5794 = vmatprep.subr.bf16.mxu0 0
        %5795 = vmatpush1.bf16.msra.mxu0 0
        %5796 = vmatprep.subr.bf16.mxu0 0
        %5797 = vmatpush1.bf16.msra.mxu0 0
        %5798 = vmatprep.subr.bf16.mxu0 0
        %5799 = vmatpush1.bf16.msra.mxu0 0
        %5800 = vmatprep.subr.bf16.mxu0 0
        %5801 = vmatpush1.bf16.msra.mxu0 0
        %5802 = vmatprep.subr.bf16.mxu0 0
        %5803 = vmatpush1.bf16.msra.mxu0 0
        %5804 = vmatprep.subr.bf16.mxu0 0
        %5805 = vmatpush1.bf16.msra.mxu0 0
        %5806 = vmatprep.subr.bf16.mxu0 0
        %5807 = vmatpush1.bf16.msra.mxu0 0
        %5808 = vmatprep.subr.bf16.mxu0 0
        %5809 = vmatpush1.bf16.msra.mxu0 0
        %5810 = vmatprep.subr.bf16.mxu0 0
        %5811 = vmatpush1.bf16.msra.mxu0 0
        %5812 = vmatprep.mubr.bf16.mxu0 0
        %5813 = vmatmul.mubr.bf16.gmra.mrb[0].mxu0 %v5775
        %v5814 = vpop.f32.mrb[0].mxu0
        %v5815 = vadd.f32 0.0, %v5814
        %v5816 = vpop.f32.mrb[0].mxu0
        %v5817 = vpop.f32.mrb[0].mxu0
        %v5818 = vadd.f32 0.0, %v5817
        %v5819 = vpop.f32.mrb[0].mxu0
        %5820 = vmatprep.mubr.bf16.mxu0 0
        %5821 = vmatmul.mubr.bf16.gmra.mrb[0].mxu0 %v5778
        %v5822 = vpop.f32.mrb[0].mxu0
        %v5823 = vadd.f32 0.0, %v5822
        %v5824 = vpop.f32.mrb[0].mxu0
        %v5825 = vpop.f32.mrb[0].mxu0
        %v5826 = vpop.f32.mrb[0].mxu0
        %5827 = vdwg.mxu0
        %v5828 = vpack.c.b16 %v5731, %v5731
        %v5837 = vunpack.c.l.b16 %v5707
        %v5838 = vunpack.c.l.b16 %v5708
        %v5839 = vunpack.c.l.b16 %v5709
        %v5840 = vunpack.c.l.b16 %v5710
        %v5841 = vunpack.c.l.b16 %v5711
        %v5842 = vunpack.c.l.b16 %v5712
        %v5843 = vunpack.c.l.b16 %v5713
        %v5844 = vunpack.c.l.b16 %v5714
        %v5845 = vpack.c.b16 %v5838, %v5837
        %v5846 = vpack.c.b16 %v5840, %v5839
        %v5847 = vpack.c.b16 %v5842, %v5841
        %v5848 = vpack.c.b16 %v5844, %v5843
        %v5853 = vsel %vm5565, %v5733, 0
        %v5856 = vsel %vm5565, %v5828, 0
        %5858 = vmatprep.subr.bf16.mxu0 0
        %5859 = vmatpush1.bf16.msra.mxu0 %v5845
        %5860 = vmatprep.subr.bf16.mxu0 0
        %5861 = vmatpush1.bf16.msra.mxu0 %v5846
        %5862 = vmatprep.subr.bf16.mxu0 0
        %5863 = vmatpush1.bf16.msra.mxu0 %v5847
        %5864 = vmatprep.subr.bf16.mxu0 0
        %5865 = vmatpush1.bf16.msra.mxu0 %v5848
        %5866 = vmatprep.subr.bf16.mxu0 0
        %5867 = vmatpush1.bf16.msra.mxu0 0
        %5868 = vmatprep.subr.bf16.mxu0 0
        %5869 = vmatpush1.bf16.msra.mxu0 0
        %5870 = vmatprep.subr.bf16.mxu0 0
        %5871 = vmatpush1.bf16.msra.mxu0 0
        %5872 = vmatprep.subr.bf16.mxu0 0
        %5873 = vmatpush1.bf16.msra.mxu0 0
        %5874 = vmatprep.subr.bf16.mxu0 0
        %5875 = vmatpush1.bf16.msra.mxu0 0
        %5876 = vmatprep.subr.bf16.mxu0 0
        %5877 = vmatpush1.bf16.msra.mxu0 0
        %5878 = vmatprep.subr.bf16.mxu0 0
        %5879 = vmatpush1.bf16.msra.mxu0 0
        %5880 = vmatprep.subr.bf16.mxu0 0
        %5881 = vmatpush1.bf16.msra.mxu0 0
        %5882 = vmatprep.subr.bf16.mxu0 0
        %5883 = vmatpush1.bf16.msra.mxu0 0
        %5884 = vmatprep.subr.bf16.mxu0 0
        %5885 = vmatpush1.bf16.msra.mxu0 0
        %5886 = vmatprep.subr.bf16.mxu0 0
        %5887 = vmatpush1.bf16.msra.mxu0 0
        %5888 = vmatprep.subr.bf16.mxu0 0
        %5889 = vmatpush1.bf16.msra.mxu0 0
        %5890 = vmatprep.mubr.bf16.mxu0 0
        %5891 = vmatmul.mubr.bf16.gmra.mrb[0].mxu0 %v5853
        %v5892 = vpop.f32.mrb[0].mxu0
        %v5893 = vadd.f32 %v5815, %v5892
        %v5894 = vpop.f32.mrb[0].mxu0
        %v5895 = vpop.f32.mrb[0].mxu0
        %v5896 = vadd.f32 %v5818, %v5895
        %v5897 = vpop.f32.mrb[0].mxu0
        %5898 = vmatprep.mubr.bf16.mxu0 0
        %5899 = vmatmul.mubr.bf16.gmra.mrb[0].mxu0 %v5856
        %v5900 = vpop.f32.mrb[0].mxu0
        %v5901 = vadd.f32 %v5823, %v5900
        %v5902 = vpop.f32.mrb[0].mxu0
        %v5903 = vpop.f32.mrb[0].mxu0
        %v5904 = vpop.f32.mrb[0].mxu0
        %5905 = vdwg.mxu0
        %v5906 = vld [vmem:[#allocation7] sm:$0xe]
        %s5907 = scalar_lea.vmem %s5, 64
        %v5908 = vld [vmem:[%s5907] sm:$0xf]
        %v5909 = vld [vmem:[%s5907 + $0x4] sm:$0xf]
        %v5910 = vld [vmem:[%s5907 + $0x8] sm:$0xf]
        %v5911 = vld [vmem:[%s5907 + $0xc] sm:$0xf]
        %v5912 = vld [vmem:[%s5907 + $0x10] sm:$0xf]
        %v5913 = vld [vmem:[%s5907 + $0x14] sm:$0xf]
        %v5914 = vld [vmem:[%s5907 + $0x18] sm:$0xf]
        %v5915 = vld [vmem:[%s5907 + $0x1c] sm:$0xf]
        %v5917 = vunpack.c.l.b16 %v5906
        %v5918 = vpack.c.b16 %v5730, %v5917
        %v5919 = vrot.slane %v5918, 1
        %v5920 = vrot.slane %v5734, 1
        %v5921 = vsel %vm1036, %v5919, %v5920
        %v5930 = vunpack.c.l.b16 %v5908
        %v5931 = vunpack.c.l.b16 %v5909
        %v5932 = vunpack.c.l.b16 %v5910
        %v5933 = vunpack.c.l.b16 %v5911
        %v5934 = vunpack.c.l.b16 %v5912
        %v5935 = vunpack.c.l.b16 %v5913
        %v5936 = vunpack.c.l.b16 %v5914
        %v5937 = vunpack.c.l.b16 %v5915
        %v5938 = vpack.c.b16 %v5931, %v5930
        %v5939 = vpack.c.b16 %v5933, %v5932
        %v5940 = vpack.c.b16 %v5935, %v5934
        %v5941 = vpack.c.b16 %v5937, %v5936
        %v5947 = vsel %vm5565, %v5921, 0
        %v5950 = vsel %vm5565, %v5920, 0
        %5952 = vmatprep.subr.bf16.mxu0 0
        %5953 = vmatpush1.bf16.msra.mxu0 %v5938
        %5954 = vmatprep.subr.bf16.mxu0 0
        %5955 = vmatpush1.bf16.msra.mxu0 %v5939
        %5956 = vmatprep.subr.bf16.mxu0 0
        %5957 = vmatpush1.bf16.msra.mxu0 %v5940
        %5958 = vmatprep.subr.bf16.mxu0 0
        %5959 = vmatpush1.bf16.msra.mxu0 %v5941
        %5960 = vmatprep.subr.bf16.mxu0 0
        %5961 = vmatpush1.bf16.msra.mxu0 0
        %5962 = vmatprep.subr.bf16.mxu0 0
        %5963 = vmatpush1.bf16.msra.mxu0 0
        %5964 = vmatprep.subr.bf16.mxu0 0
        %5965 = vmatpush1.bf16.msra.mxu0 0
        %5966 = vmatprep.subr.bf16.mxu0 0
        %5967 = vmatpush1.bf16.msra.mxu0 0
        %5968 = vmatprep.subr.bf16.mxu0 0
        %5969 = vmatpush1.bf16.msra.mxu0 0
        %5970 = vmatprep.subr.bf16.mxu0 0
        %5971 = vmatpush1.bf16.msra.mxu0 0
        %5972 = vmatprep.subr.bf16.mxu0 0
        %5973 = vmatpush1.bf16.msra.mxu0 0
        %5974 = vmatprep.subr.bf16.mxu0 0
        %5975 = vmatpush1.bf16.msra.mxu0 0
        %5976 = vmatprep.subr.bf16.mxu0 0
        %5977 = vmatpush1.bf16.msra.mxu0 0
        %5978 = vmatprep.subr.bf16.mxu0 0
        %5979 = vmatpush1.bf16.msra.mxu0 0
        %5980 = vmatprep.subr.bf16.mxu0 0
        %5981 = vmatpush1.bf16.msra.mxu0 0
        %5982 = vmatprep.subr.bf16.mxu0 0
        %5983 = vmatpush1.bf16.msra.mxu0 0
        %5984 = vmatprep.mubr.bf16.mxu0 0
        %5985 = vmatmul.mubr.bf16.gmra.mrb[0].mxu0 %v5947
        %v5986 = vpop.f32.mrb[0].mxu0
        %v5987 = vadd.f32 0.0, %v5986
        %v5988 = vpop.f32.mrb[0].mxu0
        %v5989 = vpop.f32.mrb[0].mxu0
        %v5990 = vadd.f32 0.0, %v5989
        %v5991 = vpop.f32.mrb[0].mxu0
        %5992 = vmatprep.mubr.bf16.mxu0 0
        %5993 = vmatmul.mubr.bf16.gmra.mrb[0].mxu0 %v5950
        %v5994 = vpop.f32.mrb[0].mxu0
        %v5995 = vadd.f32 0.0, %v5994
        %v5996 = vpop.f32.mrb[0].mxu0
        %v5997 = vpop.f32.mrb[0].mxu0
        %v5998 = vpop.f32.mrb[0].mxu0
        %5999 = vdwg.mxu0
        %v6000 = vadd.f32 %v5893, %v5987
        %v6001 = vadd.f32 %v5896, %v5990
        %v6002 = vadd.f32 %v5901, %v5995
        %v6003 = vld [vmem:[#allocation7] sm:$0x8]
        %v6004 = vld [vmem:[#allocation7 + $0xc] sm:$0x7]
        %s6005 = scalar_lea.vmem %s5, 96
        %v6006 = vld [vmem:[%s6005] sm:$0xf]
        %v6007 = vld [vmem:[%s6005 + $0x4] sm:$0xf]
        %v6008 = vld [vmem:[%s6005 + $0x8] sm:$0xf]
        %v6009 = vld [vmem:[%s6005 + $0xc] sm:$0xf]
        %v6010 = vld [vmem:[%s6005 + $0x10] sm:$0xf]
        %v6011 = vld [vmem:[%s6005 + $0x14] sm:$0xf]
        %v6012 = vld [vmem:[%s6005 + $0x18] sm:$0xf]
        %v6013 = vld [vmem:[%s6005 + $0x1c] sm:$0xf]
        %v6016 = vunpack.c.l.b16 %v6003
        %v6017 = vunpack.c.l.b16 %v6004
        %v6018 = vpack.c.b16 %v5730, %v6016
        %v6019 = vpack.c.b16 %v6017, %v5731
        %v6020 = vrot.slane %v6018, 3
        %v6021 = vrot.slane %v6019, 3
        %v6022 = vsel %vm3436, %v6020, %v6021
        %v6031 = vunpack.c.l.b16 %v6006
        %v6032 = vunpack.c.l.b16 %v6007
        %v6033 = vunpack.c.l.b16 %v6008
        %v6034 = vunpack.c.l.b16 %v6009
        %v6035 = vunpack.c.l.b16 %v6010
        %v6036 = vunpack.c.l.b16 %v6011
        %v6037 = vunpack.c.l.b16 %v6012
        %v6038 = vunpack.c.l.b16 %v6013
        %v6039 = vpack.c.b16 %v6032, %v6031
        %v6040 = vpack.c.b16 %v6034, %v6033
        %v6041 = vpack.c.b16 %v6036, %v6035
        %v6042 = vpack.c.b16 %v6038, %v6037
        %v6048 = vsel %vm5565, %v6022, 0
        %v6051 = vsel %vm5565, %v6021, 0
        %6053 = vmatprep.subr.bf16.mxu0 0
        %6054 = vmatpush1.bf16.msra.mxu0 %v6039
        %6055 = vmatprep.subr.bf16.mxu0 0
        %6056 = vmatpush1.bf16.msra.mxu0 %v6040
        %6057 = vmatprep.subr.bf16.mxu0 0
        %6058 = vmatpush1.bf16.msra.mxu0 %v6041
        %6059 = vmatprep.subr.bf16.mxu0 0
        %6060 = vmatpush1.bf16.msra.mxu0 %v6042
        %6061 = vmatprep.subr.bf16.mxu0 0
        %6062 = vmatpush1.bf16.msra.mxu0 0
        %6063 = vmatprep.subr.bf16.mxu0 0
        %6064 = vmatpush1.bf16.msra.mxu0 0
        %6065 = vmatprep.subr.bf16.mxu0 0
        %6066 = vmatpush1.bf16.msra.mxu0 0
        %6067 = vmatprep.subr.bf16.mxu0 0
        %6068 = vmatpush1.bf16.msra.mxu0 0
        %6069 = vmatprep.subr.bf16.mxu0 0
        %6070 = vmatpush1.bf16.msra.mxu0 0
        %6071 = vmatprep.subr.bf16.mxu0 0
        %6072 = vmatpush1.bf16.msra.mxu0 0
        %6073 = vmatprep.subr.bf16.mxu0 0
        %6074 = vmatpush1.bf16.msra.mxu0 0
        %6075 = vmatprep.subr.bf16.mxu0 0
        %6076 = vmatpush1.bf16.msra.mxu0 0
        %6077 = vmatprep.subr.bf16.mxu0 0
        %6078 = vmatpush1.bf16.msra.mxu0 0
        %6079 = vmatprep.subr.bf16.mxu0 0
        %6080 = vmatpush1.bf16.msra.mxu0 0
        %6081 = vmatprep.subr.bf16.mxu0 0
        %6082 = vmatpush1.bf16.msra.mxu0 0
        %6083 = vmatprep.subr.bf16.mxu0 0
        %6084 = vmatpush1.bf16.msra.mxu0 0
        %6085 = vmatprep.mubr.bf16.mxu0 0
        %6086 = vmatmul.mubr.bf16.gmra.mrb[0].mxu0 %v6048
        %v6087 = vpop.f32.mrb[0].mxu0
        %v6088 = vadd.f32 0.0, %v6087
        %v6089 = vpop.f32.mrb[0].mxu0
        %v6090 = vpop.f32.mrb[0].mxu0
        %v6091 = vadd.f32 0.0, %v6090
        %v6092 = vpop.f32.mrb[0].mxu0
        %6093 = vmatprep.mubr.bf16.mxu0 0
        %6094 = vmatmul.mubr.bf16.gmra.mrb[0].mxu0 %v6051
        %v6095 = vpop.f32.mrb[0].mxu0
        %v6096 = vadd.f32 0.0, %v6095
        %v6097 = vpop.f32.mrb[0].mxu0
        %v6098 = vpop.f32.mrb[0].mxu0
        %v6099 = vpop.f32.mrb[0].mxu0
        %6100 = vdwg.mxu0
        %v6101 = vadd.f32 %v6000, %v6088
        %v6102 = vadd.f32 %v6001, %v6091
        %v6103 = vadd.f32 %v6002, %v6096
        %v6104 = vld [vmem:[#allocation7 + $0xc] sm:$0xf]
        %s6105 = scalar_lea.vmem %s5, 128
        %v6106 = vld [vmem:[%s6105] sm:$0xf]
        %v6107 = vld [vmem:[%s6105 + $0x4] sm:$0xf]
        %v6108 = vld [vmem:[%s6105 + $0x8] sm:$0xf]
        %v6109 = vld [vmem:[%s6105 + $0xc] sm:$0xf]
        %v6110 = vld [vmem:[%s6105 + $0x10] sm:$0xf]
        %v6111 = vld [vmem:[%s6105 + $0x14] sm:$0xf]
        %v6112 = vld [vmem:[%s6105 + $0x18] sm:$0xf]
        %v6113 = vld [vmem:[%s6105 + $0x1c] sm:$0xf]
        %v6115 = vunpack.c.l.b16 %v6104
        %v6116 = vpack.c.b16 %v6115, %v5731
        %vm6117 = vsmask.f32 4352
        %v6119 = vshrl.u32 %v6018, 16
        %v6121 = vrot.slane %v6119, 3
        %v6122 = vshll.u32 %v6018, 16
        %v6124 = vrot.slane %v6122, 4
        %v6125 = vor.u32 %v6121, %v6124
        %v6127 = vshrl.u32 %v6116, 16
        %v6129 = vrot.slane %v6127, 3
        %v6130 = vshll.u32 %v6116, 16
        %v6132 = vrot.slane %v6130, 4
        %v6133 = vor.u32 %v6129, %v6132
        %v6134 = vsel %vm6117, %v6125, %v6133
        %v6143 = vunpack.c.l.b16 %v6106
        %v6144 = vunpack.c.l.b16 %v6107
        %v6145 = vunpack.c.l.b16 %v6108
        %v6146 = vunpack.c.l.b16 %v6109
        %v6147 = vunpack.c.l.b16 %v6110
        %v6148 = vunpack.c.l.b16 %v6111
        %v6149 = vunpack.c.l.b16 %v6112
        %v6150 = vunpack.c.l.b16 %v6113
        %v6151 = vpack.c.b16 %v6144, %v6143
        %v6152 = vpack.c.b16 %v6146, %v6145
        %v6153 = vpack.c.b16 %v6148, %v6147
        %v6154 = vpack.c.b16 %v6150, %v6149
        %v6160 = vsel %vm5565, %v6134, 0
        %v6163 = vsel %vm5565, %v6133, 0
        %6165 = vmatprep.subr.bf16.mxu0 0
        %6166 = vmatpush1.bf16.msra.mxu0 %v6151
        %6167 = vmatprep.subr.bf16.mxu0 0
        %6168 = vmatpush1.bf16.msra.mxu0 %v6152
        %6169 = vmatprep.subr.bf16.mxu0 0
        %6170 = vmatpush1.bf16.msra.mxu0 %v6153
        %6171 = vmatprep.subr.bf16.mxu0 0
        %6172 = vmatpush1.bf16.msra.mxu0 %v6154
        %6173 = vmatprep.subr.bf16.mxu0 0
        %6174 = vmatpush1.bf16.msra.mxu0 0
        %6175 = vmatprep.subr.bf16.mxu0 0
        %6176 = vmatpush1.bf16.msra.mxu0 0
        %6177 = vmatprep.subr.bf16.mxu0 0
        %6178 = vmatpush1.bf16.msra.mxu0 0
        %6179 = vmatprep.subr.bf16.mxu0 0
        %6180 = vmatpush1.bf16.msra.mxu0 0
        %6181 = vmatprep.subr.bf16.mxu0 0
        %6182 = vmatpush1.bf16.msra.mxu0 0
        %6183 = vmatprep.subr.bf16.mxu0 0
        %6184 = vmatpush1.bf16.msra.mxu0 0
        %6185 = vmatprep.subr.bf16.mxu0 0
        %6186 = vmatpush1.bf16.msra.mxu0 0
        %6187 = vmatprep.subr.bf16.mxu0 0
        %6188 = vmatpush1.bf16.msra.mxu0 0
        %6189 = vmatprep.subr.bf16.mxu0 0
        %6190 = vmatpush1.bf16.msra.mxu0 0
        %6191 = vmatprep.subr.bf16.mxu0 0
        %6192 = vmatpush1.bf16.msra.mxu0 0
        %6193 = vmatprep.subr.bf16.mxu0 0
        %6194 = vmatpush1.bf16.msra.mxu0 0
        %6195 = vmatprep.subr.bf16.mxu0 0
        %6196 = vmatpush1.bf16.msra.mxu0 0
        %6197 = vmatprep.mubr.bf16.mxu0 0
        %6198 = vmatmul.mubr.bf16.gmra.mrb[0].mxu0 %v6160
        %v6199 = vpop.f32.mrb[0].mxu0
        %v6200 = vadd.f32 0.0, %v6199
        %v6201 = vpop.f32.mrb[0].mxu0
        %v6202 = vpop.f32.mrb[0].mxu0
        %v6203 = vadd.f32 0.0, %v6202
        %v6204 = vpop.f32.mrb[0].mxu0
        %6205 = vmatprep.mubr.bf16.mxu0 0
        %6206 = vmatmul.mubr.bf16.gmra.mrb[0].mxu0 %v6163
        %v6207 = vpop.f32.mrb[0].mxu0
        %v6208 = vadd.f32 0.0, %v6207
        %v6209 = vpop.f32.mrb[0].mxu0
        %v6210 = vpop.f32.mrb[0].mxu0
        %v6211 = vpop.f32.mrb[0].mxu0
        %6212 = vdwg.mxu0
        %v6213 = vadd.f32 %v6101, %v6200
        %v6214 = vadd.f32 %v6102, %v6203
        %v6215 = vadd.f32 %v6103, %v6208
        %s6216 = scalar_lea.vmem %s5, 160
        %v6217 = vld [vmem:[%s6216] sm:$0xf]
        %v6218 = vld [vmem:[%s6216 + $0x4] sm:$0xf]
        %v6219 = vld [vmem:[%s6216 + $0x8] sm:$0xf]
        %v6220 = vld [vmem:[%s6216 + $0xc] sm:$0xf]
        %v6221 = vld [vmem:[%s6216 + $0x10] sm:$0xf]
        %v6222 = vld [vmem:[%s6216 + $0x14] sm:$0xf]
        %v6223 = vld [vmem:[%s6216 + $0x18] sm:$0xf]
        %v6224 = vld [vmem:[%s6216 + $0x1c] sm:$0xf]
        %v6225 = vpack.c.b16 %v5731, %v5730
        %v6226 = vpack.c.b16 %v6115, %v6115
        %v6235 = vunpack.c.l.b16 %v6217
        %v6236 = vunpack.c.l.b16 %v6218
        %v6237 = vunpack.c.l.b16 %v6219
        %v6238 = vunpack.c.l.b16 %v6220
        %v6239 = vunpack.c.l.b16 %v6221
        %v6240 = vunpack.c.l.b16 %v6222
        %v6241 = vunpack.c.l.b16 %v6223
        %v6242 = vunpack.c.l.b16 %v6224
        %v6243 = vpack.c.b16 %v6236, %v6235
        %v6244 = vpack.c.b16 %v6238, %v6237
        %v6245 = vpack.c.b16 %v6240, %v6239
        %v6246 = vpack.c.b16 %v6242, %v6241
        %v6252 = vsel %vm5565, %v6225, 0
        %v6255 = vsel %vm5565, %v6226, 0
        %6257 = vmatprep.subr.bf16.mxu0 0
        %6258 = vmatpush1.bf16.msra.mxu0 %v6243
        %6259 = vmatprep.subr.bf16.mxu0 0
        %6260 = vmatpush1.bf16.msra.mxu0 %v6244
        %6261 = vmatprep.subr.bf16.mxu0 0
        %6262 = vmatpush1.bf16.msra.mxu0 %v6245
        %6263 = vmatprep.subr.bf16.mxu0 0
        %6264 = vmatpush1.bf16.msra.mxu0 %v6246
        %6265 = vmatprep.subr.bf16.mxu0 0
        %6266 = vmatpush1.bf16.msra.mxu0 0
        %6267 = vmatprep.subr.bf16.mxu0 0
        %6268 = vmatpush1.bf16.msra.mxu0 0
        %6269 = vmatprep.subr.bf16.mxu0 0
        %6270 = vmatpush1.bf16.msra.mxu0 0
        %6271 = vmatprep.subr.bf16.mxu0 0
        %6272 = vmatpush1.bf16.msra.mxu0 0
        %6273 = vmatprep.subr.bf16.mxu0 0
        %6274 = vmatpush1.bf16.msra.mxu0 0
        %6275 = vmatprep.subr.bf16.mxu0 0
        %6276 = vmatpush1.bf16.msra.mxu0 0
        %6277 = vmatprep.subr.bf16.mxu0 0
        %6278 = vmatpush1.bf16.msra.mxu0 0
        %6279 = vmatprep.subr.bf16.mxu0 0
        %6280 = vmatpush1.bf16.msra.mxu0 0
        %6281 = vmatprep.subr.bf16.mxu0 0
        %6282 = vmatpush1.bf16.msra.mxu0 0
        %6283 = vmatprep.subr.bf16.mxu0 0
        %6284 = vmatpush1.bf16.msra.mxu0 0
        %6285 = vmatprep.subr.bf16.mxu0 0
        %6286 = vmatpush1.bf16.msra.mxu0 0
        %6287 = vmatprep.subr.bf16.mxu0 0
        %6288 = vmatpush1.bf16.msra.mxu0 0
        %6289 = vmatprep.mubr.bf16.mxu0 0
        %6290 = vmatmul.mubr.bf16.gmra.mrb[0].mxu0 %v6252
        %v6291 = vpop.f32.mrb[0].mxu0
        %v6292 = vadd.f32 0.0, %v6291
        %v6293 = vpop.f32.mrb[0].mxu0
        %v6294 = vpop.f32.mrb[0].mxu0
        %v6295 = vadd.f32 0.0, %v6294
        %v6296 = vpop.f32.mrb[0].mxu0
        %6297 = vmatprep.mubr.bf16.mxu0 0
        %6298 = vmatmul.mubr.bf16.gmra.mrb[0].mxu0 %v6255
        %v6299 = vpop.f32.mrb[0].mxu0
        %v6300 = vadd.f32 0.0, %v6299
        %v6301 = vpop.f32.mrb[0].mxu0
        %v6302 = vpop.f32.mrb[0].mxu0
        %v6303 = vpop.f32.mrb[0].mxu0
        %6304 = vdwg.mxu0
        %v6305 = vadd.f32 %v6213, %v6292
        %v6306 = vadd.f32 %v6214, %v6295
        %v6307 = vadd.f32 %v6215, %v6300
        %v6308 = vld [vmem:[#allocation7 + $0x4] sm:$0xc]
        %v6309 = vld [vmem:[#allocation7 + $0x8] sm:$0xf]
        %v6310 = vld [vmem:[#allocation7 + $0xc] sm:$0xf]
        %v6311 = vld [vmem:[#allocation7 + $0x10] sm:$0x3]
        %s6312 = scalar_lea.vmem %s5, 192
        %v6313 = vld [vmem:[%s6312] sm:$0xf]
        %v6314 = vld [vmem:[%s6312 + $0x4] sm:$0xf]
        %v6315 = vld [vmem:[%s6312 + $0x8] sm:$0xf]
        %v6316 = vld [vmem:[%s6312 + $0xc] sm:$0xf]
        %v6317 = vld [vmem:[%s6312 + $0x10] sm:$0xf]
        %v6318 = vld [vmem:[%s6312 + $0x14] sm:$0xf]
        %v6319 = vld [vmem:[%s6312 + $0x18] sm:$0xf]
        %v6320 = vld [vmem:[%s6312 + $0x1c] sm:$0xf]
        %v6325 = vunpack.c.l.b16 %v6308
        %v6326 = vunpack.c.l.b16 %v6309
        %v6327 = vunpack.c.l.b16 %v6310
        %v6328 = vunpack.c.l.b16 %v6311
        %v6329 = vpack.c.b16 %v6326, %v6325
        %v6330 = vpack.c.b16 %v6328, %v6327
        %v6331 = vrot.slane %v6329, 2
        %v6332 = vrot.slane %v6330, 2
        %v6333 = vsel %vm2236, %v6331, %v6332
        %v6342 = vunpack.c.l.b16 %v6313
        %v6343 = vunpack.c.l.b16 %v6314
        %v6344 = vunpack.c.l.b16 %v6315
        %v6345 = vunpack.c.l.b16 %v6316
        %v6346 = vunpack.c.l.b16 %v6317
        %v6347 = vunpack.c.l.b16 %v6318
        %v6348 = vunpack.c.l.b16 %v6319
        %v6349 = vunpack.c.l.b16 %v6320
        %v6350 = vpack.c.b16 %v6343, %v6342
        %v6351 = vpack.c.b16 %v6345, %v6344
        %v6352 = vpack.c.b16 %v6347, %v6346
        %v6353 = vpack.c.b16 %v6349, %v6348
        %v6359 = vsel %vm5565, %v6333, 0
        %v6362 = vsel %vm5565, %v6332, 0
        %6364 = vmatprep.subr.bf16.mxu0 0
        %6365 = vmatpush1.bf16.msra.mxu0 %v6350
        %6366 = vmatprep.subr.bf16.mxu0 0
        %6367 = vmatpush1.bf16.msra.mxu0 %v6351
        %6368 = vmatprep.subr.bf16.mxu0 0
        %6369 = vmatpush1.bf16.msra.mxu0 %v6352
        %6370 = vmatprep.subr.bf16.mxu0 0
        %6371 = vmatpush1.bf16.msra.mxu0 %v6353
        %6372 = vmatprep.subr.bf16.mxu0 0
        %6373 = vmatpush1.bf16.msra.mxu0 0
        %6374 = vmatprep.subr.bf16.mxu0 0
        %6375 = vmatpush1.bf16.msra.mxu0 0
        %6376 = vmatprep.subr.bf16.mxu0 0
        %6377 = vmatpush1.bf16.msra.mxu0 0
        %6378 = vmatprep.subr.bf16.mxu0 0
        %6379 = vmatpush1.bf16.msra.mxu0 0
        %6380 = vmatprep.subr.bf16.mxu0 0
        %6381 = vmatpush1.bf16.msra.mxu0 0
        %6382 = vmatprep.subr.bf16.mxu0 0
        %6383 = vmatpush1.bf16.msra.mxu0 0
        %6384 = vmatprep.subr.bf16.mxu0 0
        %6385 = vmatpush1.bf16.msra.mxu0 0
        %6386 = vmatprep.subr.bf16.mxu0 0
        %6387 = vmatpush1.bf16.msra.mxu0 0
        %6388 = vmatprep.subr.bf16.mxu0 0
        %6389 = vmatpush1.bf16.msra.mxu0 0
        %6390 = vmatprep.subr.bf16.mxu0 0
        %6391 = vmatpush1.bf16.msra.mxu0 0
        %6392 = vmatprep.subr.bf16.mxu0 0
        %6393 = vmatpush1.bf16.msra.mxu0 0
        %6394 = vmatprep.subr.bf16.mxu0 0
        %6395 = vmatpush1.bf16.msra.mxu0 0
        %6396 = vmatprep.mubr.bf16.mxu0 0
        %6397 = vmatmul.mubr.bf16.gmra.mrb[0].mxu0 %v6359
        %v6398 = vpop.f32.mrb[0].mxu0
        %v6399 = vadd.f32 0.0, %v6398
        %v6400 = vpop.f32.mrb[0].mxu0
        %v6401 = vpop.f32.mrb[0].mxu0
        %v6402 = vadd.f32 0.0, %v6401
        %v6403 = vpop.f32.mrb[0].mxu0
        %6404 = vmatprep.mubr.bf16.mxu0 0
        %6405 = vmatmul.mubr.bf16.gmra.mrb[0].mxu0 %v6362
        %v6406 = vpop.f32.mrb[0].mxu0
        %v6407 = vadd.f32 0.0, %v6406
        %v6408 = vpop.f32.mrb[0].mxu0
        %v6409 = vpop.f32.mrb[0].mxu0
        %v6410 = vpop.f32.mrb[0].mxu0
        %6411 = vdwg.mxu0
        %v6412 = vadd.f32 %v6305, %v6399
        %v6413 = vadd.f32 %v6306, %v6402
        %v6414 = vadd.f32 %v6307, %v6407
        %v6415 = vld [vmem:[#allocation7 + $0x10] sm:$0x7]
        %s6416 = scalar_lea.vmem %s5, 224
        %v6417 = vld [vmem:[%s6416] sm:$0xf]
        %v6418 = vld [vmem:[%s6416 + $0x4] sm:$0xf]
        %v6419 = vld [vmem:[%s6416 + $0x8] sm:$0xf]
        %v6420 = vld [vmem:[%s6416 + $0xc] sm:$0xf]
        %v6421 = vld [vmem:[%s6416 + $0x10] sm:$0xf]
        %v6422 = vld [vmem:[%s6416 + $0x14] sm:$0xf]
        %v6423 = vld [vmem:[%s6416 + $0x18] sm:$0xf]
        %v6424 = vld [vmem:[%s6416 + $0x1c] sm:$0xf]
        %v6426 = vunpack.c.l.b16 %v6415
        %v6427 = vpack.c.b16 %v6426, %v6327
        %v6429 = vshrl.u32 %v6329, 16
        %v6431 = vrot.slane %v6429, 2
        %v6432 = vshll.u32 %v6329, 16
        %v6434 = vrot.slane %v6432, 3
        %v6435 = vor.u32 %v6431, %v6434
        %v6437 = vshrl.u32 %v6427, 16
        %v6439 = vrot.slane %v6437, 2
        %v6440 = vshll.u32 %v6427, 16
        %v6442 = vrot.slane %v6440, 3
        %v6443 = vor.u32 %v6439, %v6442
        %v6444 = vsel %vm2989, %v6435, %v6443
        %v6453 = vunpack.c.l.b16 %v6417
        %v6454 = vunpack.c.l.b16 %v6418
        %v6455 = vunpack.c.l.b16 %v6419
        %v6456 = vunpack.c.l.b16 %v6420
        %v6457 = vunpack.c.l.b16 %v6421
        %v6458 = vunpack.c.l.b16 %v6422
        %v6459 = vunpack.c.l.b16 %v6423
        %v6460 = vunpack.c.l.b16 %v6424
        %v6461 = vpack.c.b16 %v6454, %v6453
        %v6462 = vpack.c.b16 %v6456, %v6455
        %v6463 = vpack.c.b16 %v6458, %v6457
        %v6464 = vpack.c.b16 %v6460, %v6459
        %v6470 = vsel %vm5565, %v6444, 0
        %v6473 = vsel %vm5565, %v6443, 0
        %6475 = vmatprep.subr.bf16.mxu0 0
        %6476 = vmatpush1.bf16.msra.mxu0 %v6461
        %6477 = vmatprep.subr.bf16.mxu0 0
        %6478 = vmatpush1.bf16.msra.mxu0 %v6462
        %6479 = vmatprep.subr.bf16.mxu0 0
        %6480 = vmatpush1.bf16.msra.mxu0 %v6463
        %6481 = vmatprep.subr.bf16.mxu0 0
        %6482 = vmatpush1.bf16.msra.mxu0 %v6464
        %6483 = vmatprep.subr.bf16.mxu0 0
        %6484 = vmatpush1.bf16.msra.mxu0 0
        %6485 = vmatprep.subr.bf16.mxu0 0
        %6486 = vmatpush1.bf16.msra.mxu0 0
        %6487 = vmatprep.subr.bf16.mxu0 0
        %6488 = vmatpush1.bf16.msra.mxu0 0
        %6489 = vmatprep.subr.bf16.mxu0 0
        %6490 = vmatpush1.bf16.msra.mxu0 0
        %6491 = vmatprep.subr.bf16.mxu0 0
        %6492 = vmatpush1.bf16.msra.mxu0 0
        %6493 = vmatprep.subr.bf16.mxu0 0
        %6494 = vmatpush1.bf16.msra.mxu0 0
        %6495 = vmatprep.subr.bf16.mxu0 0
        %6496 = vmatpush1.bf16.msra.mxu0 0
        %6497 = vmatprep.subr.bf16.mxu0 0
        %6498 = vmatpush1.bf16.msra.mxu0 0
        %6499 = vmatprep.subr.bf16.mxu0 0
        %6500 = vmatpush1.bf16.msra.mxu0 0
        %6501 = vmatprep.subr.bf16.mxu0 0
        %6502 = vmatpush1.bf16.msra.mxu0 0
        %6503 = vmatprep.subr.bf16.mxu0 0
        %6504 = vmatpush1.bf16.msra.mxu0 0
        %6505 = vmatprep.subr.bf16.mxu0 0
        %6506 = vmatpush1.bf16.msra.mxu0 0
        %6507 = vmatprep.mubr.bf16.mxu0 0
        %6508 = vmatmul.mubr.bf16.gmra.mrb[0].mxu0 %v6470
        %v6509 = vpop.f32.mrb[0].mxu0
        %v6510 = vadd.f32 0.0, %v6509
        %v6511 = vpop.f32.mrb[0].mxu0
        %v6512 = vpop.f32.mrb[0].mxu0
        %v6513 = vadd.f32 0.0, %v6512
        %v6514 = vpop.f32.mrb[0].mxu0
        %6515 = vmatprep.mubr.bf16.mxu0 0
        %6516 = vmatmul.mubr.bf16.gmra.mrb[0].mxu0 %v6473
        %v6517 = vpop.f32.mrb[0].mxu0
        %v6518 = vadd.f32 0.0, %v6517
        %v6519 = vpop.f32.mrb[0].mxu0
        %v6520 = vpop.f32.mrb[0].mxu0
        %v6521 = vpop.f32.mrb[0].mxu0
        %6522 = vdwg.mxu0
        %v6523 = vadd.f32 %v6412, %v6510
        %v6524 = vadd.f32 %v6413, %v6513
        %v6525 = vadd.f32 %v6414, %v6518
        %v6526 = vld [vmem:[#allocation7 + $0x4] sm:$0x8]
        %s6527 = scalar_lea.vmem %s5, 256
        %v6528 = vld [vmem:[%s6527] sm:$0xf]
        %v6529 = vld [vmem:[%s6527 + $0x4] sm:$0xf]
        %v6530 = vld [vmem:[%s6527 + $0x8] sm:$0xf]
        %v6531 = vld [vmem:[%s6527 + $0xc] sm:$0xf]
        %v6532 = vld [vmem:[%s6527 + $0x10] sm:$0xf]
        %v6533 = vld [vmem:[%s6527 + $0x14] sm:$0xf]
        %v6534 = vld [vmem:[%s6527 + $0x18] sm:$0xf]
        %v6535 = vld [vmem:[%s6527 + $0x1c] sm:$0xf]
        %v6537 = vunpack.c.l.b16 %v6526
        %v6538 = vpack.c.b16 %v6326, %v6537
        %v6539 = vrot.slane %v6538, 3
        %v6540 = vrot.slane %v6427, 3
        %v6541 = vsel %vm3436, %v6539, %v6540
        %v6550 = vunpack.c.l.b16 %v6528
        %v6551 = vunpack.c.l.b16 %v6529
        %v6552 = vunpack.c.l.b16 %v6530
        %v6553 = vunpack.c.l.b16 %v6531
        %v6554 = vunpack.c.l.b16 %v6532
        %v6555 = vunpack.c.l.b16 %v6533
        %v6556 = vunpack.c.l.b16 %v6534
        %v6557 = vunpack.c.l.b16 %v6535
        %v6558 = vpack.c.b16 %v6551, %v6550
        %v6559 = vpack.c.b16 %v6553, %v6552
        %v6560 = vpack.c.b16 %v6555, %v6554
        %v6561 = vpack.c.b16 %v6557, %v6556
        %v6567 = vsel %vm5565, %v6541, 0
        %v6570 = vsel %vm5565, %v6540, 0
        %6572 = vmatprep.subr.bf16.mxu0 0
        %6573 = vmatpush1.bf16.msra.mxu0 %v6558
        %6574 = vmatprep.subr.bf16.mxu0 0
        %6575 = vmatpush1.bf16.msra.mxu0 %v6559
        %6576 = vmatprep.subr.bf16.mxu0 0
        %6577 = vmatpush1.bf16.msra.mxu0 %v6560
        %6578 = vmatprep.subr.bf16.mxu0 0
        %6579 = vmatpush1.bf16.msra.mxu0 %v6561
        %6580 = vmatprep.subr.bf16.mxu0 0
        %6581 = vmatpush1.bf16.msra.mxu0 0
        %6582 = vmatprep.subr.bf16.mxu0 0
        %6583 = vmatpush1.bf16.msra.mxu0 0
        %6584 = vmatprep.subr.bf16.mxu0 0
        %6585 = vmatpush1.bf16.msra.mxu0 0
        %6586 = vmatprep.subr.bf16.mxu0 0
        %6587 = vmatpush1.bf16.msra.mxu0 0
        %6588 = vmatprep.subr.bf16.mxu0 0
        %6589 = vmatpush1.bf16.msra.mxu0 0
        %6590 = vmatprep.subr.bf16.mxu0 0
        %6591 = vmatpush1.bf16.msra.mxu0 0
        %6592 = vmatprep.subr.bf16.mxu0 0
        %6593 = vmatpush1.bf16.msra.mxu0 0
        %6594 = vmatprep.subr.bf16.mxu0 0
        %6595 = vmatpush1.bf16.msra.mxu0 0
        %6596 = vmatprep.subr.bf16.mxu0 0
        %6597 = vmatpush1.bf16.msra.mxu0 0
        %6598 = vmatprep.subr.bf16.mxu0 0
        %6599 = vmatpush1.bf16.msra.mxu0 0
        %6600 = vmatprep.subr.bf16.mxu0 0
        %6601 = vmatpush1.bf16.msra.mxu0 0
        %6602 = vmatprep.subr.bf16.mxu0 0
        %6603 = vmatpush1.bf16.msra.mxu0 0
        %6604 = vmatprep.mubr.bf16.mxu0 0
        %6605 = vmatmul.mubr.bf16.gmra.mrb[0].mxu0 %v6567
        %v6606 = vpop.f32.mrb[0].mxu0
        %v6607 = vadd.f32 0.0, %v6606
        %v6608 = vpop.f32.mrb[0].mxu0
        %v6609 = vpop.f32.mrb[0].mxu0
        %v6610 = vadd.f32 0.0, %v6609
        %v6611 = vpop.f32.mrb[0].mxu0
        %6612 = vmatprep.mubr.bf16.mxu0 0
        %6613 = vmatmul.mubr.bf16.gmra.mrb[0].mxu0 %v6570
        %v6614 = vpop.f32.mrb[0].mxu0
        %v6615 = vadd.f32 0.0, %v6614
        %v6616 = vpop.f32.mrb[0].mxu0
        %v6617 = vpop.f32.mrb[0].mxu0
        %v6618 = vpop.f32.mrb[0].mxu0
        %6619 = vdwg.mxu0
        %v6620 = vadd.f32 %v6523, %v6607
        %v6621 = vadd.f32 %v6524, %v6610
        %v6622 = vadd.f32 %v6525, %v6615
        %v6623 = vld [vmem:[%s6] sm:$0x1]
        %v6625 = vlaneseq
        %v6626 = vshrl.u32 %v6625, 7
        %v6627 = vsub.s32 0, %v6626
        %v6628 = vrot.slane %v6623, %v6627
        %v6630 = vadd.f32 %v6620, %v6628
        %v6631 = vadd.f32 %v6621, %v6628
        %v6632 = vadd.f32 %v6622, %v6628
        %v6633 = vmax.f32 %v6630, 0.0
        %v6634 = vmax.f32 %v6631, 0.0
        %v6635 = vmax.f32 %v6632, 0.0
        %6636 = vst [vmem:[#allocation8] sm:$0xff] %v6633
        %6637 = vst [vmem:[#allocation8 + $0x8] sm:$0xff] %v6634
        %6638 = vst [vmem:[#allocation8 + $0x10] sm:$0xff] %v6635
        %v6639 = vld [vmem:[#allocation8] ss:$2 sm:$0xff]
        %s6640 = scalar_lea.vmem [#allocation8], 16
        %v6641 = vld [vmem:[%s6640] ss:$2 sm:$0xf]
        %s6642 = scalar_lea.vmem [#allocation8], 1
        %v6643 = vld [vmem:[%s6642] ss:$2 sm:$0xff]
        %s6644 = scalar_lea.vmem [#allocation8], 17
        %v6645 = vld [vmem:[%s6644] ss:$2 sm:$0xf]
        %v6646 = vmax.f32 %v6639, %v6643
        %v6647 = vmax.f32 %v6641, %v6645
        %6648 = vst [vmem:[#allocation9] sm:$0xff] %v6646
        %6649 = vst [vmem:[#allocation9 + $0x8] sm:$0xf] %v6647
        %v6650 = vld [vmem:[#allocation9] sm:$0x3]
        %v6651 = vld [vmem:[#allocation9 + $0x3] sm:$0x3]
        %v6652 = vmax.f32 %v6650, %v6651
        %6653 = vst [vmem:[%s271] sm:$0x3] %v6652
        %v6654 = vld [vmem:[#allocation9 + $0x6] sm:$0x3]
        %v6655 = vld [vmem:[#allocation9 + $0x9] sm:$0x3]
        %v6656 = vmax.f32 %v6654, %v6655
        %6657 = vst [vmem:[%s271 + $0x2] sm:$0x3] %v6656
        %s6658 = sand.u32 %s181, 1
        %s6659 = scalar_lea.sflag [#allocation11], %s6658
        %s6660 = sand.u32 %s181, 1
        %s6661 = smul.addr %s6660, 4
        %s6662 = scalar_lea.vmem [#allocation10], %s6661
        // Predicated region
        $region49: #{tpu_custom_call.1} parent=47 // pred_check
          %p6663 = pneg %p191
        $region50: #{tpu_custom_call.1} parent=47 // pred_check_branch
          %6665 = sbr.rel (%p6663) target = $region52
        $region51: #{tpu_custom_call.1} parent=47 // pred_region
          %s6667 = ssub.s32 64, 64
          %6668 = vsyncadd %s6659, %s6667
          %s6669 = smul.addr %s21, 64
          %s6670 = scalar_lea.hbm %s7, %s6669
          %s6672 = sshll.u32 %s6662, 4
          %s6673 = int_to_ptr.vmem [resolvable:$true] %s6672
          %6675 = dma.vmem_to_hbm [thread:$0]  %s6673, 64, %s6670, %s6659
        $region52: #{tpu_custom_call.1} parent=47 // pred_fallthru
          _
      $region48: #{tpu_custom_call.1} parent=5 // pred_fallthru
        _
      %p6676 = scmp.le.s32.totalorder 2, %s16
      // Predicated region
      $region53: #{tpu_custom_call.1} parent=5 // pred_check
        %p6677 = pneg %p6676
      $region54: #{tpu_custom_call.1} parent=5 // pred_check_branch
        %6679 = sbr.rel (%p6677) target = $region56
      $region55: #{tpu_custom_call.1} parent=5 // pred_region
        %s6680 = ssub.s32 %s16, 2
        // Predicated region
        $region57: #{tpu_custom_call.1} parent=55 // pred_check
          %p6681 = pneg %p197
        $region58: #{tpu_custom_call.1} parent=55 // pred_check_branch
          %6683 = sbr.rel (%p6681) target = $region60
        $region59: #{tpu_custom_call.1} parent=55 // pred_region
          %s6684 = sand.u32 %s182, 1
          %s6685 = scalar_lea.sflag [#allocation11], %s6684
          %s6686 = sand.u32 %s182, 1
          %s6687 = smul.addr %s6686, 4
          %s6688 = scalar_lea.vmem [#allocation10], %s6687
          %6689 = dma.done %s6685, 64
        $region60: #{tpu_custom_call.1} parent=55 // pred_fallthru
          _
      $region56: #{tpu_custom_call.1} parent=5 // pred_fallthru
        _
    $region6: #{tpu_custom_call.1} parent=1 // loop_footer
      %s20 = sadd.s32 1, %s16
    $region7: #{tpu_custom_call.1} parent=1 // loop_footer_branch
      %15 = sbr.rel target = $region3
    $region8: #{tpu_custom_call.1} parent=1 // loop_exit
      _
    %6690 = vsyncpa [#allocation11], 1
    %s6691 = scalar_lea.sflag [#allocation11], 1
    %6692 = vsyncpa %s6691, 1

</llo_original>
